<compile_context>
chip_gen: v5e
topology: v5e:2x2
jax: 0.10.0
libtpu: 0.0.40
codegen_flags: <defaults>
</compile_context>

<pallas_src>
import functools

import jax
import jax.numpy as jnp
from jax.experimental import pallas as pl
from jax.experimental.pallas import tpu as pltpu

INPUT_SIZE = 3
HIDDEN = 8
LAYERS = 5
SEQ = 30                    # fc1 expects 240 = SEQ * HIDDEN input features
FC1_OUT = 64
FC2_OUT = 1


# ---------------------------------------------------------------------------
# Pallas kernel: full forward pass (stacked tanh-RNN + fc1 + ReLU + fc2)
# ---------------------------------------------------------------------------
def rnn_forward_kernel(xflat_ref,     # (T*B, I)   time-major flattened input (row = t*B + b)
                       h0_ref,        # (L, B, H)  initial hidden states
                       wih0_ref,      # (I, H)     layer-0 input weights (transposed)
                       wihs_ref,      # (L-1, H, H) layer>0 input weights (transposed)
                       whhs_ref,      # (L, H, H)  hidden weights (transposed)
                       bias_ref,      # (L, H)     b_ih + b_hh folded
                       w1_ref,        # (240, 64)  fc1 weight (transposed)
                       b1_ref,        # (1, 64)
                       w2_ref,        # (1, 64)    fc2 weight (original row layout)
                       b2_ref,        # (1, 1)
                       out_ref,       # (B, 1)
                       seq_ref,       # scratch (T*B, H): previous layer's outputs
                       xproj_ref,     # scratch (T*B, H): hoisted input projection
                       fc1_in_ref):   # scratch (B, T*H): PyTorch-flattened last-layer outputs
    TB = xflat_ref.shape[0]
    B = TB // SEQ
    T = SEQ

    for l in range(LAYERS):
        # ---- hoisted input projection: all T timesteps in one matmul --------
        b_l = bias_ref[pl.ds(l, 1), :]                               # (1, H)
        if l == 0:
            xproj_ref[...] = (
                jnp.dot(xflat_ref[...], wih0_ref[...],
                        preferred_element_type=jnp.float32) + b_l)
        else:
            # Read previous layer's full sequence before it gets overwritten.
            xproj_ref[...] = (
                jnp.dot(seq_ref[...], wihs_ref[l - 1],
                        preferred_element_type=jnp.float32) + b_l)

        # ---- serial recurrence: h = tanh(xproj[t] + h @ w_hh) ---------------
        w_hh = whhs_ref[l]                                           # (H, H)
        h = h0_ref[l]                                                # (B, H)
        last = (l == LAYERS - 1)
        for t in range(T):
            h = jnp.tanh(
                xproj_ref[pl.ds(t * B, B), :]
                + jnp.dot(h, w_hh, preferred_element_type=jnp.float32))
            if last:
                # PyTorch reshape layout: column = t*H + h  -> fc1 input slab.
                fc1_in_ref[:, pl.ds(t * HIDDEN, HIDDEN)] = h
            else:
                seq_ref[pl.ds(t * B, B), :] = h

    # ---- fc1: single full-depth (B, 240) x (240, 64) matmul + ReLU ----------
    y1 = jnp.maximum(
        jnp.dot(fc1_in_ref[...], w1_ref[...],
                preferred_element_type=jnp.float32) + b1_ref[...],
        0.0)                                                          # (B, 64)

    # ---- fc2 as VPU multiply + lane reduce (skip a tiny MXU pass) -----------
    out_ref[...] = (jnp.sum(y1 * w2_ref[...], axis=-1, keepdims=True)
                    + b2_ref[...])                                    # (B, 1)


# ---------------------------------------------------------------------------
# One-time parameter layout preparation (hoisted out of the per-call path)
# ---------------------------------------------------------------------------
def prepare_params(params):
    return dict(
        wih0_t=params["w_ih"][0].T,                                   # (I, H)
        wihs_t=jnp.stack([w.T for w in params["w_ih"][1:]]),          # (L-1, H, H)
        whhs_t=jnp.stack([w.T for w in params["w_hh"]]),              # (L, H, H)
        bias=jnp.stack([bi + bh for bi, bh in
                        zip(params["b_ih"], params["b_hh"])]),        # (L, H)
        w1_t=params["w1"].T,                                          # (240, 64)
        b1=params["b1"].reshape(1, FC1_OUT),                          # (1, 64)
        w2=params["w2"].reshape(1, FC1_OUT),                          # (1, 64)
        b2=params["b2"].reshape(1, FC2_OUT),                          # (1, 1)
    )


# ---------------------------------------------------------------------------
# Wrapper (layout plumbing + pallas_call)
# ---------------------------------------------------------------------------
def rnn_net_forward(x, h0, prepped):
    """x: (B, T, I) float32, h0: (L, B, H) float32 -> (B,) float32."""
    B, T, _ = x.shape
    assert T == SEQ, "fc1(in_features=240) implies seq_len == 30"

    # Time-major, batch-flattened input: row index = t*B + b.
    xflat = jnp.transpose(x, (1, 0, 2)).reshape(T * B, INPUT_SIZE).astype(jnp.float32)

    vmem = pl.BlockSpec(memory_space=pltpu.MemorySpace.VMEM)
    out = pl.pallas_call(
        rnn_forward_kernel,
        out_shape=jax.ShapeDtypeStruct((B, 1), jnp.float32),
        in_specs=[vmem] * 10,
        out_specs=vmem,
        scratch_shapes=[
            pltpu.VMEM((T * B, HIDDEN), jnp.float32),     # seq_ref
            pltpu.VMEM((T * B, HIDDEN), jnp.float32),     # xproj_ref
            pltpu.VMEM((B, T * HIDDEN), jnp.float32),     # fc1_in_ref
        ],
    )(xflat, h0.astype(jnp.float32), prepped["wih0_t"], prepped["wihs_t"],
      prepped["whhs_t"], prepped["bias"], prepped["w1_t"], prepped["b1"],
      prepped["w2"], prepped["b2"])

    return jnp.ravel(out)                                              # torch.flatten -> (B,)


# ---------------------------------------------------------------------------
# Deterministic parameter init (PyTorch-style uniform ranges)
# ---------------------------------------------------------------------------
def init_params(key):
    keys = list(jax.random.split(key, 4 * LAYERS + 4))
    k = iter(keys)
    s = 1.0 / jnp.sqrt(jnp.float32(HIDDEN))
    w_ih, w_hh, b_ih, b_hh = [], [], [], []
    for l in range(LAYERS):
        in_dim = INPUT_SIZE if l == 0 else HIDDEN
        w_ih.append(jax.random.uniform(next(k), (HIDDEN, in_dim), jnp.float32, -s, s))
        w_hh.append(jax.random.uniform(next(k), (HIDDEN, HIDDEN), jnp.float32, -s, s))
        b_ih.append(jax.random.uniform(next(k), (HIDDEN,), jnp.float32, -s, s))
        b_hh.append(jax.random.uniform(next(k), (HIDDEN,), jnp.float32, -s, s))
    s1 = 1.0 / jnp.sqrt(jnp.float32(SEQ * HIDDEN))
    w1 = jax.random.uniform(next(k), (FC1_OUT, SEQ * HIDDEN), jnp.float32, -s1, s1)
    b1 = jax.random.uniform(next(k), (FC1_OUT,), jnp.float32, -s1, s1)
    s2 = 1.0 / jnp.sqrt(jnp.float32(FC1_OUT))
    w2 = jax.random.uniform(next(k), (FC2_OUT, FC1_OUT), jnp.float32, -s2, s2)
    b2 = jax.random.uniform(next(k), (FC2_OUT,), jnp.float32, -s2, s2)
    return dict(w_ih=w_ih, w_hh=w_hh, b_ih=b_ih, b_hh=b_hh, w1=w1, b1=b1, w2=w2, b2=b2)


# ---------------------------------------------------------------------------
# Pure-JAX reference (mirrors the PyTorch forward exactly)
# ---------------------------------------------------------------------------
def reference_forward(x, h0, p):
    B, T, _ = x.shape
    seq = x
    for l in range(LAYERS):
        w_ih, w_hh = p["w_ih"][l], p["w_hh"][l]
        b = p["b_ih"][l] + p["b_hh"][l]
        h = h0[l]
        outs = []
        for t in range(T):
            h = jnp.tanh(seq[:, t, :] @ w_ih.T + h @ w_hh.T + b)
            outs.append(h)
        seq = jnp.stack(outs, axis=1)                                  # (B, T, H)
    flat = seq.reshape(B, -1)                                          # (B, 240)
    y1 = jnp.maximum(flat @ p["w1"].T + p["b1"], 0.0)
    y2 = y1 @ p["w2"].T + p["b2"]
    return jnp.ravel(y2)


if __name__ == "__main__":
    key = jax.random.PRNGKey(0)
    kp, kx, kh = jax.random.split(key, 3)

    params = init_params(kp)
    prepped = prepare_params(params)          # weight layout transforms done once

    B = 2
    x = jax.random.normal(kx, (B, SEQ, INPUT_SIZE), jnp.float32)       # (2, 30, 3)
    h0 = jax.random.normal(kh, (LAYERS, B, HIDDEN), jnp.float32)       # (5, 2, 8)

    fwd = jax.jit(functools.partial(rnn_net_forward, prepped=prepped))
    out = jax.block_until_ready(fwd(x, h0))

    ref = reference_forward(x, h0, params)
    assert out.shape == (B,), out.shape
    assert bool(jnp.all(jnp.isfinite(out)))
    assert bool(jnp.allclose(out, ref, rtol=2e-2, atol=2e-2)), (out, ref)

    print("KERNEL_OK")
</pallas_src>

<mosaic_0001>
module attributes {stable_mosaic.version = 11 : i64} {
  func.func @rnn_forward_kernel(%arg0: memref<60x3xf32, #tpu.memory_space<vmem>>, %arg1: memref<5x2x8xf32, #tpu.memory_space<vmem>>, %arg2: memref<3x8xf32, #tpu.memory_space<vmem>>, %arg3: memref<4x8x8xf32, #tpu.memory_space<vmem>>, %arg4: memref<5x8x8xf32, #tpu.memory_space<vmem>>, %arg5: memref<5x8xf32, #tpu.memory_space<vmem>>, %arg6: memref<240x64xf32, #tpu.memory_space<vmem>>, %arg7: memref<1x64xf32, #tpu.memory_space<vmem>>, %arg8: memref<1x64xf32, #tpu.memory_space<vmem>>, %arg9: memref<1x1xf32, #tpu.memory_space<vmem>>, %arg10: memref<2x1xf32, #tpu.memory_space<vmem>>, %arg11: memref<60x8xf32, #tpu.memory_space<vmem>>, %arg12: memref<60x8xf32, #tpu.memory_space<vmem>>, %arg13: memref<2x240xf32, #tpu.memory_space<vmem>>) attributes {dimension_semantics = [], scalar_prefetch = 0 : i64, scratch_operands = 3 : i64, tpu.core_type = #tpu.core_type<tc>} {
    %c0 = arith.constant 0 : index
    %c0_0 = arith.constant 0 : index
    %0 = vector.load %arg5[%c0, %c0_0] : memref<5x8xf32, #tpu.memory_space<vmem>>, vector<1x8xf32>
    %c0_1 = arith.constant 0 : index
    %c0_2 = arith.constant 0 : index
    %1 = vector.load %arg0[%c0_1, %c0_2] : memref<60x3xf32, #tpu.memory_space<vmem>>, vector<60x3xf32>
    %c0_3 = arith.constant 0 : index
    %c0_4 = arith.constant 0 : index
    %2 = vector.load %arg2[%c0_3, %c0_4] : memref<3x8xf32, #tpu.memory_space<vmem>>, vector<3x8xf32>
    %cst = arith.constant dense<0.000000e+00> : vector<60x8xf32>
    %3 = tpu.matmul %1, %2, %cst {dimension_numbers = #tpu.dot_dimension_numbers<[1], [0], [0], [1], [0, 0, 1, 1], [], []>} : vector<60x3xf32>, vector<3x8xf32>, vector<60x8xf32> -> vector<60x8xf32>
    %4 = vector.broadcast %0 : vector<1x8xf32> to vector<60x8xf32>
    %5 = arith.addf %3, %4 : vector<60x8xf32>
    %c0_5 = arith.constant 0 : index
    %c0_6 = arith.constant 0 : index
    %6 = vector.load %arg12[%c0_5, %c0_6] : memref<60x8xf32, #tpu.memory_space<vmem>>, vector<60x8xf32>
    tpu.vector_store %arg12[%c0_5, %c0_6], %5 {strides = array<i32>} : memref<60x8xf32, #tpu.memory_space<vmem>>, vector<60x8xf32>,
    %c0_7 = arith.constant 0 : index
    %c0_8 = arith.constant 0 : index
    %c0_9 = arith.constant 0 : index
    %7 = vector.load %arg4[%c0_7, %c0_8, %c0_9] : memref<5x8x8xf32, #tpu.memory_space<vmem>>, vector<1x8x8xf32>
    %8 = vector.shape_cast %7 : vector<1x8x8xf32> to vector<8x8xf32>
    %c0_10 = arith.constant 0 : index
    %c0_11 = arith.constant 0 : index
    %c0_12 = arith.constant 0 : index
    %9 = vector.load %arg1[%c0_10, %c0_11, %c0_12] : memref<5x2x8xf32, #tpu.memory_space<vmem>>, vector<1x2x8xf32>
    %10 = vector.shape_cast %9 : vector<1x2x8xf32> to vector<2x8xf32>
    %c0_13 = arith.constant 0 : index
    %c0_14 = arith.constant 0 : index
    %11 = vector.load %arg12[%c0_13, %c0_14] : memref<60x8xf32, #tpu.memory_space<vmem>>, vector<2x8xf32>
    %cst_15 = arith.constant dense<0.000000e+00> : vector<2x8xf32>
    %12 = tpu.matmul %10, %8, %cst_15 {dimension_numbers = #tpu.dot_dimension_numbers<[1], [0], [0], [1], [0, 0, 1, 1], [], []>} : vector<2x8xf32>, vector<8x8xf32>, vector<2x8xf32> -> vector<2x8xf32>
    %13 = arith.addf %11, %12 : vector<2x8xf32>
    %14 = math.tanh %13 : vector<2x8xf32>
    %c0_16 = arith.constant 0 : index
    %c0_17 = arith.constant 0 : index
    %15 = vector.load %arg11[%c0_16, %c0_17] : memref<60x8xf32, #tpu.memory_space<vmem>>, vector<2x8xf32>
    tpu.vector_store %arg11[%c0_16, %c0_17], %14 {strides = array<i32>} : memref<60x8xf32, #tpu.memory_space<vmem>>, vector<2x8xf32>,
    %c2 = arith.constant 2 : index
    %c0_18 = arith.constant 0 : index
    %16 = vector.load %arg12[%c2, %c0_18] : memref<60x8xf32, #tpu.memory_space<vmem>>, vector<2x8xf32>
    %cst_19 = arith.constant dense<0.000000e+00> : vector<2x8xf32>
    %17 = tpu.matmul %14, %8, %cst_19 {dimension_numbers = #tpu.dot_dimension_numbers<[1], [0], [0], [1], [0, 0, 1, 1], [], []>} : vector<2x8xf32>, vector<8x8xf32>, vector<2x8xf32> -> vector<2x8xf32>
    %18 = arith.addf %16, %17 : vector<2x8xf32>
    %19 = math.tanh %18 : vector<2x8xf32>
    %c2_20 = arith.constant 2 : index
    %c0_21 = arith.constant 0 : index
    %20 = vector.load %arg11[%c2_20, %c0_21] : memref<60x8xf32, #tpu.memory_space<vmem>>, vector<2x8xf32>
    tpu.vector_store %arg11[%c2_20, %c0_21], %19 {strides = array<i32>} : memref<60x8xf32, #tpu.memory_space<vmem>>, vector<2x8xf32>,
    %c4 = arith.constant 4 : index
    %c0_22 = arith.constant 0 : index
    %21 = vector.load %arg12[%c4, %c0_22] : memref<60x8xf32, #tpu.memory_space<vmem>>, vector<2x8xf32>
    %cst_23 = arith.constant dense<0.000000e+00> : vector<2x8xf32>
    %22 = tpu.matmul %19, %8, %cst_23 {dimension_numbers = #tpu.dot_dimension_numbers<[1], [0], [0], [1], [0, 0, 1, 1], [], []>} : vector<2x8xf32>, vector<8x8xf32>, vector<2x8xf32> -> vector<2x8xf32>
    %23 = arith.addf %21, %22 : vector<2x8xf32>
    %24 = math.tanh %23 : vector<2x8xf32>
    %c4_24 = arith.constant 4 : index
    %c0_25 = arith.constant 0 : index
    %25 = vector.load %arg11[%c4_24, %c0_25] : memref<60x8xf32, #tpu.memory_space<vmem>>, vector<2x8xf32>
    tpu.vector_store %arg11[%c4_24, %c0_25], %24 {strides = array<i32>} : memref<60x8xf32, #tpu.memory_space<vmem>>, vector<2x8xf32>,
    %c6 = arith.constant 6 : index
    %c0_26 = arith.constant 0 : index
    %26 = vector.load %arg12[%c6, %c0_26] : memref<60x8xf32, #tpu.memory_space<vmem>>, vector<2x8xf32>
    %cst_27 = arith.constant dense<0.000000e+00> : vector<2x8xf32>
    %27 = tpu.matmul %24, %8, %cst_27 {dimension_numbers = #tpu.dot_dimension_numbers<[1], [0], [0], [1], [0, 0, 1, 1], [], []>} : vector<2x8xf32>, vector<8x8xf32>, vector<2x8xf32> -> vector<2x8xf32>
    %28 = arith.addf %26, %27 : vector<2x8xf32>
    %29 = math.tanh %28 : vector<2x8xf32>
    %c6_28 = arith.constant 6 : index
    %c0_29 = arith.constant 0 : index
    %30 = vector.load %arg11[%c6_28, %c0_29] : memref<60x8xf32, #tpu.memory_space<vmem>>, vector<2x8xf32>
    tpu.vector_store %arg11[%c6_28, %c0_29], %29 {strides = array<i32>} : memref<60x8xf32, #tpu.memory_space<vmem>>, vector<2x8xf32>,
    %c8 = arith.constant 8 : index
    %c0_30 = arith.constant 0 : index
    %31 = vector.load %arg12[%c8, %c0_30] : memref<60x8xf32, #tpu.memory_space<vmem>>, vector<2x8xf32>
    %cst_31 = arith.constant dense<0.000000e+00> : vector<2x8xf32>
    %32 = tpu.matmul %29, %8, %cst_31 {dimension_numbers = #tpu.dot_dimension_numbers<[1], [0], [0], [1], [0, 0, 1, 1], [], []>} : vector<2x8xf32>, vector<8x8xf32>, vector<2x8xf32> -> vector<2x8xf32>
    %33 = arith.addf %31, %32 : vector<2x8xf32>
    %34 = math.tanh %33 : vector<2x8xf32>
    %c8_32 = arith.constant 8 : index
    %c0_33 = arith.constant 0 : index
    %35 = vector.load %arg11[%c8_32, %c0_33] : memref<60x8xf32, #tpu.memory_space<vmem>>, vector<2x8xf32>
    tpu.vector_store %arg11[%c8_32, %c0_33], %34 {strides = array<i32>} : memref<60x8xf32, #tpu.memory_space<vmem>>, vector<2x8xf32>,
    %c10 = arith.constant 10 : index
    %c0_34 = arith.constant 0 : index
    %36 = vector.load %arg12[%c10, %c0_34] : memref<60x8xf32, #tpu.memory_space<vmem>>, vector<2x8xf32>
    %cst_35 = arith.constant dense<0.000000e+00> : vector<2x8xf32>
    %37 = tpu.matmul %34, %8, %cst_35 {dimension_numbers = #tpu.dot_dimension_numbers<[1], [0], [0], [1], [0, 0, 1, 1], [], []>} : vector<2x8xf32>, vector<8x8xf32>, vector<2x8xf32> -> vector<2x8xf32>
    %38 = arith.addf %36, %37 : vector<2x8xf32>
    %39 = math.tanh %38 : vector<2x8xf32>
    %c10_36 = arith.constant 10 : index
    %c0_37 = arith.constant 0 : index
    %40 = vector.load %arg11[%c10_36, %c0_37] : memref<60x8xf32, #tpu.memory_space<vmem>>, vector<2x8xf32>
    tpu.vector_store %arg11[%c10_36, %c0_37], %39 {strides = array<i32>} : memref<60x8xf32, #tpu.memory_space<vmem>>, vector<2x8xf32>,
    %c12 = arith.constant 12 : index
    %c0_38 = arith.constant 0 : index
    %41 = vector.load %arg12[%c12, %c0_38] : memref<60x8xf32, #tpu.memory_space<vmem>>, vector<2x8xf32>
    %cst_39 = arith.constant dense<0.000000e+00> : vector<2x8xf32>
    %42 = tpu.matmul %39, %8, %cst_39 {dimension_numbers = #tpu.dot_dimension_numbers<[1], [0], [0], [1], [0, 0, 1, 1], [], []>} : vector<2x8xf32>, vector<8x8xf32>, vector<2x8xf32> -> vector<2x8xf32>
    %43 = arith.addf %41, %42 : vector<2x8xf32>
    %44 = math.tanh %43 : vector<2x8xf32>
    %c12_40 = arith.constant 12 : index
    %c0_41 = arith.constant 0 : index
    %45 = vector.load %arg11[%c12_40, %c0_41] : memref<60x8xf32, #tpu.memory_space<vmem>>, vector<2x8xf32>
    tpu.vector_store %arg11[%c12_40, %c0_41], %44 {strides = array<i32>} : memref<60x8xf32, #tpu.memory_space<vmem>>, vector<2x8xf32>,
    %c14 = arith.constant 14 : index
    %c0_42 = arith.constant 0 : index
    %46 = vector.load %arg12[%c14, %c0_42] : memref<60x8xf32, #tpu.memory_space<vmem>>, vector<2x8xf32>
    %cst_43 = arith.constant dense<0.000000e+00> : vector<2x8xf32>
    %47 = tpu.matmul %44, %8, %cst_43 {dimension_numbers = #tpu.dot_dimension_numbers<[1], [0], [0], [1], [0, 0, 1, 1], [], []>} : vector<2x8xf32>, vector<8x8xf32>, vector<2x8xf32> -> vector<2x8xf32>
    %48 = arith.addf %46, %47 : vector<2x8xf32>
    %49 = math.tanh %48 : vector<2x8xf32>
    %c14_44 = arith.constant 14 : index
    %c0_45 = arith.constant 0 : index
    %50 = vector.load %arg11[%c14_44, %c0_45] : memref<60x8xf32, #tpu.memory_space<vmem>>, vector<2x8xf32>
    tpu.vector_store %arg11[%c14_44, %c0_45], %49 {strides = array<i32>} : memref<60x8xf32, #tpu.memory_space<vmem>>, vector<2x8xf32>,
    %c16 = arith.constant 16 : index
    %c0_46 = arith.constant 0 : index
    %51 = vector.load %arg12[%c16, %c0_46] : memref<60x8xf32, #tpu.memory_space<vmem>>, vector<2x8xf32>
    %cst_47 = arith.constant dense<0.000000e+00> : vector<2x8xf32>
    %52 = tpu.matmul %49, %8, %cst_47 {dimension_numbers = #tpu.dot_dimension_numbers<[1], [0], [0], [1], [0, 0, 1, 1], [], []>} : vector<2x8xf32>, vector<8x8xf32>, vector<2x8xf32> -> vector<2x8xf32>
    %53 = arith.addf %51, %52 : vector<2x8xf32>
    %54 = math.tanh %53 : vector<2x8xf32>
    %c16_48 = arith.constant 16 : index
    %c0_49 = arith.constant 0 : index
    %55 = vector.load %arg11[%c16_48, %c0_49] : memref<60x8xf32, #tpu.memory_space<vmem>>, vector<2x8xf32>
    tpu.vector_store %arg11[%c16_48, %c0_49], %54 {strides = array<i32>} : memref<60x8xf32, #tpu.memory_space<vmem>>, vector<2x8xf32>,
    %c18 = arith.constant 18 : index
    %c0_50 = arith.constant 0 : index
    %56 = vector.load %arg12[%c18, %c0_50] : memref<60x8xf32, #tpu.memory_space<vmem>>, vector<2x8xf32>
    %cst_51 = arith.constant dense<0.000000e+00> : vector<2x8xf32>
    %57 = tpu.matmul %54, %8, %cst_51 {dimension_numbers = #tpu.dot_dimension_numbers<[1], [0], [0], [1], [0, 0, 1, 1], [], []>} : vector<2x8xf32>, vector<8x8xf32>, vector<2x8xf32> -> vector<2x8xf32>
    %58 = arith.addf %56, %57 : vector<2x8xf32>
    %59 = math.tanh %58 : vector<2x8xf32>
    %c18_52 = arith.constant 18 : index
    %c0_53 = arith.constant 0 : index
    %60 = vector.load %arg11[%c18_52, %c0_53] : memref<60x8xf32, #tpu.memory_space<vmem>>, vector<2x8xf32>
    tpu.vector_store %arg11[%c18_52, %c0_53], %59 {strides = array<i32>} : memref<60x8xf32, #tpu.memory_space<vmem>>, vector<2x8xf32>,
    %c20 = arith.constant 20 : index
    %c0_54 = arith.constant 0 : index
    %61 = vector.load %arg12[%c20, %c0_54] : memref<60x8xf32, #tpu.memory_space<vmem>>, vector<2x8xf32>
    %cst_55 = arith.constant dense<0.000000e+00> : vector<2x8xf32>
    %62 = tpu.matmul %59, %8, %cst_55 {dimension_numbers = #tpu.dot_dimension_numbers<[1], [0], [0], [1], [0, 0, 1, 1], [], []>} : vector<2x8xf32>, vector<8x8xf32>, vector<2x8xf32> -> vector<2x8xf32>
    %63 = arith.addf %61, %62 : vector<2x8xf32>
    %64 = math.tanh %63 : vector<2x8xf32>
    %c20_56 = arith.constant 20 : index
    %c0_57 = arith.constant 0 : index
    %65 = vector.load %arg11[%c20_56, %c0_57] : memref<60x8xf32, #tpu.memory_space<vmem>>, vector<2x8xf32>
    tpu.vector_store %arg11[%c20_56, %c0_57], %64 {strides = array<i32>} : memref<60x8xf32, #tpu.memory_space<vmem>>, vector<2x8xf32>,
    %c22 = arith.constant 22 : index
    %c0_58 = arith.constant 0 : index
    %66 = vector.load %arg12[%c22, %c0_58] : memref<60x8xf32, #tpu.memory_space<vmem>>, vector<2x8xf32>
    %cst_59 = arith.constant dense<0.000000e+00> : vector<2x8xf32>
    %67 = tpu.matmul %64, %8, %cst_59 {dimension_numbers = #tpu.dot_dimension_numbers<[1], [0], [0], [1], [0, 0, 1, 1], [], []>} : vector<2x8xf32>, vector<8x8xf32>, vector<2x8xf32> -> vector<2x8xf32>
    %68 = arith.addf %66, %67 : vector<2x8xf32>
    %69 = math.tanh %68 : vector<2x8xf32>
    %c22_60 = arith.constant 22 : index
    %c0_61 = arith.constant 0 : index
    %70 = vector.load %arg11[%c22_60, %c0_61] : memref<60x8xf32, #tpu.memory_space<vmem>>, vector<2x8xf32>
    tpu.vector_store %arg11[%c22_60, %c0_61], %69 {strides = array<i32>} : memref<60x8xf32, #tpu.memory_space<vmem>>, vector<2x8xf32>,
    %c24 = arith.constant 24 : index
    %c0_62 = arith.constant 0 : index
    %71 = vector.load %arg12[%c24, %c0_62] : memref<60x8xf32, #tpu.memory_space<vmem>>, vector<2x8xf32>
    %cst_63 = arith.constant dense<0.000000e+00> : vector<2x8xf32>
    %72 = tpu.matmul %69, %8, %cst_63 {dimension_numbers = #tpu.dot_dimension_numbers<[1], [0], [0], [1], [0, 0, 1, 1], [], []>} : vector<2x8xf32>, vector<8x8xf32>, vector<2x8xf32> -> vector<2x8xf32>
    %73 = arith.addf %71, %72 : vector<2x8xf32>
    %74 = math.tanh %73 : vector<2x8xf32>
    %c24_64 = arith.constant 24 : index
    %c0_65 = arith.constant 0 : index
    %75 = vector.load %arg11[%c24_64, %c0_65] : memref<60x8xf32, #tpu.memory_space<vmem>>, vector<2x8xf32>
    tpu.vector_store %arg11[%c24_64, %c0_65], %74 {strides = array<i32>} : memref<60x8xf32, #tpu.memory_space<vmem>>, vector<2x8xf32>,
    %c26 = arith.constant 26 : index
    %c0_66 = arith.constant 0 : index
    %76 = vector.load %arg12[%c26, %c0_66] : memref<60x8xf32, #tpu.memory_space<vmem>>, vector<2x8xf32>
    %cst_67 = arith.constant dense<0.000000e+00> : vector<2x8xf32>
    %77 = tpu.matmul %74, %8, %cst_67 {dimension_numbers = #tpu.dot_dimension_numbers<[1], [0], [0], [1], [0, 0, 1, 1], [], []>} : vector<2x8xf32>, vector<8x8xf32>, vector<2x8xf32> -> vector<2x8xf32>
    %78 = arith.addf %76, %77 : vector<2x8xf32>
    %79 = math.tanh %78 : vector<2x8xf32>
    %c26_68 = arith.constant 26 : index
    %c0_69 = arith.constant 0 : index
    %80 = vector.load %arg11[%c26_68, %c0_69] : memref<60x8xf32, #tpu.memory_space<vmem>>, vector<2x8xf32>
    tpu.vector_store %arg11[%c26_68, %c0_69], %79 {strides = array<i32>} : memref<60x8xf32, #tpu.memory_space<vmem>>, vector<2x8xf32>,
    %c28 = arith.constant 28 : index
    %c0_70 = arith.constant 0 : index
    %81 = vector.load %arg12[%c28, %c0_70] : memref<60x8xf32, #tpu.memory_space<vmem>>, vector<2x8xf32>
    %cst_71 = arith.constant dense<0.000000e+00> : vector<2x8xf32>
    %82 = tpu.matmul %79, %8, %cst_71 {dimension_numbers = #tpu.dot_dimension_numbers<[1], [0], [0], [1], [0, 0, 1, 1], [], []>} : vector<2x8xf32>, vector<8x8xf32>, vector<2x8xf32> -> vector<2x8xf32>
    %83 = arith.addf %81, %82 : vector<2x8xf32>
    %84 = math.tanh %83 : vector<2x8xf32>
    %c28_72 = arith.constant 28 : index
    %c0_73 = arith.constant 0 : index
    %85 = vector.load %arg11[%c28_72, %c0_73] : memref<60x8xf32, #tpu.memory_space<vmem>>, vector<2x8xf32>
    tpu.vector_store %arg11[%c28_72, %c0_73], %84 {strides = array<i32>} : memref<60x8xf32, #tpu.memory_space<vmem>>, vector<2x8xf32>,
    %c30 = arith.constant 30 : index
    %c0_74 = arith.constant 0 : index
    %86 = vector.load %arg12[%c30, %c0_74] : memref<60x8xf32, #tpu.memory_space<vmem>>, vector<2x8xf32>
    %cst_75 = arith.constant dense<0.000000e+00> : vector<2x8xf32>
    %87 = tpu.matmul %84, %8, %cst_75 {dimension_numbers = #tpu.dot_dimension_numbers<[1], [0], [0], [1], [0, 0, 1, 1], [], []>} : vector<2x8xf32>, vector<8x8xf32>, vector<2x8xf32> -> vector<2x8xf32>
    %88 = arith.addf %86, %87 : vector<2x8xf32>
    %89 = math.tanh %88 : vector<2x8xf32>
    %c30_76 = arith.constant 30 : index
    %c0_77 = arith.constant 0 : index
    %90 = vector.load %arg11[%c30_76, %c0_77] : memref<60x8xf32, #tpu.memory_space<vmem>>, vector<2x8xf32>
    tpu.vector_store %arg11[%c30_76, %c0_77], %89 {strides = array<i32>} : memref<60x8xf32, #tpu.memory_space<vmem>>, vector<2x8xf32>,
    %c32 = arith.constant 32 : index
    %c0_78 = arith.constant 0 : index
    %91 = vector.load %arg12[%c32, %c0_78] : memref<60x8xf32, #tpu.memory_space<vmem>>, vector<2x8xf32>
    %cst_79 = arith.constant dense<0.000000e+00> : vector<2x8xf32>
    %92 = tpu.matmul %89, %8, %cst_79 {dimension_numbers = #tpu.dot_dimension_numbers<[1], [0], [0], [1], [0, 0, 1, 1], [], []>} : vector<2x8xf32>, vector<8x8xf32>, vector<2x8xf32> -> vector<2x8xf32>
    %93 = arith.addf %91, %92 : vector<2x8xf32>
    %94 = math.tanh %93 : vector<2x8xf32>
    %c32_80 = arith.constant 32 : index
    %c0_81 = arith.constant 0 : index
    %95 = vector.load %arg11[%c32_80, %c0_81] : memref<60x8xf32, #tpu.memory_space<vmem>>, vector<2x8xf32>
    tpu.vector_store %arg11[%c32_80, %c0_81], %94 {strides = array<i32>} : memref<60x8xf32, #tpu.memory_space<vmem>>, vector<2x8xf32>,
    %c34 = arith.constant 34 : index
    %c0_82 = arith.constant 0 : index
    %96 = vector.load %arg12[%c34, %c0_82] : memref<60x8xf32, #tpu.memory_space<vmem>>, vector<2x8xf32>
    %cst_83 = arith.constant dense<0.000000e+00> : vector<2x8xf32>
    %97 = tpu.matmul %94, %8, %cst_83 {dimension_numbers = #tpu.dot_dimension_numbers<[1], [0], [0], [1], [0, 0, 1, 1], [], []>} : vector<2x8xf32>, vector<8x8xf32>, vector<2x8xf32> -> vector<2x8xf32>
    %98 = arith.addf %96, %97 : vector<2x8xf32>
    %99 = math.tanh %98 : vector<2x8xf32>
    %c34_84 = arith.constant 34 : index
    %c0_85 = arith.constant 0 : index
    %100 = vector.load %arg11[%c34_84, %c0_85] : memref<60x8xf32, #tpu.memory_space<vmem>>, vector<2x8xf32>
    tpu.vector_store %arg11[%c34_84, %c0_85], %99 {strides = array<i32>} : memref<60x8xf32, #tpu.memory_space<vmem>>, vector<2x8xf32>,
    %c36 = arith.constant 36 : index
    %c0_86 = arith.constant 0 : index
    %101 = vector.load %arg12[%c36, %c0_86] : memref<60x8xf32, #tpu.memory_space<vmem>>, vector<2x8xf32>
    %cst_87 = arith.constant dense<0.000000e+00> : vector<2x8xf32>
    %102 = tpu.matmul %99, %8, %cst_87 {dimension_numbers = #tpu.dot_dimension_numbers<[1], [0], [0], [1], [0, 0, 1, 1], [], []>} : vector<2x8xf32>, vector<8x8xf32>, vector<2x8xf32> -> vector<2x8xf32>
    %103 = arith.addf %101, %102 : vector<2x8xf32>
    %104 = math.tanh %103 : vector<2x8xf32>
    %c36_88 = arith.constant 36 : index
    %c0_89 = arith.constant 0 : index
    %105 = vector.load %arg11[%c36_88, %c0_89] : memref<60x8xf32, #tpu.memory_space<vmem>>, vector<2x8xf32>
    tpu.vector_store %arg11[%c36_88, %c0_89], %104 {strides = array<i32>} : memref<60x8xf32, #tpu.memory_space<vmem>>, vector<2x8xf32>,
    %c38 = arith.constant 38 : index
    %c0_90 = arith.constant 0 : index
    %106 = vector.load %arg12[%c38, %c0_90] : memref<60x8xf32, #tpu.memory_space<vmem>>, vector<2x8xf32>
    %cst_91 = arith.constant dense<0.000000e+00> : vector<2x8xf32>
    %107 = tpu.matmul %104, %8, %cst_91 {dimension_numbers = #tpu.dot_dimension_numbers<[1], [0], [0], [1], [0, 0, 1, 1], [], []>} : vector<2x8xf32>, vector<8x8xf32>, vector<2x8xf32> -> vector<2x8xf32>
    %108 = arith.addf %106, %107 : vector<2x8xf32>
    %109 = math.tanh %108 : vector<2x8xf32>
    %c38_92 = arith.constant 38 : index
    %c0_93 = arith.constant 0 : index
    %110 = vector.load %arg11[%c38_92, %c0_93] : memref<60x8xf32, #tpu.memory_space<vmem>>, vector<2x8xf32>
    tpu.vector_store %arg11[%c38_92, %c0_93], %109 {strides = array<i32>} : memref<60x8xf32, #tpu.memory_space<vmem>>, vector<2x8xf32>,
    %c40 = arith.constant 40 : index
    %c0_94 = arith.constant 0 : index
    %111 = vector.load %arg12[%c40, %c0_94] : memref<60x8xf32, #tpu.memory_space<vmem>>, vector<2x8xf32>
    %cst_95 = arith.constant dense<0.000000e+00> : vector<2x8xf32>
    %112 = tpu.matmul %109, %8, %cst_95 {dimension_numbers = #tpu.dot_dimension_numbers<[1], [0], [0], [1], [0, 0, 1, 1], [], []>} : vector<2x8xf32>, vector<8x8xf32>, vector<2x8xf32> -> vector<2x8xf32>
    %113 = arith.addf %111, %112 : vector<2x8xf32>
    %114 = math.tanh %113 : vector<2x8xf32>
    %c40_96 = arith.constant 40 : index
    %c0_97 = arith.constant 0 : index
    %115 = vector.load %arg11[%c40_96, %c0_97] : memref<60x8xf32, #tpu.memory_space<vmem>>, vector<2x8xf32>
    tpu.vector_store %arg11[%c40_96, %c0_97], %114 {strides = array<i32>} : memref<60x8xf32, #tpu.memory_space<vmem>>, vector<2x8xf32>,
    %c42 = arith.constant 42 : index
    %c0_98 = arith.constant 0 : index
    %116 = vector.load %arg12[%c42, %c0_98] : memref<60x8xf32, #tpu.memory_space<vmem>>, vector<2x8xf32>
    %cst_99 = arith.constant dense<0.000000e+00> : vector<2x8xf32>
    %117 = tpu.matmul %114, %8, %cst_99 {dimension_numbers = #tpu.dot_dimension_numbers<[1], [0], [0], [1], [0, 0, 1, 1], [], []>} : vector<2x8xf32>, vector<8x8xf32>, vector<2x8xf32> -> vector<2x8xf32>
    %118 = arith.addf %116, %117 : vector<2x8xf32>
    %119 = math.tanh %118 : vector<2x8xf32>
    %c42_100 = arith.constant 42 : index
    %c0_101 = arith.constant 0 : index
    %120 = vector.load %arg11[%c42_100, %c0_101] : memref<60x8xf32, #tpu.memory_space<vmem>>, vector<2x8xf32>
    tpu.vector_store %arg11[%c42_100, %c0_101], %119 {strides = array<i32>} : memref<60x8xf32, #tpu.memory_space<vmem>>, vector<2x8xf32>,
    %c44 = arith.constant 44 : index
    %c0_102 = arith.constant 0 : index
    %121 = vector.load %arg12[%c44, %c0_102] : memref<60x8xf32, #tpu.memory_space<vmem>>, vector<2x8xf32>
    %cst_103 = arith.constant dense<0.000000e+00> : vector<2x8xf32>
    %122 = tpu.matmul %119, %8, %cst_103 {dimension_numbers = #tpu.dot_dimension_numbers<[1], [0], [0], [1], [0, 0, 1, 1], [], []>} : vector<2x8xf32>, vector<8x8xf32>, vector<2x8xf32> -> vector<2x8xf32>
    %123 = arith.addf %121, %122 : vector<2x8xf32>
    %124 = math.tanh %123 : vector<2x8xf32>
    %c44_104 = arith.constant 44 : index
    %c0_105 = arith.constant 0 : index
    %125 = vector.load %arg11[%c44_104, %c0_105] : memref<60x8xf32, #tpu.memory_space<vmem>>, vector<2x8xf32>
    tpu.vector_store %arg11[%c44_104, %c0_105], %124 {strides = array<i32>} : memref<60x8xf32, #tpu.memory_space<vmem>>, vector<2x8xf32>,
    %c46 = arith.constant 46 : index
    %c0_106 = arith.constant 0 : index
    %126 = vector.load %arg12[%c46, %c0_106] : memref<60x8xf32, #tpu.memory_space<vmem>>, vector<2x8xf32>
    %cst_107 = arith.constant dense<0.000000e+00> : vector<2x8xf32>
    %127 = tpu.matmul %124, %8, %cst_107 {dimension_numbers = #tpu.dot_dimension_numbers<[1], [0], [0], [1], [0, 0, 1, 1], [], []>} : vector<2x8xf32>, vector<8x8xf32>, vector<2x8xf32> -> vector<2x8xf32>
    %128 = arith.addf %126, %127 : vector<2x8xf32>
    %129 = math.tanh %128 : vector<2x8xf32>
    %c46_108 = arith.constant 46 : index
    %c0_109 = arith.constant 0 : index
    %130 = vector.load %arg11[%c46_108, %c0_109] : memref<60x8xf32, #tpu.memory_space<vmem>>, vector<2x8xf32>
    tpu.vector_store %arg11[%c46_108, %c0_109], %129 {strides = array<i32>} : memref<60x8xf32, #tpu.memory_space<vmem>>, vector<2x8xf32>,
    %c48 = arith.constant 48 : index
    %c0_110 = arith.constant 0 : index
    %131 = vector.load %arg12[%c48, %c0_110] : memref<60x8xf32, #tpu.memory_space<vmem>>, vector<2x8xf32>
    %cst_111 = arith.constant dense<0.000000e+00> : vector<2x8xf32>
    %132 = tpu.matmul %129, %8, %cst_111 {dimension_numbers = #tpu.dot_dimension_numbers<[1], [0], [0], [1], [0, 0, 1, 1], [], []>} : vector<2x8xf32>, vector<8x8xf32>, vector<2x8xf32> -> vector<2x8xf32>
    %133 = arith.addf %131, %132 : vector<2x8xf32>
    %134 = math.tanh %133 : vector<2x8xf32>
    %c48_112 = arith.constant 48 : index
    %c0_113 = arith.constant 0 : index
    %135 = vector.load %arg11[%c48_112, %c0_113] : memref<60x8xf32, #tpu.memory_space<vmem>>, vector<2x8xf32>
    tpu.vector_store %arg11[%c48_112, %c0_113], %134 {strides = array<i32>} : memref<60x8xf32, #tpu.memory_space<vmem>>, vector<2x8xf32>,
    %c50 = arith.constant 50 : index
    %c0_114 = arith.constant 0 : index
    %136 = vector.load %arg12[%c50, %c0_114] : memref<60x8xf32, #tpu.memory_space<vmem>>, vector<2x8xf32>
    %cst_115 = arith.constant dense<0.000000e+00> : vector<2x8xf32>
    %137 = tpu.matmul %134, %8, %cst_115 {dimension_numbers = #tpu.dot_dimension_numbers<[1], [0], [0], [1], [0, 0, 1, 1], [], []>} : vector<2x8xf32>, vector<8x8xf32>, vector<2x8xf32> -> vector<2x8xf32>
    %138 = arith.addf %136, %137 : vector<2x8xf32>
    %139 = math.tanh %138 : vector<2x8xf32>
    %c50_116 = arith.constant 50 : index
    %c0_117 = arith.constant 0 : index
    %140 = vector.load %arg11[%c50_116, %c0_117] : memref<60x8xf32, #tpu.memory_space<vmem>>, vector<2x8xf32>
    tpu.vector_store %arg11[%c50_116, %c0_117], %139 {strides = array<i32>} : memref<60x8xf32, #tpu.memory_space<vmem>>, vector<2x8xf32>,
    %c52 = arith.constant 52 : index
    %c0_118 = arith.constant 0 : index
    %141 = vector.load %arg12[%c52, %c0_118] : memref<60x8xf32, #tpu.memory_space<vmem>>, vector<2x8xf32>
    %cst_119 = arith.constant dense<0.000000e+00> : vector<2x8xf32>
    %142 = tpu.matmul %139, %8, %cst_119 {dimension_numbers = #tpu.dot_dimension_numbers<[1], [0], [0], [1], [0, 0, 1, 1], [], []>} : vector<2x8xf32>, vector<8x8xf32>, vector<2x8xf32> -> vector<2x8xf32>
    %143 = arith.addf %141, %142 : vector<2x8xf32>
    %144 = math.tanh %143 : vector<2x8xf32>
    %c52_120 = arith.constant 52 : index
    %c0_121 = arith.constant 0 : index
    %145 = vector.load %arg11[%c52_120, %c0_121] : memref<60x8xf32, #tpu.memory_space<vmem>>, vector<2x8xf32>
    tpu.vector_store %arg11[%c52_120, %c0_121], %144 {strides = array<i32>} : memref<60x8xf32, #tpu.memory_space<vmem>>, vector<2x8xf32>,
    %c54 = arith.constant 54 : index
    %c0_122 = arith.constant 0 : index
    %146 = vector.load %arg12[%c54, %c0_122] : memref<60x8xf32, #tpu.memory_space<vmem>>, vector<2x8xf32>
    %cst_123 = arith.constant dense<0.000000e+00> : vector<2x8xf32>
    %147 = tpu.matmul %144, %8, %cst_123 {dimension_numbers = #tpu.dot_dimension_numbers<[1], [0], [0], [1], [0, 0, 1, 1], [], []>} : vector<2x8xf32>, vector<8x8xf32>, vector<2x8xf32> -> vector<2x8xf32>
    %148 = arith.addf %146, %147 : vector<2x8xf32>
    %149 = math.tanh %148 : vector<2x8xf32>
    %c54_124 = arith.constant 54 : index
    %c0_125 = arith.constant 0 : index
    %150 = vector.load %arg11[%c54_124, %c0_125] : memref<60x8xf32, #tpu.memory_space<vmem>>, vector<2x8xf32>
    tpu.vector_store %arg11[%c54_124, %c0_125], %149 {strides = array<i32>} : memref<60x8xf32, #tpu.memory_space<vmem>>, vector<2x8xf32>,
    %c56 = arith.constant 56 : index
    %c0_126 = arith.constant 0 : index
    %151 = vector.load %arg12[%c56, %c0_126] : memref<60x8xf32, #tpu.memory_space<vmem>>, vector<2x8xf32>
    %cst_127 = arith.constant dense<0.000000e+00> : vector<2x8xf32>
    %152 = tpu.matmul %149, %8, %cst_127 {dimension_numbers = #tpu.dot_dimension_numbers<[1], [0], [0], [1], [0, 0, 1, 1], [], []>} : vector<2x8xf32>, vector<8x8xf32>, vector<2x8xf32> -> vector<2x8xf32>
    %153 = arith.addf %151, %152 : vector<2x8xf32>
    %154 = math.tanh %153 : vector<2x8xf32>
    %c56_128 = arith.constant 56 : index
    %c0_129 = arith.constant 0 : index
    %155 = vector.load %arg11[%c56_128, %c0_129] : memref<60x8xf32, #tpu.memory_space<vmem>>, vector<2x8xf32>
    tpu.vector_store %arg11[%c56_128, %c0_129], %154 {strides = array<i32>} : memref<60x8xf32, #tpu.memory_space<vmem>>, vector<2x8xf32>,
    %c58 = arith.constant 58 : index
    %c0_130 = arith.constant 0 : index
    %156 = vector.load %arg12[%c58, %c0_130] : memref<60x8xf32, #tpu.memory_space<vmem>>, vector<2x8xf32>
    %cst_131 = arith.constant dense<0.000000e+00> : vector<2x8xf32>
    %157 = tpu.matmul %154, %8, %cst_131 {dimension_numbers = #tpu.dot_dimension_numbers<[1], [0], [0], [1], [0, 0, 1, 1], [], []>} : vector<2x8xf32>, vector<8x8xf32>, vector<2x8xf32> -> vector<2x8xf32>
    %158 = arith.addf %156, %157 : vector<2x8xf32>
    %159 = math.tanh %158 : vector<2x8xf32>
    %c58_132 = arith.constant 58 : index
    %c0_133 = arith.constant 0 : index
    %160 = vector.load %arg11[%c58_132, %c0_133] : memref<60x8xf32, #tpu.memory_space<vmem>>, vector<2x8xf32>
    tpu.vector_store %arg11[%c58_132, %c0_133], %159 {strides = array<i32>} : memref<60x8xf32, #tpu.memory_space<vmem>>, vector<2x8xf32>,
    %c1 = arith.constant 1 : index
    %c0_134 = arith.constant 0 : index
    %161 = vector.load %arg5[%c1, %c0_134] : memref<5x8xf32, #tpu.memory_space<vmem>>, vector<1x8xf32>
    %c0_135 = arith.constant 0 : index
    %c0_136 = arith.constant 0 : index
    %162 = vector.load %arg11[%c0_135, %c0_136] : memref<60x8xf32, #tpu.memory_space<vmem>>, vector<60x8xf32>
    %c0_137 = arith.constant 0 : index
    %c0_138 = arith.constant 0 : index
    %c0_139 = arith.constant 0 : index
    %163 = vector.load %arg3[%c0_137, %c0_138, %c0_139] : memref<4x8x8xf32, #tpu.memory_space<vmem>>, vector<1x8x8xf32>
    %164 = vector.shape_cast %163 : vector<1x8x8xf32> to vector<8x8xf32>
    %cst_140 = arith.constant dense<0.000000e+00> : vector<60x8xf32>
    %165 = tpu.matmul %162, %164, %cst_140 {dimension_numbers = #tpu.dot_dimension_numbers<[1], [0], [0], [1], [0, 0, 1, 1], [], []>} : vector<60x8xf32>, vector<8x8xf32>, vector<60x8xf32> -> vector<60x8xf32>
    %166 = vector.broadcast %161 : vector<1x8xf32> to vector<60x8xf32>
    %167 = arith.addf %165, %166 : vector<60x8xf32>
    %c0_141 = arith.constant 0 : index
    %c0_142 = arith.constant 0 : index
    %168 = vector.load %arg12[%c0_141, %c0_142] : memref<60x8xf32, #tpu.memory_space<vmem>>, vector<60x8xf32>
    tpu.vector_store %arg12[%c0_141, %c0_142], %167 {strides = array<i32>} : memref<60x8xf32, #tpu.memory_space<vmem>>, vector<60x8xf32>,
    %c1_143 = arith.constant 1 : index
    %c0_144 = arith.constant 0 : index
    %c0_145 = arith.constant 0 : index
    %169 = vector.load %arg4[%c1_143, %c0_144, %c0_145] : memref<5x8x8xf32, #tpu.memory_space<vmem>>, vector<1x8x8xf32>
    %170 = vector.shape_cast %169 : vector<1x8x8xf32> to vector<8x8xf32>
    %c1_146 = arith.constant 1 : index
    %c0_147 = arith.constant 0 : index
    %c0_148 = arith.constant 0 : index
    %171 = vector.load %arg1[%c1_146, %c0_147, %c0_148] : memref<5x2x8xf32, #tpu.memory_space<vmem>>, vector<1x2x8xf32>
    %172 = vector.shape_cast %171 : vector<1x2x8xf32> to vector<2x8xf32>
    %c0_149 = arith.constant 0 : index
    %c0_150 = arith.constant 0 : index
    %173 = vector.load %arg12[%c0_149, %c0_150] : memref<60x8xf32, #tpu.memory_space<vmem>>, vector<2x8xf32>
    %cst_151 = arith.constant dense<0.000000e+00> : vector<2x8xf32>
    %174 = tpu.matmul %172, %170, %cst_151 {dimension_numbers = #tpu.dot_dimension_numbers<[1], [0], [0], [1], [0, 0, 1, 1], [], []>} : vector<2x8xf32>, vector<8x8xf32>, vector<2x8xf32> -> vector<2x8xf32>
    %175 = arith.addf %173, %174 : vector<2x8xf32>
    %176 = math.tanh %175 : vector<2x8xf32>
    %c0_152 = arith.constant 0 : index
    %c0_153 = arith.constant 0 : index
    %177 = vector.load %arg11[%c0_152, %c0_153] : memref<60x8xf32, #tpu.memory_space<vmem>>, vector<2x8xf32>
    tpu.vector_store %arg11[%c0_152, %c0_153], %176 {strides = array<i32>} : memref<60x8xf32, #tpu.memory_space<vmem>>, vector<2x8xf32>,
    %c2_154 = arith.constant 2 : index
    %c0_155 = arith.constant 0 : index
    %178 = vector.load %arg12[%c2_154, %c0_155] : memref<60x8xf32, #tpu.memory_space<vmem>>, vector<2x8xf32>
    %cst_156 = arith.constant dense<0.000000e+00> : vector<2x8xf32>
    %179 = tpu.matmul %176, %170, %cst_156 {dimension_numbers = #tpu.dot_dimension_numbers<[1], [0], [0], [1], [0, 0, 1, 1], [], []>} : vector<2x8xf32>, vector<8x8xf32>, vector<2x8xf32> -> vector<2x8xf32>
    %180 = arith.addf %178, %179 : vector<2x8xf32>
    %181 = math.tanh %180 : vector<2x8xf32>
    %c2_157 = arith.constant 2 : index
    %c0_158 = arith.constant 0 : index
    %182 = vector.load %arg11[%c2_157, %c0_158] : memref<60x8xf32, #tpu.memory_space<vmem>>, vector<2x8xf32>
    tpu.vector_store %arg11[%c2_157, %c0_158], %181 {strides = array<i32>} : memref<60x8xf32, #tpu.memory_space<vmem>>, vector<2x8xf32>,
    %c4_159 = arith.constant 4 : index
    %c0_160 = arith.constant 0 : index
    %183 = vector.load %arg12[%c4_159, %c0_160] : memref<60x8xf32, #tpu.memory_space<vmem>>, vector<2x8xf32>
    %cst_161 = arith.constant dense<0.000000e+00> : vector<2x8xf32>
    %184 = tpu.matmul %181, %170, %cst_161 {dimension_numbers = #tpu.dot_dimension_numbers<[1], [0], [0], [1], [0, 0, 1, 1], [], []>} : vector<2x8xf32>, vector<8x8xf32>, vector<2x8xf32> -> vector<2x8xf32>
    %185 = arith.addf %183, %184 : vector<2x8xf32>
    %186 = math.tanh %185 : vector<2x8xf32>
    %c4_162 = arith.constant 4 : index
    %c0_163 = arith.constant 0 : index
    %187 = vector.load %arg11[%c4_162, %c0_163] : memref<60x8xf32, #tpu.memory_space<vmem>>, vector<2x8xf32>
    tpu.vector_store %arg11[%c4_162, %c0_163], %186 {strides = array<i32>} : memref<60x8xf32, #tpu.memory_space<vmem>>, vector<2x8xf32>,
    %c6_164 = arith.constant 6 : index
    %c0_165 = arith.constant 0 : index
    %188 = vector.load %arg12[%c6_164, %c0_165] : memref<60x8xf32, #tpu.memory_space<vmem>>, vector<2x8xf32>
    %cst_166 = arith.constant dense<0.000000e+00> : vector<2x8xf32>
    %189 = tpu.matmul %186, %170, %cst_166 {dimension_numbers = #tpu.dot_dimension_numbers<[1], [0], [0], [1], [0, 0, 1, 1], [], []>} : vector<2x8xf32>, vector<8x8xf32>, vector<2x8xf32> -> vector<2x8xf32>
    %190 = arith.addf %188, %189 : vector<2x8xf32>
    %191 = math.tanh %190 : vector<2x8xf32>
    %c6_167 = arith.constant 6 : index
    %c0_168 = arith.constant 0 : index
    %192 = vector.load %arg11[%c6_167, %c0_168] : memref<60x8xf32, #tpu.memory_space<vmem>>, vector<2x8xf32>
    tpu.vector_store %arg11[%c6_167, %c0_168], %191 {strides = array<i32>} : memref<60x8xf32, #tpu.memory_space<vmem>>, vector<2x8xf32>,
    %c8_169 = arith.constant 8 : index
    %c0_170 = arith.constant 0 : index
    %193 = vector.load %arg12[%c8_169, %c0_170] : memref<60x8xf32, #tpu.memory_space<vmem>>, vector<2x8xf32>
    %cst_171 = arith.constant dense<0.000000e+00> : vector<2x8xf32>
    %194 = tpu.matmul %191, %170, %cst_171 {dimension_numbers = #tpu.dot_dimension_numbers<[1], [0], [0], [1], [0, 0, 1, 1], [], []>} : vector<2x8xf32>, vector<8x8xf32>, vector<2x8xf32> -> vector<2x8xf32>
    %195 = arith.addf %193, %194 : vector<2x8xf32>
    %196 = math.tanh %195 : vector<2x8xf32>
    %c8_172 = arith.constant 8 : index
    %c0_173 = arith.constant 0 : index
    %197 = vector.load %arg11[%c8_172, %c0_173] : memref<60x8xf32, #tpu.memory_space<vmem>>, vector<2x8xf32>
    tpu.vector_store %arg11[%c8_172, %c0_173], %196 {strides = array<i32>} : memref<60x8xf32, #tpu.memory_space<vmem>>, vector<2x8xf32>,
    %c10_174 = arith.constant 10 : index
    %c0_175 = arith.constant 0 : index
    %198 = vector.load %arg12[%c10_174, %c0_175] : memref<60x8xf32, #tpu.memory_space<vmem>>, vector<2x8xf32>
    %cst_176 = arith.constant dense<0.000000e+00> : vector<2x8xf32>
    %199 = tpu.matmul %196, %170, %cst_176 {dimension_numbers = #tpu.dot_dimension_numbers<[1], [0], [0], [1], [0, 0, 1, 1], [], []>} : vector<2x8xf32>, vector<8x8xf32>, vector<2x8xf32> -> vector<2x8xf32>
    %200 = arith.addf %198, %199 : vector<2x8xf32>
    %201 = math.tanh %200 : vector<2x8xf32>
    %c10_177 = arith.constant 10 : index
    %c0_178 = arith.constant 0 : index
    %202 = vector.load %arg11[%c10_177, %c0_178] : memref<60x8xf32, #tpu.memory_space<vmem>>, vector<2x8xf32>
    tpu.vector_store %arg11[%c10_177, %c0_178], %201 {strides = array<i32>} : memref<60x8xf32, #tpu.memory_space<vmem>>, vector<2x8xf32>,
    %c12_179 = arith.constant 12 : index
    %c0_180 = arith.constant 0 : index
    %203 = vector.load %arg12[%c12_179, %c0_180] : memref<60x8xf32, #tpu.memory_space<vmem>>, vector<2x8xf32>
    %cst_181 = arith.constant dense<0.000000e+00> : vector<2x8xf32>
    %204 = tpu.matmul %201, %170, %cst_181 {dimension_numbers = #tpu.dot_dimension_numbers<[1], [0], [0], [1], [0, 0, 1, 1], [], []>} : vector<2x8xf32>, vector<8x8xf32>, vector<2x8xf32> -> vector<2x8xf32>
    %205 = arith.addf %203, %204 : vector<2x8xf32>
    %206 = math.tanh %205 : vector<2x8xf32>
    %c12_182 = arith.constant 12 : index
    %c0_183 = arith.constant 0 : index
    %207 = vector.load %arg11[%c12_182, %c0_183] : memref<60x8xf32, #tpu.memory_space<vmem>>, vector<2x8xf32>
    tpu.vector_store %arg11[%c12_182, %c0_183], %206 {strides = array<i32>} : memref<60x8xf32, #tpu.memory_space<vmem>>, vector<2x8xf32>,
    %c14_184 = arith.constant 14 : index
    %c0_185 = arith.constant 0 : index
    %208 = vector.load %arg12[%c14_184, %c0_185] : memref<60x8xf32, #tpu.memory_space<vmem>>, vector<2x8xf32>
    %cst_186 = arith.constant dense<0.000000e+00> : vector<2x8xf32>
    %209 = tpu.matmul %206, %170, %cst_186 {dimension_numbers = #tpu.dot_dimension_numbers<[1], [0], [0], [1], [0, 0, 1, 1], [], []>} : vector<2x8xf32>, vector<8x8xf32>, vector<2x8xf32> -> vector<2x8xf32>
    %210 = arith.addf %208, %209 : vector<2x8xf32>
    %211 = math.tanh %210 : vector<2x8xf32>
    %c14_187 = arith.constant 14 : index
    %c0_188 = arith.constant 0 : index
    %212 = vector.load %arg11[%c14_187, %c0_188] : memref<60x8xf32, #tpu.memory_space<vmem>>, vector<2x8xf32>
    tpu.vector_store %arg11[%c14_187, %c0_188], %211 {strides = array<i32>} : memref<60x8xf32, #tpu.memory_space<vmem>>, vector<2x8xf32>,
    %c16_189 = arith.constant 16 : index
    %c0_190 = arith.constant 0 : index
    %213 = vector.load %arg12[%c16_189, %c0_190] : memref<60x8xf32, #tpu.memory_space<vmem>>, vector<2x8xf32>
    %cst_191 = arith.constant dense<0.000000e+00> : vector<2x8xf32>
    %214 = tpu.matmul %211, %170, %cst_191 {dimension_numbers = #tpu.dot_dimension_numbers<[1], [0], [0], [1], [0, 0, 1, 1], [], []>} : vector<2x8xf32>, vector<8x8xf32>, vector<2x8xf32> -> vector<2x8xf32>
    %215 = arith.addf %213, %214 : vector<2x8xf32>
    %216 = math.tanh %215 : vector<2x8xf32>
    %c16_192 = arith.constant 16 : index
    %c0_193 = arith.constant 0 : index
    %217 = vector.load %arg11[%c16_192, %c0_193] : memref<60x8xf32, #tpu.memory_space<vmem>>, vector<2x8xf32>
    tpu.vector_store %arg11[%c16_192, %c0_193], %216 {strides = array<i32>} : memref<60x8xf32, #tpu.memory_space<vmem>>, vector<2x8xf32>,
    %c18_194 = arith.constant 18 : index
    %c0_195 = arith.constant 0 : index
    %218 = vector.load %arg12[%c18_194, %c0_195] : memref<60x8xf32, #tpu.memory_space<vmem>>, vector<2x8xf32>
    %cst_196 = arith.constant dense<0.000000e+00> : vector<2x8xf32>
    %219 = tpu.matmul %216, %170, %cst_196 {dimension_numbers = #tpu.dot_dimension_numbers<[1], [0], [0], [1], [0, 0, 1, 1], [], []>} : vector<2x8xf32>, vector<8x8xf32>, vector<2x8xf32> -> vector<2x8xf32>
    %220 = arith.addf %218, %219 : vector<2x8xf32>
    %221 = math.tanh %220 : vector<2x8xf32>
    %c18_197 = arith.constant 18 : index
    %c0_198 = arith.constant 0 : index
    %222 = vector.load %arg11[%c18_197, %c0_198] : memref<60x8xf32, #tpu.memory_space<vmem>>, vector<2x8xf32>
    tpu.vector_store %arg11[%c18_197, %c0_198], %221 {strides = array<i32>} : memref<60x8xf32, #tpu.memory_space<vmem>>, vector<2x8xf32>,
    %c20_199 = arith.constant 20 : index
    %c0_200 = arith.constant 0 : index
    %223 = vector.load %arg12[%c20_199, %c0_200] : memref<60x8xf32, #tpu.memory_space<vmem>>, vector<2x8xf32>
    %cst_201 = arith.constant dense<0.000000e+00> : vector<2x8xf32>
    %224 = tpu.matmul %221, %170, %cst_201 {dimension_numbers = #tpu.dot_dimension_numbers<[1], [0], [0], [1], [0, 0, 1, 1], [], []>} : vector<2x8xf32>, vector<8x8xf32>, vector<2x8xf32> -> vector<2x8xf32>
    %225 = arith.addf %223, %224 : vector<2x8xf32>
    %226 = math.tanh %225 : vector<2x8xf32>
    %c20_202 = arith.constant 20 : index
    %c0_203 = arith.constant 0 : index
    %227 = vector.load %arg11[%c20_202, %c0_203] : memref<60x8xf32, #tpu.memory_space<vmem>>, vector<2x8xf32>
    tpu.vector_store %arg11[%c20_202, %c0_203], %226 {strides = array<i32>} : memref<60x8xf32, #tpu.memory_space<vmem>>, vector<2x8xf32>,
    %c22_204 = arith.constant 22 : index
    %c0_205 = arith.constant 0 : index
    %228 = vector.load %arg12[%c22_204, %c0_205] : memref<60x8xf32, #tpu.memory_space<vmem>>, vector<2x8xf32>
    %cst_206 = arith.constant dense<0.000000e+00> : vector<2x8xf32>
    %229 = tpu.matmul %226, %170, %cst_206 {dimension_numbers = #tpu.dot_dimension_numbers<[1], [0], [0], [1], [0, 0, 1, 1], [], []>} : vector<2x8xf32>, vector<8x8xf32>, vector<2x8xf32> -> vector<2x8xf32>
    %230 = arith.addf %228, %229 : vector<2x8xf32>
    %231 = math.tanh %230 : vector<2x8xf32>
    %c22_207 = arith.constant 22 : index
    %c0_208 = arith.constant 0 : index
    %232 = vector.load %arg11[%c22_207, %c0_208] : memref<60x8xf32, #tpu.memory_space<vmem>>, vector<2x8xf32>
    tpu.vector_store %arg11[%c22_207, %c0_208], %231 {strides = array<i32>} : memref<60x8xf32, #tpu.memory_space<vmem>>, vector<2x8xf32>,
    %c24_209 = arith.constant 24 : index
    %c0_210 = arith.constant 0 : index
    %233 = vector.load %arg12[%c24_209, %c0_210] : memref<60x8xf32, #tpu.memory_space<vmem>>, vector<2x8xf32>
    %cst_211 = arith.constant dense<0.000000e+00> : vector<2x8xf32>
    %234 = tpu.matmul %231, %170, %cst_211 {dimension_numbers = #tpu.dot_dimension_numbers<[1], [0], [0], [1], [0, 0, 1, 1], [], []>} : vector<2x8xf32>, vector<8x8xf32>, vector<2x8xf32> -> vector<2x8xf32>
    %235 = arith.addf %233, %234 : vector<2x8xf32>
    %236 = math.tanh %235 : vector<2x8xf32>
    %c24_212 = arith.constant 24 : index
    %c0_213 = arith.constant 0 : index
    %237 = vector.load %arg11[%c24_212, %c0_213] : memref<60x8xf32, #tpu.memory_space<vmem>>, vector<2x8xf32>
    tpu.vector_store %arg11[%c24_212, %c0_213], %236 {strides = array<i32>} : memref<60x8xf32, #tpu.memory_space<vmem>>, vector<2x8xf32>,
    %c26_214 = arith.constant 26 : index
    %c0_215 = arith.constant 0 : index
    %238 = vector.load %arg12[%c26_214, %c0_215] : memref<60x8xf32, #tpu.memory_space<vmem>>, vector<2x8xf32>
    %cst_216 = arith.constant dense<0.000000e+00> : vector<2x8xf32>
    %239 = tpu.matmul %236, %170, %cst_216 {dimension_numbers = #tpu.dot_dimension_numbers<[1], [0], [0], [1], [0, 0, 1, 1], [], []>} : vector<2x8xf32>, vector<8x8xf32>, vector<2x8xf32> -> vector<2x8xf32>
    %240 = arith.addf %238, %239 : vector<2x8xf32>
    %241 = math.tanh %240 : vector<2x8xf32>
    %c26_217 = arith.constant 26 : index
    %c0_218 = arith.constant 0 : index
    %242 = vector.load %arg11[%c26_217, %c0_218] : memref<60x8xf32, #tpu.memory_space<vmem>>, vector<2x8xf32>
    tpu.vector_store %arg11[%c26_217, %c0_218], %241 {strides = array<i32>} : memref<60x8xf32, #tpu.memory_space<vmem>>, vector<2x8xf32>,
    %c28_219 = arith.constant 28 : index
    %c0_220 = arith.constant 0 : index
    %243 = vector.load %arg12[%c28_219, %c0_220] : memref<60x8xf32, #tpu.memory_space<vmem>>, vector<2x8xf32>
    %cst_221 = arith.constant dense<0.000000e+00> : vector<2x8xf32>
    %244 = tpu.matmul %241, %170, %cst_221 {dimension_numbers = #tpu.dot_dimension_numbers<[1], [0], [0], [1], [0, 0, 1, 1], [], []>} : vector<2x8xf32>, vector<8x8xf32>, vector<2x8xf32> -> vector<2x8xf32>
    %245 = arith.addf %243, %244 : vector<2x8xf32>
    %246 = math.tanh %245 : vector<2x8xf32>
    %c28_222 = arith.constant 28 : index
    %c0_223 = arith.constant 0 : index
    %247 = vector.load %arg11[%c28_222, %c0_223] : memref<60x8xf32, #tpu.memory_space<vmem>>, vector<2x8xf32>
    tpu.vector_store %arg11[%c28_222, %c0_223], %246 {strides = array<i32>} : memref<60x8xf32, #tpu.memory_space<vmem>>, vector<2x8xf32>,
    %c30_224 = arith.constant 30 : index
    %c0_225 = arith.constant 0 : index
    %248 = vector.load %arg12[%c30_224, %c0_225] : memref<60x8xf32, #tpu.memory_space<vmem>>, vector<2x8xf32>
    %cst_226 = arith.constant dense<0.000000e+00> : vector<2x8xf32>
    %249 = tpu.matmul %246, %170, %cst_226 {dimension_numbers = #tpu.dot_dimension_numbers<[1], [0], [0], [1], [0, 0, 1, 1], [], []>} : vector<2x8xf32>, vector<8x8xf32>, vector<2x8xf32> -> vector<2x8xf32>
    %250 = arith.addf %248, %249 : vector<2x8xf32>
    %251 = math.tanh %250 : vector<2x8xf32>
    %c30_227 = arith.constant 30 : index
    %c0_228 = arith.constant 0 : index
    %252 = vector.load %arg11[%c30_227, %c0_228] : memref<60x8xf32, #tpu.memory_space<vmem>>, vector<2x8xf32>
    tpu.vector_store %arg11[%c30_227, %c0_228], %251 {strides = array<i32>} : memref<60x8xf32, #tpu.memory_space<vmem>>, vector<2x8xf32>,
    %c32_229 = arith.constant 32 : index
    %c0_230 = arith.constant 0 : index
    %253 = vector.load %arg12[%c32_229, %c0_230] : memref<60x8xf32, #tpu.memory_space<vmem>>, vector<2x8xf32>
    %cst_231 = arith.constant dense<0.000000e+00> : vector<2x8xf32>
    %254 = tpu.matmul %251, %170, %cst_231 {dimension_numbers = #tpu.dot_dimension_numbers<[1], [0], [0], [1], [0, 0, 1, 1], [], []>} : vector<2x8xf32>, vector<8x8xf32>, vector<2x8xf32> -> vector<2x8xf32>
    %255 = arith.addf %253, %254 : vector<2x8xf32>
    %256 = math.tanh %255 : vector<2x8xf32>
    %c32_232 = arith.constant 32 : index
    %c0_233 = arith.constant 0 : index
    %257 = vector.load %arg11[%c32_232, %c0_233] : memref<60x8xf32, #tpu.memory_space<vmem>>, vector<2x8xf32>
    tpu.vector_store %arg11[%c32_232, %c0_233], %256 {strides = array<i32>} : memref<60x8xf32, #tpu.memory_space<vmem>>, vector<2x8xf32>,
    %c34_234 = arith.constant 34 : index
    %c0_235 = arith.constant 0 : index
    %258 = vector.load %arg12[%c34_234, %c0_235] : memref<60x8xf32, #tpu.memory_space<vmem>>, vector<2x8xf32>
    %cst_236 = arith.constant dense<0.000000e+00> : vector<2x8xf32>
    %259 = tpu.matmul %256, %170, %cst_236 {dimension_numbers = #tpu.dot_dimension_numbers<[1], [0], [0], [1], [0, 0, 1, 1], [], []>} : vector<2x8xf32>, vector<8x8xf32>, vector<2x8xf32> -> vector<2x8xf32>
    %260 = arith.addf %258, %259 : vector<2x8xf32>
    %261 = math.tanh %260 : vector<2x8xf32>
    %c34_237 = arith.constant 34 : index
    %c0_238 = arith.constant 0 : index
    %262 = vector.load %arg11[%c34_237, %c0_238] : memref<60x8xf32, #tpu.memory_space<vmem>>, vector<2x8xf32>
    tpu.vector_store %arg11[%c34_237, %c0_238], %261 {strides = array<i32>} : memref<60x8xf32, #tpu.memory_space<vmem>>, vector<2x8xf32>,
    %c36_239 = arith.constant 36 : index
    %c0_240 = arith.constant 0 : index
    %263 = vector.load %arg12[%c36_239, %c0_240] : memref<60x8xf32, #tpu.memory_space<vmem>>, vector<2x8xf32>
    %cst_241 = arith.constant dense<0.000000e+00> : vector<2x8xf32>
    %264 = tpu.matmul %261, %170, %cst_241 {dimension_numbers = #tpu.dot_dimension_numbers<[1], [0], [0], [1], [0, 0, 1, 1], [], []>} : vector<2x8xf32>, vector<8x8xf32>, vector<2x8xf32> -> vector<2x8xf32>
    %265 = arith.addf %263, %264 : vector<2x8xf32>
    %266 = math.tanh %265 : vector<2x8xf32>
    %c36_242 = arith.constant 36 : index
    %c0_243 = arith.constant 0 : index
    %267 = vector.load %arg11[%c36_242, %c0_243] : memref<60x8xf32, #tpu.memory_space<vmem>>, vector<2x8xf32>
    tpu.vector_store %arg11[%c36_242, %c0_243], %266 {strides = array<i32>} : memref<60x8xf32, #tpu.memory_space<vmem>>, vector<2x8xf32>,
    %c38_244 = arith.constant 38 : index
    %c0_245 = arith.constant 0 : index
    %268 = vector.load %arg12[%c38_244, %c0_245] : memref<60x8xf32, #tpu.memory_space<vmem>>, vector<2x8xf32>
    %cst_246 = arith.constant dense<0.000000e+00> : vector<2x8xf32>
    %269 = tpu.matmul %266, %170, %cst_246 {dimension_numbers = #tpu.dot_dimension_numbers<[1], [0], [0], [1], [0, 0, 1, 1], [], []>} : vector<2x8xf32>, vector<8x8xf32>, vector<2x8xf32> -> vector<2x8xf32>
    %270 = arith.addf %268, %269 : vector<2x8xf32>
    %271 = math.tanh %270 : vector<2x8xf32>
    %c38_247 = arith.constant 38 : index
    %c0_248 = arith.constant 0 : index
    %272 = vector.load %arg11[%c38_247, %c0_248] : memref<60x8xf32, #tpu.memory_space<vmem>>, vector<2x8xf32>
    tpu.vector_store %arg11[%c38_247, %c0_248], %271 {strides = array<i32>} : memref<60x8xf32, #tpu.memory_space<vmem>>, vector<2x8xf32>,
    %c40_249 = arith.constant 40 : index
    %c0_250 = arith.constant 0 : index
    %273 = vector.load %arg12[%c40_249, %c0_250] : memref<60x8xf32, #tpu.memory_space<vmem>>, vector<2x8xf32>
    %cst_251 = arith.constant dense<0.000000e+00> : vector<2x8xf32>
    %274 = tpu.matmul %271, %170, %cst_251 {dimension_numbers = #tpu.dot_dimension_numbers<[1], [0], [0], [1], [0, 0, 1, 1], [], []>} : vector<2x8xf32>, vector<8x8xf32>, vector<2x8xf32> -> vector<2x8xf32>
    %275 = arith.addf %273, %274 : vector<2x8xf32>
    %276 = math.tanh %275 : vector<2x8xf32>
    %c40_252 = arith.constant 40 : index
    %c0_253 = arith.constant 0 : index
    %277 = vector.load %arg11[%c40_252, %c0_253] : memref<60x8xf32, #tpu.memory_space<vmem>>, vector<2x8xf32>
    tpu.vector_store %arg11[%c40_252, %c0_253], %276 {strides = array<i32>} : memref<60x8xf32, #tpu.memory_space<vmem>>, vector<2x8xf32>,
    %c42_254 = arith.constant 42 : index
    %c0_255 = arith.constant 0 : index
    %278 = vector.load %arg12[%c42_254, %c0_255] : memref<60x8xf32, #tpu.memory_space<vmem>>, vector<2x8xf32>
    %cst_256 = arith.constant dense<0.000000e+00> : vector<2x8xf32>
    %279 = tpu.matmul %276, %170, %cst_256 {dimension_numbers = #tpu.dot_dimension_numbers<[1], [0], [0], [1], [0, 0, 1, 1], [], []>} : vector<2x8xf32>, vector<8x8xf32>, vector<2x8xf32> -> vector<2x8xf32>
    %280 = arith.addf %278, %279 : vector<2x8xf32>
    %281 = math.tanh %280 : vector<2x8xf32>
    %c42_257 = arith.constant 42 : index
    %c0_258 = arith.constant 0 : index
    %282 = vector.load %arg11[%c42_257, %c0_258] : memref<60x8xf32, #tpu.memory_space<vmem>>, vector<2x8xf32>
    tpu.vector_store %arg11[%c42_257, %c0_258], %281 {strides = array<i32>} : memref<60x8xf32, #tpu.memory_space<vmem>>, vector<2x8xf32>,
    %c44_259 = arith.constant 44 : index
    %c0_260 = arith.constant 0 : index
    %283 = vector.load %arg12[%c44_259, %c0_260] : memref<60x8xf32, #tpu.memory_space<vmem>>, vector<2x8xf32>
    %cst_261 = arith.constant dense<0.000000e+00> : vector<2x8xf32>
    %284 = tpu.matmul %281, %170, %cst_261 {dimension_numbers = #tpu.dot_dimension_numbers<[1], [0], [0], [1], [0, 0, 1, 1], [], []>} : vector<2x8xf32>, vector<8x8xf32>, vector<2x8xf32> -> vector<2x8xf32>
    %285 = arith.addf %283, %284 : vector<2x8xf32>
    %286 = math.tanh %285 : vector<2x8xf32>
    %c44_262 = arith.constant 44 : index
    %c0_263 = arith.constant 0 : index
    %287 = vector.load %arg11[%c44_262, %c0_263] : memref<60x8xf32, #tpu.memory_space<vmem>>, vector<2x8xf32>
    tpu.vector_store %arg11[%c44_262, %c0_263], %286 {strides = array<i32>} : memref<60x8xf32, #tpu.memory_space<vmem>>, vector<2x8xf32>,
    %c46_264 = arith.constant 46 : index
    %c0_265 = arith.constant 0 : index
    %288 = vector.load %arg12[%c46_264, %c0_265] : memref<60x8xf32, #tpu.memory_space<vmem>>, vector<2x8xf32>
    %cst_266 = arith.constant dense<0.000000e+00> : vector<2x8xf32>
    %289 = tpu.matmul %286, %170, %cst_266 {dimension_numbers = #tpu.dot_dimension_numbers<[1], [0], [0], [1], [0, 0, 1, 1], [], []>} : vector<2x8xf32>, vector<8x8xf32>, vector<2x8xf32> -> vector<2x8xf32>
    %290 = arith.addf %288, %289 : vector<2x8xf32>
    %291 = math.tanh %290 : vector<2x8xf32>
    %c46_267 = arith.constant 46 : index
    %c0_268 = arith.constant 0 : index
    %292 = vector.load %arg11[%c46_267, %c0_268] : memref<60x8xf32, #tpu.memory_space<vmem>>, vector<2x8xf32>
    tpu.vector_store %arg11[%c46_267, %c0_268], %291 {strides = array<i32>} : memref<60x8xf32, #tpu.memory_space<vmem>>, vector<2x8xf32>,
    %c48_269 = arith.constant 48 : index
    %c0_270 = arith.constant 0 : index
    %293 = vector.load %arg12[%c48_269, %c0_270] : memref<60x8xf32, #tpu.memory_space<vmem>>, vector<2x8xf32>
    %cst_271 = arith.constant dense<0.000000e+00> : vector<2x8xf32>
    %294 = tpu.matmul %291, %170, %cst_271 {dimension_numbers = #tpu.dot_dimension_numbers<[1], [0], [0], [1], [0, 0, 1, 1], [], []>} : vector<2x8xf32>, vector<8x8xf32>, vector<2x8xf32> -> vector<2x8xf32>
    %295 = arith.addf %293, %294 : vector<2x8xf32>
    %296 = math.tanh %295 : vector<2x8xf32>
    %c48_272 = arith.constant 48 : index
    %c0_273 = arith.constant 0 : index
    %297 = vector.load %arg11[%c48_272, %c0_273] : memref<60x8xf32, #tpu.memory_space<vmem>>, vector<2x8xf32>
    tpu.vector_store %arg11[%c48_272, %c0_273], %296 {strides = array<i32>} : memref<60x8xf32, #tpu.memory_space<vmem>>, vector<2x8xf32>,
    %c50_274 = arith.constant 50 : index
    %c0_275 = arith.constant 0 : index
    %298 = vector.load %arg12[%c50_274, %c0_275] : memref<60x8xf32, #tpu.memory_space<vmem>>, vector<2x8xf32>
    %cst_276 = arith.constant dense<0.000000e+00> : vector<2x8xf32>
    %299 = tpu.matmul %296, %170, %cst_276 {dimension_numbers = #tpu.dot_dimension_numbers<[1], [0], [0], [1], [0, 0, 1, 1], [], []>} : vector<2x8xf32>, vector<8x8xf32>, vector<2x8xf32> -> vector<2x8xf32>
    %300 = arith.addf %298, %299 : vector<2x8xf32>
    %301 = math.tanh %300 : vector<2x8xf32>
    %c50_277 = arith.constant 50 : index
    %c0_278 = arith.constant 0 : index
    %302 = vector.load %arg11[%c50_277, %c0_278] : memref<60x8xf32, #tpu.memory_space<vmem>>, vector<2x8xf32>
    tpu.vector_store %arg11[%c50_277, %c0_278], %301 {strides = array<i32>} : memref<60x8xf32, #tpu.memory_space<vmem>>, vector<2x8xf32>,
    %c52_279 = arith.constant 52 : index
    %c0_280 = arith.constant 0 : index
    %303 = vector.load %arg12[%c52_279, %c0_280] : memref<60x8xf32, #tpu.memory_space<vmem>>, vector<2x8xf32>
    %cst_281 = arith.constant dense<0.000000e+00> : vector<2x8xf32>
    %304 = tpu.matmul %301, %170, %cst_281 {dimension_numbers = #tpu.dot_dimension_numbers<[1], [0], [0], [1], [0, 0, 1, 1], [], []>} : vector<2x8xf32>, vector<8x8xf32>, vector<2x8xf32> -> vector<2x8xf32>
    %305 = arith.addf %303, %304 : vector<2x8xf32>
    %306 = math.tanh %305 : vector<2x8xf32>
    %c52_282 = arith.constant 52 : index
    %c0_283 = arith.constant 0 : index
    %307 = vector.load %arg11[%c52_282, %c0_283] : memref<60x8xf32, #tpu.memory_space<vmem>>, vector<2x8xf32>
    tpu.vector_store %arg11[%c52_282, %c0_283], %306 {strides = array<i32>} : memref<60x8xf32, #tpu.memory_space<vmem>>, vector<2x8xf32>,
    %c54_284 = arith.constant 54 : index
    %c0_285 = arith.constant 0 : index
    %308 = vector.load %arg12[%c54_284, %c0_285] : memref<60x8xf32, #tpu.memory_space<vmem>>, vector<2x8xf32>
    %cst_286 = arith.constant dense<0.000000e+00> : vector<2x8xf32>
    %309 = tpu.matmul %306, %170, %cst_286 {dimension_numbers = #tpu.dot_dimension_numbers<[1], [0], [0], [1], [0, 0, 1, 1], [], []>} : vector<2x8xf32>, vector<8x8xf32>, vector<2x8xf32> -> vector<2x8xf32>
    %310 = arith.addf %308, %309 : vector<2x8xf32>
    %311 = math.tanh %310 : vector<2x8xf32>
    %c54_287 = arith.constant 54 : index
    %c0_288 = arith.constant 0 : index
    %312 = vector.load %arg11[%c54_287, %c0_288] : memref<60x8xf32, #tpu.memory_space<vmem>>, vector<2x8xf32>
    tpu.vector_store %arg11[%c54_287, %c0_288], %311 {strides = array<i32>} : memref<60x8xf32, #tpu.memory_space<vmem>>, vector<2x8xf32>,
    %c56_289 = arith.constant 56 : index
    %c0_290 = arith.constant 0 : index
    %313 = vector.load %arg12[%c56_289, %c0_290] : memref<60x8xf32, #tpu.memory_space<vmem>>, vector<2x8xf32>
    %cst_291 = arith.constant dense<0.000000e+00> : vector<2x8xf32>
    %314 = tpu.matmul %311, %170, %cst_291 {dimension_numbers = #tpu.dot_dimension_numbers<[1], [0], [0], [1], [0, 0, 1, 1], [], []>} : vector<2x8xf32>, vector<8x8xf32>, vector<2x8xf32> -> vector<2x8xf32>
    %315 = arith.addf %313, %314 : vector<2x8xf32>
    %316 = math.tanh %315 : vector<2x8xf32>
    %c56_292 = arith.constant 56 : index
    %c0_293 = arith.constant 0 : index
    %317 = vector.load %arg11[%c56_292, %c0_293] : memref<60x8xf32, #tpu.memory_space<vmem>>, vector<2x8xf32>
    tpu.vector_store %arg11[%c56_292, %c0_293], %316 {strides = array<i32>} : memref<60x8xf32, #tpu.memory_space<vmem>>, vector<2x8xf32>,
    %c58_294 = arith.constant 58 : index
    %c0_295 = arith.constant 0 : index
    %318 = vector.load %arg12[%c58_294, %c0_295] : memref<60x8xf32, #tpu.memory_space<vmem>>, vector<2x8xf32>
    %cst_296 = arith.constant dense<0.000000e+00> : vector<2x8xf32>
    %319 = tpu.matmul %316, %170, %cst_296 {dimension_numbers = #tpu.dot_dimension_numbers<[1], [0], [0], [1], [0, 0, 1, 1], [], []>} : vector<2x8xf32>, vector<8x8xf32>, vector<2x8xf32> -> vector<2x8xf32>
    %320 = arith.addf %318, %319 : vector<2x8xf32>
    %321 = math.tanh %320 : vector<2x8xf32>
    %c58_297 = arith.constant 58 : index
    %c0_298 = arith.constant 0 : index
    %322 = vector.load %arg11[%c58_297, %c0_298] : memref<60x8xf32, #tpu.memory_space<vmem>>, vector<2x8xf32>
    tpu.vector_store %arg11[%c58_297, %c0_298], %321 {strides = array<i32>} : memref<60x8xf32, #tpu.memory_space<vmem>>, vector<2x8xf32>,
    %c2_299 = arith.constant 2 : index
    %c0_300 = arith.constant 0 : index
    %323 = vector.load %arg5[%c2_299, %c0_300] : memref<5x8xf32, #tpu.memory_space<vmem>>, vector<1x8xf32>
    %c0_301 = arith.constant 0 : index
    %c0_302 = arith.constant 0 : index
    %324 = vector.load %arg11[%c0_301, %c0_302] : memref<60x8xf32, #tpu.memory_space<vmem>>, vector<60x8xf32>
    %c1_303 = arith.constant 1 : index
    %c0_304 = arith.constant 0 : index
    %c0_305 = arith.constant 0 : index
    %325 = vector.load %arg3[%c1_303, %c0_304, %c0_305] : memref<4x8x8xf32, #tpu.memory_space<vmem>>, vector<1x8x8xf32>
    %326 = vector.shape_cast %325 : vector<1x8x8xf32> to vector<8x8xf32>
    %cst_306 = arith.constant dense<0.000000e+00> : vector<60x8xf32>
    %327 = tpu.matmul %324, %326, %cst_306 {dimension_numbers = #tpu.dot_dimension_numbers<[1], [0], [0], [1], [0, 0, 1, 1], [], []>} : vector<60x8xf32>, vector<8x8xf32>, vector<60x8xf32> -> vector<60x8xf32>
    %328 = vector.broadcast %323 : vector<1x8xf32> to vector<60x8xf32>
    %329 = arith.addf %327, %328 : vector<60x8xf32>
    %c0_307 = arith.constant 0 : index
    %c0_308 = arith.constant 0 : index
    %330 = vector.load %arg12[%c0_307, %c0_308] : memref<60x8xf32, #tpu.memory_space<vmem>>, vector<60x8xf32>
    tpu.vector_store %arg12[%c0_307, %c0_308], %329 {strides = array<i32>} : memref<60x8xf32, #tpu.memory_space<vmem>>, vector<60x8xf32>,
    %c2_309 = arith.constant 2 : index
    %c0_310 = arith.constant 0 : index
    %c0_311 = arith.constant 0 : index
    %331 = vector.load %arg4[%c2_309, %c0_310, %c0_311] : memref<5x8x8xf32, #tpu.memory_space<vmem>>, vector<1x8x8xf32>
    %332 = vector.shape_cast %331 : vector<1x8x8xf32> to vector<8x8xf32>
    %c2_312 = arith.constant 2 : index
    %c0_313 = arith.constant 0 : index
    %c0_314 = arith.constant 0 : index
    %333 = vector.load %arg1[%c2_312, %c0_313, %c0_314] : memref<5x2x8xf32, #tpu.memory_space<vmem>>, vector<1x2x8xf32>
    %334 = vector.shape_cast %333 : vector<1x2x8xf32> to vector<2x8xf32>
    %c0_315 = arith.constant 0 : index
    %c0_316 = arith.constant 0 : index
    %335 = vector.load %arg12[%c0_315, %c0_316] : memref<60x8xf32, #tpu.memory_space<vmem>>, vector<2x8xf32>
    %cst_317 = arith.constant dense<0.000000e+00> : vector<2x8xf32>
    %336 = tpu.matmul %334, %332, %cst_317 {dimension_numbers = #tpu.dot_dimension_numbers<[1], [0], [0], [1], [0, 0, 1, 1], [], []>} : vector<2x8xf32>, vector<8x8xf32>, vector<2x8xf32> -> vector<2x8xf32>
    %337 = arith.addf %335, %336 : vector<2x8xf32>
    %338 = math.tanh %337 : vector<2x8xf32>
    %c0_318 = arith.constant 0 : index
    %c0_319 = arith.constant 0 : index
    %339 = vector.load %arg11[%c0_318, %c0_319] : memref<60x8xf32, #tpu.memory_space<vmem>>, vector<2x8xf32>
    tpu.vector_store %arg11[%c0_318, %c0_319], %338 {strides = array<i32>} : memref<60x8xf32, #tpu.memory_space<vmem>>, vector<2x8xf32>,
    %c2_320 = arith.constant 2 : index
    %c0_321 = arith.constant 0 : index
    %340 = vector.load %arg12[%c2_320, %c0_321] : memref<60x8xf32, #tpu.memory_space<vmem>>, vector<2x8xf32>
    %cst_322 = arith.constant dense<0.000000e+00> : vector<2x8xf32>
    %341 = tpu.matmul %338, %332, %cst_322 {dimension_numbers = #tpu.dot_dimension_numbers<[1], [0], [0], [1], [0, 0, 1, 1], [], []>} : vector<2x8xf32>, vector<8x8xf32>, vector<2x8xf32> -> vector<2x8xf32>
    %342 = arith.addf %340, %341 : vector<2x8xf32>
    %343 = math.tanh %342 : vector<2x8xf32>
    %c2_323 = arith.constant 2 : index
    %c0_324 = arith.constant 0 : index
    %344 = vector.load %arg11[%c2_323, %c0_324] : memref<60x8xf32, #tpu.memory_space<vmem>>, vector<2x8xf32>
    tpu.vector_store %arg11[%c2_323, %c0_324], %343 {strides = array<i32>} : memref<60x8xf32, #tpu.memory_space<vmem>>, vector<2x8xf32>,
    %c4_325 = arith.constant 4 : index
    %c0_326 = arith.constant 0 : index
    %345 = vector.load %arg12[%c4_325, %c0_326] : memref<60x8xf32, #tpu.memory_space<vmem>>, vector<2x8xf32>
    %cst_327 = arith.constant dense<0.000000e+00> : vector<2x8xf32>
    %346 = tpu.matmul %343, %332, %cst_327 {dimension_numbers = #tpu.dot_dimension_numbers<[1], [0], [0], [1], [0, 0, 1, 1], [], []>} : vector<2x8xf32>, vector<8x8xf32>, vector<2x8xf32> -> vector<2x8xf32>
    %347 = arith.addf %345, %346 : vector<2x8xf32>
    %348 = math.tanh %347 : vector<2x8xf32>
    %c4_328 = arith.constant 4 : index
    %c0_329 = arith.constant 0 : index
    %349 = vector.load %arg11[%c4_328, %c0_329] : memref<60x8xf32, #tpu.memory_space<vmem>>, vector<2x8xf32>
    tpu.vector_store %arg11[%c4_328, %c0_329], %348 {strides = array<i32>} : memref<60x8xf32, #tpu.memory_space<vmem>>, vector<2x8xf32>,
    %c6_330 = arith.constant 6 : index
    %c0_331 = arith.constant 0 : index
    %350 = vector.load %arg12[%c6_330, %c0_331] : memref<60x8xf32, #tpu.memory_space<vmem>>, vector<2x8xf32>
    %cst_332 = arith.constant dense<0.000000e+00> : vector<2x8xf32>
    %351 = tpu.matmul %348, %332, %cst_332 {dimension_numbers = #tpu.dot_dimension_numbers<[1], [0], [0], [1], [0, 0, 1, 1], [], []>} : vector<2x8xf32>, vector<8x8xf32>, vector<2x8xf32> -> vector<2x8xf32>
    %352 = arith.addf %350, %351 : vector<2x8xf32>
    %353 = math.tanh %352 : vector<2x8xf32>
    %c6_333 = arith.constant 6 : index
    %c0_334 = arith.constant 0 : index
    %354 = vector.load %arg11[%c6_333, %c0_334] : memref<60x8xf32, #tpu.memory_space<vmem>>, vector<2x8xf32>
    tpu.vector_store %arg11[%c6_333, %c0_334], %353 {strides = array<i32>} : memref<60x8xf32, #tpu.memory_space<vmem>>, vector<2x8xf32>,
    %c8_335 = arith.constant 8 : index
    %c0_336 = arith.constant 0 : index
    %355 = vector.load %arg12[%c8_335, %c0_336] : memref<60x8xf32, #tpu.memory_space<vmem>>, vector<2x8xf32>
    %cst_337 = arith.constant dense<0.000000e+00> : vector<2x8xf32>
    %356 = tpu.matmul %353, %332, %cst_337 {dimension_numbers = #tpu.dot_dimension_numbers<[1], [0], [0], [1], [0, 0, 1, 1], [], []>} : vector<2x8xf32>, vector<8x8xf32>, vector<2x8xf32> -> vector<2x8xf32>
    %357 = arith.addf %355, %356 : vector<2x8xf32>
    %358 = math.tanh %357 : vector<2x8xf32>
    %c8_338 = arith.constant 8 : index
    %c0_339 = arith.constant 0 : index
    %359 = vector.load %arg11[%c8_338, %c0_339] : memref<60x8xf32, #tpu.memory_space<vmem>>, vector<2x8xf32>
    tpu.vector_store %arg11[%c8_338, %c0_339], %358 {strides = array<i32>} : memref<60x8xf32, #tpu.memory_space<vmem>>, vector<2x8xf32>,
    %c10_340 = arith.constant 10 : index
    %c0_341 = arith.constant 0 : index
    %360 = vector.load %arg12[%c10_340, %c0_341] : memref<60x8xf32, #tpu.memory_space<vmem>>, vector<2x8xf32>
    %cst_342 = arith.constant dense<0.000000e+00> : vector<2x8xf32>
    %361 = tpu.matmul %358, %332, %cst_342 {dimension_numbers = #tpu.dot_dimension_numbers<[1], [0], [0], [1], [0, 0, 1, 1], [], []>} : vector<2x8xf32>, vector<8x8xf32>, vector<2x8xf32> -> vector<2x8xf32>
    %362 = arith.addf %360, %361 : vector<2x8xf32>
    %363 = math.tanh %362 : vector<2x8xf32>
    %c10_343 = arith.constant 10 : index
    %c0_344 = arith.constant 0 : index
    %364 = vector.load %arg11[%c10_343, %c0_344] : memref<60x8xf32, #tpu.memory_space<vmem>>, vector<2x8xf32>
    tpu.vector_store %arg11[%c10_343, %c0_344], %363 {strides = array<i32>} : memref<60x8xf32, #tpu.memory_space<vmem>>, vector<2x8xf32>,
    %c12_345 = arith.constant 12 : index
    %c0_346 = arith.constant 0 : index
    %365 = vector.load %arg12[%c12_345, %c0_346] : memref<60x8xf32, #tpu.memory_space<vmem>>, vector<2x8xf32>
    %cst_347 = arith.constant dense<0.000000e+00> : vector<2x8xf32>
    %366 = tpu.matmul %363, %332, %cst_347 {dimension_numbers = #tpu.dot_dimension_numbers<[1], [0], [0], [1], [0, 0, 1, 1], [], []>} : vector<2x8xf32>, vector<8x8xf32>, vector<2x8xf32> -> vector<2x8xf32>
    %367 = arith.addf %365, %366 : vector<2x8xf32>
    %368 = math.tanh %367 : vector<2x8xf32>
    %c12_348 = arith.constant 12 : index
    %c0_349 = arith.constant 0 : index
    %369 = vector.load %arg11[%c12_348, %c0_349] : memref<60x8xf32, #tpu.memory_space<vmem>>, vector<2x8xf32>
    tpu.vector_store %arg11[%c12_348, %c0_349], %368 {strides = array<i32>} : memref<60x8xf32, #tpu.memory_space<vmem>>, vector<2x8xf32>,
    %c14_350 = arith.constant 14 : index
    %c0_351 = arith.constant 0 : index
    %370 = vector.load %arg12[%c14_350, %c0_351] : memref<60x8xf32, #tpu.memory_space<vmem>>, vector<2x8xf32>
    %cst_352 = arith.constant dense<0.000000e+00> : vector<2x8xf32>
    %371 = tpu.matmul %368, %332, %cst_352 {dimension_numbers = #tpu.dot_dimension_numbers<[1], [0], [0], [1], [0, 0, 1, 1], [], []>} : vector<2x8xf32>, vector<8x8xf32>, vector<2x8xf32> -> vector<2x8xf32>
    %372 = arith.addf %370, %371 : vector<2x8xf32>
    %373 = math.tanh %372 : vector<2x8xf32>
    %c14_353 = arith.constant 14 : index
    %c0_354 = arith.constant 0 : index
    %374 = vector.load %arg11[%c14_353, %c0_354] : memref<60x8xf32, #tpu.memory_space<vmem>>, vector<2x8xf32>
    tpu.vector_store %arg11[%c14_353, %c0_354], %373 {strides = array<i32>} : memref<60x8xf32, #tpu.memory_space<vmem>>, vector<2x8xf32>,
    %c16_355 = arith.constant 16 : index
    %c0_356 = arith.constant 0 : index
    %375 = vector.load %arg12[%c16_355, %c0_356] : memref<60x8xf32, #tpu.memory_space<vmem>>, vector<2x8xf32>
    %cst_357 = arith.constant dense<0.000000e+00> : vector<2x8xf32>
    %376 = tpu.matmul %373, %332, %cst_357 {dimension_numbers = #tpu.dot_dimension_numbers<[1], [0], [0], [1], [0, 0, 1, 1], [], []>} : vector<2x8xf32>, vector<8x8xf32>, vector<2x8xf32> -> vector<2x8xf32>
    %377 = arith.addf %375, %376 : vector<2x8xf32>
    %378 = math.tanh %377 : vector<2x8xf32>
    %c16_358 = arith.constant 16 : index
    %c0_359 = arith.constant 0 : index
    %379 = vector.load %arg11[%c16_358, %c0_359] : memref<60x8xf32, #tpu.memory_space<vmem>>, vector<2x8xf32>
    tpu.vector_store %arg11[%c16_358, %c0_359], %378 {strides = array<i32>} : memref<60x8xf32, #tpu.memory_space<vmem>>, vector<2x8xf32>,
    %c18_360 = arith.constant 18 : index
    %c0_361 = arith.constant 0 : index
    %380 = vector.load %arg12[%c18_360, %c0_361] : memref<60x8xf32, #tpu.memory_space<vmem>>, vector<2x8xf32>
    %cst_362 = arith.constant dense<0.000000e+00> : vector<2x8xf32>
    %381 = tpu.matmul %378, %332, %cst_362 {dimension_numbers = #tpu.dot_dimension_numbers<[1], [0], [0], [1], [0, 0, 1, 1], [], []>} : vector<2x8xf32>, vector<8x8xf32>, vector<2x8xf32> -> vector<2x8xf32>
    %382 = arith.addf %380, %381 : vector<2x8xf32>
    %383 = math.tanh %382 : vector<2x8xf32>
    %c18_363 = arith.constant 18 : index
    %c0_364 = arith.constant 0 : index
    %384 = vector.load %arg11[%c18_363, %c0_364] : memref<60x8xf32, #tpu.memory_space<vmem>>, vector<2x8xf32>
    tpu.vector_store %arg11[%c18_363, %c0_364], %383 {strides = array<i32>} : memref<60x8xf32, #tpu.memory_space<vmem>>, vector<2x8xf32>,
    %c20_365 = arith.constant 20 : index
    %c0_366 = arith.constant 0 : index
    %385 = vector.load %arg12[%c20_365, %c0_366] : memref<60x8xf32, #tpu.memory_space<vmem>>, vector<2x8xf32>
    %cst_367 = arith.constant dense<0.000000e+00> : vector<2x8xf32>
    %386 = tpu.matmul %383, %332, %cst_367 {dimension_numbers = #tpu.dot_dimension_numbers<[1], [0], [0], [1], [0, 0, 1, 1], [], []>} : vector<2x8xf32>, vector<8x8xf32>, vector<2x8xf32> -> vector<2x8xf32>
    %387 = arith.addf %385, %386 : vector<2x8xf32>
    %388 = math.tanh %387 : vector<2x8xf32>
    %c20_368 = arith.constant 20 : index
    %c0_369 = arith.constant 0 : index
    %389 = vector.load %arg11[%c20_368, %c0_369] : memref<60x8xf32, #tpu.memory_space<vmem>>, vector<2x8xf32>
    tpu.vector_store %arg11[%c20_368, %c0_369], %388 {strides = array<i32>} : memref<60x8xf32, #tpu.memory_space<vmem>>, vector<2x8xf32>,
    %c22_370 = arith.constant 22 : index
    %c0_371 = arith.constant 0 : index
    %390 = vector.load %arg12[%c22_370, %c0_371] : memref<60x8xf32, #tpu.memory_space<vmem>>, vector<2x8xf32>
    %cst_372 = arith.constant dense<0.000000e+00> : vector<2x8xf32>
    %391 = tpu.matmul %388, %332, %cst_372 {dimension_numbers = #tpu.dot_dimension_numbers<[1], [0], [0], [1], [0, 0, 1, 1], [], []>} : vector<2x8xf32>, vector<8x8xf32>, vector<2x8xf32> -> vector<2x8xf32>
    %392 = arith.addf %390, %391 : vector<2x8xf32>
    %393 = math.tanh %392 : vector<2x8xf32>
    %c22_373 = arith.constant 22 : index
    %c0_374 = arith.constant 0 : index
    %394 = vector.load %arg11[%c22_373, %c0_374] : memref<60x8xf32, #tpu.memory_space<vmem>>, vector<2x8xf32>
    tpu.vector_store %arg11[%c22_373, %c0_374], %393 {strides = array<i32>} : memref<60x8xf32, #tpu.memory_space<vmem>>, vector<2x8xf32>,
    %c24_375 = arith.constant 24 : index
    %c0_376 = arith.constant 0 : index
    %395 = vector.load %arg12[%c24_375, %c0_376] : memref<60x8xf32, #tpu.memory_space<vmem>>, vector<2x8xf32>
    %cst_377 = arith.constant dense<0.000000e+00> : vector<2x8xf32>
    %396 = tpu.matmul %393, %332, %cst_377 {dimension_numbers = #tpu.dot_dimension_numbers<[1], [0], [0], [1], [0, 0, 1, 1], [], []>} : vector<2x8xf32>, vector<8x8xf32>, vector<2x8xf32> -> vector<2x8xf32>
    %397 = arith.addf %395, %396 : vector<2x8xf32>
    %398 = math.tanh %397 : vector<2x8xf32>
    %c24_378 = arith.constant 24 : index
    %c0_379 = arith.constant 0 : index
    %399 = vector.load %arg11[%c24_378, %c0_379] : memref<60x8xf32, #tpu.memory_space<vmem>>, vector<2x8xf32>
    tpu.vector_store %arg11[%c24_378, %c0_379], %398 {strides = array<i32>} : memref<60x8xf32, #tpu.memory_space<vmem>>, vector<2x8xf32>,
    %c26_380 = arith.constant 26 : index
    %c0_381 = arith.constant 0 : index
    %400 = vector.load %arg12[%c26_380, %c0_381] : memref<60x8xf32, #tpu.memory_space<vmem>>, vector<2x8xf32>
    %cst_382 = arith.constant dense<0.000000e+00> : vector<2x8xf32>
    %401 = tpu.matmul %398, %332, %cst_382 {dimension_numbers = #tpu.dot_dimension_numbers<[1], [0], [0], [1], [0, 0, 1, 1], [], []>} : vector<2x8xf32>, vector<8x8xf32>, vector<2x8xf32> -> vector<2x8xf32>
    %402 = arith.addf %400, %401 : vector<2x8xf32>
    %403 = math.tanh %402 : vector<2x8xf32>
    %c26_383 = arith.constant 26 : index
    %c0_384 = arith.constant 0 : index
    %404 = vector.load %arg11[%c26_383, %c0_384] : memref<60x8xf32, #tpu.memory_space<vmem>>, vector<2x8xf32>
    tpu.vector_store %arg11[%c26_383, %c0_384], %403 {strides = array<i32>} : memref<60x8xf32, #tpu.memory_space<vmem>>, vector<2x8xf32>,
    %c28_385 = arith.constant 28 : index
    %c0_386 = arith.constant 0 : index
    %405 = vector.load %arg12[%c28_385, %c0_386] : memref<60x8xf32, #tpu.memory_space<vmem>>, vector<2x8xf32>
    %cst_387 = arith.constant dense<0.000000e+00> : vector<2x8xf32>
    %406 = tpu.matmul %403, %332, %cst_387 {dimension_numbers = #tpu.dot_dimension_numbers<[1], [0], [0], [1], [0, 0, 1, 1], [], []>} : vector<2x8xf32>, vector<8x8xf32>, vector<2x8xf32> -> vector<2x8xf32>
    %407 = arith.addf %405, %406 : vector<2x8xf32>
    %408 = math.tanh %407 : vector<2x8xf32>
    %c28_388 = arith.constant 28 : index
    %c0_389 = arith.constant 0 : index
    %409 = vector.load %arg11[%c28_388, %c0_389] : memref<60x8xf32, #tpu.memory_space<vmem>>, vector<2x8xf32>
    tpu.vector_store %arg11[%c28_388, %c0_389], %408 {strides = array<i32>} : memref<60x8xf32, #tpu.memory_space<vmem>>, vector<2x8xf32>,
    %c30_390 = arith.constant 30 : index
    %c0_391 = arith.constant 0 : index
    %410 = vector.load %arg12[%c30_390, %c0_391] : memref<60x8xf32, #tpu.memory_space<vmem>>, vector<2x8xf32>
    %cst_392 = arith.constant dense<0.000000e+00> : vector<2x8xf32>
    %411 = tpu.matmul %408, %332, %cst_392 {dimension_numbers = #tpu.dot_dimension_numbers<[1], [0], [0], [1], [0, 0, 1, 1], [], []>} : vector<2x8xf32>, vector<8x8xf32>, vector<2x8xf32> -> vector<2x8xf32>
    %412 = arith.addf %410, %411 : vector<2x8xf32>
    %413 = math.tanh %412 : vector<2x8xf32>
    %c30_393 = arith.constant 30 : index
    %c0_394 = arith.constant 0 : index
    %414 = vector.load %arg11[%c30_393, %c0_394] : memref<60x8xf32, #tpu.memory_space<vmem>>, vector<2x8xf32>
    tpu.vector_store %arg11[%c30_393, %c0_394], %413 {strides = array<i32>} : memref<60x8xf32, #tpu.memory_space<vmem>>, vector<2x8xf32>,
    %c32_395 = arith.constant 32 : index
    %c0_396 = arith.constant 0 : index
    %415 = vector.load %arg12[%c32_395, %c0_396] : memref<60x8xf32, #tpu.memory_space<vmem>>, vector<2x8xf32>
    %cst_397 = arith.constant dense<0.000000e+00> : vector<2x8xf32>
    %416 = tpu.matmul %413, %332, %cst_397 {dimension_numbers = #tpu.dot_dimension_numbers<[1], [0], [0], [1], [0, 0, 1, 1], [], []>} : vector<2x8xf32>, vector<8x8xf32>, vector<2x8xf32> -> vector<2x8xf32>
    %417 = arith.addf %415, %416 : vector<2x8xf32>
    %418 = math.tanh %417 : vector<2x8xf32>
    %c32_398 = arith.constant 32 : index
    %c0_399 = arith.constant 0 : index
    %419 = vector.load %arg11[%c32_398, %c0_399] : memref<60x8xf32, #tpu.memory_space<vmem>>, vector<2x8xf32>
    tpu.vector_store %arg11[%c32_398, %c0_399], %418 {strides = array<i32>} : memref<60x8xf32, #tpu.memory_space<vmem>>, vector<2x8xf32>,
    %c34_400 = arith.constant 34 : index
    %c0_401 = arith.constant 0 : index
    %420 = vector.load %arg12[%c34_400, %c0_401] : memref<60x8xf32, #tpu.memory_space<vmem>>, vector<2x8xf32>
    %cst_402 = arith.constant dense<0.000000e+00> : vector<2x8xf32>
    %421 = tpu.matmul %418, %332, %cst_402 {dimension_numbers = #tpu.dot_dimension_numbers<[1], [0], [0], [1], [0, 0, 1, 1], [], []>} : vector<2x8xf32>, vector<8x8xf32>, vector<2x8xf32> -> vector<2x8xf32>
    %422 = arith.addf %420, %421 : vector<2x8xf32>
    %423 = math.tanh %422 : vector<2x8xf32>
    %c34_403 = arith.constant 34 : index
    %c0_404 = arith.constant 0 : index
    %424 = vector.load %arg11[%c34_403, %c0_404] : memref<60x8xf32, #tpu.memory_space<vmem>>, vector<2x8xf32>
    tpu.vector_store %arg11[%c34_403, %c0_404], %423 {strides = array<i32>} : memref<60x8xf32, #tpu.memory_space<vmem>>, vector<2x8xf32>,
    %c36_405 = arith.constant 36 : index
    %c0_406 = arith.constant 0 : index
    %425 = vector.load %arg12[%c36_405, %c0_406] : memref<60x8xf32, #tpu.memory_space<vmem>>, vector<2x8xf32>
    %cst_407 = arith.constant dense<0.000000e+00> : vector<2x8xf32>
    %426 = tpu.matmul %423, %332, %cst_407 {dimension_numbers = #tpu.dot_dimension_numbers<[1], [0], [0], [1], [0, 0, 1, 1], [], []>} : vector<2x8xf32>, vector<8x8xf32>, vector<2x8xf32> -> vector<2x8xf32>
    %427 = arith.addf %425, %426 : vector<2x8xf32>
    %428 = math.tanh %427 : vector<2x8xf32>
    %c36_408 = arith.constant 36 : index
    %c0_409 = arith.constant 0 : index
    %429 = vector.load %arg11[%c36_408, %c0_409] : memref<60x8xf32, #tpu.memory_space<vmem>>, vector<2x8xf32>
    tpu.vector_store %arg11[%c36_408, %c0_409], %428 {strides = array<i32>} : memref<60x8xf32, #tpu.memory_space<vmem>>, vector<2x8xf32>,
    %c38_410 = arith.constant 38 : index
    %c0_411 = arith.constant 0 : index
    %430 = vector.load %arg12[%c38_410, %c0_411] : memref<60x8xf32, #tpu.memory_space<vmem>>, vector<2x8xf32>
    %cst_412 = arith.constant dense<0.000000e+00> : vector<2x8xf32>
    %431 = tpu.matmul %428, %332, %cst_412 {dimension_numbers = #tpu.dot_dimension_numbers<[1], [0], [0], [1], [0, 0, 1, 1], [], []>} : vector<2x8xf32>, vector<8x8xf32>, vector<2x8xf32> -> vector<2x8xf32>
    %432 = arith.addf %430, %431 : vector<2x8xf32>
    %433 = math.tanh %432 : vector<2x8xf32>
    %c38_413 = arith.constant 38 : index
    %c0_414 = arith.constant 0 : index
    %434 = vector.load %arg11[%c38_413, %c0_414] : memref<60x8xf32, #tpu.memory_space<vmem>>, vector<2x8xf32>
    tpu.vector_store %arg11[%c38_413, %c0_414], %433 {strides = array<i32>} : memref<60x8xf32, #tpu.memory_space<vmem>>, vector<2x8xf32>,
    %c40_415 = arith.constant 40 : index
    %c0_416 = arith.constant 0 : index
    %435 = vector.load %arg12[%c40_415, %c0_416] : memref<60x8xf32, #tpu.memory_space<vmem>>, vector<2x8xf32>
    %cst_417 = arith.constant dense<0.000000e+00> : vector<2x8xf32>
    %436 = tpu.matmul %433, %332, %cst_417 {dimension_numbers = #tpu.dot_dimension_numbers<[1], [0], [0], [1], [0, 0, 1, 1], [], []>} : vector<2x8xf32>, vector<8x8xf32>, vector<2x8xf32> -> vector<2x8xf32>
    %437 = arith.addf %435, %436 : vector<2x8xf32>
    %438 = math.tanh %437 : vector<2x8xf32>
    %c40_418 = arith.constant 40 : index
    %c0_419 = arith.constant 0 : index
    %439 = vector.load %arg11[%c40_418, %c0_419] : memref<60x8xf32, #tpu.memory_space<vmem>>, vector<2x8xf32>
    tpu.vector_store %arg11[%c40_418, %c0_419], %438 {strides = array<i32>} : memref<60x8xf32, #tpu.memory_space<vmem>>, vector<2x8xf32>,
    %c42_420 = arith.constant 42 : index
    %c0_421 = arith.constant 0 : index
    %440 = vector.load %arg12[%c42_420, %c0_421] : memref<60x8xf32, #tpu.memory_space<vmem>>, vector<2x8xf32>
    %cst_422 = arith.constant dense<0.000000e+00> : vector<2x8xf32>
    %441 = tpu.matmul %438, %332, %cst_422 {dimension_numbers = #tpu.dot_dimension_numbers<[1], [0], [0], [1], [0, 0, 1, 1], [], []>} : vector<2x8xf32>, vector<8x8xf32>, vector<2x8xf32> -> vector<2x8xf32>
    %442 = arith.addf %440, %441 : vector<2x8xf32>
    %443 = math.tanh %442 : vector<2x8xf32>
    %c42_423 = arith.constant 42 : index
    %c0_424 = arith.constant 0 : index
    %444 = vector.load %arg11[%c42_423, %c0_424] : memref<60x8xf32, #tpu.memory_space<vmem>>, vector<2x8xf32>
    tpu.vector_store %arg11[%c42_423, %c0_424], %443 {strides = array<i32>} : memref<60x8xf32, #tpu.memory_space<vmem>>, vector<2x8xf32>,
    %c44_425 = arith.constant 44 : index
    %c0_426 = arith.constant 0 : index
    %445 = vector.load %arg12[%c44_425, %c0_426] : memref<60x8xf32, #tpu.memory_space<vmem>>, vector<2x8xf32>
    %cst_427 = arith.constant dense<0.000000e+00> : vector<2x8xf32>
    %446 = tpu.matmul %443, %332, %cst_427 {dimension_numbers = #tpu.dot_dimension_numbers<[1], [0], [0], [1], [0, 0, 1, 1], [], []>} : vector<2x8xf32>, vector<8x8xf32>, vector<2x8xf32> -> vector<2x8xf32>
    %447 = arith.addf %445, %446 : vector<2x8xf32>
    %448 = math.tanh %447 : vector<2x8xf32>
    %c44_428 = arith.constant 44 : index
    %c0_429 = arith.constant 0 : index
    %449 = vector.load %arg11[%c44_428, %c0_429] : memref<60x8xf32, #tpu.memory_space<vmem>>, vector<2x8xf32>
    tpu.vector_store %arg11[%c44_428, %c0_429], %448 {strides = array<i32>} : memref<60x8xf32, #tpu.memory_space<vmem>>, vector<2x8xf32>,
    %c46_430 = arith.constant 46 : index
    %c0_431 = arith.constant 0 : index
    %450 = vector.load %arg12[%c46_430, %c0_431] : memref<60x8xf32, #tpu.memory_space<vmem>>, vector<2x8xf32>
    %cst_432 = arith.constant dense<0.000000e+00> : vector<2x8xf32>
    %451 = tpu.matmul %448, %332, %cst_432 {dimension_numbers = #tpu.dot_dimension_numbers<[1], [0], [0], [1], [0, 0, 1, 1], [], []>} : vector<2x8xf32>, vector<8x8xf32>, vector<2x8xf32> -> vector<2x8xf32>
    %452 = arith.addf %450, %451 : vector<2x8xf32>
    %453 = math.tanh %452 : vector<2x8xf32>
    %c46_433 = arith.constant 46 : index
    %c0_434 = arith.constant 0 : index
    %454 = vector.load %arg11[%c46_433, %c0_434] : memref<60x8xf32, #tpu.memory_space<vmem>>, vector<2x8xf32>
    tpu.vector_store %arg11[%c46_433, %c0_434], %453 {strides = array<i32>} : memref<60x8xf32, #tpu.memory_space<vmem>>, vector<2x8xf32>,
    %c48_435 = arith.constant 48 : index
    %c0_436 = arith.constant 0 : index
    %455 = vector.load %arg12[%c48_435, %c0_436] : memref<60x8xf32, #tpu.memory_space<vmem>>, vector<2x8xf32>
    %cst_437 = arith.constant dense<0.000000e+00> : vector<2x8xf32>
    %456 = tpu.matmul %453, %332, %cst_437 {dimension_numbers = #tpu.dot_dimension_numbers<[1], [0], [0], [1], [0, 0, 1, 1], [], []>} : vector<2x8xf32>, vector<8x8xf32>, vector<2x8xf32> -> vector<2x8xf32>
    %457 = arith.addf %455, %456 : vector<2x8xf32>
    %458 = math.tanh %457 : vector<2x8xf32>
    %c48_438 = arith.constant 48 : index
    %c0_439 = arith.constant 0 : index
    %459 = vector.load %arg11[%c48_438, %c0_439] : memref<60x8xf32, #tpu.memory_space<vmem>>, vector<2x8xf32>
    tpu.vector_store %arg11[%c48_438, %c0_439], %458 {strides = array<i32>} : memref<60x8xf32, #tpu.memory_space<vmem>>, vector<2x8xf32>,
    %c50_440 = arith.constant 50 : index
    %c0_441 = arith.constant 0 : index
    %460 = vector.load %arg12[%c50_440, %c0_441] : memref<60x8xf32, #tpu.memory_space<vmem>>, vector<2x8xf32>
    %cst_442 = arith.constant dense<0.000000e+00> : vector<2x8xf32>
    %461 = tpu.matmul %458, %332, %cst_442 {dimension_numbers = #tpu.dot_dimension_numbers<[1], [0], [0], [1], [0, 0, 1, 1], [], []>} : vector<2x8xf32>, vector<8x8xf32>, vector<2x8xf32> -> vector<2x8xf32>
    %462 = arith.addf %460, %461 : vector<2x8xf32>
    %463 = math.tanh %462 : vector<2x8xf32>
    %c50_443 = arith.constant 50 : index
    %c0_444 = arith.constant 0 : index
    %464 = vector.load %arg11[%c50_443, %c0_444] : memref<60x8xf32, #tpu.memory_space<vmem>>, vector<2x8xf32>
    tpu.vector_store %arg11[%c50_443, %c0_444], %463 {strides = array<i32>} : memref<60x8xf32, #tpu.memory_space<vmem>>, vector<2x8xf32>,
    %c52_445 = arith.constant 52 : index
    %c0_446 = arith.constant 0 : index
    %465 = vector.load %arg12[%c52_445, %c0_446] : memref<60x8xf32, #tpu.memory_space<vmem>>, vector<2x8xf32>
    %cst_447 = arith.constant dense<0.000000e+00> : vector<2x8xf32>
    %466 = tpu.matmul %463, %332, %cst_447 {dimension_numbers = #tpu.dot_dimension_numbers<[1], [0], [0], [1], [0, 0, 1, 1], [], []>} : vector<2x8xf32>, vector<8x8xf32>, vector<2x8xf32> -> vector<2x8xf32>
    %467 = arith.addf %465, %466 : vector<2x8xf32>
    %468 = math.tanh %467 : vector<2x8xf32>
    %c52_448 = arith.constant 52 : index
    %c0_449 = arith.constant 0 : index
    %469 = vector.load %arg11[%c52_448, %c0_449] : memref<60x8xf32, #tpu.memory_space<vmem>>, vector<2x8xf32>
    tpu.vector_store %arg11[%c52_448, %c0_449], %468 {strides = array<i32>} : memref<60x8xf32, #tpu.memory_space<vmem>>, vector<2x8xf32>,
    %c54_450 = arith.constant 54 : index
    %c0_451 = arith.constant 0 : index
    %470 = vector.load %arg12[%c54_450, %c0_451] : memref<60x8xf32, #tpu.memory_space<vmem>>, vector<2x8xf32>
    %cst_452 = arith.constant dense<0.000000e+00> : vector<2x8xf32>
    %471 = tpu.matmul %468, %332, %cst_452 {dimension_numbers = #tpu.dot_dimension_numbers<[1], [0], [0], [1], [0, 0, 1, 1], [], []>} : vector<2x8xf32>, vector<8x8xf32>, vector<2x8xf32> -> vector<2x8xf32>
    %472 = arith.addf %470, %471 : vector<2x8xf32>
    %473 = math.tanh %472 : vector<2x8xf32>
    %c54_453 = arith.constant 54 : index
    %c0_454 = arith.constant 0 : index
    %474 = vector.load %arg11[%c54_453, %c0_454] : memref<60x8xf32, #tpu.memory_space<vmem>>, vector<2x8xf32>
    tpu.vector_store %arg11[%c54_453, %c0_454], %473 {strides = array<i32>} : memref<60x8xf32, #tpu.memory_space<vmem>>, vector<2x8xf32>,
    %c56_455 = arith.constant 56 : index
    %c0_456 = arith.constant 0 : index
    %475 = vector.load %arg12[%c56_455, %c0_456] : memref<60x8xf32, #tpu.memory_space<vmem>>, vector<2x8xf32>
    %cst_457 = arith.constant dense<0.000000e+00> : vector<2x8xf32>
    %476 = tpu.matmul %473, %332, %cst_457 {dimension_numbers = #tpu.dot_dimension_numbers<[1], [0], [0], [1], [0, 0, 1, 1], [], []>} : vector<2x8xf32>, vector<8x8xf32>, vector<2x8xf32> -> vector<2x8xf32>
    %477 = arith.addf %475, %476 : vector<2x8xf32>
    %478 = math.tanh %477 : vector<2x8xf32>
    %c56_458 = arith.constant 56 : index
    %c0_459 = arith.constant 0 : index
    %479 = vector.load %arg11[%c56_458, %c0_459] : memref<60x8xf32, #tpu.memory_space<vmem>>, vector<2x8xf32>
    tpu.vector_store %arg11[%c56_458, %c0_459], %478 {strides = array<i32>} : memref<60x8xf32, #tpu.memory_space<vmem>>, vector<2x8xf32>,
    %c58_460 = arith.constant 58 : index
    %c0_461 = arith.constant 0 : index
    %480 = vector.load %arg12[%c58_460, %c0_461] : memref<60x8xf32, #tpu.memory_space<vmem>>, vector<2x8xf32>
    %cst_462 = arith.constant dense<0.000000e+00> : vector<2x8xf32>
    %481 = tpu.matmul %478, %332, %cst_462 {dimension_numbers = #tpu.dot_dimension_numbers<[1], [0], [0], [1], [0, 0, 1, 1], [], []>} : vector<2x8xf32>, vector<8x8xf32>, vector<2x8xf32> -> vector<2x8xf32>
    %482 = arith.addf %480, %481 : vector<2x8xf32>
    %483 = math.tanh %482 : vector<2x8xf32>
    %c58_463 = arith.constant 58 : index
    %c0_464 = arith.constant 0 : index
    %484 = vector.load %arg11[%c58_463, %c0_464] : memref<60x8xf32, #tpu.memory_space<vmem>>, vector<2x8xf32>
    tpu.vector_store %arg11[%c58_463, %c0_464], %483 {strides = array<i32>} : memref<60x8xf32, #tpu.memory_space<vmem>>, vector<2x8xf32>,
    %c3 = arith.constant 3 : index
    %c0_465 = arith.constant 0 : index
    %485 = vector.load %arg5[%c3, %c0_465] : memref<5x8xf32, #tpu.memory_space<vmem>>, vector<1x8xf32>
    %c0_466 = arith.constant 0 : index
    %c0_467 = arith.constant 0 : index
    %486 = vector.load %arg11[%c0_466, %c0_467] : memref<60x8xf32, #tpu.memory_space<vmem>>, vector<60x8xf32>
    %c2_468 = arith.constant 2 : index
    %c0_469 = arith.constant 0 : index
    %c0_470 = arith.constant 0 : index
    %487 = vector.load %arg3[%c2_468, %c0_469, %c0_470] : memref<4x8x8xf32, #tpu.memory_space<vmem>>, vector<1x8x8xf32>
    %488 = vector.shape_cast %487 : vector<1x8x8xf32> to vector<8x8xf32>
    %cst_471 = arith.constant dense<0.000000e+00> : vector<60x8xf32>
    %489 = tpu.matmul %486, %488, %cst_471 {dimension_numbers = #tpu.dot_dimension_numbers<[1], [0], [0], [1], [0, 0, 1, 1], [], []>} : vector<60x8xf32>, vector<8x8xf32>, vector<60x8xf32> -> vector<60x8xf32>
    %490 = vector.broadcast %485 : vector<1x8xf32> to vector<60x8xf32>
    %491 = arith.addf %489, %490 : vector<60x8xf32>
    %c0_472 = arith.constant 0 : index
    %c0_473 = arith.constant 0 : index
    %492 = vector.load %arg12[%c0_472, %c0_473] : memref<60x8xf32, #tpu.memory_space<vmem>>, vector<60x8xf32>
    tpu.vector_store %arg12[%c0_472, %c0_473], %491 {strides = array<i32>} : memref<60x8xf32, #tpu.memory_space<vmem>>, vector<60x8xf32>,
    %c3_474 = arith.constant 3 : index
    %c0_475 = arith.constant 0 : index
    %c0_476 = arith.constant 0 : index
    %493 = vector.load %arg4[%c3_474, %c0_475, %c0_476] : memref<5x8x8xf32, #tpu.memory_space<vmem>>, vector<1x8x8xf32>
    %494 = vector.shape_cast %493 : vector<1x8x8xf32> to vector<8x8xf32>
    %c3_477 = arith.constant 3 : index
    %c0_478 = arith.constant 0 : index
    %c0_479 = arith.constant 0 : index
    %495 = vector.load %arg1[%c3_477, %c0_478, %c0_479] : memref<5x2x8xf32, #tpu.memory_space<vmem>>, vector<1x2x8xf32>
    %496 = vector.shape_cast %495 : vector<1x2x8xf32> to vector<2x8xf32>
    %c0_480 = arith.constant 0 : index
    %c0_481 = arith.constant 0 : index
    %497 = vector.load %arg12[%c0_480, %c0_481] : memref<60x8xf32, #tpu.memory_space<vmem>>, vector<2x8xf32>
    %cst_482 = arith.constant dense<0.000000e+00> : vector<2x8xf32>
    %498 = tpu.matmul %496, %494, %cst_482 {dimension_numbers = #tpu.dot_dimension_numbers<[1], [0], [0], [1], [0, 0, 1, 1], [], []>} : vector<2x8xf32>, vector<8x8xf32>, vector<2x8xf32> -> vector<2x8xf32>
    %499 = arith.addf %497, %498 : vector<2x8xf32>
    %500 = math.tanh %499 : vector<2x8xf32>
    %c0_483 = arith.constant 0 : index
    %c0_484 = arith.constant 0 : index
    %501 = vector.load %arg11[%c0_483, %c0_484] : memref<60x8xf32, #tpu.memory_space<vmem>>, vector<2x8xf32>
    tpu.vector_store %arg11[%c0_483, %c0_484], %500 {strides = array<i32>} : memref<60x8xf32, #tpu.memory_space<vmem>>, vector<2x8xf32>,
    %c2_485 = arith.constant 2 : index
    %c0_486 = arith.constant 0 : index
    %502 = vector.load %arg12[%c2_485, %c0_486] : memref<60x8xf32, #tpu.memory_space<vmem>>, vector<2x8xf32>
    %cst_487 = arith.constant dense<0.000000e+00> : vector<2x8xf32>
    %503 = tpu.matmul %500, %494, %cst_487 {dimension_numbers = #tpu.dot_dimension_numbers<[1], [0], [0], [1], [0, 0, 1, 1], [], []>} : vector<2x8xf32>, vector<8x8xf32>, vector<2x8xf32> -> vector<2x8xf32>
    %504 = arith.addf %502, %503 : vector<2x8xf32>
    %505 = math.tanh %504 : vector<2x8xf32>
    %c2_488 = arith.constant 2 : index
    %c0_489 = arith.constant 0 : index
    %506 = vector.load %arg11[%c2_488, %c0_489] : memref<60x8xf32, #tpu.memory_space<vmem>>, vector<2x8xf32>
    tpu.vector_store %arg11[%c2_488, %c0_489], %505 {strides = array<i32>} : memref<60x8xf32, #tpu.memory_space<vmem>>, vector<2x8xf32>,
    %c4_490 = arith.constant 4 : index
    %c0_491 = arith.constant 0 : index
    %507 = vector.load %arg12[%c4_490, %c0_491] : memref<60x8xf32, #tpu.memory_space<vmem>>, vector<2x8xf32>
    %cst_492 = arith.constant dense<0.000000e+00> : vector<2x8xf32>
    %508 = tpu.matmul %505, %494, %cst_492 {dimension_numbers = #tpu.dot_dimension_numbers<[1], [0], [0], [1], [0, 0, 1, 1], [], []>} : vector<2x8xf32>, vector<8x8xf32>, vector<2x8xf32> -> vector<2x8xf32>
    %509 = arith.addf %507, %508 : vector<2x8xf32>
    %510 = math.tanh %509 : vector<2x8xf32>
    %c4_493 = arith.constant 4 : index
    %c0_494 = arith.constant 0 : index
    %511 = vector.load %arg11[%c4_493, %c0_494] : memref<60x8xf32, #tpu.memory_space<vmem>>, vector<2x8xf32>
    tpu.vector_store %arg11[%c4_493, %c0_494], %510 {strides = array<i32>} : memref<60x8xf32, #tpu.memory_space<vmem>>, vector<2x8xf32>,
    %c6_495 = arith.constant 6 : index
    %c0_496 = arith.constant 0 : index
    %512 = vector.load %arg12[%c6_495, %c0_496] : memref<60x8xf32, #tpu.memory_space<vmem>>, vector<2x8xf32>
    %cst_497 = arith.constant dense<0.000000e+00> : vector<2x8xf32>
    %513 = tpu.matmul %510, %494, %cst_497 {dimension_numbers = #tpu.dot_dimension_numbers<[1], [0], [0], [1], [0, 0, 1, 1], [], []>} : vector<2x8xf32>, vector<8x8xf32>, vector<2x8xf32> -> vector<2x8xf32>
    %514 = arith.addf %512, %513 : vector<2x8xf32>
    %515 = math.tanh %514 : vector<2x8xf32>
    %c6_498 = arith.constant 6 : index
    %c0_499 = arith.constant 0 : index
    %516 = vector.load %arg11[%c6_498, %c0_499] : memref<60x8xf32, #tpu.memory_space<vmem>>, vector<2x8xf32>
    tpu.vector_store %arg11[%c6_498, %c0_499], %515 {strides = array<i32>} : memref<60x8xf32, #tpu.memory_space<vmem>>, vector<2x8xf32>,
    %c8_500 = arith.constant 8 : index
    %c0_501 = arith.constant 0 : index
    %517 = vector.load %arg12[%c8_500, %c0_501] : memref<60x8xf32, #tpu.memory_space<vmem>>, vector<2x8xf32>
    %cst_502 = arith.constant dense<0.000000e+00> : vector<2x8xf32>
    %518 = tpu.matmul %515, %494, %cst_502 {dimension_numbers = #tpu.dot_dimension_numbers<[1], [0], [0], [1], [0, 0, 1, 1], [], []>} : vector<2x8xf32>, vector<8x8xf32>, vector<2x8xf32> -> vector<2x8xf32>
    %519 = arith.addf %517, %518 : vector<2x8xf32>
    %520 = math.tanh %519 : vector<2x8xf32>
    %c8_503 = arith.constant 8 : index
    %c0_504 = arith.constant 0 : index
    %521 = vector.load %arg11[%c8_503, %c0_504] : memref<60x8xf32, #tpu.memory_space<vmem>>, vector<2x8xf32>
    tpu.vector_store %arg11[%c8_503, %c0_504], %520 {strides = array<i32>} : memref<60x8xf32, #tpu.memory_space<vmem>>, vector<2x8xf32>,
    %c10_505 = arith.constant 10 : index
    %c0_506 = arith.constant 0 : index
    %522 = vector.load %arg12[%c10_505, %c0_506] : memref<60x8xf32, #tpu.memory_space<vmem>>, vector<2x8xf32>
    %cst_507 = arith.constant dense<0.000000e+00> : vector<2x8xf32>
    %523 = tpu.matmul %520, %494, %cst_507 {dimension_numbers = #tpu.dot_dimension_numbers<[1], [0], [0], [1], [0, 0, 1, 1], [], []>} : vector<2x8xf32>, vector<8x8xf32>, vector<2x8xf32> -> vector<2x8xf32>
    %524 = arith.addf %522, %523 : vector<2x8xf32>
    %525 = math.tanh %524 : vector<2x8xf32>
    %c10_508 = arith.constant 10 : index
    %c0_509 = arith.constant 0 : index
    %526 = vector.load %arg11[%c10_508, %c0_509] : memref<60x8xf32, #tpu.memory_space<vmem>>, vector<2x8xf32>
    tpu.vector_store %arg11[%c10_508, %c0_509], %525 {strides = array<i32>} : memref<60x8xf32, #tpu.memory_space<vmem>>, vector<2x8xf32>,
    %c12_510 = arith.constant 12 : index
    %c0_511 = arith.constant 0 : index
    %527 = vector.load %arg12[%c12_510, %c0_511] : memref<60x8xf32, #tpu.memory_space<vmem>>, vector<2x8xf32>
    %cst_512 = arith.constant dense<0.000000e+00> : vector<2x8xf32>
    %528 = tpu.matmul %525, %494, %cst_512 {dimension_numbers = #tpu.dot_dimension_numbers<[1], [0], [0], [1], [0, 0, 1, 1], [], []>} : vector<2x8xf32>, vector<8x8xf32>, vector<2x8xf32> -> vector<2x8xf32>
    %529 = arith.addf %527, %528 : vector<2x8xf32>
    %530 = math.tanh %529 : vector<2x8xf32>
    %c12_513 = arith.constant 12 : index
    %c0_514 = arith.constant 0 : index
    %531 = vector.load %arg11[%c12_513, %c0_514] : memref<60x8xf32, #tpu.memory_space<vmem>>, vector<2x8xf32>
    tpu.vector_store %arg11[%c12_513, %c0_514], %530 {strides = array<i32>} : memref<60x8xf32, #tpu.memory_space<vmem>>, vector<2x8xf32>,
    %c14_515 = arith.constant 14 : index
    %c0_516 = arith.constant 0 : index
    %532 = vector.load %arg12[%c14_515, %c0_516] : memref<60x8xf32, #tpu.memory_space<vmem>>, vector<2x8xf32>
    %cst_517 = arith.constant dense<0.000000e+00> : vector<2x8xf32>
    %533 = tpu.matmul %530, %494, %cst_517 {dimension_numbers = #tpu.dot_dimension_numbers<[1], [0], [0], [1], [0, 0, 1, 1], [], []>} : vector<2x8xf32>, vector<8x8xf32>, vector<2x8xf32> -> vector<2x8xf32>
    %534 = arith.addf %532, %533 : vector<2x8xf32>
    %535 = math.tanh %534 : vector<2x8xf32>
    %c14_518 = arith.constant 14 : index
    %c0_519 = arith.constant 0 : index
    %536 = vector.load %arg11[%c14_518, %c0_519] : memref<60x8xf32, #tpu.memory_space<vmem>>, vector<2x8xf32>
    tpu.vector_store %arg11[%c14_518, %c0_519], %535 {strides = array<i32>} : memref<60x8xf32, #tpu.memory_space<vmem>>, vector<2x8xf32>,
    %c16_520 = arith.constant 16 : index
    %c0_521 = arith.constant 0 : index
    %537 = vector.load %arg12[%c16_520, %c0_521] : memref<60x8xf32, #tpu.memory_space<vmem>>, vector<2x8xf32>
    %cst_522 = arith.constant dense<0.000000e+00> : vector<2x8xf32>
    %538 = tpu.matmul %535, %494, %cst_522 {dimension_numbers = #tpu.dot_dimension_numbers<[1], [0], [0], [1], [0, 0, 1, 1], [], []>} : vector<2x8xf32>, vector<8x8xf32>, vector<2x8xf32> -> vector<2x8xf32>
    %539 = arith.addf %537, %538 : vector<2x8xf32>
    %540 = math.tanh %539 : vector<2x8xf32>
    %c16_523 = arith.constant 16 : index
    %c0_524 = arith.constant 0 : index
    %541 = vector.load %arg11[%c16_523, %c0_524] : memref<60x8xf32, #tpu.memory_space<vmem>>, vector<2x8xf32>
    tpu.vector_store %arg11[%c16_523, %c0_524], %540 {strides = array<i32>} : memref<60x8xf32, #tpu.memory_space<vmem>>, vector<2x8xf32>,
    %c18_525 = arith.constant 18 : index
    %c0_526 = arith.constant 0 : index
    %542 = vector.load %arg12[%c18_525, %c0_526] : memref<60x8xf32, #tpu.memory_space<vmem>>, vector<2x8xf32>
    %cst_527 = arith.constant dense<0.000000e+00> : vector<2x8xf32>
    %543 = tpu.matmul %540, %494, %cst_527 {dimension_numbers = #tpu.dot_dimension_numbers<[1], [0], [0], [1], [0, 0, 1, 1], [], []>} : vector<2x8xf32>, vector<8x8xf32>, vector<2x8xf32> -> vector<2x8xf32>
    %544 = arith.addf %542, %543 : vector<2x8xf32>
    %545 = math.tanh %544 : vector<2x8xf32>
    %c18_528 = arith.constant 18 : index
    %c0_529 = arith.constant 0 : index
    %546 = vector.load %arg11[%c18_528, %c0_529] : memref<60x8xf32, #tpu.memory_space<vmem>>, vector<2x8xf32>
    tpu.vector_store %arg11[%c18_528, %c0_529], %545 {strides = array<i32>} : memref<60x8xf32, #tpu.memory_space<vmem>>, vector<2x8xf32>,
    %c20_530 = arith.constant 20 : index
    %c0_531 = arith.constant 0 : index
    %547 = vector.load %arg12[%c20_530, %c0_531] : memref<60x8xf32, #tpu.memory_space<vmem>>, vector<2x8xf32>
    %cst_532 = arith.constant dense<0.000000e+00> : vector<2x8xf32>
    %548 = tpu.matmul %545, %494, %cst_532 {dimension_numbers = #tpu.dot_dimension_numbers<[1], [0], [0], [1], [0, 0, 1, 1], [], []>} : vector<2x8xf32>, vector<8x8xf32>, vector<2x8xf32> -> vector<2x8xf32>
    %549 = arith.addf %547, %548 : vector<2x8xf32>
    %550 = math.tanh %549 : vector<2x8xf32>
    %c20_533 = arith.constant 20 : index
    %c0_534 = arith.constant 0 : index
    %551 = vector.load %arg11[%c20_533, %c0_534] : memref<60x8xf32, #tpu.memory_space<vmem>>, vector<2x8xf32>
    tpu.vector_store %arg11[%c20_533, %c0_534], %550 {strides = array<i32>} : memref<60x8xf32, #tpu.memory_space<vmem>>, vector<2x8xf32>,
    %c22_535 = arith.constant 22 : index
    %c0_536 = arith.constant 0 : index
    %552 = vector.load %arg12[%c22_535, %c0_536] : memref<60x8xf32, #tpu.memory_space<vmem>>, vector<2x8xf32>
    %cst_537 = arith.constant dense<0.000000e+00> : vector<2x8xf32>
    %553 = tpu.matmul %550, %494, %cst_537 {dimension_numbers = #tpu.dot_dimension_numbers<[1], [0], [0], [1], [0, 0, 1, 1], [], []>} : vector<2x8xf32>, vector<8x8xf32>, vector<2x8xf32> -> vector<2x8xf32>
    %554 = arith.addf %552, %553 : vector<2x8xf32>
    %555 = math.tanh %554 : vector<2x8xf32>
    %c22_538 = arith.constant 22 : index
    %c0_539 = arith.constant 0 : index
    %556 = vector.load %arg11[%c22_538, %c0_539] : memref<60x8xf32, #tpu.memory_space<vmem>>, vector<2x8xf32>
    tpu.vector_store %arg11[%c22_538, %c0_539], %555 {strides = array<i32>} : memref<60x8xf32, #tpu.memory_space<vmem>>, vector<2x8xf32>,
    %c24_540 = arith.constant 24 : index
    %c0_541 = arith.constant 0 : index
    %557 = vector.load %arg12[%c24_540, %c0_541] : memref<60x8xf32, #tpu.memory_space<vmem>>, vector<2x8xf32>
    %cst_542 = arith.constant dense<0.000000e+00> : vector<2x8xf32>
    %558 = tpu.matmul %555, %494, %cst_542 {dimension_numbers = #tpu.dot_dimension_numbers<[1], [0], [0], [1], [0, 0, 1, 1], [], []>} : vector<2x8xf32>, vector<8x8xf32>, vector<2x8xf32> -> vector<2x8xf32>
    %559 = arith.addf %557, %558 : vector<2x8xf32>
    %560 = math.tanh %559 : vector<2x8xf32>
    %c24_543 = arith.constant 24 : index
    %c0_544 = arith.constant 0 : index
    %561 = vector.load %arg11[%c24_543, %c0_544] : memref<60x8xf32, #tpu.memory_space<vmem>>, vector<2x8xf32>
    tpu.vector_store %arg11[%c24_543, %c0_544], %560 {strides = array<i32>} : memref<60x8xf32, #tpu.memory_space<vmem>>, vector<2x8xf32>,
    %c26_545 = arith.constant 26 : index
    %c0_546 = arith.constant 0 : index
    %562 = vector.load %arg12[%c26_545, %c0_546] : memref<60x8xf32, #tpu.memory_space<vmem>>, vector<2x8xf32>
    %cst_547 = arith.constant dense<0.000000e+00> : vector<2x8xf32>
    %563 = tpu.matmul %560, %494, %cst_547 {dimension_numbers = #tpu.dot_dimension_numbers<[1], [0], [0], [1], [0, 0, 1, 1], [], []>} : vector<2x8xf32>, vector<8x8xf32>, vector<2x8xf32> -> vector<2x8xf32>
    %564 = arith.addf %562, %563 : vector<2x8xf32>
    %565 = math.tanh %564 : vector<2x8xf32>
    %c26_548 = arith.constant 26 : index
    %c0_549 = arith.constant 0 : index
    %566 = vector.load %arg11[%c26_548, %c0_549] : memref<60x8xf32, #tpu.memory_space<vmem>>, vector<2x8xf32>
    tpu.vector_store %arg11[%c26_548, %c0_549], %565 {strides = array<i32>} : memref<60x8xf32, #tpu.memory_space<vmem>>, vector<2x8xf32>,
    %c28_550 = arith.constant 28 : index
    %c0_551 = arith.constant 0 : index
    %567 = vector.load %arg12[%c28_550, %c0_551] : memref<60x8xf32, #tpu.memory_space<vmem>>, vector<2x8xf32>
    %cst_552 = arith.constant dense<0.000000e+00> : vector<2x8xf32>
    %568 = tpu.matmul %565, %494, %cst_552 {dimension_numbers = #tpu.dot_dimension_numbers<[1], [0], [0], [1], [0, 0, 1, 1], [], []>} : vector<2x8xf32>, vector<8x8xf32>, vector<2x8xf32> -> vector<2x8xf32>
    %569 = arith.addf %567, %568 : vector<2x8xf32>
    %570 = math.tanh %569 : vector<2x8xf32>
    %c28_553 = arith.constant 28 : index
    %c0_554 = arith.constant 0 : index
    %571 = vector.load %arg11[%c28_553, %c0_554] : memref<60x8xf32, #tpu.memory_space<vmem>>, vector<2x8xf32>
    tpu.vector_store %arg11[%c28_553, %c0_554], %570 {strides = array<i32>} : memref<60x8xf32, #tpu.memory_space<vmem>>, vector<2x8xf32>,
    %c30_555 = arith.constant 30 : index
    %c0_556 = arith.constant 0 : index
    %572 = vector.load %arg12[%c30_555, %c0_556] : memref<60x8xf32, #tpu.memory_space<vmem>>, vector<2x8xf32>
    %cst_557 = arith.constant dense<0.000000e+00> : vector<2x8xf32>
    %573 = tpu.matmul %570, %494, %cst_557 {dimension_numbers = #tpu.dot_dimension_numbers<[1], [0], [0], [1], [0, 0, 1, 1], [], []>} : vector<2x8xf32>, vector<8x8xf32>, vector<2x8xf32> -> vector<2x8xf32>
    %574 = arith.addf %572, %573 : vector<2x8xf32>
    %575 = math.tanh %574 : vector<2x8xf32>
    %c30_558 = arith.constant 30 : index
    %c0_559 = arith.constant 0 : index
    %576 = vector.load %arg11[%c30_558, %c0_559] : memref<60x8xf32, #tpu.memory_space<vmem>>, vector<2x8xf32>
    tpu.vector_store %arg11[%c30_558, %c0_559], %575 {strides = array<i32>} : memref<60x8xf32, #tpu.memory_space<vmem>>, vector<2x8xf32>,
    %c32_560 = arith.constant 32 : index
    %c0_561 = arith.constant 0 : index
    %577 = vector.load %arg12[%c32_560, %c0_561] : memref<60x8xf32, #tpu.memory_space<vmem>>, vector<2x8xf32>
    %cst_562 = arith.constant dense<0.000000e+00> : vector<2x8xf32>
    %578 = tpu.matmul %575, %494, %cst_562 {dimension_numbers = #tpu.dot_dimension_numbers<[1], [0], [0], [1], [0, 0, 1, 1], [], []>} : vector<2x8xf32>, vector<8x8xf32>, vector<2x8xf32> -> vector<2x8xf32>
    %579 = arith.addf %577, %578 : vector<2x8xf32>
    %580 = math.tanh %579 : vector<2x8xf32>
    %c32_563 = arith.constant 32 : index
    %c0_564 = arith.constant 0 : index
    %581 = vector.load %arg11[%c32_563, %c0_564] : memref<60x8xf32, #tpu.memory_space<vmem>>, vector<2x8xf32>
    tpu.vector_store %arg11[%c32_563, %c0_564], %580 {strides = array<i32>} : memref<60x8xf32, #tpu.memory_space<vmem>>, vector<2x8xf32>,
    %c34_565 = arith.constant 34 : index
    %c0_566 = arith.constant 0 : index
    %582 = vector.load %arg12[%c34_565, %c0_566] : memref<60x8xf32, #tpu.memory_space<vmem>>, vector<2x8xf32>
    %cst_567 = arith.constant dense<0.000000e+00> : vector<2x8xf32>
    %583 = tpu.matmul %580, %494, %cst_567 {dimension_numbers = #tpu.dot_dimension_numbers<[1], [0], [0], [1], [0, 0, 1, 1], [], []>} : vector<2x8xf32>, vector<8x8xf32>, vector<2x8xf32> -> vector<2x8xf32>
    %584 = arith.addf %582, %583 : vector<2x8xf32>
    %585 = math.tanh %584 : vector<2x8xf32>
    %c34_568 = arith.constant 34 : index
    %c0_569 = arith.constant 0 : index
    %586 = vector.load %arg11[%c34_568, %c0_569] : memref<60x8xf32, #tpu.memory_space<vmem>>, vector<2x8xf32>
    tpu.vector_store %arg11[%c34_568, %c0_569], %585 {strides = array<i32>} : memref<60x8xf32, #tpu.memory_space<vmem>>, vector<2x8xf32>,
    %c36_570 = arith.constant 36 : index
    %c0_571 = arith.constant 0 : index
    %587 = vector.load %arg12[%c36_570, %c0_571] : memref<60x8xf32, #tpu.memory_space<vmem>>, vector<2x8xf32>
    %cst_572 = arith.constant dense<0.000000e+00> : vector<2x8xf32>
    %588 = tpu.matmul %585, %494, %cst_572 {dimension_numbers = #tpu.dot_dimension_numbers<[1], [0], [0], [1], [0, 0, 1, 1], [], []>} : vector<2x8xf32>, vector<8x8xf32>, vector<2x8xf32> -> vector<2x8xf32>
    %589 = arith.addf %587, %588 : vector<2x8xf32>
    %590 = math.tanh %589 : vector<2x8xf32>
    %c36_573 = arith.constant 36 : index
    %c0_574 = arith.constant 0 : index
    %591 = vector.load %arg11[%c36_573, %c0_574] : memref<60x8xf32, #tpu.memory_space<vmem>>, vector<2x8xf32>
    tpu.vector_store %arg11[%c36_573, %c0_574], %590 {strides = array<i32>} : memref<60x8xf32, #tpu.memory_space<vmem>>, vector<2x8xf32>,
    %c38_575 = arith.constant 38 : index
    %c0_576 = arith.constant 0 : index
    %592 = vector.load %arg12[%c38_575, %c0_576] : memref<60x8xf32, #tpu.memory_space<vmem>>, vector<2x8xf32>
    %cst_577 = arith.constant dense<0.000000e+00> : vector<2x8xf32>
    %593 = tpu.matmul %590, %494, %cst_577 {dimension_numbers = #tpu.dot_dimension_numbers<[1], [0], [0], [1], [0, 0, 1, 1], [], []>} : vector<2x8xf32>, vector<8x8xf32>, vector<2x8xf32> -> vector<2x8xf32>
    %594 = arith.addf %592, %593 : vector<2x8xf32>
    %595 = math.tanh %594 : vector<2x8xf32>
    %c38_578 = arith.constant 38 : index
    %c0_579 = arith.constant 0 : index
    %596 = vector.load %arg11[%c38_578, %c0_579] : memref<60x8xf32, #tpu.memory_space<vmem>>, vector<2x8xf32>
    tpu.vector_store %arg11[%c38_578, %c0_579], %595 {strides = array<i32>} : memref<60x8xf32, #tpu.memory_space<vmem>>, vector<2x8xf32>,
    %c40_580 = arith.constant 40 : index
    %c0_581 = arith.constant 0 : index
    %597 = vector.load %arg12[%c40_580, %c0_581] : memref<60x8xf32, #tpu.memory_space<vmem>>, vector<2x8xf32>
    %cst_582 = arith.constant dense<0.000000e+00> : vector<2x8xf32>
    %598 = tpu.matmul %595, %494, %cst_582 {dimension_numbers = #tpu.dot_dimension_numbers<[1], [0], [0], [1], [0, 0, 1, 1], [], []>} : vector<2x8xf32>, vector<8x8xf32>, vector<2x8xf32> -> vector<2x8xf32>
    %599 = arith.addf %597, %598 : vector<2x8xf32>
    %600 = math.tanh %599 : vector<2x8xf32>
    %c40_583 = arith.constant 40 : index
    %c0_584 = arith.constant 0 : index
    %601 = vector.load %arg11[%c40_583, %c0_584] : memref<60x8xf32, #tpu.memory_space<vmem>>, vector<2x8xf32>
    tpu.vector_store %arg11[%c40_583, %c0_584], %600 {strides = array<i32>} : memref<60x8xf32, #tpu.memory_space<vmem>>, vector<2x8xf32>,
    %c42_585 = arith.constant 42 : index
    %c0_586 = arith.constant 0 : index
    %602 = vector.load %arg12[%c42_585, %c0_586] : memref<60x8xf32, #tpu.memory_space<vmem>>, vector<2x8xf32>
    %cst_587 = arith.constant dense<0.000000e+00> : vector<2x8xf32>
    %603 = tpu.matmul %600, %494, %cst_587 {dimension_numbers = #tpu.dot_dimension_numbers<[1], [0], [0], [1], [0, 0, 1, 1], [], []>} : vector<2x8xf32>, vector<8x8xf32>, vector<2x8xf32> -> vector<2x8xf32>
    %604 = arith.addf %602, %603 : vector<2x8xf32>
    %605 = math.tanh %604 : vector<2x8xf32>
    %c42_588 = arith.constant 42 : index
    %c0_589 = arith.constant 0 : index
    %606 = vector.load %arg11[%c42_588, %c0_589] : memref<60x8xf32, #tpu.memory_space<vmem>>, vector<2x8xf32>
    tpu.vector_store %arg11[%c42_588, %c0_589], %605 {strides = array<i32>} : memref<60x8xf32, #tpu.memory_space<vmem>>, vector<2x8xf32>,
    %c44_590 = arith.constant 44 : index
    %c0_591 = arith.constant 0 : index
    %607 = vector.load %arg12[%c44_590, %c0_591] : memref<60x8xf32, #tpu.memory_space<vmem>>, vector<2x8xf32>
    %cst_592 = arith.constant dense<0.000000e+00> : vector<2x8xf32>
    %608 = tpu.matmul %605, %494, %cst_592 {dimension_numbers = #tpu.dot_dimension_numbers<[1], [0], [0], [1], [0, 0, 1, 1], [], []>} : vector<2x8xf32>, vector<8x8xf32>, vector<2x8xf32> -> vector<2x8xf32>
    %609 = arith.addf %607, %608 : vector<2x8xf32>
    %610 = math.tanh %609 : vector<2x8xf32>
    %c44_593 = arith.constant 44 : index
    %c0_594 = arith.constant 0 : index
    %611 = vector.load %arg11[%c44_593, %c0_594] : memref<60x8xf32, #tpu.memory_space<vmem>>, vector<2x8xf32>
    tpu.vector_store %arg11[%c44_593, %c0_594], %610 {strides = array<i32>} : memref<60x8xf32, #tpu.memory_space<vmem>>, vector<2x8xf32>,
    %c46_595 = arith.constant 46 : index
    %c0_596 = arith.constant 0 : index
    %612 = vector.load %arg12[%c46_595, %c0_596] : memref<60x8xf32, #tpu.memory_space<vmem>>, vector<2x8xf32>
    %cst_597 = arith.constant dense<0.000000e+00> : vector<2x8xf32>
    %613 = tpu.matmul %610, %494, %cst_597 {dimension_numbers = #tpu.dot_dimension_numbers<[1], [0], [0], [1], [0, 0, 1, 1], [], []>} : vector<2x8xf32>, vector<8x8xf32>, vector<2x8xf32> -> vector<2x8xf32>
    %614 = arith.addf %612, %613 : vector<2x8xf32>
    %615 = math.tanh %614 : vector<2x8xf32>
    %c46_598 = arith.constant 46 : index
    %c0_599 = arith.constant 0 : index
    %616 = vector.load %arg11[%c46_598, %c0_599] : memref<60x8xf32, #tpu.memory_space<vmem>>, vector<2x8xf32>
    tpu.vector_store %arg11[%c46_598, %c0_599], %615 {strides = array<i32>} : memref<60x8xf32, #tpu.memory_space<vmem>>, vector<2x8xf32>,
    %c48_600 = arith.constant 48 : index
    %c0_601 = arith.constant 0 : index
    %617 = vector.load %arg12[%c48_600, %c0_601] : memref<60x8xf32, #tpu.memory_space<vmem>>, vector<2x8xf32>
    %cst_602 = arith.constant dense<0.000000e+00> : vector<2x8xf32>
    %618 = tpu.matmul %615, %494, %cst_602 {dimension_numbers = #tpu.dot_dimension_numbers<[1], [0], [0], [1], [0, 0, 1, 1], [], []>} : vector<2x8xf32>, vector<8x8xf32>, vector<2x8xf32> -> vector<2x8xf32>
    %619 = arith.addf %617, %618 : vector<2x8xf32>
    %620 = math.tanh %619 : vector<2x8xf32>
    %c48_603 = arith.constant 48 : index
    %c0_604 = arith.constant 0 : index
    %621 = vector.load %arg11[%c48_603, %c0_604] : memref<60x8xf32, #tpu.memory_space<vmem>>, vector<2x8xf32>
    tpu.vector_store %arg11[%c48_603, %c0_604], %620 {strides = array<i32>} : memref<60x8xf32, #tpu.memory_space<vmem>>, vector<2x8xf32>,
    %c50_605 = arith.constant 50 : index
    %c0_606 = arith.constant 0 : index
    %622 = vector.load %arg12[%c50_605, %c0_606] : memref<60x8xf32, #tpu.memory_space<vmem>>, vector<2x8xf32>
    %cst_607 = arith.constant dense<0.000000e+00> : vector<2x8xf32>
    %623 = tpu.matmul %620, %494, %cst_607 {dimension_numbers = #tpu.dot_dimension_numbers<[1], [0], [0], [1], [0, 0, 1, 1], [], []>} : vector<2x8xf32>, vector<8x8xf32>, vector<2x8xf32> -> vector<2x8xf32>
    %624 = arith.addf %622, %623 : vector<2x8xf32>
    %625 = math.tanh %624 : vector<2x8xf32>
    %c50_608 = arith.constant 50 : index
    %c0_609 = arith.constant 0 : index
    %626 = vector.load %arg11[%c50_608, %c0_609] : memref<60x8xf32, #tpu.memory_space<vmem>>, vector<2x8xf32>
    tpu.vector_store %arg11[%c50_608, %c0_609], %625 {strides = array<i32>} : memref<60x8xf32, #tpu.memory_space<vmem>>, vector<2x8xf32>,
    %c52_610 = arith.constant 52 : index
    %c0_611 = arith.constant 0 : index
    %627 = vector.load %arg12[%c52_610, %c0_611] : memref<60x8xf32, #tpu.memory_space<vmem>>, vector<2x8xf32>
    %cst_612 = arith.constant dense<0.000000e+00> : vector<2x8xf32>
    %628 = tpu.matmul %625, %494, %cst_612 {dimension_numbers = #tpu.dot_dimension_numbers<[1], [0], [0], [1], [0, 0, 1, 1], [], []>} : vector<2x8xf32>, vector<8x8xf32>, vector<2x8xf32> -> vector<2x8xf32>
    %629 = arith.addf %627, %628 : vector<2x8xf32>
    %630 = math.tanh %629 : vector<2x8xf32>
    %c52_613 = arith.constant 52 : index
    %c0_614 = arith.constant 0 : index
    %631 = vector.load %arg11[%c52_613, %c0_614] : memref<60x8xf32, #tpu.memory_space<vmem>>, vector<2x8xf32>
    tpu.vector_store %arg11[%c52_613, %c0_614], %630 {strides = array<i32>} : memref<60x8xf32, #tpu.memory_space<vmem>>, vector<2x8xf32>,
    %c54_615 = arith.constant 54 : index
    %c0_616 = arith.constant 0 : index
    %632 = vector.load %arg12[%c54_615, %c0_616] : memref<60x8xf32, #tpu.memory_space<vmem>>, vector<2x8xf32>
    %cst_617 = arith.constant dense<0.000000e+00> : vector<2x8xf32>
    %633 = tpu.matmul %630, %494, %cst_617 {dimension_numbers = #tpu.dot_dimension_numbers<[1], [0], [0], [1], [0, 0, 1, 1], [], []>} : vector<2x8xf32>, vector<8x8xf32>, vector<2x8xf32> -> vector<2x8xf32>
    %634 = arith.addf %632, %633 : vector<2x8xf32>
    %635 = math.tanh %634 : vector<2x8xf32>
    %c54_618 = arith.constant 54 : index
    %c0_619 = arith.constant 0 : index
    %636 = vector.load %arg11[%c54_618, %c0_619] : memref<60x8xf32, #tpu.memory_space<vmem>>, vector<2x8xf32>
    tpu.vector_store %arg11[%c54_618, %c0_619], %635 {strides = array<i32>} : memref<60x8xf32, #tpu.memory_space<vmem>>, vector<2x8xf32>,
    %c56_620 = arith.constant 56 : index
    %c0_621 = arith.constant 0 : index
    %637 = vector.load %arg12[%c56_620, %c0_621] : memref<60x8xf32, #tpu.memory_space<vmem>>, vector<2x8xf32>
    %cst_622 = arith.constant dense<0.000000e+00> : vector<2x8xf32>
    %638 = tpu.matmul %635, %494, %cst_622 {dimension_numbers = #tpu.dot_dimension_numbers<[1], [0], [0], [1], [0, 0, 1, 1], [], []>} : vector<2x8xf32>, vector<8x8xf32>, vector<2x8xf32> -> vector<2x8xf32>
    %639 = arith.addf %637, %638 : vector<2x8xf32>
    %640 = math.tanh %639 : vector<2x8xf32>
    %c56_623 = arith.constant 56 : index
    %c0_624 = arith.constant 0 : index
    %641 = vector.load %arg11[%c56_623, %c0_624] : memref<60x8xf32, #tpu.memory_space<vmem>>, vector<2x8xf32>
    tpu.vector_store %arg11[%c56_623, %c0_624], %640 {strides = array<i32>} : memref<60x8xf32, #tpu.memory_space<vmem>>, vector<2x8xf32>,
    %c58_625 = arith.constant 58 : index
    %c0_626 = arith.constant 0 : index
    %642 = vector.load %arg12[%c58_625, %c0_626] : memref<60x8xf32, #tpu.memory_space<vmem>>, vector<2x8xf32>
    %cst_627 = arith.constant dense<0.000000e+00> : vector<2x8xf32>
    %643 = tpu.matmul %640, %494, %cst_627 {dimension_numbers = #tpu.dot_dimension_numbers<[1], [0], [0], [1], [0, 0, 1, 1], [], []>} : vector<2x8xf32>, vector<8x8xf32>, vector<2x8xf32> -> vector<2x8xf32>
    %644 = arith.addf %642, %643 : vector<2x8xf32>
    %645 = math.tanh %644 : vector<2x8xf32>
    %c58_628 = arith.constant 58 : index
    %c0_629 = arith.constant 0 : index
    %646 = vector.load %arg11[%c58_628, %c0_629] : memref<60x8xf32, #tpu.memory_space<vmem>>, vector<2x8xf32>
    tpu.vector_store %arg11[%c58_628, %c0_629], %645 {strides = array<i32>} : memref<60x8xf32, #tpu.memory_space<vmem>>, vector<2x8xf32>,
    %c4_630 = arith.constant 4 : index
    %c0_631 = arith.constant 0 : index
    %647 = vector.load %arg5[%c4_630, %c0_631] : memref<5x8xf32, #tpu.memory_space<vmem>>, vector<1x8xf32>
    %c0_632 = arith.constant 0 : index
    %c0_633 = arith.constant 0 : index
    %648 = vector.load %arg11[%c0_632, %c0_633] : memref<60x8xf32, #tpu.memory_space<vmem>>, vector<60x8xf32>
    %c3_634 = arith.constant 3 : index
    %c0_635 = arith.constant 0 : index
    %c0_636 = arith.constant 0 : index
    %649 = vector.load %arg3[%c3_634, %c0_635, %c0_636] : memref<4x8x8xf32, #tpu.memory_space<vmem>>, vector<1x8x8xf32>
    %650 = vector.shape_cast %649 : vector<1x8x8xf32> to vector<8x8xf32>
    %cst_637 = arith.constant dense<0.000000e+00> : vector<60x8xf32>
    %651 = tpu.matmul %648, %650, %cst_637 {dimension_numbers = #tpu.dot_dimension_numbers<[1], [0], [0], [1], [0, 0, 1, 1], [], []>} : vector<60x8xf32>, vector<8x8xf32>, vector<60x8xf32> -> vector<60x8xf32>
    %652 = vector.broadcast %647 : vector<1x8xf32> to vector<60x8xf32>
    %653 = arith.addf %651, %652 : vector<60x8xf32>
    %c0_638 = arith.constant 0 : index
    %c0_639 = arith.constant 0 : index
    %654 = vector.load %arg12[%c0_638, %c0_639] : memref<60x8xf32, #tpu.memory_space<vmem>>, vector<60x8xf32>
    tpu.vector_store %arg12[%c0_638, %c0_639], %653 {strides = array<i32>} : memref<60x8xf32, #tpu.memory_space<vmem>>, vector<60x8xf32>,
    %c4_640 = arith.constant 4 : index
    %c0_641 = arith.constant 0 : index
    %c0_642 = arith.constant 0 : index
    %655 = vector.load %arg4[%c4_640, %c0_641, %c0_642] : memref<5x8x8xf32, #tpu.memory_space<vmem>>, vector<1x8x8xf32>
    %656 = vector.shape_cast %655 : vector<1x8x8xf32> to vector<8x8xf32>
    %c4_643 = arith.constant 4 : index
    %c0_644 = arith.constant 0 : index
    %c0_645 = arith.constant 0 : index
    %657 = vector.load %arg1[%c4_643, %c0_644, %c0_645] : memref<5x2x8xf32, #tpu.memory_space<vmem>>, vector<1x2x8xf32>
    %658 = vector.shape_cast %657 : vector<1x2x8xf32> to vector<2x8xf32>
    %c0_646 = arith.constant 0 : index
    %c0_647 = arith.constant 0 : index
    %659 = vector.load %arg12[%c0_646, %c0_647] : memref<60x8xf32, #tpu.memory_space<vmem>>, vector<2x8xf32>
    %cst_648 = arith.constant dense<0.000000e+00> : vector<2x8xf32>
    %660 = tpu.matmul %658, %656, %cst_648 {dimension_numbers = #tpu.dot_dimension_numbers<[1], [0], [0], [1], [0, 0, 1, 1], [], []>} : vector<2x8xf32>, vector<8x8xf32>, vector<2x8xf32> -> vector<2x8xf32>
    %661 = arith.addf %659, %660 : vector<2x8xf32>
    %662 = math.tanh %661 : vector<2x8xf32>
    %c0_649 = arith.constant 0 : index
    %c0_650 = arith.constant 0 : index
    %663 = vector.load %arg13[%c0_649, %c0_650] : memref<2x240xf32, #tpu.memory_space<vmem>>, vector<2x8xf32>
    tpu.vector_store %arg13[%c0_649, %c0_650], %662 {strides = array<i32>} : memref<2x240xf32, #tpu.memory_space<vmem>>, vector<2x8xf32>,
    %c2_651 = arith.constant 2 : index
    %c0_652 = arith.constant 0 : index
    %664 = vector.load %arg12[%c2_651, %c0_652] : memref<60x8xf32, #tpu.memory_space<vmem>>, vector<2x8xf32>
    %cst_653 = arith.constant dense<0.000000e+00> : vector<2x8xf32>
    %665 = tpu.matmul %662, %656, %cst_653 {dimension_numbers = #tpu.dot_dimension_numbers<[1], [0], [0], [1], [0, 0, 1, 1], [], []>} : vector<2x8xf32>, vector<8x8xf32>, vector<2x8xf32> -> vector<2x8xf32>
    %666 = arith.addf %664, %665 : vector<2x8xf32>
    %667 = math.tanh %666 : vector<2x8xf32>
    %c0_654 = arith.constant 0 : index
    %c8_655 = arith.constant 8 : index
    %668 = vector.load %arg13[%c0_654, %c8_655] : memref<2x240xf32, #tpu.memory_space<vmem>>, vector<2x8xf32>
    tpu.vector_store %arg13[%c0_654, %c8_655], %667 {strides = array<i32>} : memref<2x240xf32, #tpu.memory_space<vmem>>, vector<2x8xf32>,
    %c4_656 = arith.constant 4 : index
    %c0_657 = arith.constant 0 : index
    %669 = vector.load %arg12[%c4_656, %c0_657] : memref<60x8xf32, #tpu.memory_space<vmem>>, vector<2x8xf32>
    %cst_658 = arith.constant dense<0.000000e+00> : vector<2x8xf32>
    %670 = tpu.matmul %667, %656, %cst_658 {dimension_numbers = #tpu.dot_dimension_numbers<[1], [0], [0], [1], [0, 0, 1, 1], [], []>} : vector<2x8xf32>, vector<8x8xf32>, vector<2x8xf32> -> vector<2x8xf32>
    %671 = arith.addf %669, %670 : vector<2x8xf32>
    %672 = math.tanh %671 : vector<2x8xf32>
    %c0_659 = arith.constant 0 : index
    %c16_660 = arith.constant 16 : index
    %673 = vector.load %arg13[%c0_659, %c16_660] : memref<2x240xf32, #tpu.memory_space<vmem>>, vector<2x8xf32>
    tpu.vector_store %arg13[%c0_659, %c16_660], %672 {strides = array<i32>} : memref<2x240xf32, #tpu.memory_space<vmem>>, vector<2x8xf32>,
    %c6_661 = arith.constant 6 : index
    %c0_662 = arith.constant 0 : index
    %674 = vector.load %arg12[%c6_661, %c0_662] : memref<60x8xf32, #tpu.memory_space<vmem>>, vector<2x8xf32>
    %cst_663 = arith.constant dense<0.000000e+00> : vector<2x8xf32>
    %675 = tpu.matmul %672, %656, %cst_663 {dimension_numbers = #tpu.dot_dimension_numbers<[1], [0], [0], [1], [0, 0, 1, 1], [], []>} : vector<2x8xf32>, vector<8x8xf32>, vector<2x8xf32> -> vector<2x8xf32>
    %676 = arith.addf %674, %675 : vector<2x8xf32>
    %677 = math.tanh %676 : vector<2x8xf32>
    %c0_664 = arith.constant 0 : index
    %c24_665 = arith.constant 24 : index
    %678 = vector.load %arg13[%c0_664, %c24_665] : memref<2x240xf32, #tpu.memory_space<vmem>>, vector<2x8xf32>
    tpu.vector_store %arg13[%c0_664, %c24_665], %677 {strides = array<i32>} : memref<2x240xf32, #tpu.memory_space<vmem>>, vector<2x8xf32>,
    %c8_666 = arith.constant 8 : index
    %c0_667 = arith.constant 0 : index
    %679 = vector.load %arg12[%c8_666, %c0_667] : memref<60x8xf32, #tpu.memory_space<vmem>>, vector<2x8xf32>
    %cst_668 = arith.constant dense<0.000000e+00> : vector<2x8xf32>
    %680 = tpu.matmul %677, %656, %cst_668 {dimension_numbers = #tpu.dot_dimension_numbers<[1], [0], [0], [1], [0, 0, 1, 1], [], []>} : vector<2x8xf32>, vector<8x8xf32>, vector<2x8xf32> -> vector<2x8xf32>
    %681 = arith.addf %679, %680 : vector<2x8xf32>
    %682 = math.tanh %681 : vector<2x8xf32>
    %c0_669 = arith.constant 0 : index
    %c32_670 = arith.constant 32 : index
    %683 = vector.load %arg13[%c0_669, %c32_670] : memref<2x240xf32, #tpu.memory_space<vmem>>, vector<2x8xf32>
    tpu.vector_store %arg13[%c0_669, %c32_670], %682 {strides = array<i32>} : memref<2x240xf32, #tpu.memory_space<vmem>>, vector<2x8xf32>,
    %c10_671 = arith.constant 10 : index
    %c0_672 = arith.constant 0 : index
    %684 = vector.load %arg12[%c10_671, %c0_672] : memref<60x8xf32, #tpu.memory_space<vmem>>, vector<2x8xf32>
    %cst_673 = arith.constant dense<0.000000e+00> : vector<2x8xf32>
    %685 = tpu.matmul %682, %656, %cst_673 {dimension_numbers = #tpu.dot_dimension_numbers<[1], [0], [0], [1], [0, 0, 1, 1], [], []>} : vector<2x8xf32>, vector<8x8xf32>, vector<2x8xf32> -> vector<2x8xf32>
    %686 = arith.addf %684, %685 : vector<2x8xf32>
    %687 = math.tanh %686 : vector<2x8xf32>
    %c0_674 = arith.constant 0 : index
    %c40_675 = arith.constant 40 : index
    %688 = vector.load %arg13[%c0_674, %c40_675] : memref<2x240xf32, #tpu.memory_space<vmem>>, vector<2x8xf32>
    tpu.vector_store %arg13[%c0_674, %c40_675], %687 {strides = array<i32>} : memref<2x240xf32, #tpu.memory_space<vmem>>, vector<2x8xf32>,
    %c12_676 = arith.constant 12 : index
    %c0_677 = arith.constant 0 : index
    %689 = vector.load %arg12[%c12_676, %c0_677] : memref<60x8xf32, #tpu.memory_space<vmem>>, vector<2x8xf32>
    %cst_678 = arith.constant dense<0.000000e+00> : vector<2x8xf32>
    %690 = tpu.matmul %687, %656, %cst_678 {dimension_numbers = #tpu.dot_dimension_numbers<[1], [0], [0], [1], [0, 0, 1, 1], [], []>} : vector<2x8xf32>, vector<8x8xf32>, vector<2x8xf32> -> vector<2x8xf32>
    %691 = arith.addf %689, %690 : vector<2x8xf32>
    %692 = math.tanh %691 : vector<2x8xf32>
    %c0_679 = arith.constant 0 : index
    %c48_680 = arith.constant 48 : index
    %693 = vector.load %arg13[%c0_679, %c48_680] : memref<2x240xf32, #tpu.memory_space<vmem>>, vector<2x8xf32>
    tpu.vector_store %arg13[%c0_679, %c48_680], %692 {strides = array<i32>} : memref<2x240xf32, #tpu.memory_space<vmem>>, vector<2x8xf32>,
    %c14_681 = arith.constant 14 : index
    %c0_682 = arith.constant 0 : index
    %694 = vector.load %arg12[%c14_681, %c0_682] : memref<60x8xf32, #tpu.memory_space<vmem>>, vector<2x8xf32>
    %cst_683 = arith.constant dense<0.000000e+00> : vector<2x8xf32>
    %695 = tpu.matmul %692, %656, %cst_683 {dimension_numbers = #tpu.dot_dimension_numbers<[1], [0], [0], [1], [0, 0, 1, 1], [], []>} : vector<2x8xf32>, vector<8x8xf32>, vector<2x8xf32> -> vector<2x8xf32>
    %696 = arith.addf %694, %695 : vector<2x8xf32>
    %697 = math.tanh %696 : vector<2x8xf32>
    %c0_684 = arith.constant 0 : index
    %c56_685 = arith.constant 56 : index
    %698 = vector.load %arg13[%c0_684, %c56_685] : memref<2x240xf32, #tpu.memory_space<vmem>>, vector<2x8xf32>
    tpu.vector_store %arg13[%c0_684, %c56_685], %697 {strides = array<i32>} : memref<2x240xf32, #tpu.memory_space<vmem>>, vector<2x8xf32>,
    %c16_686 = arith.constant 16 : index
    %c0_687 = arith.constant 0 : index
    %699 = vector.load %arg12[%c16_686, %c0_687] : memref<60x8xf32, #tpu.memory_space<vmem>>, vector<2x8xf32>
    %cst_688 = arith.constant dense<0.000000e+00> : vector<2x8xf32>
    %700 = tpu.matmul %697, %656, %cst_688 {dimension_numbers = #tpu.dot_dimension_numbers<[1], [0], [0], [1], [0, 0, 1, 1], [], []>} : vector<2x8xf32>, vector<8x8xf32>, vector<2x8xf32> -> vector<2x8xf32>
    %701 = arith.addf %699, %700 : vector<2x8xf32>
    %702 = math.tanh %701 : vector<2x8xf32>
    %c0_689 = arith.constant 0 : index
    %c64 = arith.constant 64 : index
    %703 = vector.load %arg13[%c0_689, %c64] : memref<2x240xf32, #tpu.memory_space<vmem>>, vector<2x8xf32>
    tpu.vector_store %arg13[%c0_689, %c64], %702 {strides = array<i32>} : memref<2x240xf32, #tpu.memory_space<vmem>>, vector<2x8xf32>,
    %c18_690 = arith.constant 18 : index
    %c0_691 = arith.constant 0 : index
    %704 = vector.load %arg12[%c18_690, %c0_691] : memref<60x8xf32, #tpu.memory_space<vmem>>, vector<2x8xf32>
    %cst_692 = arith.constant dense<0.000000e+00> : vector<2x8xf32>
    %705 = tpu.matmul %702, %656, %cst_692 {dimension_numbers = #tpu.dot_dimension_numbers<[1], [0], [0], [1], [0, 0, 1, 1], [], []>} : vector<2x8xf32>, vector<8x8xf32>, vector<2x8xf32> -> vector<2x8xf32>
    %706 = arith.addf %704, %705 : vector<2x8xf32>
    %707 = math.tanh %706 : vector<2x8xf32>
    %c0_693 = arith.constant 0 : index
    %c72 = arith.constant 72 : index
    %708 = vector.load %arg13[%c0_693, %c72] : memref<2x240xf32, #tpu.memory_space<vmem>>, vector<2x8xf32>
    tpu.vector_store %arg13[%c0_693, %c72], %707 {strides = array<i32>} : memref<2x240xf32, #tpu.memory_space<vmem>>, vector<2x8xf32>,
    %c20_694 = arith.constant 20 : index
    %c0_695 = arith.constant 0 : index
    %709 = vector.load %arg12[%c20_694, %c0_695] : memref<60x8xf32, #tpu.memory_space<vmem>>, vector<2x8xf32>
    %cst_696 = arith.constant dense<0.000000e+00> : vector<2x8xf32>
    %710 = tpu.matmul %707, %656, %cst_696 {dimension_numbers = #tpu.dot_dimension_numbers<[1], [0], [0], [1], [0, 0, 1, 1], [], []>} : vector<2x8xf32>, vector<8x8xf32>, vector<2x8xf32> -> vector<2x8xf32>
    %711 = arith.addf %709, %710 : vector<2x8xf32>
    %712 = math.tanh %711 : vector<2x8xf32>
    %c0_697 = arith.constant 0 : index
    %c80 = arith.constant 80 : index
    %713 = vector.load %arg13[%c0_697, %c80] : memref<2x240xf32, #tpu.memory_space<vmem>>, vector<2x8xf32>
    tpu.vector_store %arg13[%c0_697, %c80], %712 {strides = array<i32>} : memref<2x240xf32, #tpu.memory_space<vmem>>, vector<2x8xf32>,
    %c22_698 = arith.constant 22 : index
    %c0_699 = arith.constant 0 : index
    %714 = vector.load %arg12[%c22_698, %c0_699] : memref<60x8xf32, #tpu.memory_space<vmem>>, vector<2x8xf32>
    %cst_700 = arith.constant dense<0.000000e+00> : vector<2x8xf32>
    %715 = tpu.matmul %712, %656, %cst_700 {dimension_numbers = #tpu.dot_dimension_numbers<[1], [0], [0], [1], [0, 0, 1, 1], [], []>} : vector<2x8xf32>, vector<8x8xf32>, vector<2x8xf32> -> vector<2x8xf32>
    %716 = arith.addf %714, %715 : vector<2x8xf32>
    %717 = math.tanh %716 : vector<2x8xf32>
    %c0_701 = arith.constant 0 : index
    %c88 = arith.constant 88 : index
    %718 = vector.load %arg13[%c0_701, %c88] : memref<2x240xf32, #tpu.memory_space<vmem>>, vector<2x8xf32>
    tpu.vector_store %arg13[%c0_701, %c88], %717 {strides = array<i32>} : memref<2x240xf32, #tpu.memory_space<vmem>>, vector<2x8xf32>,
    %c24_702 = arith.constant 24 : index
    %c0_703 = arith.constant 0 : index
    %719 = vector.load %arg12[%c24_702, %c0_703] : memref<60x8xf32, #tpu.memory_space<vmem>>, vector<2x8xf32>
    %cst_704 = arith.constant dense<0.000000e+00> : vector<2x8xf32>
    %720 = tpu.matmul %717, %656, %cst_704 {dimension_numbers = #tpu.dot_dimension_numbers<[1], [0], [0], [1], [0, 0, 1, 1], [], []>} : vector<2x8xf32>, vector<8x8xf32>, vector<2x8xf32> -> vector<2x8xf32>
    %721 = arith.addf %719, %720 : vector<2x8xf32>
    %722 = math.tanh %721 : vector<2x8xf32>
    %c0_705 = arith.constant 0 : index
    %c96 = arith.constant 96 : index
    %723 = vector.load %arg13[%c0_705, %c96] : memref<2x240xf32, #tpu.memory_space<vmem>>, vector<2x8xf32>
    tpu.vector_store %arg13[%c0_705, %c96], %722 {strides = array<i32>} : memref<2x240xf32, #tpu.memory_space<vmem>>, vector<2x8xf32>,
    %c26_706 = arith.constant 26 : index
    %c0_707 = arith.constant 0 : index
    %724 = vector.load %arg12[%c26_706, %c0_707] : memref<60x8xf32, #tpu.memory_space<vmem>>, vector<2x8xf32>
    %cst_708 = arith.constant dense<0.000000e+00> : vector<2x8xf32>
    %725 = tpu.matmul %722, %656, %cst_708 {dimension_numbers = #tpu.dot_dimension_numbers<[1], [0], [0], [1], [0, 0, 1, 1], [], []>} : vector<2x8xf32>, vector<8x8xf32>, vector<2x8xf32> -> vector<2x8xf32>
    %726 = arith.addf %724, %725 : vector<2x8xf32>
    %727 = math.tanh %726 : vector<2x8xf32>
    %c0_709 = arith.constant 0 : index
    %c104 = arith.constant 104 : index
    %728 = vector.load %arg13[%c0_709, %c104] : memref<2x240xf32, #tpu.memory_space<vmem>>, vector<2x8xf32>
    tpu.vector_store %arg13[%c0_709, %c104], %727 {strides = array<i32>} : memref<2x240xf32, #tpu.memory_space<vmem>>, vector<2x8xf32>,
    %c28_710 = arith.constant 28 : index
    %c0_711 = arith.constant 0 : index
    %729 = vector.load %arg12[%c28_710, %c0_711] : memref<60x8xf32, #tpu.memory_space<vmem>>, vector<2x8xf32>
    %cst_712 = arith.constant dense<0.000000e+00> : vector<2x8xf32>
    %730 = tpu.matmul %727, %656, %cst_712 {dimension_numbers = #tpu.dot_dimension_numbers<[1], [0], [0], [1], [0, 0, 1, 1], [], []>} : vector<2x8xf32>, vector<8x8xf32>, vector<2x8xf32> -> vector<2x8xf32>
    %731 = arith.addf %729, %730 : vector<2x8xf32>
    %732 = math.tanh %731 : vector<2x8xf32>
    %c0_713 = arith.constant 0 : index
    %c112 = arith.constant 112 : index
    %733 = vector.load %arg13[%c0_713, %c112] : memref<2x240xf32, #tpu.memory_space<vmem>>, vector<2x8xf32>
    tpu.vector_store %arg13[%c0_713, %c112], %732 {strides = array<i32>} : memref<2x240xf32, #tpu.memory_space<vmem>>, vector<2x8xf32>,
    %c30_714 = arith.constant 30 : index
    %c0_715 = arith.constant 0 : index
    %734 = vector.load %arg12[%c30_714, %c0_715] : memref<60x8xf32, #tpu.memory_space<vmem>>, vector<2x8xf32>
    %cst_716 = arith.constant dense<0.000000e+00> : vector<2x8xf32>
    %735 = tpu.matmul %732, %656, %cst_716 {dimension_numbers = #tpu.dot_dimension_numbers<[1], [0], [0], [1], [0, 0, 1, 1], [], []>} : vector<2x8xf32>, vector<8x8xf32>, vector<2x8xf32> -> vector<2x8xf32>
    %736 = arith.addf %734, %735 : vector<2x8xf32>
    %737 = math.tanh %736 : vector<2x8xf32>
    %c0_717 = arith.constant 0 : index
    %c120 = arith.constant 120 : index
    %738 = vector.load %arg13[%c0_717, %c120] : memref<2x240xf32, #tpu.memory_space<vmem>>, vector<2x8xf32>
    tpu.vector_store %arg13[%c0_717, %c120], %737 {strides = array<i32>} : memref<2x240xf32, #tpu.memory_space<vmem>>, vector<2x8xf32>,
    %c32_718 = arith.constant 32 : index
    %c0_719 = arith.constant 0 : index
    %739 = vector.load %arg12[%c32_718, %c0_719] : memref<60x8xf32, #tpu.memory_space<vmem>>, vector<2x8xf32>
    %cst_720 = arith.constant dense<0.000000e+00> : vector<2x8xf32>
    %740 = tpu.matmul %737, %656, %cst_720 {dimension_numbers = #tpu.dot_dimension_numbers<[1], [0], [0], [1], [0, 0, 1, 1], [], []>} : vector<2x8xf32>, vector<8x8xf32>, vector<2x8xf32> -> vector<2x8xf32>
    %741 = arith.addf %739, %740 : vector<2x8xf32>
    %742 = math.tanh %741 : vector<2x8xf32>
    %c0_721 = arith.constant 0 : index
    %c128 = arith.constant 128 : index
    %743 = vector.load %arg13[%c0_721, %c128] : memref<2x240xf32, #tpu.memory_space<vmem>>, vector<2x8xf32>
    tpu.vector_store %arg13[%c0_721, %c128], %742 {strides = array<i32>} : memref<2x240xf32, #tpu.memory_space<vmem>>, vector<2x8xf32>,
    %c34_722 = arith.constant 34 : index
    %c0_723 = arith.constant 0 : index
    %744 = vector.load %arg12[%c34_722, %c0_723] : memref<60x8xf32, #tpu.memory_space<vmem>>, vector<2x8xf32>
    %cst_724 = arith.constant dense<0.000000e+00> : vector<2x8xf32>
    %745 = tpu.matmul %742, %656, %cst_724 {dimension_numbers = #tpu.dot_dimension_numbers<[1], [0], [0], [1], [0, 0, 1, 1], [], []>} : vector<2x8xf32>, vector<8x8xf32>, vector<2x8xf32> -> vector<2x8xf32>
    %746 = arith.addf %744, %745 : vector<2x8xf32>
    %747 = math.tanh %746 : vector<2x8xf32>
    %c0_725 = arith.constant 0 : index
    %c136 = arith.constant 136 : index
    %748 = vector.load %arg13[%c0_725, %c136] : memref<2x240xf32, #tpu.memory_space<vmem>>, vector<2x8xf32>
    tpu.vector_store %arg13[%c0_725, %c136], %747 {strides = array<i32>} : memref<2x240xf32, #tpu.memory_space<vmem>>, vector<2x8xf32>,
    %c36_726 = arith.constant 36 : index
    %c0_727 = arith.constant 0 : index
    %749 = vector.load %arg12[%c36_726, %c0_727] : memref<60x8xf32, #tpu.memory_space<vmem>>, vector<2x8xf32>
    %cst_728 = arith.constant dense<0.000000e+00> : vector<2x8xf32>
    %750 = tpu.matmul %747, %656, %cst_728 {dimension_numbers = #tpu.dot_dimension_numbers<[1], [0], [0], [1], [0, 0, 1, 1], [], []>} : vector<2x8xf32>, vector<8x8xf32>, vector<2x8xf32> -> vector<2x8xf32>
    %751 = arith.addf %749, %750 : vector<2x8xf32>
    %752 = math.tanh %751 : vector<2x8xf32>
    %c0_729 = arith.constant 0 : index
    %c144 = arith.constant 144 : index
    %753 = vector.load %arg13[%c0_729, %c144] : memref<2x240xf32, #tpu.memory_space<vmem>>, vector<2x8xf32>
    tpu.vector_store %arg13[%c0_729, %c144], %752 {strides = array<i32>} : memref<2x240xf32, #tpu.memory_space<vmem>>, vector<2x8xf32>,
    %c38_730 = arith.constant 38 : index
    %c0_731 = arith.constant 0 : index
    %754 = vector.load %arg12[%c38_730, %c0_731] : memref<60x8xf32, #tpu.memory_space<vmem>>, vector<2x8xf32>
    %cst_732 = arith.constant dense<0.000000e+00> : vector<2x8xf32>
    %755 = tpu.matmul %752, %656, %cst_732 {dimension_numbers = #tpu.dot_dimension_numbers<[1], [0], [0], [1], [0, 0, 1, 1], [], []>} : vector<2x8xf32>, vector<8x8xf32>, vector<2x8xf32> -> vector<2x8xf32>
    %756 = arith.addf %754, %755 : vector<2x8xf32>
    %757 = math.tanh %756 : vector<2x8xf32>
    %c0_733 = arith.constant 0 : index
    %c152 = arith.constant 152 : index
    %758 = vector.load %arg13[%c0_733, %c152] : memref<2x240xf32, #tpu.memory_space<vmem>>, vector<2x8xf32>
    tpu.vector_store %arg13[%c0_733, %c152], %757 {strides = array<i32>} : memref<2x240xf32, #tpu.memory_space<vmem>>, vector<2x8xf32>,
    %c40_734 = arith.constant 40 : index
    %c0_735 = arith.constant 0 : index
    %759 = vector.load %arg12[%c40_734, %c0_735] : memref<60x8xf32, #tpu.memory_space<vmem>>, vector<2x8xf32>
    %cst_736 = arith.constant dense<0.000000e+00> : vector<2x8xf32>
    %760 = tpu.matmul %757, %656, %cst_736 {dimension_numbers = #tpu.dot_dimension_numbers<[1], [0], [0], [1], [0, 0, 1, 1], [], []>} : vector<2x8xf32>, vector<8x8xf32>, vector<2x8xf32> -> vector<2x8xf32>
    %761 = arith.addf %759, %760 : vector<2x8xf32>
    %762 = math.tanh %761 : vector<2x8xf32>
    %c0_737 = arith.constant 0 : index
    %c160 = arith.constant 160 : index
    %763 = vector.load %arg13[%c0_737, %c160] : memref<2x240xf32, #tpu.memory_space<vmem>>, vector<2x8xf32>
    tpu.vector_store %arg13[%c0_737, %c160], %762 {strides = array<i32>} : memref<2x240xf32, #tpu.memory_space<vmem>>, vector<2x8xf32>,
    %c42_738 = arith.constant 42 : index
    %c0_739 = arith.constant 0 : index
    %764 = vector.load %arg12[%c42_738, %c0_739] : memref<60x8xf32, #tpu.memory_space<vmem>>, vector<2x8xf32>
    %cst_740 = arith.constant dense<0.000000e+00> : vector<2x8xf32>
    %765 = tpu.matmul %762, %656, %cst_740 {dimension_numbers = #tpu.dot_dimension_numbers<[1], [0], [0], [1], [0, 0, 1, 1], [], []>} : vector<2x8xf32>, vector<8x8xf32>, vector<2x8xf32> -> vector<2x8xf32>
    %766 = arith.addf %764, %765 : vector<2x8xf32>
    %767 = math.tanh %766 : vector<2x8xf32>
    %c0_741 = arith.constant 0 : index
    %c168 = arith.constant 168 : index
    %768 = vector.load %arg13[%c0_741, %c168] : memref<2x240xf32, #tpu.memory_space<vmem>>, vector<2x8xf32>
    tpu.vector_store %arg13[%c0_741, %c168], %767 {strides = array<i32>} : memref<2x240xf32, #tpu.memory_space<vmem>>, vector<2x8xf32>,
    %c44_742 = arith.constant 44 : index
    %c0_743 = arith.constant 0 : index
    %769 = vector.load %arg12[%c44_742, %c0_743] : memref<60x8xf32, #tpu.memory_space<vmem>>, vector<2x8xf32>
    %cst_744 = arith.constant dense<0.000000e+00> : vector<2x8xf32>
    %770 = tpu.matmul %767, %656, %cst_744 {dimension_numbers = #tpu.dot_dimension_numbers<[1], [0], [0], [1], [0, 0, 1, 1], [], []>} : vector<2x8xf32>, vector<8x8xf32>, vector<2x8xf32> -> vector<2x8xf32>
    %771 = arith.addf %769, %770 : vector<2x8xf32>
    %772 = math.tanh %771 : vector<2x8xf32>
    %c0_745 = arith.constant 0 : index
    %c176 = arith.constant 176 : index
    %773 = vector.load %arg13[%c0_745, %c176] : memref<2x240xf32, #tpu.memory_space<vmem>>, vector<2x8xf32>
    tpu.vector_store %arg13[%c0_745, %c176], %772 {strides = array<i32>} : memref<2x240xf32, #tpu.memory_space<vmem>>, vector<2x8xf32>,
    %c46_746 = arith.constant 46 : index
    %c0_747 = arith.constant 0 : index
    %774 = vector.load %arg12[%c46_746, %c0_747] : memref<60x8xf32, #tpu.memory_space<vmem>>, vector<2x8xf32>
    %cst_748 = arith.constant dense<0.000000e+00> : vector<2x8xf32>
    %775 = tpu.matmul %772, %656, %cst_748 {dimension_numbers = #tpu.dot_dimension_numbers<[1], [0], [0], [1], [0, 0, 1, 1], [], []>} : vector<2x8xf32>, vector<8x8xf32>, vector<2x8xf32> -> vector<2x8xf32>
    %776 = arith.addf %774, %775 : vector<2x8xf32>
    %777 = math.tanh %776 : vector<2x8xf32>
    %c0_749 = arith.constant 0 : index
    %c184 = arith.constant 184 : index
    %778 = vector.load %arg13[%c0_749, %c184] : memref<2x240xf32, #tpu.memory_space<vmem>>, vector<2x8xf32>
    tpu.vector_store %arg13[%c0_749, %c184], %777 {strides = array<i32>} : memref<2x240xf32, #tpu.memory_space<vmem>>, vector<2x8xf32>,
    %c48_750 = arith.constant 48 : index
    %c0_751 = arith.constant 0 : index
    %779 = vector.load %arg12[%c48_750, %c0_751] : memref<60x8xf32, #tpu.memory_space<vmem>>, vector<2x8xf32>
    %cst_752 = arith.constant dense<0.000000e+00> : vector<2x8xf32>
    %780 = tpu.matmul %777, %656, %cst_752 {dimension_numbers = #tpu.dot_dimension_numbers<[1], [0], [0], [1], [0, 0, 1, 1], [], []>} : vector<2x8xf32>, vector<8x8xf32>, vector<2x8xf32> -> vector<2x8xf32>
    %781 = arith.addf %779, %780 : vector<2x8xf32>
    %782 = math.tanh %781 : vector<2x8xf32>
    %c0_753 = arith.constant 0 : index
    %c192 = arith.constant 192 : index
    %783 = vector.load %arg13[%c0_753, %c192] : memref<2x240xf32, #tpu.memory_space<vmem>>, vector<2x8xf32>
    tpu.vector_store %arg13[%c0_753, %c192], %782 {strides = array<i32>} : memref<2x240xf32, #tpu.memory_space<vmem>>, vector<2x8xf32>,
    %c50_754 = arith.constant 50 : index
    %c0_755 = arith.constant 0 : index
    %784 = vector.load %arg12[%c50_754, %c0_755] : memref<60x8xf32, #tpu.memory_space<vmem>>, vector<2x8xf32>
    %cst_756 = arith.constant dense<0.000000e+00> : vector<2x8xf32>
    %785 = tpu.matmul %782, %656, %cst_756 {dimension_numbers = #tpu.dot_dimension_numbers<[1], [0], [0], [1], [0, 0, 1, 1], [], []>} : vector<2x8xf32>, vector<8x8xf32>, vector<2x8xf32> -> vector<2x8xf32>
    %786 = arith.addf %784, %785 : vector<2x8xf32>
    %787 = math.tanh %786 : vector<2x8xf32>
    %c0_757 = arith.constant 0 : index
    %c200 = arith.constant 200 : index
    %788 = vector.load %arg13[%c0_757, %c200] : memref<2x240xf32, #tpu.memory_space<vmem>>, vector<2x8xf32>
    tpu.vector_store %arg13[%c0_757, %c200], %787 {strides = array<i32>} : memref<2x240xf32, #tpu.memory_space<vmem>>, vector<2x8xf32>,
    %c52_758 = arith.constant 52 : index
    %c0_759 = arith.constant 0 : index
    %789 = vector.load %arg12[%c52_758, %c0_759] : memref<60x8xf32, #tpu.memory_space<vmem>>, vector<2x8xf32>
    %cst_760 = arith.constant dense<0.000000e+00> : vector<2x8xf32>
    %790 = tpu.matmul %787, %656, %cst_760 {dimension_numbers = #tpu.dot_dimension_numbers<[1], [0], [0], [1], [0, 0, 1, 1], [], []>} : vector<2x8xf32>, vector<8x8xf32>, vector<2x8xf32> -> vector<2x8xf32>
    %791 = arith.addf %789, %790 : vector<2x8xf32>
    %792 = math.tanh %791 : vector<2x8xf32>
    %c0_761 = arith.constant 0 : index
    %c208 = arith.constant 208 : index
    %793 = vector.load %arg13[%c0_761, %c208] : memref<2x240xf32, #tpu.memory_space<vmem>>, vector<2x8xf32>
    tpu.vector_store %arg13[%c0_761, %c208], %792 {strides = array<i32>} : memref<2x240xf32, #tpu.memory_space<vmem>>, vector<2x8xf32>,
    %c54_762 = arith.constant 54 : index
    %c0_763 = arith.constant 0 : index
    %794 = vector.load %arg12[%c54_762, %c0_763] : memref<60x8xf32, #tpu.memory_space<vmem>>, vector<2x8xf32>
    %cst_764 = arith.constant dense<0.000000e+00> : vector<2x8xf32>
    %795 = tpu.matmul %792, %656, %cst_764 {dimension_numbers = #tpu.dot_dimension_numbers<[1], [0], [0], [1], [0, 0, 1, 1], [], []>} : vector<2x8xf32>, vector<8x8xf32>, vector<2x8xf32> -> vector<2x8xf32>
    %796 = arith.addf %794, %795 : vector<2x8xf32>
    %797 = math.tanh %796 : vector<2x8xf32>
    %c0_765 = arith.constant 0 : index
    %c216 = arith.constant 216 : index
    %798 = vector.load %arg13[%c0_765, %c216] : memref<2x240xf32, #tpu.memory_space<vmem>>, vector<2x8xf32>
    tpu.vector_store %arg13[%c0_765, %c216], %797 {strides = array<i32>} : memref<2x240xf32, #tpu.memory_space<vmem>>, vector<2x8xf32>,
    %c56_766 = arith.constant 56 : index
    %c0_767 = arith.constant 0 : index
    %799 = vector.load %arg12[%c56_766, %c0_767] : memref<60x8xf32, #tpu.memory_space<vmem>>, vector<2x8xf32>
    %cst_768 = arith.constant dense<0.000000e+00> : vector<2x8xf32>
    %800 = tpu.matmul %797, %656, %cst_768 {dimension_numbers = #tpu.dot_dimension_numbers<[1], [0], [0], [1], [0, 0, 1, 1], [], []>} : vector<2x8xf32>, vector<8x8xf32>, vector<2x8xf32> -> vector<2x8xf32>
    %801 = arith.addf %799, %800 : vector<2x8xf32>
    %802 = math.tanh %801 : vector<2x8xf32>
    %c0_769 = arith.constant 0 : index
    %c224 = arith.constant 224 : index
    %803 = vector.load %arg13[%c0_769, %c224] : memref<2x240xf32, #tpu.memory_space<vmem>>, vector<2x8xf32>
    tpu.vector_store %arg13[%c0_769, %c224], %802 {strides = array<i32>} : memref<2x240xf32, #tpu.memory_space<vmem>>, vector<2x8xf32>,
    %c58_770 = arith.constant 58 : index
    %c0_771 = arith.constant 0 : index
    %804 = vector.load %arg12[%c58_770, %c0_771] : memref<60x8xf32, #tpu.memory_space<vmem>>, vector<2x8xf32>
    %cst_772 = arith.constant dense<0.000000e+00> : vector<2x8xf32>
    %805 = tpu.matmul %802, %656, %cst_772 {dimension_numbers = #tpu.dot_dimension_numbers<[1], [0], [0], [1], [0, 0, 1, 1], [], []>} : vector<2x8xf32>, vector<8x8xf32>, vector<2x8xf32> -> vector<2x8xf32>
    %806 = arith.addf %804, %805 : vector<2x8xf32>
    %807 = math.tanh %806 : vector<2x8xf32>
    %c0_773 = arith.constant 0 : index
    %c232 = arith.constant 232 : index
    %808 = vector.load %arg13[%c0_773, %c232] : memref<2x240xf32, #tpu.memory_space<vmem>>, vector<2x8xf32>
    tpu.vector_store %arg13[%c0_773, %c232], %807 {strides = array<i32>} : memref<2x240xf32, #tpu.memory_space<vmem>>, vector<2x8xf32>,
    %c0_774 = arith.constant 0 : index
    %c0_775 = arith.constant 0 : index
    %809 = vector.load %arg13[%c0_774, %c0_775] : memref<2x240xf32, #tpu.memory_space<vmem>>, vector<2x240xf32>
    %c0_776 = arith.constant 0 : index
    %c0_777 = arith.constant 0 : index
    %810 = vector.load %arg6[%c0_776, %c0_777] : memref<240x64xf32, #tpu.memory_space<vmem>>, vector<240x64xf32>
    %cst_778 = arith.constant dense<0.000000e+00> : vector<2x64xf32>
    %811 = tpu.matmul %809, %810, %cst_778 {dimension_numbers = #tpu.dot_dimension_numbers<[1], [0], [0], [1], [0, 0, 1, 1], [], []>} : vector<2x240xf32>, vector<240x64xf32>, vector<2x64xf32> -> vector<2x64xf32>
    %c0_779 = arith.constant 0 : index
    %c0_780 = arith.constant 0 : index
    %812 = vector.load %arg7[%c0_779, %c0_780] : memref<1x64xf32, #tpu.memory_space<vmem>>, vector<1x64xf32>
    %813 = vector.broadcast %812 : vector<1x64xf32> to vector<2x64xf32>
    %814 = arith.addf %811, %813 : vector<2x64xf32>
    %cst_781 = arith.constant 0.000000e+00 : f32
    %815 = vector.broadcast %cst_781 : f32 to vector<2x64xf32>
    %816 = arith.maximumf %814, %815 : vector<2x64xf32>
    %c0_782 = arith.constant 0 : index
    %c0_783 = arith.constant 0 : index
    %817 = vector.load %arg8[%c0_782, %c0_783] : memref<1x64xf32, #tpu.memory_space<vmem>>, vector<1x64xf32>
    %818 = vector.broadcast %817 : vector<1x64xf32> to vector<2x64xf32>
    %819 = arith.mulf %816, %818 : vector<2x64xf32>
    %cst_784 = arith.constant dense<0.000000e+00> : vector<2xf32>
    %820 = vector.multi_reduction <add>, %819, %cst_784 [1] : vector<2x64xf32> to vector<2xf32>
    %821 = vector.shape_cast %820 : vector<2xf32> to vector<2x1xf32>
    %c0_785 = arith.constant 0 : index
    %c0_786 = arith.constant 0 : index
    %822 = vector.load %arg9[%c0_785, %c0_786] : memref<1x1xf32, #tpu.memory_space<vmem>>, vector<1x1xf32>
    %823 = vector.broadcast %822 : vector<1x1xf32> to vector<2x1xf32>
    %824 = arith.addf %821, %823 : vector<2x1xf32>
    %c0_787 = arith.constant 0 : index
    %c0_788 = arith.constant 0 : index
    %825 = vector.load %arg10[%c0_787, %c0_788] : memref<2x1xf32, #tpu.memory_space<vmem>>, vector<2x1xf32>
    tpu.vector_store %arg10[%c0_787, %c0_788], %824 {strides = array<i32>} : memref<2x1xf32, #tpu.memory_space<vmem>>, vector<2x1xf32>,
    return
  }
}

</mosaic_0001>

<llo_original>
// kernel: rnn_net_forward.1
$region0: #{rnn_net_forward.1}
  #allocation0 [shape = 'u32[]', space=smem, size = 0x4, offset = 0x4, fixed_abs, tag = 'smem constant byte address 0x4 - core index']
  #allocation1 [shape = 'u32[72,128]{1,0:T(1,128)}', space=vmem, size = 0x9000, scoped, tag = 'internal scratch']
  #allocation2 [shape = 'f32[60,8]{1,0:T(8,128)}', space=vmem, size = 0x8000, scoped, tag = 'scratch operand']
  #allocation3 [shape = 'f32[60,8]{1,0:T(8,128)}', space=vmem, size = 0x8000, scoped, tag = 'scratch operand']
  #allocation4 [shape = 'f32[2,240]{1,0:T(2,128)}', space=vmem, size = 0x800, scoped, tag = 'scratch operand']
  #allocation5 [shape = 'f32[1,1]{1,0:T(1,128)S(1)}', space=vmem, size = 0x200, scoped, tag = 'scoped memory for rnn_net_forward.1']
  %s0 = inlined_call_operand.vmem [shape: f32[60,3], index: 0, kind: input, shape index: {}]
  %s1 = inlined_call_operand.vmem [shape: f32[5,2,8], index: 1, kind: input, shape index: {}]
  %s2 = inlined_call_operand.vmem [shape: f32[3,8], index: 2, kind: input, shape index: {}]
  %s3 = inlined_call_operand.vmem [shape: f32[4,8,8], index: 3, kind: input, shape index: {}]
  %s4 = inlined_call_operand.vmem [shape: f32[5,8,8], index: 4, kind: input, shape index: {}]
  %s5 = inlined_call_operand.vmem [shape: f32[5,8], index: 5, kind: input, shape index: {}]
  %s6 = inlined_call_operand.hbm [shape: f32[240,64], index: 6, kind: input, shape index: {}]
  %s7 = inlined_call_operand.vmem [shape: f32[1,64], index: 7, kind: input, shape index: {}]
  %s8 = inlined_call_operand.vmem [shape: f32[1,64], index: 8, kind: input, shape index: {}]
  %s9 = inlined_call_operand.<no memory space> [shape: f32[1,1], index: 9, kind: input, shape index: {}]
  %s10 = inlined_call_operand.vmem [shape: f32[2,1], index: 10, kind: output, shape index: {}]
  %s11 = sld [smem:[#allocation0]]
  $region54: #{rnn_net_forward.1} parent=0
    _
  %s13 = ssub.s32 1, %s11
  %s14 = scalar_select 0, %s13, %s11
  %v15 = vstv %s9
  %16 = vst [vmem:[#allocation5] sm:$0x1] %v15
  $region1: #{rnn_net_forward.1} parent=0
    #allocation6 [shape = 'u8[122880]{0}', space=vmem, size = 0x1e000, scoped, tag = 'input window, operand 6, single buffered']
    #allocation7 [shape = 's32[1]{0}', space=sflag, size = 0x4, scoped, tag = 'scoped memory for rnn_net_forward.1']
    %17 = vsyncpa [#allocation7], 0
    // Predicated region
    $region2: #{rnn_net_forward.1} parent=1 // pred_check
      _
    $region3: #{rnn_net_forward.1} parent=1 // pred_check_branch
      %19 = sbr.rel (0) target = $region5
    $region4: #{rnn_net_forward.1} parent=1 // pred_region
      _
    $region5: #{rnn_net_forward.1} parent=1 // pred_fallthru
      _
    // Predicated region
    $region6: #{rnn_net_forward.1} parent=1 // pred_check
      _
    $region7: #{rnn_net_forward.1} parent=1 // pred_check_branch
      %21 = sbr.rel (0) target = $region9
    $region8: #{rnn_net_forward.1} parent=1 // pred_region
      _
    $region9: #{rnn_net_forward.1} parent=1 // pred_fallthru
      _
    // Predicated region
    $region10: #{rnn_net_forward.1} parent=1 // pred_check
      _
    $region11: #{rnn_net_forward.1} parent=1 // pred_check_branch
      %23 = sbr.rel (0) target = $region13
    $region12: #{rnn_net_forward.1} parent=1 // pred_region
      _
    $region13: #{rnn_net_forward.1} parent=1 // pred_fallthru
      _
    // Predicated region
    $region14: #{rnn_net_forward.1} parent=1 // pred_check
      _
    $region15: #{rnn_net_forward.1} parent=1 // pred_check_branch
      %25 = sbr.rel (0) target = $region17
    $region16: #{rnn_net_forward.1} parent=1 // pred_region
      _
    $region17: #{rnn_net_forward.1} parent=1 // pred_fallthru
      _
    // Predicated region
    $region18: #{rnn_net_forward.1} parent=1 // pred_check
      _
    $region19: #{rnn_net_forward.1} parent=1 // pred_check_branch
      %27 = sbr.rel (0) target = $region21
    $region20: #{rnn_net_forward.1} parent=1 // pred_region
      _
    $region21: #{rnn_net_forward.1} parent=1 // pred_fallthru
      _
    // Predicated region
    $region22: #{rnn_net_forward.1} parent=1 // pred_check
      _
    $region23: #{rnn_net_forward.1} parent=1 // pred_check_branch
      %29 = sbr.rel (0) target = $region25
    $region24: #{rnn_net_forward.1} parent=1 // pred_region
      _
    $region25: #{rnn_net_forward.1} parent=1 // pred_fallthru
      _
    // Predicated region
    $region26: #{rnn_net_forward.1} parent=1 // pred_check
      _
    $region27: #{rnn_net_forward.1} parent=1 // pred_check_branch
      %31 = sbr.rel (0) target = $region29
    $region28: #{rnn_net_forward.1} parent=1 // pred_region
      %33 = vsyncadd [#allocation7], 0
      %s34 = sshll.u32 %s6, 4
      %s35 = int_to_ptr.hbm [resolvable:$true] %s34
      %s36 = sshll.u32 [#allocation6], 4
      %s37 = int_to_ptr.vmem [resolvable:$true] %s36
      %42 = dma.hbm_to_vmem [thread:$0]  %s35, 3840, %s37, [#allocation7], 128, 128, 8
    $region29: #{rnn_net_forward.1} parent=1 // pred_fallthru
      _
    // Predicated region
    $region30: #{rnn_net_forward.1} parent=1 // pred_check
      _
    $region31: #{rnn_net_forward.1} parent=1 // pred_check_branch
      %44 = sbr.rel (0) target = $region33
    $region32: #{rnn_net_forward.1} parent=1 // pred_region
      _
    $region33: #{rnn_net_forward.1} parent=1 // pred_fallthru
      _
    // Predicated region
    $region34: #{rnn_net_forward.1} parent=1 // pred_check
      _
    $region35: #{rnn_net_forward.1} parent=1 // pred_check_branch
      %46 = sbr.rel (0) target = $region37
    $region36: #{rnn_net_forward.1} parent=1 // pred_region
      _
    $region37: #{rnn_net_forward.1} parent=1 // pred_fallthru
      _
    // Predicated region
    $region38: #{rnn_net_forward.1} parent=1 // pred_check
      _
    $region39: #{rnn_net_forward.1} parent=1 // pred_check_branch
      %48 = sbr.rel (0) target = $region41
    $region40: #{rnn_net_forward.1} parent=1 // pred_region
      _
    $region41: #{rnn_net_forward.1} parent=1 // pred_fallthru
      _
    // Predicated region
    $region42: #{rnn_net_forward.1} parent=1 // pred_check
      _
    $region43: #{rnn_net_forward.1} parent=1 // pred_check_branch
      %50 = sbr.rel (0) target = $region45
    $region44: #{rnn_net_forward.1} parent=1 // pred_region
      %52 = dma.done [#allocation7], 3840
    $region45: #{rnn_net_forward.1} parent=1 // pred_fallthru
      _
    %v53 = vld [vmem:[%s5] sm:$0x1]
    %v54 = vld [vmem:[%s0] sm:$0xff]
    %v55 = vld [vmem:[%s0 + $0x8] sm:$0xff]
    %v56 = vld [vmem:[%s0 + $0x10] sm:$0xff]
    %v57 = vld [vmem:[%s0 + $0x18] sm:$0xff]
    %v58 = vld [vmem:[%s0 + $0x20] sm:$0xff]
    %v59 = vld [vmem:[%s0 + $0x28] sm:$0xff]
    %v60 = vld [vmem:[%s0 + $0x30] sm:$0xff]
    %v61 = vld [vmem:[%s0 + $0x38] sm:$0xf]
    %v62 = vld [vmem:[%s2] sm:$0x7]
    %v63 = vperm.slane %v53, 0
    %vm64 = vcmask 23552
    %v66 = vsel %vm64, %v54, 0
    %v69 = vsel %vm64, %v55, 0
    %v72 = vsel %vm64, %v56, 0
    %v75 = vsel %vm64, %v57, 0
    %v78 = vsel %vm64, %v58, 0
    %v81 = vsel %vm64, %v59, 0
    %v84 = vsel %vm64, %v60, 0
    %v87 = vsel %vm64, %v61, 0
    %vm89 = vcmask 1042432
    %v91 = vsel %vm89, %v62, 0
    %93 = vmatpush.msra.mxu0 0.0
    %94 = vmatpush.msra.mxu0 0.0
    %95 = vmatpush.msra.mxu0 0.0
    %96 = vmatpush.msra.mxu0 0.0
    %97 = vmatpush.msra.mxu0 0.0
    %98 = vmatpush.msra.mxu0 0.0
    %99 = vmatpush.msra.mxu0 0.0
    %100 = vmatpush.msra.mxu0 0.0
    %101 = vmatpush.msra.mxu0 0.0
    %102 = vmatpush.msra.mxu0 0.0
    %103 = vmatpush.msra.mxu0 0.0
    %104 = vmatpush.msra.mxu0 0.0
    %105 = vmatpush.msra.mxu0 0.0
    %106 = vmatpush.msra.mxu0 0.0
    %107 = vmatpush.msra.mxu0 0.0
    %108 = vmatpush.msra.mxu0 %v91
    %109 = vmatmul.f32.gmra.mxu0 %v66
    %v110 = vpop.f32.mrf.mxu0
    %v111 = vadd.f32 %v63, %v110
    %112 = vmatmul.f32.gmra.mxu0 %v69
    %v113 = vpop.f32.mrf.mxu0
    %v114 = vadd.f32 %v63, %v113
    %115 = vmatmul.f32.gmra.mxu0 %v72
    %v116 = vpop.f32.mrf.mxu0
    %v117 = vadd.f32 %v63, %v116
    %118 = vmatmul.f32.gmra.mxu0 %v75
    %v119 = vpop.f32.mrf.mxu0
    %v120 = vadd.f32 %v63, %v119
    %121 = vmatmul.f32.gmra.mxu0 %v78
    %v122 = vpop.f32.mrf.mxu0
    %v123 = vadd.f32 %v63, %v122
    %124 = vmatmul.f32.gmra.mxu0 %v81
    %v125 = vpop.f32.mrf.mxu0
    %v126 = vadd.f32 %v63, %v125
    %127 = vmatmul.f32.gmra.mxu0 %v84
    %v128 = vpop.f32.mrf.mxu0
    %v129 = vadd.f32 %v63, %v128
    %130 = vmatmul.f32.gmra.mxu0 %v87
    %v131 = vpop.f32.mrf.mxu0
    %v132 = vadd.f32 %v63, %v131
    %133 = vdwg.mxu0
    %vm134 = vcmask 64512
    %135 = vst.msk [vmem:[#allocation3] sm:$0xff] %vm134, %v111
    %136 = vst.msk [vmem:[#allocation3 + $0x8] sm:$0xff] %vm134, %v114
    %137 = vst.msk [vmem:[#allocation3 + $0x10] sm:$0xff] %vm134, %v117
    %138 = vst.msk [vmem:[#allocation3 + $0x18] sm:$0xff] %vm134, %v120
    %139 = vst.msk [vmem:[#allocation3 + $0x20] sm:$0xff] %vm134, %v123
    %140 = vst.msk [vmem:[#allocation3 + $0x28] sm:$0xff] %vm134, %v126
    %141 = vst.msk [vmem:[#allocation3 + $0x30] sm:$0xff] %vm134, %v129
    %vm142 = vcmask 60416
    %143 = vst.msk [vmem:[#allocation3 + $0x38] sm:$0xf] %vm142, %v132
    %v144 = vld [vmem:[%s4] sm:$0xff]
    %v145 = vld [vmem:[%s1] sm:$0x3]
    %v146 = vld [vmem:[#allocation3] sm:$0x3]
    %v148 = vsel %vm134, %v145, 0
    %150 = vmatpush.msra.mxu0 0.0
    %151 = vmatpush.msra.mxu0 0.0
    %152 = vmatpush.msra.mxu0 0.0
    %153 = vmatpush.msra.mxu0 0.0
    %154 = vmatpush.msra.mxu0 0.0
    %155 = vmatpush.msra.mxu0 0.0
    %156 = vmatpush.msra.mxu0 0.0
    %157 = vmatpush.msra.mxu0 0.0
    %158 = vmatpush.msra.mxu0 0.0
    %159 = vmatpush.msra.mxu0 0.0
    %160 = vmatpush.msra.mxu0 0.0
    %161 = vmatpush.msra.mxu0 0.0
    %162 = vmatpush.msra.mxu0 0.0
    %163 = vmatpush.msra.mxu0 0.0
    %164 = vmatpush.msra.mxu0 0.0
    %165 = vmatpush.msra.mxu0 %v144
    %166 = vmatmul.f32.gmra.mxu0 %v148
    %v167 = vpop.f32.mrf.mxu0
    %v168 = vadd.f32 0.0, %v167
    %169 = vdwg.mxu0
    %v170 = vadd.f32 %v146, %v168
    %v171 = vtanh.pop %v170
    %vm172 = vcmask 58368
    %173 = vst.msk [vmem:[#allocation2] sm:$0x3] %vm172, %v171
    %v174 = vld [vmem:[#allocation3 + $0x2] sm:$0x3]
    %v176 = vsel %vm134, %v171, 0
    %178 = vmatpush.msra.mxu0 0.0
    %179 = vmatpush.msra.mxu0 0.0
    %180 = vmatpush.msra.mxu0 0.0
    %181 = vmatpush.msra.mxu0 0.0
    %182 = vmatpush.msra.mxu0 0.0
    %183 = vmatpush.msra.mxu0 0.0
    %184 = vmatpush.msra.mxu0 0.0
    %185 = vmatpush.msra.mxu0 0.0
    %186 = vmatpush.msra.mxu0 0.0
    %187 = vmatpush.msra.mxu0 0.0
    %188 = vmatpush.msra.mxu0 0.0
    %189 = vmatpush.msra.mxu0 0.0
    %190 = vmatpush.msra.mxu0 0.0
    %191 = vmatpush.msra.mxu0 0.0
    %192 = vmatpush.msra.mxu0 0.0
    %193 = vmatpush.msra.mxu0 %v144
    %194 = vmatmul.f32.gmra.mxu0 %v176
    %v195 = vpop.f32.mrf.mxu0
    %v196 = vadd.f32 0.0, %v195
    %197 = vdwg.mxu0
    %v198 = vadd.f32 %v174, %v196
    %v199 = vtanh.pop %v198
    %200 = vst.msk [vmem:[#allocation2 + $0x2] sm:$0x3] %vm172, %v199
    %v201 = vld [vmem:[#allocation3 + $0x4] sm:$0x3]
    %v203 = vsel %vm134, %v199, 0
    %205 = vmatpush.msra.mxu0 0.0
    %206 = vmatpush.msra.mxu0 0.0
    %207 = vmatpush.msra.mxu0 0.0
    %208 = vmatpush.msra.mxu0 0.0
    %209 = vmatpush.msra.mxu0 0.0
    %210 = vmatpush.msra.mxu0 0.0
    %211 = vmatpush.msra.mxu0 0.0
    %212 = vmatpush.msra.mxu0 0.0
    %213 = vmatpush.msra.mxu0 0.0
    %214 = vmatpush.msra.mxu0 0.0
    %215 = vmatpush.msra.mxu0 0.0
    %216 = vmatpush.msra.mxu0 0.0
    %217 = vmatpush.msra.mxu0 0.0
    %218 = vmatpush.msra.mxu0 0.0
    %219 = vmatpush.msra.mxu0 0.0
    %220 = vmatpush.msra.mxu0 %v144
    %221 = vmatmul.f32.gmra.mxu0 %v203
    %v222 = vpop.f32.mrf.mxu0
    %v223 = vadd.f32 0.0, %v222
    %224 = vdwg.mxu0
    %v225 = vadd.f32 %v201, %v223
    %v226 = vtanh.pop %v225
    %227 = vst.msk [vmem:[#allocation2 + $0x4] sm:$0x3] %vm172, %v226
    %v228 = vld [vmem:[#allocation3 + $0x6] sm:$0x3]
    %v230 = vsel %vm134, %v226, 0
    %232 = vmatpush.msra.mxu0 0.0
    %233 = vmatpush.msra.mxu0 0.0
    %234 = vmatpush.msra.mxu0 0.0
    %235 = vmatpush.msra.mxu0 0.0
    %236 = vmatpush.msra.mxu0 0.0
    %237 = vmatpush.msra.mxu0 0.0
    %238 = vmatpush.msra.mxu0 0.0
    %239 = vmatpush.msra.mxu0 0.0
    %240 = vmatpush.msra.mxu0 0.0
    %241 = vmatpush.msra.mxu0 0.0
    %242 = vmatpush.msra.mxu0 0.0
    %243 = vmatpush.msra.mxu0 0.0
    %244 = vmatpush.msra.mxu0 0.0
    %245 = vmatpush.msra.mxu0 0.0
    %246 = vmatpush.msra.mxu0 0.0
    %247 = vmatpush.msra.mxu0 %v144
    %248 = vmatmul.f32.gmra.mxu0 %v230
    %v249 = vpop.f32.mrf.mxu0
    %v250 = vadd.f32 0.0, %v249
    %251 = vdwg.mxu0
    %v252 = vadd.f32 %v228, %v250
    %v253 = vtanh.pop %v252
    %254 = vst.msk [vmem:[#allocation2 + $0x6] sm:$0x3] %vm172, %v253
    %v255 = vld [vmem:[#allocation3 + $0x8] sm:$0x3]
    %v257 = vsel %vm134, %v253, 0
    %259 = vmatpush.msra.mxu0 0.0
    %260 = vmatpush.msra.mxu0 0.0
    %261 = vmatpush.msra.mxu0 0.0
    %262 = vmatpush.msra.mxu0 0.0
    %263 = vmatpush.msra.mxu0 0.0
    %264 = vmatpush.msra.mxu0 0.0
    %265 = vmatpush.msra.mxu0 0.0
    %266 = vmatpush.msra.mxu0 0.0
    %267 = vmatpush.msra.mxu0 0.0
    %268 = vmatpush.msra.mxu0 0.0
    %269 = vmatpush.msra.mxu0 0.0
    %270 = vmatpush.msra.mxu0 0.0
    %271 = vmatpush.msra.mxu0 0.0
    %272 = vmatpush.msra.mxu0 0.0
    %273 = vmatpush.msra.mxu0 0.0
    %274 = vmatpush.msra.mxu0 %v144
    %275 = vmatmul.f32.gmra.mxu0 %v257
    %v276 = vpop.f32.mrf.mxu0
    %v277 = vadd.f32 0.0, %v276
    %278 = vdwg.mxu0
    %v279 = vadd.f32 %v255, %v277
    %v280 = vtanh.pop %v279
    %281 = vst.msk [vmem:[#allocation2 + $0x8] sm:$0x3] %vm172, %v280
    %v282 = vld [vmem:[#allocation3 + $0xa] sm:$0x3]
    %v284 = vsel %vm134, %v280, 0
    %286 = vmatpush.msra.mxu0 0.0
    %287 = vmatpush.msra.mxu0 0.0
    %288 = vmatpush.msra.mxu0 0.0
    %289 = vmatpush.msra.mxu0 0.0
    %290 = vmatpush.msra.mxu0 0.0
    %291 = vmatpush.msra.mxu0 0.0
    %292 = vmatpush.msra.mxu0 0.0
    %293 = vmatpush.msra.mxu0 0.0
    %294 = vmatpush.msra.mxu0 0.0
    %295 = vmatpush.msra.mxu0 0.0
    %296 = vmatpush.msra.mxu0 0.0
    %297 = vmatpush.msra.mxu0 0.0
    %298 = vmatpush.msra.mxu0 0.0
    %299 = vmatpush.msra.mxu0 0.0
    %300 = vmatpush.msra.mxu0 0.0
    %301 = vmatpush.msra.mxu0 %v144
    %302 = vmatmul.f32.gmra.mxu0 %v284
    %v303 = vpop.f32.mrf.mxu0
    %v304 = vadd.f32 0.0, %v303
    %305 = vdwg.mxu0
    %v306 = vadd.f32 %v282, %v304
    %v307 = vtanh.pop %v306
    %308 = vst.msk [vmem:[#allocation2 + $0xa] sm:$0x3] %vm172, %v307
    %v309 = vld [vmem:[#allocation3 + $0xc] sm:$0x3]
    %v311 = vsel %vm134, %v307, 0
    %313 = vmatpush.msra.mxu0 0.0
    %314 = vmatpush.msra.mxu0 0.0
    %315 = vmatpush.msra.mxu0 0.0
    %316 = vmatpush.msra.mxu0 0.0
    %317 = vmatpush.msra.mxu0 0.0
    %318 = vmatpush.msra.mxu0 0.0
    %319 = vmatpush.msra.mxu0 0.0
    %320 = vmatpush.msra.mxu0 0.0
    %321 = vmatpush.msra.mxu0 0.0
    %322 = vmatpush.msra.mxu0 0.0
    %323 = vmatpush.msra.mxu0 0.0
    %324 = vmatpush.msra.mxu0 0.0
    %325 = vmatpush.msra.mxu0 0.0
    %326 = vmatpush.msra.mxu0 0.0
    %327 = vmatpush.msra.mxu0 0.0
    %328 = vmatpush.msra.mxu0 %v144
    %329 = vmatmul.f32.gmra.mxu0 %v311
    %v330 = vpop.f32.mrf.mxu0
    %v331 = vadd.f32 0.0, %v330
    %332 = vdwg.mxu0
    %v333 = vadd.f32 %v309, %v331
    %v334 = vtanh.pop %v333
    %335 = vst.msk [vmem:[#allocation2 + $0xc] sm:$0x3] %vm172, %v334
    %v336 = vld [vmem:[#allocation3 + $0xe] sm:$0x3]
    %v338 = vsel %vm134, %v334, 0
    %340 = vmatpush.msra.mxu0 0.0
    %341 = vmatpush.msra.mxu0 0.0
    %342 = vmatpush.msra.mxu0 0.0
    %343 = vmatpush.msra.mxu0 0.0
    %344 = vmatpush.msra.mxu0 0.0
    %345 = vmatpush.msra.mxu0 0.0
    %346 = vmatpush.msra.mxu0 0.0
    %347 = vmatpush.msra.mxu0 0.0
    %348 = vmatpush.msra.mxu0 0.0
    %349 = vmatpush.msra.mxu0 0.0
    %350 = vmatpush.msra.mxu0 0.0
    %351 = vmatpush.msra.mxu0 0.0
    %352 = vmatpush.msra.mxu0 0.0
    %353 = vmatpush.msra.mxu0 0.0
    %354 = vmatpush.msra.mxu0 0.0
    %355 = vmatpush.msra.mxu0 %v144
    %356 = vmatmul.f32.gmra.mxu0 %v338
    %v357 = vpop.f32.mrf.mxu0
    %v358 = vadd.f32 0.0, %v357
    %359 = vdwg.mxu0
    %v360 = vadd.f32 %v336, %v358
    %v361 = vtanh.pop %v360
    %362 = vst.msk [vmem:[#allocation2 + $0xe] sm:$0x3] %vm172, %v361
    %v363 = vld [vmem:[#allocation3 + $0x10] sm:$0x3]
    %v365 = vsel %vm134, %v361, 0
    %367 = vmatpush.msra.mxu0 0.0
    %368 = vmatpush.msra.mxu0 0.0
    %369 = vmatpush.msra.mxu0 0.0
    %370 = vmatpush.msra.mxu0 0.0
    %371 = vmatpush.msra.mxu0 0.0
    %372 = vmatpush.msra.mxu0 0.0
    %373 = vmatpush.msra.mxu0 0.0
    %374 = vmatpush.msra.mxu0 0.0
    %375 = vmatpush.msra.mxu0 0.0
    %376 = vmatpush.msra.mxu0 0.0
    %377 = vmatpush.msra.mxu0 0.0
    %378 = vmatpush.msra.mxu0 0.0
    %379 = vmatpush.msra.mxu0 0.0
    %380 = vmatpush.msra.mxu0 0.0
    %381 = vmatpush.msra.mxu0 0.0
    %382 = vmatpush.msra.mxu0 %v144
    %383 = vmatmul.f32.gmra.mxu0 %v365
    %v384 = vpop.f32.mrf.mxu0
    %v385 = vadd.f32 0.0, %v384
    %386 = vdwg.mxu0
    %v387 = vadd.f32 %v363, %v385
    %v388 = vtanh.pop %v387
    %389 = vst.msk [vmem:[#allocation2 + $0x10] sm:$0x3] %vm172, %v388
    %v390 = vld [vmem:[#allocation3 + $0x12] sm:$0x3]
    %v392 = vsel %vm134, %v388, 0
    %394 = vmatpush.msra.mxu0 0.0
    %395 = vmatpush.msra.mxu0 0.0
    %396 = vmatpush.msra.mxu0 0.0
    %397 = vmatpush.msra.mxu0 0.0
    %398 = vmatpush.msra.mxu0 0.0
    %399 = vmatpush.msra.mxu0 0.0
    %400 = vmatpush.msra.mxu0 0.0
    %401 = vmatpush.msra.mxu0 0.0
    %402 = vmatpush.msra.mxu0 0.0
    %403 = vmatpush.msra.mxu0 0.0
    %404 = vmatpush.msra.mxu0 0.0
    %405 = vmatpush.msra.mxu0 0.0
    %406 = vmatpush.msra.mxu0 0.0
    %407 = vmatpush.msra.mxu0 0.0
    %408 = vmatpush.msra.mxu0 0.0
    %409 = vmatpush.msra.mxu0 %v144
    %410 = vmatmul.f32.gmra.mxu0 %v392
    %v411 = vpop.f32.mrf.mxu0
    %v412 = vadd.f32 0.0, %v411
    %413 = vdwg.mxu0
    %v414 = vadd.f32 %v390, %v412
    %v415 = vtanh.pop %v414
    %416 = vst.msk [vmem:[#allocation2 + $0x12] sm:$0x3] %vm172, %v415
    %v417 = vld [vmem:[#allocation3 + $0x14] sm:$0x3]
    %v419 = vsel %vm134, %v415, 0
    %421 = vmatpush.msra.mxu0 0.0
    %422 = vmatpush.msra.mxu0 0.0
    %423 = vmatpush.msra.mxu0 0.0
    %424 = vmatpush.msra.mxu0 0.0
    %425 = vmatpush.msra.mxu0 0.0
    %426 = vmatpush.msra.mxu0 0.0
    %427 = vmatpush.msra.mxu0 0.0
    %428 = vmatpush.msra.mxu0 0.0
    %429 = vmatpush.msra.mxu0 0.0
    %430 = vmatpush.msra.mxu0 0.0
    %431 = vmatpush.msra.mxu0 0.0
    %432 = vmatpush.msra.mxu0 0.0
    %433 = vmatpush.msra.mxu0 0.0
    %434 = vmatpush.msra.mxu0 0.0
    %435 = vmatpush.msra.mxu0 0.0
    %436 = vmatpush.msra.mxu0 %v144
    %437 = vmatmul.f32.gmra.mxu0 %v419
    %v438 = vpop.f32.mrf.mxu0
    %v439 = vadd.f32 0.0, %v438
    %440 = vdwg.mxu0
    %v441 = vadd.f32 %v417, %v439
    %v442 = vtanh.pop %v441
    %443 = vst.msk [vmem:[#allocation2 + $0x14] sm:$0x3] %vm172, %v442
    %v444 = vld [vmem:[#allocation3 + $0x16] sm:$0x3]
    %v446 = vsel %vm134, %v442, 0
    %448 = vmatpush.msra.mxu0 0.0
    %449 = vmatpush.msra.mxu0 0.0
    %450 = vmatpush.msra.mxu0 0.0
    %451 = vmatpush.msra.mxu0 0.0
    %452 = vmatpush.msra.mxu0 0.0
    %453 = vmatpush.msra.mxu0 0.0
    %454 = vmatpush.msra.mxu0 0.0
    %455 = vmatpush.msra.mxu0 0.0
    %456 = vmatpush.msra.mxu0 0.0
    %457 = vmatpush.msra.mxu0 0.0
    %458 = vmatpush.msra.mxu0 0.0
    %459 = vmatpush.msra.mxu0 0.0
    %460 = vmatpush.msra.mxu0 0.0
    %461 = vmatpush.msra.mxu0 0.0
    %462 = vmatpush.msra.mxu0 0.0
    %463 = vmatpush.msra.mxu0 %v144
    %464 = vmatmul.f32.gmra.mxu0 %v446
    %v465 = vpop.f32.mrf.mxu0
    %v466 = vadd.f32 0.0, %v465
    %467 = vdwg.mxu0
    %v468 = vadd.f32 %v444, %v466
    %v469 = vtanh.pop %v468
    %470 = vst.msk [vmem:[#allocation2 + $0x16] sm:$0x3] %vm172, %v469
    %v471 = vld [vmem:[#allocation3 + $0x18] sm:$0x3]
    %v473 = vsel %vm134, %v469, 0
    %475 = vmatpush.msra.mxu0 0.0
    %476 = vmatpush.msra.mxu0 0.0
    %477 = vmatpush.msra.mxu0 0.0
    %478 = vmatpush.msra.mxu0 0.0
    %479 = vmatpush.msra.mxu0 0.0
    %480 = vmatpush.msra.mxu0 0.0
    %481 = vmatpush.msra.mxu0 0.0
    %482 = vmatpush.msra.mxu0 0.0
    %483 = vmatpush.msra.mxu0 0.0
    %484 = vmatpush.msra.mxu0 0.0
    %485 = vmatpush.msra.mxu0 0.0
    %486 = vmatpush.msra.mxu0 0.0
    %487 = vmatpush.msra.mxu0 0.0
    %488 = vmatpush.msra.mxu0 0.0
    %489 = vmatpush.msra.mxu0 0.0
    %490 = vmatpush.msra.mxu0 %v144
    %491 = vmatmul.f32.gmra.mxu0 %v473
    %v492 = vpop.f32.mrf.mxu0
    %v493 = vadd.f32 0.0, %v492
    %494 = vdwg.mxu0
    %v495 = vadd.f32 %v471, %v493
    %v496 = vtanh.pop %v495
    %497 = vst.msk [vmem:[#allocation2 + $0x18] sm:$0x3] %vm172, %v496
    %v498 = vld [vmem:[#allocation3 + $0x1a] sm:$0x3]
    %v500 = vsel %vm134, %v496, 0
    %502 = vmatpush.msra.mxu0 0.0
    %503 = vmatpush.msra.mxu0 0.0
    %504 = vmatpush.msra.mxu0 0.0
    %505 = vmatpush.msra.mxu0 0.0
    %506 = vmatpush.msra.mxu0 0.0
    %507 = vmatpush.msra.mxu0 0.0
    %508 = vmatpush.msra.mxu0 0.0
    %509 = vmatpush.msra.mxu0 0.0
    %510 = vmatpush.msra.mxu0 0.0
    %511 = vmatpush.msra.mxu0 0.0
    %512 = vmatpush.msra.mxu0 0.0
    %513 = vmatpush.msra.mxu0 0.0
    %514 = vmatpush.msra.mxu0 0.0
    %515 = vmatpush.msra.mxu0 0.0
    %516 = vmatpush.msra.mxu0 0.0
    %517 = vmatpush.msra.mxu0 %v144
    %518 = vmatmul.f32.gmra.mxu0 %v500
    %v519 = vpop.f32.mrf.mxu0
    %v520 = vadd.f32 0.0, %v519
    %521 = vdwg.mxu0
    %v522 = vadd.f32 %v498, %v520
    %v523 = vtanh.pop %v522
    %524 = vst.msk [vmem:[#allocation2 + $0x1a] sm:$0x3] %vm172, %v523
    %v525 = vld [vmem:[#allocation3 + $0x1c] sm:$0x3]
    %v527 = vsel %vm134, %v523, 0
    %529 = vmatpush.msra.mxu0 0.0
    %530 = vmatpush.msra.mxu0 0.0
    %531 = vmatpush.msra.mxu0 0.0
    %532 = vmatpush.msra.mxu0 0.0
    %533 = vmatpush.msra.mxu0 0.0
    %534 = vmatpush.msra.mxu0 0.0
    %535 = vmatpush.msra.mxu0 0.0
    %536 = vmatpush.msra.mxu0 0.0
    %537 = vmatpush.msra.mxu0 0.0
    %538 = vmatpush.msra.mxu0 0.0
    %539 = vmatpush.msra.mxu0 0.0
    %540 = vmatpush.msra.mxu0 0.0
    %541 = vmatpush.msra.mxu0 0.0
    %542 = vmatpush.msra.mxu0 0.0
    %543 = vmatpush.msra.mxu0 0.0
    %544 = vmatpush.msra.mxu0 %v144
    %545 = vmatmul.f32.gmra.mxu0 %v527
    %v546 = vpop.f32.mrf.mxu0
    %v547 = vadd.f32 0.0, %v546
    %548 = vdwg.mxu0
    %v549 = vadd.f32 %v525, %v547
    %v550 = vtanh.pop %v549
    %551 = vst.msk [vmem:[#allocation2 + $0x1c] sm:$0x3] %vm172, %v550
    %v552 = vld [vmem:[#allocation3 + $0x1e] sm:$0x3]
    %v554 = vsel %vm134, %v550, 0
    %556 = vmatpush.msra.mxu0 0.0
    %557 = vmatpush.msra.mxu0 0.0
    %558 = vmatpush.msra.mxu0 0.0
    %559 = vmatpush.msra.mxu0 0.0
    %560 = vmatpush.msra.mxu0 0.0
    %561 = vmatpush.msra.mxu0 0.0
    %562 = vmatpush.msra.mxu0 0.0
    %563 = vmatpush.msra.mxu0 0.0
    %564 = vmatpush.msra.mxu0 0.0
    %565 = vmatpush.msra.mxu0 0.0
    %566 = vmatpush.msra.mxu0 0.0
    %567 = vmatpush.msra.mxu0 0.0
    %568 = vmatpush.msra.mxu0 0.0
    %569 = vmatpush.msra.mxu0 0.0
    %570 = vmatpush.msra.mxu0 0.0
    %571 = vmatpush.msra.mxu0 %v144
    %572 = vmatmul.f32.gmra.mxu0 %v554
    %v573 = vpop.f32.mrf.mxu0
    %v574 = vadd.f32 0.0, %v573
    %575 = vdwg.mxu0
    %v576 = vadd.f32 %v552, %v574
    %v577 = vtanh.pop %v576
    %578 = vst.msk [vmem:[#allocation2 + $0x1e] sm:$0x3] %vm172, %v577
    %v579 = vld [vmem:[#allocation3 + $0x20] sm:$0x3]
    %v581 = vsel %vm134, %v577, 0
    %583 = vmatpush.msra.mxu0 0.0
    %584 = vmatpush.msra.mxu0 0.0
    %585 = vmatpush.msra.mxu0 0.0
    %586 = vmatpush.msra.mxu0 0.0
    %587 = vmatpush.msra.mxu0 0.0
    %588 = vmatpush.msra.mxu0 0.0
    %589 = vmatpush.msra.mxu0 0.0
    %590 = vmatpush.msra.mxu0 0.0
    %591 = vmatpush.msra.mxu0 0.0
    %592 = vmatpush.msra.mxu0 0.0
    %593 = vmatpush.msra.mxu0 0.0
    %594 = vmatpush.msra.mxu0 0.0
    %595 = vmatpush.msra.mxu0 0.0
    %596 = vmatpush.msra.mxu0 0.0
    %597 = vmatpush.msra.mxu0 0.0
    %598 = vmatpush.msra.mxu0 %v144
    %599 = vmatmul.f32.gmra.mxu0 %v581
    %v600 = vpop.f32.mrf.mxu0
    %v601 = vadd.f32 0.0, %v600
    %602 = vdwg.mxu0
    %v603 = vadd.f32 %v579, %v601
    %v604 = vtanh.pop %v603
    %605 = vst.msk [vmem:[#allocation2 + $0x20] sm:$0x3] %vm172, %v604
    %v606 = vld [vmem:[#allocation3 + $0x22] sm:$0x3]
    %v608 = vsel %vm134, %v604, 0
    %610 = vmatpush.msra.mxu0 0.0
    %611 = vmatpush.msra.mxu0 0.0
    %612 = vmatpush.msra.mxu0 0.0
    %613 = vmatpush.msra.mxu0 0.0
    %614 = vmatpush.msra.mxu0 0.0
    %615 = vmatpush.msra.mxu0 0.0
    %616 = vmatpush.msra.mxu0 0.0
    %617 = vmatpush.msra.mxu0 0.0
    %618 = vmatpush.msra.mxu0 0.0
    %619 = vmatpush.msra.mxu0 0.0
    %620 = vmatpush.msra.mxu0 0.0
    %621 = vmatpush.msra.mxu0 0.0
    %622 = vmatpush.msra.mxu0 0.0
    %623 = vmatpush.msra.mxu0 0.0
    %624 = vmatpush.msra.mxu0 0.0
    %625 = vmatpush.msra.mxu0 %v144
    %626 = vmatmul.f32.gmra.mxu0 %v608
    %v627 = vpop.f32.mrf.mxu0
    %v628 = vadd.f32 0.0, %v627
    %629 = vdwg.mxu0
    %v630 = vadd.f32 %v606, %v628
    %v631 = vtanh.pop %v630
    %632 = vst.msk [vmem:[#allocation2 + $0x22] sm:$0x3] %vm172, %v631
    %v633 = vld [vmem:[#allocation3 + $0x24] sm:$0x3]
    %v635 = vsel %vm134, %v631, 0
    %637 = vmatpush.msra.mxu0 0.0
    %638 = vmatpush.msra.mxu0 0.0
    %639 = vmatpush.msra.mxu0 0.0
    %640 = vmatpush.msra.mxu0 0.0
    %641 = vmatpush.msra.mxu0 0.0
    %642 = vmatpush.msra.mxu0 0.0
    %643 = vmatpush.msra.mxu0 0.0
    %644 = vmatpush.msra.mxu0 0.0
    %645 = vmatpush.msra.mxu0 0.0
    %646 = vmatpush.msra.mxu0 0.0
    %647 = vmatpush.msra.mxu0 0.0
    %648 = vmatpush.msra.mxu0 0.0
    %649 = vmatpush.msra.mxu0 0.0
    %650 = vmatpush.msra.mxu0 0.0
    %651 = vmatpush.msra.mxu0 0.0
    %652 = vmatpush.msra.mxu0 %v144
    %653 = vmatmul.f32.gmra.mxu0 %v635
    %v654 = vpop.f32.mrf.mxu0
    %v655 = vadd.f32 0.0, %v654
    %656 = vdwg.mxu0
    %v657 = vadd.f32 %v633, %v655
    %v658 = vtanh.pop %v657
    %659 = vst.msk [vmem:[#allocation2 + $0x24] sm:$0x3] %vm172, %v658
    %v660 = vld [vmem:[#allocation3 + $0x26] sm:$0x3]
    %v662 = vsel %vm134, %v658, 0
    %664 = vmatpush.msra.mxu0 0.0
    %665 = vmatpush.msra.mxu0 0.0
    %666 = vmatpush.msra.mxu0 0.0
    %667 = vmatpush.msra.mxu0 0.0
    %668 = vmatpush.msra.mxu0 0.0
    %669 = vmatpush.msra.mxu0 0.0
    %670 = vmatpush.msra.mxu0 0.0
    %671 = vmatpush.msra.mxu0 0.0
    %672 = vmatpush.msra.mxu0 0.0
    %673 = vmatpush.msra.mxu0 0.0
    %674 = vmatpush.msra.mxu0 0.0
    %675 = vmatpush.msra.mxu0 0.0
    %676 = vmatpush.msra.mxu0 0.0
    %677 = vmatpush.msra.mxu0 0.0
    %678 = vmatpush.msra.mxu0 0.0
    %679 = vmatpush.msra.mxu0 %v144
    %680 = vmatmul.f32.gmra.mxu0 %v662
    %v681 = vpop.f32.mrf.mxu0
    %v682 = vadd.f32 0.0, %v681
    %683 = vdwg.mxu0
    %v684 = vadd.f32 %v660, %v682
    %v685 = vtanh.pop %v684
    %686 = vst.msk [vmem:[#allocation2 + $0x26] sm:$0x3] %vm172, %v685
    %v687 = vld [vmem:[#allocation3 + $0x28] sm:$0x3]
    %v689 = vsel %vm134, %v685, 0
    %691 = vmatpush.msra.mxu0 0.0
    %692 = vmatpush.msra.mxu0 0.0
    %693 = vmatpush.msra.mxu0 0.0
    %694 = vmatpush.msra.mxu0 0.0
    %695 = vmatpush.msra.mxu0 0.0
    %696 = vmatpush.msra.mxu0 0.0
    %697 = vmatpush.msra.mxu0 0.0
    %698 = vmatpush.msra.mxu0 0.0
    %699 = vmatpush.msra.mxu0 0.0
    %700 = vmatpush.msra.mxu0 0.0
    %701 = vmatpush.msra.mxu0 0.0
    %702 = vmatpush.msra.mxu0 0.0
    %703 = vmatpush.msra.mxu0 0.0
    %704 = vmatpush.msra.mxu0 0.0
    %705 = vmatpush.msra.mxu0 0.0
    %706 = vmatpush.msra.mxu0 %v144
    %707 = vmatmul.f32.gmra.mxu0 %v689
    %v708 = vpop.f32.mrf.mxu0
    %v709 = vadd.f32 0.0, %v708
    %710 = vdwg.mxu0
    %v711 = vadd.f32 %v687, %v709
    %v712 = vtanh.pop %v711
    %713 = vst.msk [vmem:[#allocation2 + $0x28] sm:$0x3] %vm172, %v712
    %v714 = vld [vmem:[#allocation3 + $0x2a] sm:$0x3]
    %v716 = vsel %vm134, %v712, 0
    %718 = vmatpush.msra.mxu0 0.0
    %719 = vmatpush.msra.mxu0 0.0
    %720 = vmatpush.msra.mxu0 0.0
    %721 = vmatpush.msra.mxu0 0.0
    %722 = vmatpush.msra.mxu0 0.0
    %723 = vmatpush.msra.mxu0 0.0
    %724 = vmatpush.msra.mxu0 0.0
    %725 = vmatpush.msra.mxu0 0.0
    %726 = vmatpush.msra.mxu0 0.0
    %727 = vmatpush.msra.mxu0 0.0
    %728 = vmatpush.msra.mxu0 0.0
    %729 = vmatpush.msra.mxu0 0.0
    %730 = vmatpush.msra.mxu0 0.0
    %731 = vmatpush.msra.mxu0 0.0
    %732 = vmatpush.msra.mxu0 0.0
    %733 = vmatpush.msra.mxu0 %v144
    %734 = vmatmul.f32.gmra.mxu0 %v716
    %v735 = vpop.f32.mrf.mxu0
    %v736 = vadd.f32 0.0, %v735
    %737 = vdwg.mxu0
    %v738 = vadd.f32 %v714, %v736
    %v739 = vtanh.pop %v738
    %740 = vst.msk [vmem:[#allocation2 + $0x2a] sm:$0x3] %vm172, %v739
    %v741 = vld [vmem:[#allocation3 + $0x2c] sm:$0x3]
    %v743 = vsel %vm134, %v739, 0
    %745 = vmatpush.msra.mxu0 0.0
    %746 = vmatpush.msra.mxu0 0.0
    %747 = vmatpush.msra.mxu0 0.0
    %748 = vmatpush.msra.mxu0 0.0
    %749 = vmatpush.msra.mxu0 0.0
    %750 = vmatpush.msra.mxu0 0.0
    %751 = vmatpush.msra.mxu0 0.0
    %752 = vmatpush.msra.mxu0 0.0
    %753 = vmatpush.msra.mxu0 0.0
    %754 = vmatpush.msra.mxu0 0.0
    %755 = vmatpush.msra.mxu0 0.0
    %756 = vmatpush.msra.mxu0 0.0
    %757 = vmatpush.msra.mxu0 0.0
    %758 = vmatpush.msra.mxu0 0.0
    %759 = vmatpush.msra.mxu0 0.0
    %760 = vmatpush.msra.mxu0 %v144
    %761 = vmatmul.f32.gmra.mxu0 %v743
    %v762 = vpop.f32.mrf.mxu0
    %v763 = vadd.f32 0.0, %v762
    %764 = vdwg.mxu0
    %v765 = vadd.f32 %v741, %v763
    %v766 = vtanh.pop %v765
    %767 = vst.msk [vmem:[#allocation2 + $0x2c] sm:$0x3] %vm172, %v766
    %v768 = vld [vmem:[#allocation3 + $0x2e] sm:$0x3]
    %v770 = vsel %vm134, %v766, 0
    %772 = vmatpush.msra.mxu0 0.0
    %773 = vmatpush.msra.mxu0 0.0
    %774 = vmatpush.msra.mxu0 0.0
    %775 = vmatpush.msra.mxu0 0.0
    %776 = vmatpush.msra.mxu0 0.0
    %777 = vmatpush.msra.mxu0 0.0
    %778 = vmatpush.msra.mxu0 0.0
    %779 = vmatpush.msra.mxu0 0.0
    %780 = vmatpush.msra.mxu0 0.0
    %781 = vmatpush.msra.mxu0 0.0
    %782 = vmatpush.msra.mxu0 0.0
    %783 = vmatpush.msra.mxu0 0.0
    %784 = vmatpush.msra.mxu0 0.0
    %785 = vmatpush.msra.mxu0 0.0
    %786 = vmatpush.msra.mxu0 0.0
    %787 = vmatpush.msra.mxu0 %v144
    %788 = vmatmul.f32.gmra.mxu0 %v770
    %v789 = vpop.f32.mrf.mxu0
    %v790 = vadd.f32 0.0, %v789
    %791 = vdwg.mxu0
    %v792 = vadd.f32 %v768, %v790
    %v793 = vtanh.pop %v792
    %794 = vst.msk [vmem:[#allocation2 + $0x2e] sm:$0x3] %vm172, %v793
    %v795 = vld [vmem:[#allocation3 + $0x30] sm:$0x3]
    %v797 = vsel %vm134, %v793, 0
    %799 = vmatpush.msra.mxu0 0.0
    %800 = vmatpush.msra.mxu0 0.0
    %801 = vmatpush.msra.mxu0 0.0
    %802 = vmatpush.msra.mxu0 0.0
    %803 = vmatpush.msra.mxu0 0.0
    %804 = vmatpush.msra.mxu0 0.0
    %805 = vmatpush.msra.mxu0 0.0
    %806 = vmatpush.msra.mxu0 0.0
    %807 = vmatpush.msra.mxu0 0.0
    %808 = vmatpush.msra.mxu0 0.0
    %809 = vmatpush.msra.mxu0 0.0
    %810 = vmatpush.msra.mxu0 0.0
    %811 = vmatpush.msra.mxu0 0.0
    %812 = vmatpush.msra.mxu0 0.0
    %813 = vmatpush.msra.mxu0 0.0
    %814 = vmatpush.msra.mxu0 %v144
    %815 = vmatmul.f32.gmra.mxu0 %v797
    %v816 = vpop.f32.mrf.mxu0
    %v817 = vadd.f32 0.0, %v816
    %818 = vdwg.mxu0
    %v819 = vadd.f32 %v795, %v817
    %v820 = vtanh.pop %v819
    %821 = vst.msk [vmem:[#allocation2 + $0x30] sm:$0x3] %vm172, %v820
    %v822 = vld [vmem:[#allocation3 + $0x32] sm:$0x3]
    %v824 = vsel %vm134, %v820, 0
    %826 = vmatpush.msra.mxu0 0.0
    %827 = vmatpush.msra.mxu0 0.0
    %828 = vmatpush.msra.mxu0 0.0
    %829 = vmatpush.msra.mxu0 0.0
    %830 = vmatpush.msra.mxu0 0.0
    %831 = vmatpush.msra.mxu0 0.0
    %832 = vmatpush.msra.mxu0 0.0
    %833 = vmatpush.msra.mxu0 0.0
    %834 = vmatpush.msra.mxu0 0.0
    %835 = vmatpush.msra.mxu0 0.0
    %836 = vmatpush.msra.mxu0 0.0
    %837 = vmatpush.msra.mxu0 0.0
    %838 = vmatpush.msra.mxu0 0.0
    %839 = vmatpush.msra.mxu0 0.0
    %840 = vmatpush.msra.mxu0 0.0
    %841 = vmatpush.msra.mxu0 %v144
    %842 = vmatmul.f32.gmra.mxu0 %v824
    %v843 = vpop.f32.mrf.mxu0
    %v844 = vadd.f32 0.0, %v843
    %845 = vdwg.mxu0
    %v846 = vadd.f32 %v822, %v844
    %v847 = vtanh.pop %v846
    %848 = vst.msk [vmem:[#allocation2 + $0x32] sm:$0x3] %vm172, %v847
    %v849 = vld [vmem:[#allocation3 + $0x34] sm:$0x3]
    %v851 = vsel %vm134, %v847, 0
    %853 = vmatpush.msra.mxu0 0.0
    %854 = vmatpush.msra.mxu0 0.0
    %855 = vmatpush.msra.mxu0 0.0
    %856 = vmatpush.msra.mxu0 0.0
    %857 = vmatpush.msra.mxu0 0.0
    %858 = vmatpush.msra.mxu0 0.0
    %859 = vmatpush.msra.mxu0 0.0
    %860 = vmatpush.msra.mxu0 0.0
    %861 = vmatpush.msra.mxu0 0.0
    %862 = vmatpush.msra.mxu0 0.0
    %863 = vmatpush.msra.mxu0 0.0
    %864 = vmatpush.msra.mxu0 0.0
    %865 = vmatpush.msra.mxu0 0.0
    %866 = vmatpush.msra.mxu0 0.0
    %867 = vmatpush.msra.mxu0 0.0
    %868 = vmatpush.msra.mxu0 %v144
    %869 = vmatmul.f32.gmra.mxu0 %v851
    %v870 = vpop.f32.mrf.mxu0
    %v871 = vadd.f32 0.0, %v870
    %872 = vdwg.mxu0
    %v873 = vadd.f32 %v849, %v871
    %v874 = vtanh.pop %v873
    %875 = vst.msk [vmem:[#allocation2 + $0x34] sm:$0x3] %vm172, %v874
    %v876 = vld [vmem:[#allocation3 + $0x36] sm:$0x3]
    %v878 = vsel %vm134, %v874, 0
    %880 = vmatpush.msra.mxu0 0.0
    %881 = vmatpush.msra.mxu0 0.0
    %882 = vmatpush.msra.mxu0 0.0
    %883 = vmatpush.msra.mxu0 0.0
    %884 = vmatpush.msra.mxu0 0.0
    %885 = vmatpush.msra.mxu0 0.0
    %886 = vmatpush.msra.mxu0 0.0
    %887 = vmatpush.msra.mxu0 0.0
    %888 = vmatpush.msra.mxu0 0.0
    %889 = vmatpush.msra.mxu0 0.0
    %890 = vmatpush.msra.mxu0 0.0
    %891 = vmatpush.msra.mxu0 0.0
    %892 = vmatpush.msra.mxu0 0.0
    %893 = vmatpush.msra.mxu0 0.0
    %894 = vmatpush.msra.mxu0 0.0
    %895 = vmatpush.msra.mxu0 %v144
    %896 = vmatmul.f32.gmra.mxu0 %v878
    %v897 = vpop.f32.mrf.mxu0
    %v898 = vadd.f32 0.0, %v897
    %899 = vdwg.mxu0
    %v900 = vadd.f32 %v876, %v898
    %v901 = vtanh.pop %v900
    %902 = vst.msk [vmem:[#allocation2 + $0x36] sm:$0x3] %vm172, %v901
    %v903 = vld [vmem:[#allocation3 + $0x38] sm:$0x3]
    %v905 = vsel %vm134, %v901, 0
    %907 = vmatpush.msra.mxu0 0.0
    %908 = vmatpush.msra.mxu0 0.0
    %909 = vmatpush.msra.mxu0 0.0
    %910 = vmatpush.msra.mxu0 0.0
    %911 = vmatpush.msra.mxu0 0.0
    %912 = vmatpush.msra.mxu0 0.0
    %913 = vmatpush.msra.mxu0 0.0
    %914 = vmatpush.msra.mxu0 0.0
    %915 = vmatpush.msra.mxu0 0.0
    %916 = vmatpush.msra.mxu0 0.0
    %917 = vmatpush.msra.mxu0 0.0
    %918 = vmatpush.msra.mxu0 0.0
    %919 = vmatpush.msra.mxu0 0.0
    %920 = vmatpush.msra.mxu0 0.0
    %921 = vmatpush.msra.mxu0 0.0
    %922 = vmatpush.msra.mxu0 %v144
    %923 = vmatmul.f32.gmra.mxu0 %v905
    %v924 = vpop.f32.mrf.mxu0
    %v925 = vadd.f32 0.0, %v924
    %926 = vdwg.mxu0
    %v927 = vadd.f32 %v903, %v925
    %v928 = vtanh.pop %v927
    %929 = vst.msk [vmem:[#allocation2 + $0x38] sm:$0x3] %vm172, %v928
    %v930 = vld [vmem:[#allocation3 + $0x3a] sm:$0x3]
    %v932 = vsel %vm134, %v928, 0
    %934 = vmatpush.msra.mxu0 0.0
    %935 = vmatpush.msra.mxu0 0.0
    %936 = vmatpush.msra.mxu0 0.0
    %937 = vmatpush.msra.mxu0 0.0
    %938 = vmatpush.msra.mxu0 0.0
    %939 = vmatpush.msra.mxu0 0.0
    %940 = vmatpush.msra.mxu0 0.0
    %941 = vmatpush.msra.mxu0 0.0
    %942 = vmatpush.msra.mxu0 0.0
    %943 = vmatpush.msra.mxu0 0.0
    %944 = vmatpush.msra.mxu0 0.0
    %945 = vmatpush.msra.mxu0 0.0
    %946 = vmatpush.msra.mxu0 0.0
    %947 = vmatpush.msra.mxu0 0.0
    %948 = vmatpush.msra.mxu0 0.0
    %949 = vmatpush.msra.mxu0 %v144
    %950 = vmatmul.f32.gmra.mxu0 %v932
    %v951 = vpop.f32.mrf.mxu0
    %v952 = vadd.f32 0.0, %v951
    %953 = vdwg.mxu0
    %v954 = vadd.f32 %v930, %v952
    %v955 = vtanh.pop %v954
    %956 = vst.msk [vmem:[#allocation2 + $0x3a] sm:$0x3] %vm172, %v955
    %v957 = vld [vmem:[%s5 + $0x1] sm:$0x1]
    %v958 = vld [vmem:[#allocation2] sm:$0xff]
    %v959 = vld [vmem:[#allocation2 + $0x8] sm:$0xff]
    %v960 = vld [vmem:[#allocation2 + $0x10] sm:$0xff]
    %v961 = vld [vmem:[#allocation2 + $0x18] sm:$0xff]
    %v962 = vld [vmem:[#allocation2 + $0x20] sm:$0xff]
    %v963 = vld [vmem:[#allocation2 + $0x28] sm:$0xff]
    %v964 = vld [vmem:[#allocation2 + $0x30] sm:$0xff]
    %v965 = vld [vmem:[#allocation2 + $0x38] sm:$0xf]
    %v966 = vld [vmem:[%s3] sm:$0xff]
    %v967 = vperm.slane %v957, 0
    %v969 = vsel %vm134, %v958, 0
    %v972 = vsel %vm134, %v959, 0
    %v975 = vsel %vm134, %v960, 0
    %v978 = vsel %vm134, %v961, 0
    %v981 = vsel %vm134, %v962, 0
    %v984 = vsel %vm134, %v963, 0
    %v987 = vsel %vm134, %v964, 0
    %v990 = vsel %vm134, %v965, 0
    %992 = vmatpush.msra.mxu0 0.0
    %993 = vmatpush.msra.mxu0 0.0
    %994 = vmatpush.msra.mxu0 0.0
    %995 = vmatpush.msra.mxu0 0.0
    %996 = vmatpush.msra.mxu0 0.0
    %997 = vmatpush.msra.mxu0 0.0
    %998 = vmatpush.msra.mxu0 0.0
    %999 = vmatpush.msra.mxu0 0.0
    %1000 = vmatpush.msra.mxu0 0.0
    %1001 = vmatpush.msra.mxu0 0.0
    %1002 = vmatpush.msra.mxu0 0.0
    %1003 = vmatpush.msra.mxu0 0.0
    %1004 = vmatpush.msra.mxu0 0.0
    %1005 = vmatpush.msra.mxu0 0.0
    %1006 = vmatpush.msra.mxu0 0.0
    %1007 = vmatpush.msra.mxu0 %v966
    %1008 = vmatmul.f32.gmra.mxu0 %v969
    %v1009 = vpop.f32.mrf.mxu0
    %v1010 = vadd.f32 %v967, %v1009
    %1011 = vmatmul.f32.gmra.mxu0 %v972
    %v1012 = vpop.f32.mrf.mxu0
    %v1013 = vadd.f32 %v967, %v1012
    %1014 = vmatmul.f32.gmra.mxu0 %v975
    %v1015 = vpop.f32.mrf.mxu0
    %v1016 = vadd.f32 %v967, %v1015
    %1017 = vmatmul.f32.gmra.mxu0 %v978
    %v1018 = vpop.f32.mrf.mxu0
    %v1019 = vadd.f32 %v967, %v1018
    %1020 = vmatmul.f32.gmra.mxu0 %v981
    %v1021 = vpop.f32.mrf.mxu0
    %v1022 = vadd.f32 %v967, %v1021
    %1023 = vmatmul.f32.gmra.mxu0 %v984
    %v1024 = vpop.f32.mrf.mxu0
    %v1025 = vadd.f32 %v967, %v1024
    %1026 = vmatmul.f32.gmra.mxu0 %v987
    %v1027 = vpop.f32.mrf.mxu0
    %v1028 = vadd.f32 %v967, %v1027
    %1029 = vmatmul.f32.gmra.mxu0 %v990
    %v1030 = vpop.f32.mrf.mxu0
    %v1031 = vadd.f32 %v967, %v1030
    %1032 = vdwg.mxu0
    %1033 = vst.msk [vmem:[#allocation3] sm:$0xff] %vm134, %v1010
    %1034 = vst.msk [vmem:[#allocation3 + $0x8] sm:$0xff] %vm134, %v1013
    %1035 = vst.msk [vmem:[#allocation3 + $0x10] sm:$0xff] %vm134, %v1016
    %1036 = vst.msk [vmem:[#allocation3 + $0x18] sm:$0xff] %vm134, %v1019
    %1037 = vst.msk [vmem:[#allocation3 + $0x20] sm:$0xff] %vm134, %v1022
    %1038 = vst.msk [vmem:[#allocation3 + $0x28] sm:$0xff] %vm134, %v1025
    %1039 = vst.msk [vmem:[#allocation3 + $0x30] sm:$0xff] %vm134, %v1028
    %1040 = vst.msk [vmem:[#allocation3 + $0x38] sm:$0xf] %vm142, %v1031
    %s1041 = scalar_lea.vmem %s4, 8
    %v1042 = vld [vmem:[%s1041] sm:$0xff]
    %s1043 = scalar_lea.vmem %s1, 2
    %v1044 = vld [vmem:[%s1043] sm:$0x3]
    %v1045 = vld [vmem:[#allocation3] sm:$0x3]
    %v1047 = vsel %vm134, %v1044, 0
    %1049 = vmatpush.msra.mxu0 0.0
    %1050 = vmatpush.msra.mxu0 0.0
    %1051 = vmatpush.msra.mxu0 0.0
    %1052 = vmatpush.msra.mxu0 0.0
    %1053 = vmatpush.msra.mxu0 0.0
    %1054 = vmatpush.msra.mxu0 0.0
    %1055 = vmatpush.msra.mxu0 0.0
    %1056 = vmatpush.msra.mxu0 0.0
    %1057 = vmatpush.msra.mxu0 0.0
    %1058 = vmatpush.msra.mxu0 0.0
    %1059 = vmatpush.msra.mxu0 0.0
    %1060 = vmatpush.msra.mxu0 0.0
    %1061 = vmatpush.msra.mxu0 0.0
    %1062 = vmatpush.msra.mxu0 0.0
    %1063 = vmatpush.msra.mxu0 0.0
    %1064 = vmatpush.msra.mxu0 %v1042
    %1065 = vmatmul.f32.gmra.mxu0 %v1047
    %v1066 = vpop.f32.mrf.mxu0
    %v1067 = vadd.f32 0.0, %v1066
    %1068 = vdwg.mxu0
    %v1069 = vadd.f32 %v1045, %v1067
    %v1070 = vtanh.pop %v1069
    %1071 = vst.msk [vmem:[#allocation2] sm:$0x3] %vm172, %v1070
    %v1072 = vld [vmem:[#allocation3 + $0x2] sm:$0x3]
    %v1074 = vsel %vm134, %v1070, 0
    %1076 = vmatpush.msra.mxu0 0.0
    %1077 = vmatpush.msra.mxu0 0.0
    %1078 = vmatpush.msra.mxu0 0.0
    %1079 = vmatpush.msra.mxu0 0.0
    %1080 = vmatpush.msra.mxu0 0.0
    %1081 = vmatpush.msra.mxu0 0.0
    %1082 = vmatpush.msra.mxu0 0.0
    %1083 = vmatpush.msra.mxu0 0.0
    %1084 = vmatpush.msra.mxu0 0.0
    %1085 = vmatpush.msra.mxu0 0.0
    %1086 = vmatpush.msra.mxu0 0.0
    %1087 = vmatpush.msra.mxu0 0.0
    %1088 = vmatpush.msra.mxu0 0.0
    %1089 = vmatpush.msra.mxu0 0.0
    %1090 = vmatpush.msra.mxu0 0.0
    %1091 = vmatpush.msra.mxu0 %v1042
    %1092 = vmatmul.f32.gmra.mxu0 %v1074
    %v1093 = vpop.f32.mrf.mxu0
    %v1094 = vadd.f32 0.0, %v1093
    %1095 = vdwg.mxu0
    %v1096 = vadd.f32 %v1072, %v1094
    %v1097 = vtanh.pop %v1096
    %1098 = vst.msk [vmem:[#allocation2 + $0x2] sm:$0x3] %vm172, %v1097
    %v1099 = vld [vmem:[#allocation3 + $0x4] sm:$0x3]
    %v1101 = vsel %vm134, %v1097, 0
    %1103 = vmatpush.msra.mxu0 0.0
    %1104 = vmatpush.msra.mxu0 0.0
    %1105 = vmatpush.msra.mxu0 0.0
    %1106 = vmatpush.msra.mxu0 0.0
    %1107 = vmatpush.msra.mxu0 0.0
    %1108 = vmatpush.msra.mxu0 0.0
    %1109 = vmatpush.msra.mxu0 0.0
    %1110 = vmatpush.msra.mxu0 0.0
    %1111 = vmatpush.msra.mxu0 0.0
    %1112 = vmatpush.msra.mxu0 0.0
    %1113 = vmatpush.msra.mxu0 0.0
    %1114 = vmatpush.msra.mxu0 0.0
    %1115 = vmatpush.msra.mxu0 0.0
    %1116 = vmatpush.msra.mxu0 0.0
    %1117 = vmatpush.msra.mxu0 0.0
    %1118 = vmatpush.msra.mxu0 %v1042
    %1119 = vmatmul.f32.gmra.mxu0 %v1101
    %v1120 = vpop.f32.mrf.mxu0
    %v1121 = vadd.f32 0.0, %v1120
    %1122 = vdwg.mxu0
    %v1123 = vadd.f32 %v1099, %v1121
    %v1124 = vtanh.pop %v1123
    %1125 = vst.msk [vmem:[#allocation2 + $0x4] sm:$0x3] %vm172, %v1124
    %v1126 = vld [vmem:[#allocation3 + $0x6] sm:$0x3]
    %v1128 = vsel %vm134, %v1124, 0
    %1130 = vmatpush.msra.mxu0 0.0
    %1131 = vmatpush.msra.mxu0 0.0
    %1132 = vmatpush.msra.mxu0 0.0
    %1133 = vmatpush.msra.mxu0 0.0
    %1134 = vmatpush.msra.mxu0 0.0
    %1135 = vmatpush.msra.mxu0 0.0
    %1136 = vmatpush.msra.mxu0 0.0
    %1137 = vmatpush.msra.mxu0 0.0
    %1138 = vmatpush.msra.mxu0 0.0
    %1139 = vmatpush.msra.mxu0 0.0
    %1140 = vmatpush.msra.mxu0 0.0
    %1141 = vmatpush.msra.mxu0 0.0
    %1142 = vmatpush.msra.mxu0 0.0
    %1143 = vmatpush.msra.mxu0 0.0
    %1144 = vmatpush.msra.mxu0 0.0
    %1145 = vmatpush.msra.mxu0 %v1042
    %1146 = vmatmul.f32.gmra.mxu0 %v1128
    %v1147 = vpop.f32.mrf.mxu0
    %v1148 = vadd.f32 0.0, %v1147
    %1149 = vdwg.mxu0
    %v1150 = vadd.f32 %v1126, %v1148
    %v1151 = vtanh.pop %v1150
    %1152 = vst.msk [vmem:[#allocation2 + $0x6] sm:$0x3] %vm172, %v1151
    %v1153 = vld [vmem:[#allocation3 + $0x8] sm:$0x3]
    %v1155 = vsel %vm134, %v1151, 0
    %1157 = vmatpush.msra.mxu0 0.0
    %1158 = vmatpush.msra.mxu0 0.0
    %1159 = vmatpush.msra.mxu0 0.0
    %1160 = vmatpush.msra.mxu0 0.0
    %1161 = vmatpush.msra.mxu0 0.0
    %1162 = vmatpush.msra.mxu0 0.0
    %1163 = vmatpush.msra.mxu0 0.0
    %1164 = vmatpush.msra.mxu0 0.0
    %1165 = vmatpush.msra.mxu0 0.0
    %1166 = vmatpush.msra.mxu0 0.0
    %1167 = vmatpush.msra.mxu0 0.0
    %1168 = vmatpush.msra.mxu0 0.0
    %1169 = vmatpush.msra.mxu0 0.0
    %1170 = vmatpush.msra.mxu0 0.0
    %1171 = vmatpush.msra.mxu0 0.0
    %1172 = vmatpush.msra.mxu0 %v1042
    %1173 = vmatmul.f32.gmra.mxu0 %v1155
    %v1174 = vpop.f32.mrf.mxu0
    %v1175 = vadd.f32 0.0, %v1174
    %1176 = vdwg.mxu0
    %v1177 = vadd.f32 %v1153, %v1175
    %v1178 = vtanh.pop %v1177
    %1179 = vst.msk [vmem:[#allocation2 + $0x8] sm:$0x3] %vm172, %v1178
    %v1180 = vld [vmem:[#allocation3 + $0xa] sm:$0x3]
    %v1182 = vsel %vm134, %v1178, 0
    %1184 = vmatpush.msra.mxu0 0.0
    %1185 = vmatpush.msra.mxu0 0.0
    %1186 = vmatpush.msra.mxu0 0.0
    %1187 = vmatpush.msra.mxu0 0.0
    %1188 = vmatpush.msra.mxu0 0.0
    %1189 = vmatpush.msra.mxu0 0.0
    %1190 = vmatpush.msra.mxu0 0.0
    %1191 = vmatpush.msra.mxu0 0.0
    %1192 = vmatpush.msra.mxu0 0.0
    %1193 = vmatpush.msra.mxu0 0.0
    %1194 = vmatpush.msra.mxu0 0.0
    %1195 = vmatpush.msra.mxu0 0.0
    %1196 = vmatpush.msra.mxu0 0.0
    %1197 = vmatpush.msra.mxu0 0.0
    %1198 = vmatpush.msra.mxu0 0.0
    %1199 = vmatpush.msra.mxu0 %v1042
    %1200 = vmatmul.f32.gmra.mxu0 %v1182
    %v1201 = vpop.f32.mrf.mxu0
    %v1202 = vadd.f32 0.0, %v1201
    %1203 = vdwg.mxu0
    %v1204 = vadd.f32 %v1180, %v1202
    %v1205 = vtanh.pop %v1204
    %1206 = vst.msk [vmem:[#allocation2 + $0xa] sm:$0x3] %vm172, %v1205
    %v1207 = vld [vmem:[#allocation3 + $0xc] sm:$0x3]
    %v1209 = vsel %vm134, %v1205, 0
    %1211 = vmatpush.msra.mxu0 0.0
    %1212 = vmatpush.msra.mxu0 0.0
    %1213 = vmatpush.msra.mxu0 0.0
    %1214 = vmatpush.msra.mxu0 0.0
    %1215 = vmatpush.msra.mxu0 0.0
    %1216 = vmatpush.msra.mxu0 0.0
    %1217 = vmatpush.msra.mxu0 0.0
    %1218 = vmatpush.msra.mxu0 0.0
    %1219 = vmatpush.msra.mxu0 0.0
    %1220 = vmatpush.msra.mxu0 0.0
    %1221 = vmatpush.msra.mxu0 0.0
    %1222 = vmatpush.msra.mxu0 0.0
    %1223 = vmatpush.msra.mxu0 0.0
    %1224 = vmatpush.msra.mxu0 0.0
    %1225 = vmatpush.msra.mxu0 0.0
    %1226 = vmatpush.msra.mxu0 %v1042
    %1227 = vmatmul.f32.gmra.mxu0 %v1209
    %v1228 = vpop.f32.mrf.mxu0
    %v1229 = vadd.f32 0.0, %v1228
    %1230 = vdwg.mxu0
    %v1231 = vadd.f32 %v1207, %v1229
    %v1232 = vtanh.pop %v1231
    %1233 = vst.msk [vmem:[#allocation2 + $0xc] sm:$0x3] %vm172, %v1232
    %v1234 = vld [vmem:[#allocation3 + $0xe] sm:$0x3]
    %v1236 = vsel %vm134, %v1232, 0
    %1238 = vmatpush.msra.mxu0 0.0
    %1239 = vmatpush.msra.mxu0 0.0
    %1240 = vmatpush.msra.mxu0 0.0
    %1241 = vmatpush.msra.mxu0 0.0
    %1242 = vmatpush.msra.mxu0 0.0
    %1243 = vmatpush.msra.mxu0 0.0
    %1244 = vmatpush.msra.mxu0 0.0
    %1245 = vmatpush.msra.mxu0 0.0
    %1246 = vmatpush.msra.mxu0 0.0
    %1247 = vmatpush.msra.mxu0 0.0
    %1248 = vmatpush.msra.mxu0 0.0
    %1249 = vmatpush.msra.mxu0 0.0
    %1250 = vmatpush.msra.mxu0 0.0
    %1251 = vmatpush.msra.mxu0 0.0
    %1252 = vmatpush.msra.mxu0 0.0
    %1253 = vmatpush.msra.mxu0 %v1042
    %1254 = vmatmul.f32.gmra.mxu0 %v1236
    %v1255 = vpop.f32.mrf.mxu0
    %v1256 = vadd.f32 0.0, %v1255
    %1257 = vdwg.mxu0
    %v1258 = vadd.f32 %v1234, %v1256
    %v1259 = vtanh.pop %v1258
    %1260 = vst.msk [vmem:[#allocation2 + $0xe] sm:$0x3] %vm172, %v1259
    %v1261 = vld [vmem:[#allocation3 + $0x10] sm:$0x3]
    %v1263 = vsel %vm134, %v1259, 0
    %1265 = vmatpush.msra.mxu0 0.0
    %1266 = vmatpush.msra.mxu0 0.0
    %1267 = vmatpush.msra.mxu0 0.0
    %1268 = vmatpush.msra.mxu0 0.0
    %1269 = vmatpush.msra.mxu0 0.0
    %1270 = vmatpush.msra.mxu0 0.0
    %1271 = vmatpush.msra.mxu0 0.0
    %1272 = vmatpush.msra.mxu0 0.0
    %1273 = vmatpush.msra.mxu0 0.0
    %1274 = vmatpush.msra.mxu0 0.0
    %1275 = vmatpush.msra.mxu0 0.0
    %1276 = vmatpush.msra.mxu0 0.0
    %1277 = vmatpush.msra.mxu0 0.0
    %1278 = vmatpush.msra.mxu0 0.0
    %1279 = vmatpush.msra.mxu0 0.0
    %1280 = vmatpush.msra.mxu0 %v1042
    %1281 = vmatmul.f32.gmra.mxu0 %v1263
    %v1282 = vpop.f32.mrf.mxu0
    %v1283 = vadd.f32 0.0, %v1282
    %1284 = vdwg.mxu0
    %v1285 = vadd.f32 %v1261, %v1283
    %v1286 = vtanh.pop %v1285
    %1287 = vst.msk [vmem:[#allocation2 + $0x10] sm:$0x3] %vm172, %v1286
    %v1288 = vld [vmem:[#allocation3 + $0x12] sm:$0x3]
    %v1290 = vsel %vm134, %v1286, 0
    %1292 = vmatpush.msra.mxu0 0.0
    %1293 = vmatpush.msra.mxu0 0.0
    %1294 = vmatpush.msra.mxu0 0.0
    %1295 = vmatpush.msra.mxu0 0.0
    %1296 = vmatpush.msra.mxu0 0.0
    %1297 = vmatpush.msra.mxu0 0.0
    %1298 = vmatpush.msra.mxu0 0.0
    %1299 = vmatpush.msra.mxu0 0.0
    %1300 = vmatpush.msra.mxu0 0.0
    %1301 = vmatpush.msra.mxu0 0.0
    %1302 = vmatpush.msra.mxu0 0.0
    %1303 = vmatpush.msra.mxu0 0.0
    %1304 = vmatpush.msra.mxu0 0.0
    %1305 = vmatpush.msra.mxu0 0.0
    %1306 = vmatpush.msra.mxu0 0.0
    %1307 = vmatpush.msra.mxu0 %v1042
    %1308 = vmatmul.f32.gmra.mxu0 %v1290
    %v1309 = vpop.f32.mrf.mxu0
    %v1310 = vadd.f32 0.0, %v1309
    %1311 = vdwg.mxu0
    %v1312 = vadd.f32 %v1288, %v1310
    %v1313 = vtanh.pop %v1312
    %1314 = vst.msk [vmem:[#allocation2 + $0x12] sm:$0x3] %vm172, %v1313
    %v1315 = vld [vmem:[#allocation3 + $0x14] sm:$0x3]
    %v1317 = vsel %vm134, %v1313, 0
    %1319 = vmatpush.msra.mxu0 0.0
    %1320 = vmatpush.msra.mxu0 0.0
    %1321 = vmatpush.msra.mxu0 0.0
    %1322 = vmatpush.msra.mxu0 0.0
    %1323 = vmatpush.msra.mxu0 0.0
    %1324 = vmatpush.msra.mxu0 0.0
    %1325 = vmatpush.msra.mxu0 0.0
    %1326 = vmatpush.msra.mxu0 0.0
    %1327 = vmatpush.msra.mxu0 0.0
    %1328 = vmatpush.msra.mxu0 0.0
    %1329 = vmatpush.msra.mxu0 0.0
    %1330 = vmatpush.msra.mxu0 0.0
    %1331 = vmatpush.msra.mxu0 0.0
    %1332 = vmatpush.msra.mxu0 0.0
    %1333 = vmatpush.msra.mxu0 0.0
    %1334 = vmatpush.msra.mxu0 %v1042
    %1335 = vmatmul.f32.gmra.mxu0 %v1317
    %v1336 = vpop.f32.mrf.mxu0
    %v1337 = vadd.f32 0.0, %v1336
    %1338 = vdwg.mxu0
    %v1339 = vadd.f32 %v1315, %v1337
    %v1340 = vtanh.pop %v1339
    %1341 = vst.msk [vmem:[#allocation2 + $0x14] sm:$0x3] %vm172, %v1340
    %v1342 = vld [vmem:[#allocation3 + $0x16] sm:$0x3]
    %v1344 = vsel %vm134, %v1340, 0
    %1346 = vmatpush.msra.mxu0 0.0
    %1347 = vmatpush.msra.mxu0 0.0
    %1348 = vmatpush.msra.mxu0 0.0
    %1349 = vmatpush.msra.mxu0 0.0
    %1350 = vmatpush.msra.mxu0 0.0
    %1351 = vmatpush.msra.mxu0 0.0
    %1352 = vmatpush.msra.mxu0 0.0
    %1353 = vmatpush.msra.mxu0 0.0
    %1354 = vmatpush.msra.mxu0 0.0
    %1355 = vmatpush.msra.mxu0 0.0
    %1356 = vmatpush.msra.mxu0 0.0
    %1357 = vmatpush.msra.mxu0 0.0
    %1358 = vmatpush.msra.mxu0 0.0
    %1359 = vmatpush.msra.mxu0 0.0
    %1360 = vmatpush.msra.mxu0 0.0
    %1361 = vmatpush.msra.mxu0 %v1042
    %1362 = vmatmul.f32.gmra.mxu0 %v1344
    %v1363 = vpop.f32.mrf.mxu0
    %v1364 = vadd.f32 0.0, %v1363
    %1365 = vdwg.mxu0
    %v1366 = vadd.f32 %v1342, %v1364
    %v1367 = vtanh.pop %v1366
    %1368 = vst.msk [vmem:[#allocation2 + $0x16] sm:$0x3] %vm172, %v1367
    %v1369 = vld [vmem:[#allocation3 + $0x18] sm:$0x3]
    %v1371 = vsel %vm134, %v1367, 0
    %1373 = vmatpush.msra.mxu0 0.0
    %1374 = vmatpush.msra.mxu0 0.0
    %1375 = vmatpush.msra.mxu0 0.0
    %1376 = vmatpush.msra.mxu0 0.0
    %1377 = vmatpush.msra.mxu0 0.0
    %1378 = vmatpush.msra.mxu0 0.0
    %1379 = vmatpush.msra.mxu0 0.0
    %1380 = vmatpush.msra.mxu0 0.0
    %1381 = vmatpush.msra.mxu0 0.0
    %1382 = vmatpush.msra.mxu0 0.0
    %1383 = vmatpush.msra.mxu0 0.0
    %1384 = vmatpush.msra.mxu0 0.0
    %1385 = vmatpush.msra.mxu0 0.0
    %1386 = vmatpush.msra.mxu0 0.0
    %1387 = vmatpush.msra.mxu0 0.0
    %1388 = vmatpush.msra.mxu0 %v1042
    %1389 = vmatmul.f32.gmra.mxu0 %v1371
    %v1390 = vpop.f32.mrf.mxu0
    %v1391 = vadd.f32 0.0, %v1390
    %1392 = vdwg.mxu0
    %v1393 = vadd.f32 %v1369, %v1391
    %v1394 = vtanh.pop %v1393
    %1395 = vst.msk [vmem:[#allocation2 + $0x18] sm:$0x3] %vm172, %v1394
    %v1396 = vld [vmem:[#allocation3 + $0x1a] sm:$0x3]
    %v1398 = vsel %vm134, %v1394, 0
    %1400 = vmatpush.msra.mxu0 0.0
    %1401 = vmatpush.msra.mxu0 0.0
    %1402 = vmatpush.msra.mxu0 0.0
    %1403 = vmatpush.msra.mxu0 0.0
    %1404 = vmatpush.msra.mxu0 0.0
    %1405 = vmatpush.msra.mxu0 0.0
    %1406 = vmatpush.msra.mxu0 0.0
    %1407 = vmatpush.msra.mxu0 0.0
    %1408 = vmatpush.msra.mxu0 0.0
    %1409 = vmatpush.msra.mxu0 0.0
    %1410 = vmatpush.msra.mxu0 0.0
    %1411 = vmatpush.msra.mxu0 0.0
    %1412 = vmatpush.msra.mxu0 0.0
    %1413 = vmatpush.msra.mxu0 0.0
    %1414 = vmatpush.msra.mxu0 0.0
    %1415 = vmatpush.msra.mxu0 %v1042
    %1416 = vmatmul.f32.gmra.mxu0 %v1398
    %v1417 = vpop.f32.mrf.mxu0
    %v1418 = vadd.f32 0.0, %v1417
    %1419 = vdwg.mxu0
    %v1420 = vadd.f32 %v1396, %v1418
    %v1421 = vtanh.pop %v1420
    %1422 = vst.msk [vmem:[#allocation2 + $0x1a] sm:$0x3] %vm172, %v1421
    %v1423 = vld [vmem:[#allocation3 + $0x1c] sm:$0x3]
    %v1425 = vsel %vm134, %v1421, 0
    %1427 = vmatpush.msra.mxu0 0.0
    %1428 = vmatpush.msra.mxu0 0.0
    %1429 = vmatpush.msra.mxu0 0.0
    %1430 = vmatpush.msra.mxu0 0.0
    %1431 = vmatpush.msra.mxu0 0.0
    %1432 = vmatpush.msra.mxu0 0.0
    %1433 = vmatpush.msra.mxu0 0.0
    %1434 = vmatpush.msra.mxu0 0.0
    %1435 = vmatpush.msra.mxu0 0.0
    %1436 = vmatpush.msra.mxu0 0.0
    %1437 = vmatpush.msra.mxu0 0.0
    %1438 = vmatpush.msra.mxu0 0.0
    %1439 = vmatpush.msra.mxu0 0.0
    %1440 = vmatpush.msra.mxu0 0.0
    %1441 = vmatpush.msra.mxu0 0.0
    %1442 = vmatpush.msra.mxu0 %v1042
    %1443 = vmatmul.f32.gmra.mxu0 %v1425
    %v1444 = vpop.f32.mrf.mxu0
    %v1445 = vadd.f32 0.0, %v1444
    %1446 = vdwg.mxu0
    %v1447 = vadd.f32 %v1423, %v1445
    %v1448 = vtanh.pop %v1447
    %1449 = vst.msk [vmem:[#allocation2 + $0x1c] sm:$0x3] %vm172, %v1448
    %v1450 = vld [vmem:[#allocation3 + $0x1e] sm:$0x3]
    %v1452 = vsel %vm134, %v1448, 0
    %1454 = vmatpush.msra.mxu0 0.0
    %1455 = vmatpush.msra.mxu0 0.0
    %1456 = vmatpush.msra.mxu0 0.0
    %1457 = vmatpush.msra.mxu0 0.0
    %1458 = vmatpush.msra.mxu0 0.0
    %1459 = vmatpush.msra.mxu0 0.0
    %1460 = vmatpush.msra.mxu0 0.0
    %1461 = vmatpush.msra.mxu0 0.0
    %1462 = vmatpush.msra.mxu0 0.0
    %1463 = vmatpush.msra.mxu0 0.0
    %1464 = vmatpush.msra.mxu0 0.0
    %1465 = vmatpush.msra.mxu0 0.0
    %1466 = vmatpush.msra.mxu0 0.0
    %1467 = vmatpush.msra.mxu0 0.0
    %1468 = vmatpush.msra.mxu0 0.0
    %1469 = vmatpush.msra.mxu0 %v1042
    %1470 = vmatmul.f32.gmra.mxu0 %v1452
    %v1471 = vpop.f32.mrf.mxu0
    %v1472 = vadd.f32 0.0, %v1471
    %1473 = vdwg.mxu0
    %v1474 = vadd.f32 %v1450, %v1472
    %v1475 = vtanh.pop %v1474
    %1476 = vst.msk [vmem:[#allocation2 + $0x1e] sm:$0x3] %vm172, %v1475
    %v1477 = vld [vmem:[#allocation3 + $0x20] sm:$0x3]
    %v1479 = vsel %vm134, %v1475, 0
    %1481 = vmatpush.msra.mxu0 0.0
    %1482 = vmatpush.msra.mxu0 0.0
    %1483 = vmatpush.msra.mxu0 0.0
    %1484 = vmatpush.msra.mxu0 0.0
    %1485 = vmatpush.msra.mxu0 0.0
    %1486 = vmatpush.msra.mxu0 0.0
    %1487 = vmatpush.msra.mxu0 0.0
    %1488 = vmatpush.msra.mxu0 0.0
    %1489 = vmatpush.msra.mxu0 0.0
    %1490 = vmatpush.msra.mxu0 0.0
    %1491 = vmatpush.msra.mxu0 0.0
    %1492 = vmatpush.msra.mxu0 0.0
    %1493 = vmatpush.msra.mxu0 0.0
    %1494 = vmatpush.msra.mxu0 0.0
    %1495 = vmatpush.msra.mxu0 0.0
    %1496 = vmatpush.msra.mxu0 %v1042
    %1497 = vmatmul.f32.gmra.mxu0 %v1479
    %v1498 = vpop.f32.mrf.mxu0
    %v1499 = vadd.f32 0.0, %v1498
    %1500 = vdwg.mxu0
    %v1501 = vadd.f32 %v1477, %v1499
    %v1502 = vtanh.pop %v1501
    %1503 = vst.msk [vmem:[#allocation2 + $0x20] sm:$0x3] %vm172, %v1502
    %v1504 = vld [vmem:[#allocation3 + $0x22] sm:$0x3]
    %v1506 = vsel %vm134, %v1502, 0
    %1508 = vmatpush.msra.mxu0 0.0
    %1509 = vmatpush.msra.mxu0 0.0
    %1510 = vmatpush.msra.mxu0 0.0
    %1511 = vmatpush.msra.mxu0 0.0
    %1512 = vmatpush.msra.mxu0 0.0
    %1513 = vmatpush.msra.mxu0 0.0
    %1514 = vmatpush.msra.mxu0 0.0
    %1515 = vmatpush.msra.mxu0 0.0
    %1516 = vmatpush.msra.mxu0 0.0
    %1517 = vmatpush.msra.mxu0 0.0
    %1518 = vmatpush.msra.mxu0 0.0
    %1519 = vmatpush.msra.mxu0 0.0
    %1520 = vmatpush.msra.mxu0 0.0
    %1521 = vmatpush.msra.mxu0 0.0
    %1522 = vmatpush.msra.mxu0 0.0
    %1523 = vmatpush.msra.mxu0 %v1042
    %1524 = vmatmul.f32.gmra.mxu0 %v1506
    %v1525 = vpop.f32.mrf.mxu0
    %v1526 = vadd.f32 0.0, %v1525
    %1527 = vdwg.mxu0
    %v1528 = vadd.f32 %v1504, %v1526
    %v1529 = vtanh.pop %v1528
    %1530 = vst.msk [vmem:[#allocation2 + $0x22] sm:$0x3] %vm172, %v1529
    %v1531 = vld [vmem:[#allocation3 + $0x24] sm:$0x3]
    %v1533 = vsel %vm134, %v1529, 0
    %1535 = vmatpush.msra.mxu0 0.0
    %1536 = vmatpush.msra.mxu0 0.0
    %1537 = vmatpush.msra.mxu0 0.0
    %1538 = vmatpush.msra.mxu0 0.0
    %1539 = vmatpush.msra.mxu0 0.0
    %1540 = vmatpush.msra.mxu0 0.0
    %1541 = vmatpush.msra.mxu0 0.0
    %1542 = vmatpush.msra.mxu0 0.0
    %1543 = vmatpush.msra.mxu0 0.0
    %1544 = vmatpush.msra.mxu0 0.0
    %1545 = vmatpush.msra.mxu0 0.0
    %1546 = vmatpush.msra.mxu0 0.0
    %1547 = vmatpush.msra.mxu0 0.0
    %1548 = vmatpush.msra.mxu0 0.0
    %1549 = vmatpush.msra.mxu0 0.0
    %1550 = vmatpush.msra.mxu0 %v1042
    %1551 = vmatmul.f32.gmra.mxu0 %v1533
    %v1552 = vpop.f32.mrf.mxu0
    %v1553 = vadd.f32 0.0, %v1552
    %1554 = vdwg.mxu0
    %v1555 = vadd.f32 %v1531, %v1553
    %v1556 = vtanh.pop %v1555
    %1557 = vst.msk [vmem:[#allocation2 + $0x24] sm:$0x3] %vm172, %v1556
    %v1558 = vld [vmem:[#allocation3 + $0x26] sm:$0x3]
    %v1560 = vsel %vm134, %v1556, 0
    %1562 = vmatpush.msra.mxu0 0.0
    %1563 = vmatpush.msra.mxu0 0.0
    %1564 = vmatpush.msra.mxu0 0.0
    %1565 = vmatpush.msra.mxu0 0.0
    %1566 = vmatpush.msra.mxu0 0.0
    %1567 = vmatpush.msra.mxu0 0.0
    %1568 = vmatpush.msra.mxu0 0.0
    %1569 = vmatpush.msra.mxu0 0.0
    %1570 = vmatpush.msra.mxu0 0.0
    %1571 = vmatpush.msra.mxu0 0.0
    %1572 = vmatpush.msra.mxu0 0.0
    %1573 = vmatpush.msra.mxu0 0.0
    %1574 = vmatpush.msra.mxu0 0.0
    %1575 = vmatpush.msra.mxu0 0.0
    %1576 = vmatpush.msra.mxu0 0.0
    %1577 = vmatpush.msra.mxu0 %v1042
    %1578 = vmatmul.f32.gmra.mxu0 %v1560
    %v1579 = vpop.f32.mrf.mxu0
    %v1580 = vadd.f32 0.0, %v1579
    %1581 = vdwg.mxu0
    %v1582 = vadd.f32 %v1558, %v1580
    %v1583 = vtanh.pop %v1582
    %1584 = vst.msk [vmem:[#allocation2 + $0x26] sm:$0x3] %vm172, %v1583
    %v1585 = vld [vmem:[#allocation3 + $0x28] sm:$0x3]
    %v1587 = vsel %vm134, %v1583, 0
    %1589 = vmatpush.msra.mxu0 0.0
    %1590 = vmatpush.msra.mxu0 0.0
    %1591 = vmatpush.msra.mxu0 0.0
    %1592 = vmatpush.msra.mxu0 0.0
    %1593 = vmatpush.msra.mxu0 0.0
    %1594 = vmatpush.msra.mxu0 0.0
    %1595 = vmatpush.msra.mxu0 0.0
    %1596 = vmatpush.msra.mxu0 0.0
    %1597 = vmatpush.msra.mxu0 0.0
    %1598 = vmatpush.msra.mxu0 0.0
    %1599 = vmatpush.msra.mxu0 0.0
    %1600 = vmatpush.msra.mxu0 0.0
    %1601 = vmatpush.msra.mxu0 0.0
    %1602 = vmatpush.msra.mxu0 0.0
    %1603 = vmatpush.msra.mxu0 0.0
    %1604 = vmatpush.msra.mxu0 %v1042
    %1605 = vmatmul.f32.gmra.mxu0 %v1587
    %v1606 = vpop.f32.mrf.mxu0
    %v1607 = vadd.f32 0.0, %v1606
    %1608 = vdwg.mxu0
    %v1609 = vadd.f32 %v1585, %v1607
    %v1610 = vtanh.pop %v1609
    %1611 = vst.msk [vmem:[#allocation2 + $0x28] sm:$0x3] %vm172, %v1610
    %v1612 = vld [vmem:[#allocation3 + $0x2a] sm:$0x3]
    %v1614 = vsel %vm134, %v1610, 0
    %1616 = vmatpush.msra.mxu0 0.0
    %1617 = vmatpush.msra.mxu0 0.0
    %1618 = vmatpush.msra.mxu0 0.0
    %1619 = vmatpush.msra.mxu0 0.0
    %1620 = vmatpush.msra.mxu0 0.0
    %1621 = vmatpush.msra.mxu0 0.0
    %1622 = vmatpush.msra.mxu0 0.0
    %1623 = vmatpush.msra.mxu0 0.0
    %1624 = vmatpush.msra.mxu0 0.0
    %1625 = vmatpush.msra.mxu0 0.0
    %1626 = vmatpush.msra.mxu0 0.0
    %1627 = vmatpush.msra.mxu0 0.0
    %1628 = vmatpush.msra.mxu0 0.0
    %1629 = vmatpush.msra.mxu0 0.0
    %1630 = vmatpush.msra.mxu0 0.0
    %1631 = vmatpush.msra.mxu0 %v1042
    %1632 = vmatmul.f32.gmra.mxu0 %v1614
    %v1633 = vpop.f32.mrf.mxu0
    %v1634 = vadd.f32 0.0, %v1633
    %1635 = vdwg.mxu0
    %v1636 = vadd.f32 %v1612, %v1634
    %v1637 = vtanh.pop %v1636
    %1638 = vst.msk [vmem:[#allocation2 + $0x2a] sm:$0x3] %vm172, %v1637
    %v1639 = vld [vmem:[#allocation3 + $0x2c] sm:$0x3]
    %v1641 = vsel %vm134, %v1637, 0
    %1643 = vmatpush.msra.mxu0 0.0
    %1644 = vmatpush.msra.mxu0 0.0
    %1645 = vmatpush.msra.mxu0 0.0
    %1646 = vmatpush.msra.mxu0 0.0
    %1647 = vmatpush.msra.mxu0 0.0
    %1648 = vmatpush.msra.mxu0 0.0
    %1649 = vmatpush.msra.mxu0 0.0
    %1650 = vmatpush.msra.mxu0 0.0
    %1651 = vmatpush.msra.mxu0 0.0
    %1652 = vmatpush.msra.mxu0 0.0
    %1653 = vmatpush.msra.mxu0 0.0
    %1654 = vmatpush.msra.mxu0 0.0
    %1655 = vmatpush.msra.mxu0 0.0
    %1656 = vmatpush.msra.mxu0 0.0
    %1657 = vmatpush.msra.mxu0 0.0
    %1658 = vmatpush.msra.mxu0 %v1042
    %1659 = vmatmul.f32.gmra.mxu0 %v1641
    %v1660 = vpop.f32.mrf.mxu0
    %v1661 = vadd.f32 0.0, %v1660
    %1662 = vdwg.mxu0
    %v1663 = vadd.f32 %v1639, %v1661
    %v1664 = vtanh.pop %v1663
    %1665 = vst.msk [vmem:[#allocation2 + $0x2c] sm:$0x3] %vm172, %v1664
    %v1666 = vld [vmem:[#allocation3 + $0x2e] sm:$0x3]
    %v1668 = vsel %vm134, %v1664, 0
    %1670 = vmatpush.msra.mxu0 0.0
    %1671 = vmatpush.msra.mxu0 0.0
    %1672 = vmatpush.msra.mxu0 0.0
    %1673 = vmatpush.msra.mxu0 0.0
    %1674 = vmatpush.msra.mxu0 0.0
    %1675 = vmatpush.msra.mxu0 0.0
    %1676 = vmatpush.msra.mxu0 0.0
    %1677 = vmatpush.msra.mxu0 0.0
    %1678 = vmatpush.msra.mxu0 0.0
    %1679 = vmatpush.msra.mxu0 0.0
    %1680 = vmatpush.msra.mxu0 0.0
    %1681 = vmatpush.msra.mxu0 0.0
    %1682 = vmatpush.msra.mxu0 0.0
    %1683 = vmatpush.msra.mxu0 0.0
    %1684 = vmatpush.msra.mxu0 0.0
    %1685 = vmatpush.msra.mxu0 %v1042
    %1686 = vmatmul.f32.gmra.mxu0 %v1668
    %v1687 = vpop.f32.mrf.mxu0
    %v1688 = vadd.f32 0.0, %v1687
    %1689 = vdwg.mxu0
    %v1690 = vadd.f32 %v1666, %v1688
    %v1691 = vtanh.pop %v1690
    %1692 = vst.msk [vmem:[#allocation2 + $0x2e] sm:$0x3] %vm172, %v1691
    %v1693 = vld [vmem:[#allocation3 + $0x30] sm:$0x3]
    %v1695 = vsel %vm134, %v1691, 0
    %1697 = vmatpush.msra.mxu0 0.0
    %1698 = vmatpush.msra.mxu0 0.0
    %1699 = vmatpush.msra.mxu0 0.0
    %1700 = vmatpush.msra.mxu0 0.0
    %1701 = vmatpush.msra.mxu0 0.0
    %1702 = vmatpush.msra.mxu0 0.0
    %1703 = vmatpush.msra.mxu0 0.0
    %1704 = vmatpush.msra.mxu0 0.0
    %1705 = vmatpush.msra.mxu0 0.0
    %1706 = vmatpush.msra.mxu0 0.0
    %1707 = vmatpush.msra.mxu0 0.0
    %1708 = vmatpush.msra.mxu0 0.0
    %1709 = vmatpush.msra.mxu0 0.0
    %1710 = vmatpush.msra.mxu0 0.0
    %1711 = vmatpush.msra.mxu0 0.0
    %1712 = vmatpush.msra.mxu0 %v1042
    %1713 = vmatmul.f32.gmra.mxu0 %v1695
    %v1714 = vpop.f32.mrf.mxu0
    %v1715 = vadd.f32 0.0, %v1714
    %1716 = vdwg.mxu0
    %v1717 = vadd.f32 %v1693, %v1715
    %v1718 = vtanh.pop %v1717
    %1719 = vst.msk [vmem:[#allocation2 + $0x30] sm:$0x3] %vm172, %v1718
    %v1720 = vld [vmem:[#allocation3 + $0x32] sm:$0x3]
    %v1722 = vsel %vm134, %v1718, 0
    %1724 = vmatpush.msra.mxu0 0.0
    %1725 = vmatpush.msra.mxu0 0.0
    %1726 = vmatpush.msra.mxu0 0.0
    %1727 = vmatpush.msra.mxu0 0.0
    %1728 = vmatpush.msra.mxu0 0.0
    %1729 = vmatpush.msra.mxu0 0.0
    %1730 = vmatpush.msra.mxu0 0.0
    %1731 = vmatpush.msra.mxu0 0.0
    %1732 = vmatpush.msra.mxu0 0.0
    %1733 = vmatpush.msra.mxu0 0.0
    %1734 = vmatpush.msra.mxu0 0.0
    %1735 = vmatpush.msra.mxu0 0.0
    %1736 = vmatpush.msra.mxu0 0.0
    %1737 = vmatpush.msra.mxu0 0.0
    %1738 = vmatpush.msra.mxu0 0.0
    %1739 = vmatpush.msra.mxu0 %v1042
    %1740 = vmatmul.f32.gmra.mxu0 %v1722
    %v1741 = vpop.f32.mrf.mxu0
    %v1742 = vadd.f32 0.0, %v1741
    %1743 = vdwg.mxu0
    %v1744 = vadd.f32 %v1720, %v1742
    %v1745 = vtanh.pop %v1744
    %1746 = vst.msk [vmem:[#allocation2 + $0x32] sm:$0x3] %vm172, %v1745
    %v1747 = vld [vmem:[#allocation3 + $0x34] sm:$0x3]
    %v1749 = vsel %vm134, %v1745, 0
    %1751 = vmatpush.msra.mxu0 0.0
    %1752 = vmatpush.msra.mxu0 0.0
    %1753 = vmatpush.msra.mxu0 0.0
    %1754 = vmatpush.msra.mxu0 0.0
    %1755 = vmatpush.msra.mxu0 0.0
    %1756 = vmatpush.msra.mxu0 0.0
    %1757 = vmatpush.msra.mxu0 0.0
    %1758 = vmatpush.msra.mxu0 0.0
    %1759 = vmatpush.msra.mxu0 0.0
    %1760 = vmatpush.msra.mxu0 0.0
    %1761 = vmatpush.msra.mxu0 0.0
    %1762 = vmatpush.msra.mxu0 0.0
    %1763 = vmatpush.msra.mxu0 0.0
    %1764 = vmatpush.msra.mxu0 0.0
    %1765 = vmatpush.msra.mxu0 0.0
    %1766 = vmatpush.msra.mxu0 %v1042
    %1767 = vmatmul.f32.gmra.mxu0 %v1749
    %v1768 = vpop.f32.mrf.mxu0
    %v1769 = vadd.f32 0.0, %v1768
    %1770 = vdwg.mxu0
    %v1771 = vadd.f32 %v1747, %v1769
    %v1772 = vtanh.pop %v1771
    %1773 = vst.msk [vmem:[#allocation2 + $0x34] sm:$0x3] %vm172, %v1772
    %v1774 = vld [vmem:[#allocation3 + $0x36] sm:$0x3]
    %v1776 = vsel %vm134, %v1772, 0
    %1778 = vmatpush.msra.mxu0 0.0
    %1779 = vmatpush.msra.mxu0 0.0
    %1780 = vmatpush.msra.mxu0 0.0
    %1781 = vmatpush.msra.mxu0 0.0
    %1782 = vmatpush.msra.mxu0 0.0
    %1783 = vmatpush.msra.mxu0 0.0
    %1784 = vmatpush.msra.mxu0 0.0
    %1785 = vmatpush.msra.mxu0 0.0
    %1786 = vmatpush.msra.mxu0 0.0
    %1787 = vmatpush.msra.mxu0 0.0
    %1788 = vmatpush.msra.mxu0 0.0
    %1789 = vmatpush.msra.mxu0 0.0
    %1790 = vmatpush.msra.mxu0 0.0
    %1791 = vmatpush.msra.mxu0 0.0
    %1792 = vmatpush.msra.mxu0 0.0
    %1793 = vmatpush.msra.mxu0 %v1042
    %1794 = vmatmul.f32.gmra.mxu0 %v1776
    %v1795 = vpop.f32.mrf.mxu0
    %v1796 = vadd.f32 0.0, %v1795
    %1797 = vdwg.mxu0
    %v1798 = vadd.f32 %v1774, %v1796
    %v1799 = vtanh.pop %v1798
    %1800 = vst.msk [vmem:[#allocation2 + $0x36] sm:$0x3] %vm172, %v1799
    %v1801 = vld [vmem:[#allocation3 + $0x38] sm:$0x3]
    %v1803 = vsel %vm134, %v1799, 0
    %1805 = vmatpush.msra.mxu0 0.0
    %1806 = vmatpush.msra.mxu0 0.0
    %1807 = vmatpush.msra.mxu0 0.0
    %1808 = vmatpush.msra.mxu0 0.0
    %1809 = vmatpush.msra.mxu0 0.0
    %1810 = vmatpush.msra.mxu0 0.0
    %1811 = vmatpush.msra.mxu0 0.0
    %1812 = vmatpush.msra.mxu0 0.0
    %1813 = vmatpush.msra.mxu0 0.0
    %1814 = vmatpush.msra.mxu0 0.0
    %1815 = vmatpush.msra.mxu0 0.0
    %1816 = vmatpush.msra.mxu0 0.0
    %1817 = vmatpush.msra.mxu0 0.0
    %1818 = vmatpush.msra.mxu0 0.0
    %1819 = vmatpush.msra.mxu0 0.0
    %1820 = vmatpush.msra.mxu0 %v1042
    %1821 = vmatmul.f32.gmra.mxu0 %v1803
    %v1822 = vpop.f32.mrf.mxu0
    %v1823 = vadd.f32 0.0, %v1822
    %1824 = vdwg.mxu0
    %v1825 = vadd.f32 %v1801, %v1823
    %v1826 = vtanh.pop %v1825
    %1827 = vst.msk [vmem:[#allocation2 + $0x38] sm:$0x3] %vm172, %v1826
    %v1828 = vld [vmem:[#allocation3 + $0x3a] sm:$0x3]
    %v1830 = vsel %vm134, %v1826, 0
    %1832 = vmatpush.msra.mxu0 0.0
    %1833 = vmatpush.msra.mxu0 0.0
    %1834 = vmatpush.msra.mxu0 0.0
    %1835 = vmatpush.msra.mxu0 0.0
    %1836 = vmatpush.msra.mxu0 0.0
    %1837 = vmatpush.msra.mxu0 0.0
    %1838 = vmatpush.msra.mxu0 0.0
    %1839 = vmatpush.msra.mxu0 0.0
    %1840 = vmatpush.msra.mxu0 0.0
    %1841 = vmatpush.msra.mxu0 0.0
    %1842 = vmatpush.msra.mxu0 0.0
    %1843 = vmatpush.msra.mxu0 0.0
    %1844 = vmatpush.msra.mxu0 0.0
    %1845 = vmatpush.msra.mxu0 0.0
    %1846 = vmatpush.msra.mxu0 0.0
    %1847 = vmatpush.msra.mxu0 %v1042
    %1848 = vmatmul.f32.gmra.mxu0 %v1830
    %v1849 = vpop.f32.mrf.mxu0
    %v1850 = vadd.f32 0.0, %v1849
    %1851 = vdwg.mxu0
    %v1852 = vadd.f32 %v1828, %v1850
    %v1853 = vtanh.pop %v1852
    %1854 = vst.msk [vmem:[#allocation2 + $0x3a] sm:$0x3] %vm172, %v1853
    %v1855 = vld [vmem:[%s5 + $0x2] sm:$0x1]
    %v1856 = vld [vmem:[#allocation2] sm:$0xff]
    %v1857 = vld [vmem:[#allocation2 + $0x8] sm:$0xff]
    %v1858 = vld [vmem:[#allocation2 + $0x10] sm:$0xff]
    %v1859 = vld [vmem:[#allocation2 + $0x18] sm:$0xff]
    %v1860 = vld [vmem:[#allocation2 + $0x20] sm:$0xff]
    %v1861 = vld [vmem:[#allocation2 + $0x28] sm:$0xff]
    %v1862 = vld [vmem:[#allocation2 + $0x30] sm:$0xff]
    %v1863 = vld [vmem:[#allocation2 + $0x38] sm:$0xf]
    %s1864 = scalar_lea.vmem %s3, 8
    %v1865 = vld [vmem:[%s1864] sm:$0xff]
    %v1866 = vperm.slane %v1855, 0
    %v1868 = vsel %vm134, %v1856, 0
    %v1871 = vsel %vm134, %v1857, 0
    %v1874 = vsel %vm134, %v1858, 0
    %v1877 = vsel %vm134, %v1859, 0
    %v1880 = vsel %vm134, %v1860, 0
    %v1883 = vsel %vm134, %v1861, 0
    %v1886 = vsel %vm134, %v1862, 0
    %v1889 = vsel %vm134, %v1863, 0
    %1891 = vmatpush.msra.mxu0 0.0
    %1892 = vmatpush.msra.mxu0 0.0
    %1893 = vmatpush.msra.mxu0 0.0
    %1894 = vmatpush.msra.mxu0 0.0
    %1895 = vmatpush.msra.mxu0 0.0
    %1896 = vmatpush.msra.mxu0 0.0
    %1897 = vmatpush.msra.mxu0 0.0
    %1898 = vmatpush.msra.mxu0 0.0
    %1899 = vmatpush.msra.mxu0 0.0
    %1900 = vmatpush.msra.mxu0 0.0
    %1901 = vmatpush.msra.mxu0 0.0
    %1902 = vmatpush.msra.mxu0 0.0
    %1903 = vmatpush.msra.mxu0 0.0
    %1904 = vmatpush.msra.mxu0 0.0
    %1905 = vmatpush.msra.mxu0 0.0
    %1906 = vmatpush.msra.mxu0 %v1865
    %1907 = vmatmul.f32.gmra.mxu0 %v1868
    %v1908 = vpop.f32.mrf.mxu0
    %v1909 = vadd.f32 %v1866, %v1908
    %1910 = vmatmul.f32.gmra.mxu0 %v1871
    %v1911 = vpop.f32.mrf.mxu0
    %v1912 = vadd.f32 %v1866, %v1911
    %1913 = vmatmul.f32.gmra.mxu0 %v1874
    %v1914 = vpop.f32.mrf.mxu0
    %v1915 = vadd.f32 %v1866, %v1914
    %1916 = vmatmul.f32.gmra.mxu0 %v1877
    %v1917 = vpop.f32.mrf.mxu0
    %v1918 = vadd.f32 %v1866, %v1917
    %1919 = vmatmul.f32.gmra.mxu0 %v1880
    %v1920 = vpop.f32.mrf.mxu0
    %v1921 = vadd.f32 %v1866, %v1920
    %1922 = vmatmul.f32.gmra.mxu0 %v1883
    %v1923 = vpop.f32.mrf.mxu0
    %v1924 = vadd.f32 %v1866, %v1923
    %1925 = vmatmul.f32.gmra.mxu0 %v1886
    %v1926 = vpop.f32.mrf.mxu0
    %v1927 = vadd.f32 %v1866, %v1926
    %1928 = vmatmul.f32.gmra.mxu0 %v1889
    %v1929 = vpop.f32.mrf.mxu0
    %v1930 = vadd.f32 %v1866, %v1929
    %1931 = vdwg.mxu0
    %1932 = vst.msk [vmem:[#allocation3] sm:$0xff] %vm134, %v1909
    %1933 = vst.msk [vmem:[#allocation3 + $0x8] sm:$0xff] %vm134, %v1912
    %1934 = vst.msk [vmem:[#allocation3 + $0x10] sm:$0xff] %vm134, %v1915
    %1935 = vst.msk [vmem:[#allocation3 + $0x18] sm:$0xff] %vm134, %v1918
    %1936 = vst.msk [vmem:[#allocation3 + $0x20] sm:$0xff] %vm134, %v1921
    %1937 = vst.msk [vmem:[#allocation3 + $0x28] sm:$0xff] %vm134, %v1924
    %1938 = vst.msk [vmem:[#allocation3 + $0x30] sm:$0xff] %vm134, %v1927
    %1939 = vst.msk [vmem:[#allocation3 + $0x38] sm:$0xf] %vm142, %v1930
    %s1940 = scalar_lea.vmem %s4, 16
    %v1941 = vld [vmem:[%s1940] sm:$0xff]
    %s1942 = scalar_lea.vmem %s1, 4
    %v1943 = vld [vmem:[%s1942] sm:$0x3]
    %v1944 = vld [vmem:[#allocation3] sm:$0x3]
    %v1946 = vsel %vm134, %v1943, 0
    %1948 = vmatpush.msra.mxu0 0.0
    %1949 = vmatpush.msra.mxu0 0.0
    %1950 = vmatpush.msra.mxu0 0.0
    %1951 = vmatpush.msra.mxu0 0.0
    %1952 = vmatpush.msra.mxu0 0.0
    %1953 = vmatpush.msra.mxu0 0.0
    %1954 = vmatpush.msra.mxu0 0.0
    %1955 = vmatpush.msra.mxu0 0.0
    %1956 = vmatpush.msra.mxu0 0.0
    %1957 = vmatpush.msra.mxu0 0.0
    %1958 = vmatpush.msra.mxu0 0.0
    %1959 = vmatpush.msra.mxu0 0.0
    %1960 = vmatpush.msra.mxu0 0.0
    %1961 = vmatpush.msra.mxu0 0.0
    %1962 = vmatpush.msra.mxu0 0.0
    %1963 = vmatpush.msra.mxu0 %v1941
    %1964 = vmatmul.f32.gmra.mxu0 %v1946
    %v1965 = vpop.f32.mrf.mxu0
    %v1966 = vadd.f32 0.0, %v1965
    %1967 = vdwg.mxu0
    %v1968 = vadd.f32 %v1944, %v1966
    %v1969 = vtanh.pop %v1968
    %1970 = vst.msk [vmem:[#allocation2] sm:$0x3] %vm172, %v1969
    %v1971 = vld [vmem:[#allocation3 + $0x2] sm:$0x3]
    %v1973 = vsel %vm134, %v1969, 0
    %1975 = vmatpush.msra.mxu0 0.0
    %1976 = vmatpush.msra.mxu0 0.0
    %1977 = vmatpush.msra.mxu0 0.0
    %1978 = vmatpush.msra.mxu0 0.0
    %1979 = vmatpush.msra.mxu0 0.0
    %1980 = vmatpush.msra.mxu0 0.0
    %1981 = vmatpush.msra.mxu0 0.0
    %1982 = vmatpush.msra.mxu0 0.0
    %1983 = vmatpush.msra.mxu0 0.0
    %1984 = vmatpush.msra.mxu0 0.0
    %1985 = vmatpush.msra.mxu0 0.0
    %1986 = vmatpush.msra.mxu0 0.0
    %1987 = vmatpush.msra.mxu0 0.0
    %1988 = vmatpush.msra.mxu0 0.0
    %1989 = vmatpush.msra.mxu0 0.0
    %1990 = vmatpush.msra.mxu0 %v1941
    %1991 = vmatmul.f32.gmra.mxu0 %v1973
    %v1992 = vpop.f32.mrf.mxu0
    %v1993 = vadd.f32 0.0, %v1992
    %1994 = vdwg.mxu0
    %v1995 = vadd.f32 %v1971, %v1993
    %v1996 = vtanh.pop %v1995
    %1997 = vst.msk [vmem:[#allocation2 + $0x2] sm:$0x3] %vm172, %v1996
    %v1998 = vld [vmem:[#allocation3 + $0x4] sm:$0x3]
    %v2000 = vsel %vm134, %v1996, 0
    %2002 = vmatpush.msra.mxu0 0.0
    %2003 = vmatpush.msra.mxu0 0.0
    %2004 = vmatpush.msra.mxu0 0.0
    %2005 = vmatpush.msra.mxu0 0.0
    %2006 = vmatpush.msra.mxu0 0.0
    %2007 = vmatpush.msra.mxu0 0.0
    %2008 = vmatpush.msra.mxu0 0.0
    %2009 = vmatpush.msra.mxu0 0.0
    %2010 = vmatpush.msra.mxu0 0.0
    %2011 = vmatpush.msra.mxu0 0.0
    %2012 = vmatpush.msra.mxu0 0.0
    %2013 = vmatpush.msra.mxu0 0.0
    %2014 = vmatpush.msra.mxu0 0.0
    %2015 = vmatpush.msra.mxu0 0.0
    %2016 = vmatpush.msra.mxu0 0.0
    %2017 = vmatpush.msra.mxu0 %v1941
    %2018 = vmatmul.f32.gmra.mxu0 %v2000
    %v2019 = vpop.f32.mrf.mxu0
    %v2020 = vadd.f32 0.0, %v2019
    %2021 = vdwg.mxu0
    %v2022 = vadd.f32 %v1998, %v2020
    %v2023 = vtanh.pop %v2022
    %2024 = vst.msk [vmem:[#allocation2 + $0x4] sm:$0x3] %vm172, %v2023
    %v2025 = vld [vmem:[#allocation3 + $0x6] sm:$0x3]
    %v2027 = vsel %vm134, %v2023, 0
    %2029 = vmatpush.msra.mxu0 0.0
    %2030 = vmatpush.msra.mxu0 0.0
    %2031 = vmatpush.msra.mxu0 0.0
    %2032 = vmatpush.msra.mxu0 0.0
    %2033 = vmatpush.msra.mxu0 0.0
    %2034 = vmatpush.msra.mxu0 0.0
    %2035 = vmatpush.msra.mxu0 0.0
    %2036 = vmatpush.msra.mxu0 0.0
    %2037 = vmatpush.msra.mxu0 0.0
    %2038 = vmatpush.msra.mxu0 0.0
    %2039 = vmatpush.msra.mxu0 0.0
    %2040 = vmatpush.msra.mxu0 0.0
    %2041 = vmatpush.msra.mxu0 0.0
    %2042 = vmatpush.msra.mxu0 0.0
    %2043 = vmatpush.msra.mxu0 0.0
    %2044 = vmatpush.msra.mxu0 %v1941
    %2045 = vmatmul.f32.gmra.mxu0 %v2027
    %v2046 = vpop.f32.mrf.mxu0
    %v2047 = vadd.f32 0.0, %v2046
    %2048 = vdwg.mxu0
    %v2049 = vadd.f32 %v2025, %v2047
    %v2050 = vtanh.pop %v2049
    %2051 = vst.msk [vmem:[#allocation2 + $0x6] sm:$0x3] %vm172, %v2050
    %v2052 = vld [vmem:[#allocation3 + $0x8] sm:$0x3]
    %v2054 = vsel %vm134, %v2050, 0
    %2056 = vmatpush.msra.mxu0 0.0
    %2057 = vmatpush.msra.mxu0 0.0
    %2058 = vmatpush.msra.mxu0 0.0
    %2059 = vmatpush.msra.mxu0 0.0
    %2060 = vmatpush.msra.mxu0 0.0
    %2061 = vmatpush.msra.mxu0 0.0
    %2062 = vmatpush.msra.mxu0 0.0
    %2063 = vmatpush.msra.mxu0 0.0
    %2064 = vmatpush.msra.mxu0 0.0
    %2065 = vmatpush.msra.mxu0 0.0
    %2066 = vmatpush.msra.mxu0 0.0
    %2067 = vmatpush.msra.mxu0 0.0
    %2068 = vmatpush.msra.mxu0 0.0
    %2069 = vmatpush.msra.mxu0 0.0
    %2070 = vmatpush.msra.mxu0 0.0
    %2071 = vmatpush.msra.mxu0 %v1941
    %2072 = vmatmul.f32.gmra.mxu0 %v2054
    %v2073 = vpop.f32.mrf.mxu0
    %v2074 = vadd.f32 0.0, %v2073
    %2075 = vdwg.mxu0
    %v2076 = vadd.f32 %v2052, %v2074
    %v2077 = vtanh.pop %v2076
    %2078 = vst.msk [vmem:[#allocation2 + $0x8] sm:$0x3] %vm172, %v2077
    %v2079 = vld [vmem:[#allocation3 + $0xa] sm:$0x3]
    %v2081 = vsel %vm134, %v2077, 0
    %2083 = vmatpush.msra.mxu0 0.0
    %2084 = vmatpush.msra.mxu0 0.0
    %2085 = vmatpush.msra.mxu0 0.0
    %2086 = vmatpush.msra.mxu0 0.0
    %2087 = vmatpush.msra.mxu0 0.0
    %2088 = vmatpush.msra.mxu0 0.0
    %2089 = vmatpush.msra.mxu0 0.0
    %2090 = vmatpush.msra.mxu0 0.0
    %2091 = vmatpush.msra.mxu0 0.0
    %2092 = vmatpush.msra.mxu0 0.0
    %2093 = vmatpush.msra.mxu0 0.0
    %2094 = vmatpush.msra.mxu0 0.0
    %2095 = vmatpush.msra.mxu0 0.0
    %2096 = vmatpush.msra.mxu0 0.0
    %2097 = vmatpush.msra.mxu0 0.0
    %2098 = vmatpush.msra.mxu0 %v1941
    %2099 = vmatmul.f32.gmra.mxu0 %v2081
    %v2100 = vpop.f32.mrf.mxu0
    %v2101 = vadd.f32 0.0, %v2100
    %2102 = vdwg.mxu0
    %v2103 = vadd.f32 %v2079, %v2101
    %v2104 = vtanh.pop %v2103
    %2105 = vst.msk [vmem:[#allocation2 + $0xa] sm:$0x3] %vm172, %v2104
    %v2106 = vld [vmem:[#allocation3 + $0xc] sm:$0x3]
    %v2108 = vsel %vm134, %v2104, 0
    %2110 = vmatpush.msra.mxu0 0.0
    %2111 = vmatpush.msra.mxu0 0.0
    %2112 = vmatpush.msra.mxu0 0.0
    %2113 = vmatpush.msra.mxu0 0.0
    %2114 = vmatpush.msra.mxu0 0.0
    %2115 = vmatpush.msra.mxu0 0.0
    %2116 = vmatpush.msra.mxu0 0.0
    %2117 = vmatpush.msra.mxu0 0.0
    %2118 = vmatpush.msra.mxu0 0.0
    %2119 = vmatpush.msra.mxu0 0.0
    %2120 = vmatpush.msra.mxu0 0.0
    %2121 = vmatpush.msra.mxu0 0.0
    %2122 = vmatpush.msra.mxu0 0.0
    %2123 = vmatpush.msra.mxu0 0.0
    %2124 = vmatpush.msra.mxu0 0.0
    %2125 = vmatpush.msra.mxu0 %v1941
    %2126 = vmatmul.f32.gmra.mxu0 %v2108
    %v2127 = vpop.f32.mrf.mxu0
    %v2128 = vadd.f32 0.0, %v2127
    %2129 = vdwg.mxu0
    %v2130 = vadd.f32 %v2106, %v2128
    %v2131 = vtanh.pop %v2130
    %2132 = vst.msk [vmem:[#allocation2 + $0xc] sm:$0x3] %vm172, %v2131
    %v2133 = vld [vmem:[#allocation3 + $0xe] sm:$0x3]
    %v2135 = vsel %vm134, %v2131, 0
    %2137 = vmatpush.msra.mxu0 0.0
    %2138 = vmatpush.msra.mxu0 0.0
    %2139 = vmatpush.msra.mxu0 0.0
    %2140 = vmatpush.msra.mxu0 0.0
    %2141 = vmatpush.msra.mxu0 0.0
    %2142 = vmatpush.msra.mxu0 0.0
    %2143 = vmatpush.msra.mxu0 0.0
    %2144 = vmatpush.msra.mxu0 0.0
    %2145 = vmatpush.msra.mxu0 0.0
    %2146 = vmatpush.msra.mxu0 0.0
    %2147 = vmatpush.msra.mxu0 0.0
    %2148 = vmatpush.msra.mxu0 0.0
    %2149 = vmatpush.msra.mxu0 0.0
    %2150 = vmatpush.msra.mxu0 0.0
    %2151 = vmatpush.msra.mxu0 0.0
    %2152 = vmatpush.msra.mxu0 %v1941
    %2153 = vmatmul.f32.gmra.mxu0 %v2135
    %v2154 = vpop.f32.mrf.mxu0
    %v2155 = vadd.f32 0.0, %v2154
    %2156 = vdwg.mxu0
    %v2157 = vadd.f32 %v2133, %v2155
    %v2158 = vtanh.pop %v2157
    %2159 = vst.msk [vmem:[#allocation2 + $0xe] sm:$0x3] %vm172, %v2158
    %v2160 = vld [vmem:[#allocation3 + $0x10] sm:$0x3]
    %v2162 = vsel %vm134, %v2158, 0
    %2164 = vmatpush.msra.mxu0 0.0
    %2165 = vmatpush.msra.mxu0 0.0
    %2166 = vmatpush.msra.mxu0 0.0
    %2167 = vmatpush.msra.mxu0 0.0
    %2168 = vmatpush.msra.mxu0 0.0
    %2169 = vmatpush.msra.mxu0 0.0
    %2170 = vmatpush.msra.mxu0 0.0
    %2171 = vmatpush.msra.mxu0 0.0
    %2172 = vmatpush.msra.mxu0 0.0
    %2173 = vmatpush.msra.mxu0 0.0
    %2174 = vmatpush.msra.mxu0 0.0
    %2175 = vmatpush.msra.mxu0 0.0
    %2176 = vmatpush.msra.mxu0 0.0
    %2177 = vmatpush.msra.mxu0 0.0
    %2178 = vmatpush.msra.mxu0 0.0
    %2179 = vmatpush.msra.mxu0 %v1941
    %2180 = vmatmul.f32.gmra.mxu0 %v2162
    %v2181 = vpop.f32.mrf.mxu0
    %v2182 = vadd.f32 0.0, %v2181
    %2183 = vdwg.mxu0
    %v2184 = vadd.f32 %v2160, %v2182
    %v2185 = vtanh.pop %v2184
    %2186 = vst.msk [vmem:[#allocation2 + $0x10] sm:$0x3] %vm172, %v2185
    %v2187 = vld [vmem:[#allocation3 + $0x12] sm:$0x3]
    %v2189 = vsel %vm134, %v2185, 0
    %2191 = vmatpush.msra.mxu0 0.0
    %2192 = vmatpush.msra.mxu0 0.0
    %2193 = vmatpush.msra.mxu0 0.0
    %2194 = vmatpush.msra.mxu0 0.0
    %2195 = vmatpush.msra.mxu0 0.0
    %2196 = vmatpush.msra.mxu0 0.0
    %2197 = vmatpush.msra.mxu0 0.0
    %2198 = vmatpush.msra.mxu0 0.0
    %2199 = vmatpush.msra.mxu0 0.0
    %2200 = vmatpush.msra.mxu0 0.0
    %2201 = vmatpush.msra.mxu0 0.0
    %2202 = vmatpush.msra.mxu0 0.0
    %2203 = vmatpush.msra.mxu0 0.0
    %2204 = vmatpush.msra.mxu0 0.0
    %2205 = vmatpush.msra.mxu0 0.0
    %2206 = vmatpush.msra.mxu0 %v1941
    %2207 = vmatmul.f32.gmra.mxu0 %v2189
    %v2208 = vpop.f32.mrf.mxu0
    %v2209 = vadd.f32 0.0, %v2208
    %2210 = vdwg.mxu0
    %v2211 = vadd.f32 %v2187, %v2209
    %v2212 = vtanh.pop %v2211
    %2213 = vst.msk [vmem:[#allocation2 + $0x12] sm:$0x3] %vm172, %v2212
    %v2214 = vld [vmem:[#allocation3 + $0x14] sm:$0x3]
    %v2216 = vsel %vm134, %v2212, 0
    %2218 = vmatpush.msra.mxu0 0.0
    %2219 = vmatpush.msra.mxu0 0.0
    %2220 = vmatpush.msra.mxu0 0.0
    %2221 = vmatpush.msra.mxu0 0.0
    %2222 = vmatpush.msra.mxu0 0.0
    %2223 = vmatpush.msra.mxu0 0.0
    %2224 = vmatpush.msra.mxu0 0.0
    %2225 = vmatpush.msra.mxu0 0.0
    %2226 = vmatpush.msra.mxu0 0.0
    %2227 = vmatpush.msra.mxu0 0.0
    %2228 = vmatpush.msra.mxu0 0.0
    %2229 = vmatpush.msra.mxu0 0.0
    %2230 = vmatpush.msra.mxu0 0.0
    %2231 = vmatpush.msra.mxu0 0.0
    %2232 = vmatpush.msra.mxu0 0.0
    %2233 = vmatpush.msra.mxu0 %v1941
    %2234 = vmatmul.f32.gmra.mxu0 %v2216
    %v2235 = vpop.f32.mrf.mxu0
    %v2236 = vadd.f32 0.0, %v2235
    %2237 = vdwg.mxu0
    %v2238 = vadd.f32 %v2214, %v2236
    %v2239 = vtanh.pop %v2238
    %2240 = vst.msk [vmem:[#allocation2 + $0x14] sm:$0x3] %vm172, %v2239
    %v2241 = vld [vmem:[#allocation3 + $0x16] sm:$0x3]
    %v2243 = vsel %vm134, %v2239, 0
    %2245 = vmatpush.msra.mxu0 0.0
    %2246 = vmatpush.msra.mxu0 0.0
    %2247 = vmatpush.msra.mxu0 0.0
    %2248 = vmatpush.msra.mxu0 0.0
    %2249 = vmatpush.msra.mxu0 0.0
    %2250 = vmatpush.msra.mxu0 0.0
    %2251 = vmatpush.msra.mxu0 0.0
    %2252 = vmatpush.msra.mxu0 0.0
    %2253 = vmatpush.msra.mxu0 0.0
    %2254 = vmatpush.msra.mxu0 0.0
    %2255 = vmatpush.msra.mxu0 0.0
    %2256 = vmatpush.msra.mxu0 0.0
    %2257 = vmatpush.msra.mxu0 0.0
    %2258 = vmatpush.msra.mxu0 0.0
    %2259 = vmatpush.msra.mxu0 0.0
    %2260 = vmatpush.msra.mxu0 %v1941
    %2261 = vmatmul.f32.gmra.mxu0 %v2243
    %v2262 = vpop.f32.mrf.mxu0
    %v2263 = vadd.f32 0.0, %v2262
    %2264 = vdwg.mxu0
    %v2265 = vadd.f32 %v2241, %v2263
    %v2266 = vtanh.pop %v2265
    %2267 = vst.msk [vmem:[#allocation2 + $0x16] sm:$0x3] %vm172, %v2266
    %v2268 = vld [vmem:[#allocation3 + $0x18] sm:$0x3]
    %v2270 = vsel %vm134, %v2266, 0
    %2272 = vmatpush.msra.mxu0 0.0
    %2273 = vmatpush.msra.mxu0 0.0
    %2274 = vmatpush.msra.mxu0 0.0
    %2275 = vmatpush.msra.mxu0 0.0
    %2276 = vmatpush.msra.mxu0 0.0
    %2277 = vmatpush.msra.mxu0 0.0
    %2278 = vmatpush.msra.mxu0 0.0
    %2279 = vmatpush.msra.mxu0 0.0
    %2280 = vmatpush.msra.mxu0 0.0
    %2281 = vmatpush.msra.mxu0 0.0
    %2282 = vmatpush.msra.mxu0 0.0
    %2283 = vmatpush.msra.mxu0 0.0
    %2284 = vmatpush.msra.mxu0 0.0
    %2285 = vmatpush.msra.mxu0 0.0
    %2286 = vmatpush.msra.mxu0 0.0
    %2287 = vmatpush.msra.mxu0 %v1941
    %2288 = vmatmul.f32.gmra.mxu0 %v2270
    %v2289 = vpop.f32.mrf.mxu0
    %v2290 = vadd.f32 0.0, %v2289
    %2291 = vdwg.mxu0
    %v2292 = vadd.f32 %v2268, %v2290
    %v2293 = vtanh.pop %v2292
    %2294 = vst.msk [vmem:[#allocation2 + $0x18] sm:$0x3] %vm172, %v2293
    %v2295 = vld [vmem:[#allocation3 + $0x1a] sm:$0x3]
    %v2297 = vsel %vm134, %v2293, 0
    %2299 = vmatpush.msra.mxu0 0.0
    %2300 = vmatpush.msra.mxu0 0.0
    %2301 = vmatpush.msra.mxu0 0.0
    %2302 = vmatpush.msra.mxu0 0.0
    %2303 = vmatpush.msra.mxu0 0.0
    %2304 = vmatpush.msra.mxu0 0.0
    %2305 = vmatpush.msra.mxu0 0.0
    %2306 = vmatpush.msra.mxu0 0.0
    %2307 = vmatpush.msra.mxu0 0.0
    %2308 = vmatpush.msra.mxu0 0.0
    %2309 = vmatpush.msra.mxu0 0.0
    %2310 = vmatpush.msra.mxu0 0.0
    %2311 = vmatpush.msra.mxu0 0.0
    %2312 = vmatpush.msra.mxu0 0.0
    %2313 = vmatpush.msra.mxu0 0.0
    %2314 = vmatpush.msra.mxu0 %v1941
    %2315 = vmatmul.f32.gmra.mxu0 %v2297
    %v2316 = vpop.f32.mrf.mxu0
    %v2317 = vadd.f32 0.0, %v2316
    %2318 = vdwg.mxu0
    %v2319 = vadd.f32 %v2295, %v2317
    %v2320 = vtanh.pop %v2319
    %2321 = vst.msk [vmem:[#allocation2 + $0x1a] sm:$0x3] %vm172, %v2320
    %v2322 = vld [vmem:[#allocation3 + $0x1c] sm:$0x3]
    %v2324 = vsel %vm134, %v2320, 0
    %2326 = vmatpush.msra.mxu0 0.0
    %2327 = vmatpush.msra.mxu0 0.0
    %2328 = vmatpush.msra.mxu0 0.0
    %2329 = vmatpush.msra.mxu0 0.0
    %2330 = vmatpush.msra.mxu0 0.0
    %2331 = vmatpush.msra.mxu0 0.0
    %2332 = vmatpush.msra.mxu0 0.0
    %2333 = vmatpush.msra.mxu0 0.0
    %2334 = vmatpush.msra.mxu0 0.0
    %2335 = vmatpush.msra.mxu0 0.0
    %2336 = vmatpush.msra.mxu0 0.0
    %2337 = vmatpush.msra.mxu0 0.0
    %2338 = vmatpush.msra.mxu0 0.0
    %2339 = vmatpush.msra.mxu0 0.0
    %2340 = vmatpush.msra.mxu0 0.0
    %2341 = vmatpush.msra.mxu0 %v1941
    %2342 = vmatmul.f32.gmra.mxu0 %v2324
    %v2343 = vpop.f32.mrf.mxu0
    %v2344 = vadd.f32 0.0, %v2343
    %2345 = vdwg.mxu0
    %v2346 = vadd.f32 %v2322, %v2344
    %v2347 = vtanh.pop %v2346
    %2348 = vst.msk [vmem:[#allocation2 + $0x1c] sm:$0x3] %vm172, %v2347
    %v2349 = vld [vmem:[#allocation3 + $0x1e] sm:$0x3]
    %v2351 = vsel %vm134, %v2347, 0
    %2353 = vmatpush.msra.mxu0 0.0
    %2354 = vmatpush.msra.mxu0 0.0
    %2355 = vmatpush.msra.mxu0 0.0
    %2356 = vmatpush.msra.mxu0 0.0
    %2357 = vmatpush.msra.mxu0 0.0
    %2358 = vmatpush.msra.mxu0 0.0
    %2359 = vmatpush.msra.mxu0 0.0
    %2360 = vmatpush.msra.mxu0 0.0
    %2361 = vmatpush.msra.mxu0 0.0
    %2362 = vmatpush.msra.mxu0 0.0
    %2363 = vmatpush.msra.mxu0 0.0
    %2364 = vmatpush.msra.mxu0 0.0
    %2365 = vmatpush.msra.mxu0 0.0
    %2366 = vmatpush.msra.mxu0 0.0
    %2367 = vmatpush.msra.mxu0 0.0
    %2368 = vmatpush.msra.mxu0 %v1941
    %2369 = vmatmul.f32.gmra.mxu0 %v2351
    %v2370 = vpop.f32.mrf.mxu0
    %v2371 = vadd.f32 0.0, %v2370
    %2372 = vdwg.mxu0
    %v2373 = vadd.f32 %v2349, %v2371
    %v2374 = vtanh.pop %v2373
    %2375 = vst.msk [vmem:[#allocation2 + $0x1e] sm:$0x3] %vm172, %v2374
    %v2376 = vld [vmem:[#allocation3 + $0x20] sm:$0x3]
    %v2378 = vsel %vm134, %v2374, 0
    %2380 = vmatpush.msra.mxu0 0.0
    %2381 = vmatpush.msra.mxu0 0.0
    %2382 = vmatpush.msra.mxu0 0.0
    %2383 = vmatpush.msra.mxu0 0.0
    %2384 = vmatpush.msra.mxu0 0.0
    %2385 = vmatpush.msra.mxu0 0.0
    %2386 = vmatpush.msra.mxu0 0.0
    %2387 = vmatpush.msra.mxu0 0.0
    %2388 = vmatpush.msra.mxu0 0.0
    %2389 = vmatpush.msra.mxu0 0.0
    %2390 = vmatpush.msra.mxu0 0.0
    %2391 = vmatpush.msra.mxu0 0.0
    %2392 = vmatpush.msra.mxu0 0.0
    %2393 = vmatpush.msra.mxu0 0.0
    %2394 = vmatpush.msra.mxu0 0.0
    %2395 = vmatpush.msra.mxu0 %v1941
    %2396 = vmatmul.f32.gmra.mxu0 %v2378
    %v2397 = vpop.f32.mrf.mxu0
    %v2398 = vadd.f32 0.0, %v2397
    %2399 = vdwg.mxu0
    %v2400 = vadd.f32 %v2376, %v2398
    %v2401 = vtanh.pop %v2400
    %2402 = vst.msk [vmem:[#allocation2 + $0x20] sm:$0x3] %vm172, %v2401
    %v2403 = vld [vmem:[#allocation3 + $0x22] sm:$0x3]
    %v2405 = vsel %vm134, %v2401, 0
    %2407 = vmatpush.msra.mxu0 0.0
    %2408 = vmatpush.msra.mxu0 0.0
    %2409 = vmatpush.msra.mxu0 0.0
    %2410 = vmatpush.msra.mxu0 0.0
    %2411 = vmatpush.msra.mxu0 0.0
    %2412 = vmatpush.msra.mxu0 0.0
    %2413 = vmatpush.msra.mxu0 0.0
    %2414 = vmatpush.msra.mxu0 0.0
    %2415 = vmatpush.msra.mxu0 0.0
    %2416 = vmatpush.msra.mxu0 0.0
    %2417 = vmatpush.msra.mxu0 0.0
    %2418 = vmatpush.msra.mxu0 0.0
    %2419 = vmatpush.msra.mxu0 0.0
    %2420 = vmatpush.msra.mxu0 0.0
    %2421 = vmatpush.msra.mxu0 0.0
    %2422 = vmatpush.msra.mxu0 %v1941
    %2423 = vmatmul.f32.gmra.mxu0 %v2405
    %v2424 = vpop.f32.mrf.mxu0
    %v2425 = vadd.f32 0.0, %v2424
    %2426 = vdwg.mxu0
    %v2427 = vadd.f32 %v2403, %v2425
    %v2428 = vtanh.pop %v2427
    %2429 = vst.msk [vmem:[#allocation2 + $0x22] sm:$0x3] %vm172, %v2428
    %v2430 = vld [vmem:[#allocation3 + $0x24] sm:$0x3]
    %v2432 = vsel %vm134, %v2428, 0
    %2434 = vmatpush.msra.mxu0 0.0
    %2435 = vmatpush.msra.mxu0 0.0
    %2436 = vmatpush.msra.mxu0 0.0
    %2437 = vmatpush.msra.mxu0 0.0
    %2438 = vmatpush.msra.mxu0 0.0
    %2439 = vmatpush.msra.mxu0 0.0
    %2440 = vmatpush.msra.mxu0 0.0
    %2441 = vmatpush.msra.mxu0 0.0
    %2442 = vmatpush.msra.mxu0 0.0
    %2443 = vmatpush.msra.mxu0 0.0
    %2444 = vmatpush.msra.mxu0 0.0
    %2445 = vmatpush.msra.mxu0 0.0
    %2446 = vmatpush.msra.mxu0 0.0
    %2447 = vmatpush.msra.mxu0 0.0
    %2448 = vmatpush.msra.mxu0 0.0
    %2449 = vmatpush.msra.mxu0 %v1941
    %2450 = vmatmul.f32.gmra.mxu0 %v2432
    %v2451 = vpop.f32.mrf.mxu0
    %v2452 = vadd.f32 0.0, %v2451
    %2453 = vdwg.mxu0
    %v2454 = vadd.f32 %v2430, %v2452
    %v2455 = vtanh.pop %v2454
    %2456 = vst.msk [vmem:[#allocation2 + $0x24] sm:$0x3] %vm172, %v2455
    %v2457 = vld [vmem:[#allocation3 + $0x26] sm:$0x3]
    %v2459 = vsel %vm134, %v2455, 0
    %2461 = vmatpush.msra.mxu0 0.0
    %2462 = vmatpush.msra.mxu0 0.0
    %2463 = vmatpush.msra.mxu0 0.0
    %2464 = vmatpush.msra.mxu0 0.0
    %2465 = vmatpush.msra.mxu0 0.0
    %2466 = vmatpush.msra.mxu0 0.0
    %2467 = vmatpush.msra.mxu0 0.0
    %2468 = vmatpush.msra.mxu0 0.0
    %2469 = vmatpush.msra.mxu0 0.0
    %2470 = vmatpush.msra.mxu0 0.0
    %2471 = vmatpush.msra.mxu0 0.0
    %2472 = vmatpush.msra.mxu0 0.0
    %2473 = vmatpush.msra.mxu0 0.0
    %2474 = vmatpush.msra.mxu0 0.0
    %2475 = vmatpush.msra.mxu0 0.0
    %2476 = vmatpush.msra.mxu0 %v1941
    %2477 = vmatmul.f32.gmra.mxu0 %v2459
    %v2478 = vpop.f32.mrf.mxu0
    %v2479 = vadd.f32 0.0, %v2478
    %2480 = vdwg.mxu0
    %v2481 = vadd.f32 %v2457, %v2479
    %v2482 = vtanh.pop %v2481
    %2483 = vst.msk [vmem:[#allocation2 + $0x26] sm:$0x3] %vm172, %v2482
    %v2484 = vld [vmem:[#allocation3 + $0x28] sm:$0x3]
    %v2486 = vsel %vm134, %v2482, 0
    %2488 = vmatpush.msra.mxu0 0.0
    %2489 = vmatpush.msra.mxu0 0.0
    %2490 = vmatpush.msra.mxu0 0.0
    %2491 = vmatpush.msra.mxu0 0.0
    %2492 = vmatpush.msra.mxu0 0.0
    %2493 = vmatpush.msra.mxu0 0.0
    %2494 = vmatpush.msra.mxu0 0.0
    %2495 = vmatpush.msra.mxu0 0.0
    %2496 = vmatpush.msra.mxu0 0.0
    %2497 = vmatpush.msra.mxu0 0.0
    %2498 = vmatpush.msra.mxu0 0.0
    %2499 = vmatpush.msra.mxu0 0.0
    %2500 = vmatpush.msra.mxu0 0.0
    %2501 = vmatpush.msra.mxu0 0.0
    %2502 = vmatpush.msra.mxu0 0.0
    %2503 = vmatpush.msra.mxu0 %v1941
    %2504 = vmatmul.f32.gmra.mxu0 %v2486
    %v2505 = vpop.f32.mrf.mxu0
    %v2506 = vadd.f32 0.0, %v2505
    %2507 = vdwg.mxu0
    %v2508 = vadd.f32 %v2484, %v2506
    %v2509 = vtanh.pop %v2508
    %2510 = vst.msk [vmem:[#allocation2 + $0x28] sm:$0x3] %vm172, %v2509
    %v2511 = vld [vmem:[#allocation3 + $0x2a] sm:$0x3]
    %v2513 = vsel %vm134, %v2509, 0
    %2515 = vmatpush.msra.mxu0 0.0
    %2516 = vmatpush.msra.mxu0 0.0
    %2517 = vmatpush.msra.mxu0 0.0
    %2518 = vmatpush.msra.mxu0 0.0
    %2519 = vmatpush.msra.mxu0 0.0
    %2520 = vmatpush.msra.mxu0 0.0
    %2521 = vmatpush.msra.mxu0 0.0
    %2522 = vmatpush.msra.mxu0 0.0
    %2523 = vmatpush.msra.mxu0 0.0
    %2524 = vmatpush.msra.mxu0 0.0
    %2525 = vmatpush.msra.mxu0 0.0
    %2526 = vmatpush.msra.mxu0 0.0
    %2527 = vmatpush.msra.mxu0 0.0
    %2528 = vmatpush.msra.mxu0 0.0
    %2529 = vmatpush.msra.mxu0 0.0
    %2530 = vmatpush.msra.mxu0 %v1941
    %2531 = vmatmul.f32.gmra.mxu0 %v2513
    %v2532 = vpop.f32.mrf.mxu0
    %v2533 = vadd.f32 0.0, %v2532
    %2534 = vdwg.mxu0
    %v2535 = vadd.f32 %v2511, %v2533
    %v2536 = vtanh.pop %v2535
    %2537 = vst.msk [vmem:[#allocation2 + $0x2a] sm:$0x3] %vm172, %v2536
    %v2538 = vld [vmem:[#allocation3 + $0x2c] sm:$0x3]
    %v2540 = vsel %vm134, %v2536, 0
    %2542 = vmatpush.msra.mxu0 0.0
    %2543 = vmatpush.msra.mxu0 0.0
    %2544 = vmatpush.msra.mxu0 0.0
    %2545 = vmatpush.msra.mxu0 0.0
    %2546 = vmatpush.msra.mxu0 0.0
    %2547 = vmatpush.msra.mxu0 0.0
    %2548 = vmatpush.msra.mxu0 0.0
    %2549 = vmatpush.msra.mxu0 0.0
    %2550 = vmatpush.msra.mxu0 0.0
    %2551 = vmatpush.msra.mxu0 0.0
    %2552 = vmatpush.msra.mxu0 0.0
    %2553 = vmatpush.msra.mxu0 0.0
    %2554 = vmatpush.msra.mxu0 0.0
    %2555 = vmatpush.msra.mxu0 0.0
    %2556 = vmatpush.msra.mxu0 0.0
    %2557 = vmatpush.msra.mxu0 %v1941
    %2558 = vmatmul.f32.gmra.mxu0 %v2540
    %v2559 = vpop.f32.mrf.mxu0
    %v2560 = vadd.f32 0.0, %v2559
    %2561 = vdwg.mxu0
    %v2562 = vadd.f32 %v2538, %v2560
    %v2563 = vtanh.pop %v2562
    %2564 = vst.msk [vmem:[#allocation2 + $0x2c] sm:$0x3] %vm172, %v2563
    %v2565 = vld [vmem:[#allocation3 + $0x2e] sm:$0x3]
    %v2567 = vsel %vm134, %v2563, 0
    %2569 = vmatpush.msra.mxu0 0.0
    %2570 = vmatpush.msra.mxu0 0.0
    %2571 = vmatpush.msra.mxu0 0.0
    %2572 = vmatpush.msra.mxu0 0.0
    %2573 = vmatpush.msra.mxu0 0.0
    %2574 = vmatpush.msra.mxu0 0.0
    %2575 = vmatpush.msra.mxu0 0.0
    %2576 = vmatpush.msra.mxu0 0.0
    %2577 = vmatpush.msra.mxu0 0.0
    %2578 = vmatpush.msra.mxu0 0.0
    %2579 = vmatpush.msra.mxu0 0.0
    %2580 = vmatpush.msra.mxu0 0.0
    %2581 = vmatpush.msra.mxu0 0.0
    %2582 = vmatpush.msra.mxu0 0.0
    %2583 = vmatpush.msra.mxu0 0.0
    %2584 = vmatpush.msra.mxu0 %v1941
    %2585 = vmatmul.f32.gmra.mxu0 %v2567
    %v2586 = vpop.f32.mrf.mxu0
    %v2587 = vadd.f32 0.0, %v2586
    %2588 = vdwg.mxu0
    %v2589 = vadd.f32 %v2565, %v2587
    %v2590 = vtanh.pop %v2589
    %2591 = vst.msk [vmem:[#allocation2 + $0x2e] sm:$0x3] %vm172, %v2590
    %v2592 = vld [vmem:[#allocation3 + $0x30] sm:$0x3]
    %v2594 = vsel %vm134, %v2590, 0
    %2596 = vmatpush.msra.mxu0 0.0
    %2597 = vmatpush.msra.mxu0 0.0
    %2598 = vmatpush.msra.mxu0 0.0
    %2599 = vmatpush.msra.mxu0 0.0
    %2600 = vmatpush.msra.mxu0 0.0
    %2601 = vmatpush.msra.mxu0 0.0
    %2602 = vmatpush.msra.mxu0 0.0
    %2603 = vmatpush.msra.mxu0 0.0
    %2604 = vmatpush.msra.mxu0 0.0
    %2605 = vmatpush.msra.mxu0 0.0
    %2606 = vmatpush.msra.mxu0 0.0
    %2607 = vmatpush.msra.mxu0 0.0
    %2608 = vmatpush.msra.mxu0 0.0
    %2609 = vmatpush.msra.mxu0 0.0
    %2610 = vmatpush.msra.mxu0 0.0
    %2611 = vmatpush.msra.mxu0 %v1941
    %2612 = vmatmul.f32.gmra.mxu0 %v2594
    %v2613 = vpop.f32.mrf.mxu0
    %v2614 = vadd.f32 0.0, %v2613
    %2615 = vdwg.mxu0
    %v2616 = vadd.f32 %v2592, %v2614
    %v2617 = vtanh.pop %v2616
    %2618 = vst.msk [vmem:[#allocation2 + $0x30] sm:$0x3] %vm172, %v2617
    %v2619 = vld [vmem:[#allocation3 + $0x32] sm:$0x3]
    %v2621 = vsel %vm134, %v2617, 0
    %2623 = vmatpush.msra.mxu0 0.0
    %2624 = vmatpush.msra.mxu0 0.0
    %2625 = vmatpush.msra.mxu0 0.0
    %2626 = vmatpush.msra.mxu0 0.0
    %2627 = vmatpush.msra.mxu0 0.0
    %2628 = vmatpush.msra.mxu0 0.0
    %2629 = vmatpush.msra.mxu0 0.0
    %2630 = vmatpush.msra.mxu0 0.0
    %2631 = vmatpush.msra.mxu0 0.0
    %2632 = vmatpush.msra.mxu0 0.0
    %2633 = vmatpush.msra.mxu0 0.0
    %2634 = vmatpush.msra.mxu0 0.0
    %2635 = vmatpush.msra.mxu0 0.0
    %2636 = vmatpush.msra.mxu0 0.0
    %2637 = vmatpush.msra.mxu0 0.0
    %2638 = vmatpush.msra.mxu0 %v1941
    %2639 = vmatmul.f32.gmra.mxu0 %v2621
    %v2640 = vpop.f32.mrf.mxu0
    %v2641 = vadd.f32 0.0, %v2640
    %2642 = vdwg.mxu0
    %v2643 = vadd.f32 %v2619, %v2641
    %v2644 = vtanh.pop %v2643
    %2645 = vst.msk [vmem:[#allocation2 + $0x32] sm:$0x3] %vm172, %v2644
    %v2646 = vld [vmem:[#allocation3 + $0x34] sm:$0x3]
    %v2648 = vsel %vm134, %v2644, 0
    %2650 = vmatpush.msra.mxu0 0.0
    %2651 = vmatpush.msra.mxu0 0.0
    %2652 = vmatpush.msra.mxu0 0.0
    %2653 = vmatpush.msra.mxu0 0.0
    %2654 = vmatpush.msra.mxu0 0.0
    %2655 = vmatpush.msra.mxu0 0.0
    %2656 = vmatpush.msra.mxu0 0.0
    %2657 = vmatpush.msra.mxu0 0.0
    %2658 = vmatpush.msra.mxu0 0.0
    %2659 = vmatpush.msra.mxu0 0.0
    %2660 = vmatpush.msra.mxu0 0.0
    %2661 = vmatpush.msra.mxu0 0.0
    %2662 = vmatpush.msra.mxu0 0.0
    %2663 = vmatpush.msra.mxu0 0.0
    %2664 = vmatpush.msra.mxu0 0.0
    %2665 = vmatpush.msra.mxu0 %v1941
    %2666 = vmatmul.f32.gmra.mxu0 %v2648
    %v2667 = vpop.f32.mrf.mxu0
    %v2668 = vadd.f32 0.0, %v2667
    %2669 = vdwg.mxu0
    %v2670 = vadd.f32 %v2646, %v2668
    %v2671 = vtanh.pop %v2670
    %2672 = vst.msk [vmem:[#allocation2 + $0x34] sm:$0x3] %vm172, %v2671
    %v2673 = vld [vmem:[#allocation3 + $0x36] sm:$0x3]
    %v2675 = vsel %vm134, %v2671, 0
    %2677 = vmatpush.msra.mxu0 0.0
    %2678 = vmatpush.msra.mxu0 0.0
    %2679 = vmatpush.msra.mxu0 0.0
    %2680 = vmatpush.msra.mxu0 0.0
    %2681 = vmatpush.msra.mxu0 0.0
    %2682 = vmatpush.msra.mxu0 0.0
    %2683 = vmatpush.msra.mxu0 0.0
    %2684 = vmatpush.msra.mxu0 0.0
    %2685 = vmatpush.msra.mxu0 0.0
    %2686 = vmatpush.msra.mxu0 0.0
    %2687 = vmatpush.msra.mxu0 0.0
    %2688 = vmatpush.msra.mxu0 0.0
    %2689 = vmatpush.msra.mxu0 0.0
    %2690 = vmatpush.msra.mxu0 0.0
    %2691 = vmatpush.msra.mxu0 0.0
    %2692 = vmatpush.msra.mxu0 %v1941
    %2693 = vmatmul.f32.gmra.mxu0 %v2675
    %v2694 = vpop.f32.mrf.mxu0
    %v2695 = vadd.f32 0.0, %v2694
    %2696 = vdwg.mxu0
    %v2697 = vadd.f32 %v2673, %v2695
    %v2698 = vtanh.pop %v2697
    %2699 = vst.msk [vmem:[#allocation2 + $0x36] sm:$0x3] %vm172, %v2698
    %v2700 = vld [vmem:[#allocation3 + $0x38] sm:$0x3]
    %v2702 = vsel %vm134, %v2698, 0
    %2704 = vmatpush.msra.mxu0 0.0
    %2705 = vmatpush.msra.mxu0 0.0
    %2706 = vmatpush.msra.mxu0 0.0
    %2707 = vmatpush.msra.mxu0 0.0
    %2708 = vmatpush.msra.mxu0 0.0
    %2709 = vmatpush.msra.mxu0 0.0
    %2710 = vmatpush.msra.mxu0 0.0
    %2711 = vmatpush.msra.mxu0 0.0
    %2712 = vmatpush.msra.mxu0 0.0
    %2713 = vmatpush.msra.mxu0 0.0
    %2714 = vmatpush.msra.mxu0 0.0
    %2715 = vmatpush.msra.mxu0 0.0
    %2716 = vmatpush.msra.mxu0 0.0
    %2717 = vmatpush.msra.mxu0 0.0
    %2718 = vmatpush.msra.mxu0 0.0
    %2719 = vmatpush.msra.mxu0 %v1941
    %2720 = vmatmul.f32.gmra.mxu0 %v2702
    %v2721 = vpop.f32.mrf.mxu0
    %v2722 = vadd.f32 0.0, %v2721
    %2723 = vdwg.mxu0
    %v2724 = vadd.f32 %v2700, %v2722
    %v2725 = vtanh.pop %v2724
    %2726 = vst.msk [vmem:[#allocation2 + $0x38] sm:$0x3] %vm172, %v2725
    %v2727 = vld [vmem:[#allocation3 + $0x3a] sm:$0x3]
    %v2729 = vsel %vm134, %v2725, 0
    %2731 = vmatpush.msra.mxu0 0.0
    %2732 = vmatpush.msra.mxu0 0.0
    %2733 = vmatpush.msra.mxu0 0.0
    %2734 = vmatpush.msra.mxu0 0.0
    %2735 = vmatpush.msra.mxu0 0.0
    %2736 = vmatpush.msra.mxu0 0.0
    %2737 = vmatpush.msra.mxu0 0.0
    %2738 = vmatpush.msra.mxu0 0.0
    %2739 = vmatpush.msra.mxu0 0.0
    %2740 = vmatpush.msra.mxu0 0.0
    %2741 = vmatpush.msra.mxu0 0.0
    %2742 = vmatpush.msra.mxu0 0.0
    %2743 = vmatpush.msra.mxu0 0.0
    %2744 = vmatpush.msra.mxu0 0.0
    %2745 = vmatpush.msra.mxu0 0.0
    %2746 = vmatpush.msra.mxu0 %v1941
    %2747 = vmatmul.f32.gmra.mxu0 %v2729
    %v2748 = vpop.f32.mrf.mxu0
    %v2749 = vadd.f32 0.0, %v2748
    %2750 = vdwg.mxu0
    %v2751 = vadd.f32 %v2727, %v2749
    %v2752 = vtanh.pop %v2751
    %2753 = vst.msk [vmem:[#allocation2 + $0x3a] sm:$0x3] %vm172, %v2752
    %v2754 = vld [vmem:[%s5 + $0x3] sm:$0x1]
    %v2755 = vld [vmem:[#allocation2] sm:$0xff]
    %v2756 = vld [vmem:[#allocation2 + $0x8] sm:$0xff]
    %v2757 = vld [vmem:[#allocation2 + $0x10] sm:$0xff]
    %v2758 = vld [vmem:[#allocation2 + $0x18] sm:$0xff]
    %v2759 = vld [vmem:[#allocation2 + $0x20] sm:$0xff]
    %v2760 = vld [vmem:[#allocation2 + $0x28] sm:$0xff]
    %v2761 = vld [vmem:[#allocation2 + $0x30] sm:$0xff]
    %v2762 = vld [vmem:[#allocation2 + $0x38] sm:$0xf]
    %s2763 = scalar_lea.vmem %s3, 16
    %v2764 = vld [vmem:[%s2763] sm:$0xff]
    %v2765 = vperm.slane %v2754, 0
    %v2767 = vsel %vm134, %v2755, 0
    %v2770 = vsel %vm134, %v2756, 0
    %v2773 = vsel %vm134, %v2757, 0
    %v2776 = vsel %vm134, %v2758, 0
    %v2779 = vsel %vm134, %v2759, 0
    %v2782 = vsel %vm134, %v2760, 0
    %v2785 = vsel %vm134, %v2761, 0
    %v2788 = vsel %vm134, %v2762, 0
    %2790 = vmatpush.msra.mxu0 0.0
    %2791 = vmatpush.msra.mxu0 0.0
    %2792 = vmatpush.msra.mxu0 0.0
    %2793 = vmatpush.msra.mxu0 0.0
    %2794 = vmatpush.msra.mxu0 0.0
    %2795 = vmatpush.msra.mxu0 0.0
    %2796 = vmatpush.msra.mxu0 0.0
    %2797 = vmatpush.msra.mxu0 0.0
    %2798 = vmatpush.msra.mxu0 0.0
    %2799 = vmatpush.msra.mxu0 0.0
    %2800 = vmatpush.msra.mxu0 0.0
    %2801 = vmatpush.msra.mxu0 0.0
    %2802 = vmatpush.msra.mxu0 0.0
    %2803 = vmatpush.msra.mxu0 0.0
    %2804 = vmatpush.msra.mxu0 0.0
    %2805 = vmatpush.msra.mxu0 %v2764
    %2806 = vmatmul.f32.gmra.mxu0 %v2767
    %v2807 = vpop.f32.mrf.mxu0
    %v2808 = vadd.f32 %v2765, %v2807
    %2809 = vmatmul.f32.gmra.mxu0 %v2770
    %v2810 = vpop.f32.mrf.mxu0
    %v2811 = vadd.f32 %v2765, %v2810
    %2812 = vmatmul.f32.gmra.mxu0 %v2773
    %v2813 = vpop.f32.mrf.mxu0
    %v2814 = vadd.f32 %v2765, %v2813
    %2815 = vmatmul.f32.gmra.mxu0 %v2776
    %v2816 = vpop.f32.mrf.mxu0
    %v2817 = vadd.f32 %v2765, %v2816
    %2818 = vmatmul.f32.gmra.mxu0 %v2779
    %v2819 = vpop.f32.mrf.mxu0
    %v2820 = vadd.f32 %v2765, %v2819
    %2821 = vmatmul.f32.gmra.mxu0 %v2782
    %v2822 = vpop.f32.mrf.mxu0
    %v2823 = vadd.f32 %v2765, %v2822
    %2824 = vmatmul.f32.gmra.mxu0 %v2785
    %v2825 = vpop.f32.mrf.mxu0
    %v2826 = vadd.f32 %v2765, %v2825
    %2827 = vmatmul.f32.gmra.mxu0 %v2788
    %v2828 = vpop.f32.mrf.mxu0
    %v2829 = vadd.f32 %v2765, %v2828
    %2830 = vdwg.mxu0
    %2831 = vst.msk [vmem:[#allocation3] sm:$0xff] %vm134, %v2808
    %2832 = vst.msk [vmem:[#allocation3 + $0x8] sm:$0xff] %vm134, %v2811
    %2833 = vst.msk [vmem:[#allocation3 + $0x10] sm:$0xff] %vm134, %v2814
    %2834 = vst.msk [vmem:[#allocation3 + $0x18] sm:$0xff] %vm134, %v2817
    %2835 = vst.msk [vmem:[#allocation3 + $0x20] sm:$0xff] %vm134, %v2820
    %2836 = vst.msk [vmem:[#allocation3 + $0x28] sm:$0xff] %vm134, %v2823
    %2837 = vst.msk [vmem:[#allocation3 + $0x30] sm:$0xff] %vm134, %v2826
    %2838 = vst.msk [vmem:[#allocation3 + $0x38] sm:$0xf] %vm142, %v2829
    %s2839 = scalar_lea.vmem %s4, 24
    %v2840 = vld [vmem:[%s2839] sm:$0xff]
    %s2841 = scalar_lea.vmem %s1, 6
    %v2842 = vld [vmem:[%s2841] sm:$0x3]
    %v2843 = vld [vmem:[#allocation3] sm:$0x3]
    %v2845 = vsel %vm134, %v2842, 0
    %2847 = vmatpush.msra.mxu0 0.0
    %2848 = vmatpush.msra.mxu0 0.0
    %2849 = vmatpush.msra.mxu0 0.0
    %2850 = vmatpush.msra.mxu0 0.0
    %2851 = vmatpush.msra.mxu0 0.0
    %2852 = vmatpush.msra.mxu0 0.0
    %2853 = vmatpush.msra.mxu0 0.0
    %2854 = vmatpush.msra.mxu0 0.0
    %2855 = vmatpush.msra.mxu0 0.0
    %2856 = vmatpush.msra.mxu0 0.0
    %2857 = vmatpush.msra.mxu0 0.0
    %2858 = vmatpush.msra.mxu0 0.0
    %2859 = vmatpush.msra.mxu0 0.0
    %2860 = vmatpush.msra.mxu0 0.0
    %2861 = vmatpush.msra.mxu0 0.0
    %2862 = vmatpush.msra.mxu0 %v2840
    %2863 = vmatmul.f32.gmra.mxu0 %v2845
    %v2864 = vpop.f32.mrf.mxu0
    %v2865 = vadd.f32 0.0, %v2864
    %2866 = vdwg.mxu0
    %v2867 = vadd.f32 %v2843, %v2865
    %v2868 = vtanh.pop %v2867
    %2869 = vst.msk [vmem:[#allocation2] sm:$0x3] %vm172, %v2868
    %v2870 = vld [vmem:[#allocation3 + $0x2] sm:$0x3]
    %v2872 = vsel %vm134, %v2868, 0
    %2874 = vmatpush.msra.mxu0 0.0
    %2875 = vmatpush.msra.mxu0 0.0
    %2876 = vmatpush.msra.mxu0 0.0
    %2877 = vmatpush.msra.mxu0 0.0
    %2878 = vmatpush.msra.mxu0 0.0
    %2879 = vmatpush.msra.mxu0 0.0
    %2880 = vmatpush.msra.mxu0 0.0
    %2881 = vmatpush.msra.mxu0 0.0
    %2882 = vmatpush.msra.mxu0 0.0
    %2883 = vmatpush.msra.mxu0 0.0
    %2884 = vmatpush.msra.mxu0 0.0
    %2885 = vmatpush.msra.mxu0 0.0
    %2886 = vmatpush.msra.mxu0 0.0
    %2887 = vmatpush.msra.mxu0 0.0
    %2888 = vmatpush.msra.mxu0 0.0
    %2889 = vmatpush.msra.mxu0 %v2840
    %2890 = vmatmul.f32.gmra.mxu0 %v2872
    %v2891 = vpop.f32.mrf.mxu0
    %v2892 = vadd.f32 0.0, %v2891
    %2893 = vdwg.mxu0
    %v2894 = vadd.f32 %v2870, %v2892
    %v2895 = vtanh.pop %v2894
    %2896 = vst.msk [vmem:[#allocation2 + $0x2] sm:$0x3] %vm172, %v2895
    %v2897 = vld [vmem:[#allocation3 + $0x4] sm:$0x3]
    %v2899 = vsel %vm134, %v2895, 0
    %2901 = vmatpush.msra.mxu0 0.0
    %2902 = vmatpush.msra.mxu0 0.0
    %2903 = vmatpush.msra.mxu0 0.0
    %2904 = vmatpush.msra.mxu0 0.0
    %2905 = vmatpush.msra.mxu0 0.0
    %2906 = vmatpush.msra.mxu0 0.0
    %2907 = vmatpush.msra.mxu0 0.0
    %2908 = vmatpush.msra.mxu0 0.0
    %2909 = vmatpush.msra.mxu0 0.0
    %2910 = vmatpush.msra.mxu0 0.0
    %2911 = vmatpush.msra.mxu0 0.0
    %2912 = vmatpush.msra.mxu0 0.0
    %2913 = vmatpush.msra.mxu0 0.0
    %2914 = vmatpush.msra.mxu0 0.0
    %2915 = vmatpush.msra.mxu0 0.0
    %2916 = vmatpush.msra.mxu0 %v2840
    %2917 = vmatmul.f32.gmra.mxu0 %v2899
    %v2918 = vpop.f32.mrf.mxu0
    %v2919 = vadd.f32 0.0, %v2918
    %2920 = vdwg.mxu0
    %v2921 = vadd.f32 %v2897, %v2919
    %v2922 = vtanh.pop %v2921
    %2923 = vst.msk [vmem:[#allocation2 + $0x4] sm:$0x3] %vm172, %v2922
    %v2924 = vld [vmem:[#allocation3 + $0x6] sm:$0x3]
    %v2926 = vsel %vm134, %v2922, 0
    %2928 = vmatpush.msra.mxu0 0.0
    %2929 = vmatpush.msra.mxu0 0.0
    %2930 = vmatpush.msra.mxu0 0.0
    %2931 = vmatpush.msra.mxu0 0.0
    %2932 = vmatpush.msra.mxu0 0.0
    %2933 = vmatpush.msra.mxu0 0.0
    %2934 = vmatpush.msra.mxu0 0.0
    %2935 = vmatpush.msra.mxu0 0.0
    %2936 = vmatpush.msra.mxu0 0.0
    %2937 = vmatpush.msra.mxu0 0.0
    %2938 = vmatpush.msra.mxu0 0.0
    %2939 = vmatpush.msra.mxu0 0.0
    %2940 = vmatpush.msra.mxu0 0.0
    %2941 = vmatpush.msra.mxu0 0.0
    %2942 = vmatpush.msra.mxu0 0.0
    %2943 = vmatpush.msra.mxu0 %v2840
    %2944 = vmatmul.f32.gmra.mxu0 %v2926
    %v2945 = vpop.f32.mrf.mxu0
    %v2946 = vadd.f32 0.0, %v2945
    %2947 = vdwg.mxu0
    %v2948 = vadd.f32 %v2924, %v2946
    %v2949 = vtanh.pop %v2948
    %2950 = vst.msk [vmem:[#allocation2 + $0x6] sm:$0x3] %vm172, %v2949
    %v2951 = vld [vmem:[#allocation3 + $0x8] sm:$0x3]
    %v2953 = vsel %vm134, %v2949, 0
    %2955 = vmatpush.msra.mxu0 0.0
    %2956 = vmatpush.msra.mxu0 0.0
    %2957 = vmatpush.msra.mxu0 0.0
    %2958 = vmatpush.msra.mxu0 0.0
    %2959 = vmatpush.msra.mxu0 0.0
    %2960 = vmatpush.msra.mxu0 0.0
    %2961 = vmatpush.msra.mxu0 0.0
    %2962 = vmatpush.msra.mxu0 0.0
    %2963 = vmatpush.msra.mxu0 0.0
    %2964 = vmatpush.msra.mxu0 0.0
    %2965 = vmatpush.msra.mxu0 0.0
    %2966 = vmatpush.msra.mxu0 0.0
    %2967 = vmatpush.msra.mxu0 0.0
    %2968 = vmatpush.msra.mxu0 0.0
    %2969 = vmatpush.msra.mxu0 0.0
    %2970 = vmatpush.msra.mxu0 %v2840
    %2971 = vmatmul.f32.gmra.mxu0 %v2953
    %v2972 = vpop.f32.mrf.mxu0
    %v2973 = vadd.f32 0.0, %v2972
    %2974 = vdwg.mxu0
    %v2975 = vadd.f32 %v2951, %v2973
    %v2976 = vtanh.pop %v2975
    %2977 = vst.msk [vmem:[#allocation2 + $0x8] sm:$0x3] %vm172, %v2976
    %v2978 = vld [vmem:[#allocation3 + $0xa] sm:$0x3]
    %v2980 = vsel %vm134, %v2976, 0
    %2982 = vmatpush.msra.mxu0 0.0
    %2983 = vmatpush.msra.mxu0 0.0
    %2984 = vmatpush.msra.mxu0 0.0
    %2985 = vmatpush.msra.mxu0 0.0
    %2986 = vmatpush.msra.mxu0 0.0
    %2987 = vmatpush.msra.mxu0 0.0
    %2988 = vmatpush.msra.mxu0 0.0
    %2989 = vmatpush.msra.mxu0 0.0
    %2990 = vmatpush.msra.mxu0 0.0
    %2991 = vmatpush.msra.mxu0 0.0
    %2992 = vmatpush.msra.mxu0 0.0
    %2993 = vmatpush.msra.mxu0 0.0
    %2994 = vmatpush.msra.mxu0 0.0
    %2995 = vmatpush.msra.mxu0 0.0
    %2996 = vmatpush.msra.mxu0 0.0
    %2997 = vmatpush.msra.mxu0 %v2840
    %2998 = vmatmul.f32.gmra.mxu0 %v2980
    %v2999 = vpop.f32.mrf.mxu0
    %v3000 = vadd.f32 0.0, %v2999
    %3001 = vdwg.mxu0
    %v3002 = vadd.f32 %v2978, %v3000
    %v3003 = vtanh.pop %v3002
    %3004 = vst.msk [vmem:[#allocation2 + $0xa] sm:$0x3] %vm172, %v3003
    %v3005 = vld [vmem:[#allocation3 + $0xc] sm:$0x3]
    %v3007 = vsel %vm134, %v3003, 0
    %3009 = vmatpush.msra.mxu0 0.0
    %3010 = vmatpush.msra.mxu0 0.0
    %3011 = vmatpush.msra.mxu0 0.0
    %3012 = vmatpush.msra.mxu0 0.0
    %3013 = vmatpush.msra.mxu0 0.0
    %3014 = vmatpush.msra.mxu0 0.0
    %3015 = vmatpush.msra.mxu0 0.0
    %3016 = vmatpush.msra.mxu0 0.0
    %3017 = vmatpush.msra.mxu0 0.0
    %3018 = vmatpush.msra.mxu0 0.0
    %3019 = vmatpush.msra.mxu0 0.0
    %3020 = vmatpush.msra.mxu0 0.0
    %3021 = vmatpush.msra.mxu0 0.0
    %3022 = vmatpush.msra.mxu0 0.0
    %3023 = vmatpush.msra.mxu0 0.0
    %3024 = vmatpush.msra.mxu0 %v2840
    %3025 = vmatmul.f32.gmra.mxu0 %v3007
    %v3026 = vpop.f32.mrf.mxu0
    %v3027 = vadd.f32 0.0, %v3026
    %3028 = vdwg.mxu0
    %v3029 = vadd.f32 %v3005, %v3027
    %v3030 = vtanh.pop %v3029
    %3031 = vst.msk [vmem:[#allocation2 + $0xc] sm:$0x3] %vm172, %v3030
    %v3032 = vld [vmem:[#allocation3 + $0xe] sm:$0x3]
    %v3034 = vsel %vm134, %v3030, 0
    %3036 = vmatpush.msra.mxu0 0.0
    %3037 = vmatpush.msra.mxu0 0.0
    %3038 = vmatpush.msra.mxu0 0.0
    %3039 = vmatpush.msra.mxu0 0.0
    %3040 = vmatpush.msra.mxu0 0.0
    %3041 = vmatpush.msra.mxu0 0.0
    %3042 = vmatpush.msra.mxu0 0.0
    %3043 = vmatpush.msra.mxu0 0.0
    %3044 = vmatpush.msra.mxu0 0.0
    %3045 = vmatpush.msra.mxu0 0.0
    %3046 = vmatpush.msra.mxu0 0.0
    %3047 = vmatpush.msra.mxu0 0.0
    %3048 = vmatpush.msra.mxu0 0.0
    %3049 = vmatpush.msra.mxu0 0.0
    %3050 = vmatpush.msra.mxu0 0.0
    %3051 = vmatpush.msra.mxu0 %v2840
    %3052 = vmatmul.f32.gmra.mxu0 %v3034
    %v3053 = vpop.f32.mrf.mxu0
    %v3054 = vadd.f32 0.0, %v3053
    %3055 = vdwg.mxu0
    %v3056 = vadd.f32 %v3032, %v3054
    %v3057 = vtanh.pop %v3056
    %3058 = vst.msk [vmem:[#allocation2 + $0xe] sm:$0x3] %vm172, %v3057
    %v3059 = vld [vmem:[#allocation3 + $0x10] sm:$0x3]
    %v3061 = vsel %vm134, %v3057, 0
    %3063 = vmatpush.msra.mxu0 0.0
    %3064 = vmatpush.msra.mxu0 0.0
    %3065 = vmatpush.msra.mxu0 0.0
    %3066 = vmatpush.msra.mxu0 0.0
    %3067 = vmatpush.msra.mxu0 0.0
    %3068 = vmatpush.msra.mxu0 0.0
    %3069 = vmatpush.msra.mxu0 0.0
    %3070 = vmatpush.msra.mxu0 0.0
    %3071 = vmatpush.msra.mxu0 0.0
    %3072 = vmatpush.msra.mxu0 0.0
    %3073 = vmatpush.msra.mxu0 0.0
    %3074 = vmatpush.msra.mxu0 0.0
    %3075 = vmatpush.msra.mxu0 0.0
    %3076 = vmatpush.msra.mxu0 0.0
    %3077 = vmatpush.msra.mxu0 0.0
    %3078 = vmatpush.msra.mxu0 %v2840
    %3079 = vmatmul.f32.gmra.mxu0 %v3061
    %v3080 = vpop.f32.mrf.mxu0
    %v3081 = vadd.f32 0.0, %v3080
    %3082 = vdwg.mxu0
    %v3083 = vadd.f32 %v3059, %v3081
    %v3084 = vtanh.pop %v3083
    %3085 = vst.msk [vmem:[#allocation2 + $0x10] sm:$0x3] %vm172, %v3084
    %v3086 = vld [vmem:[#allocation3 + $0x12] sm:$0x3]
    %v3088 = vsel %vm134, %v3084, 0
    %3090 = vmatpush.msra.mxu0 0.0
    %3091 = vmatpush.msra.mxu0 0.0
    %3092 = vmatpush.msra.mxu0 0.0
    %3093 = vmatpush.msra.mxu0 0.0
    %3094 = vmatpush.msra.mxu0 0.0
    %3095 = vmatpush.msra.mxu0 0.0
    %3096 = vmatpush.msra.mxu0 0.0
    %3097 = vmatpush.msra.mxu0 0.0
    %3098 = vmatpush.msra.mxu0 0.0
    %3099 = vmatpush.msra.mxu0 0.0
    %3100 = vmatpush.msra.mxu0 0.0
    %3101 = vmatpush.msra.mxu0 0.0
    %3102 = vmatpush.msra.mxu0 0.0
    %3103 = vmatpush.msra.mxu0 0.0
    %3104 = vmatpush.msra.mxu0 0.0
    %3105 = vmatpush.msra.mxu0 %v2840
    %3106 = vmatmul.f32.gmra.mxu0 %v3088
    %v3107 = vpop.f32.mrf.mxu0
    %v3108 = vadd.f32 0.0, %v3107
    %3109 = vdwg.mxu0
    %v3110 = vadd.f32 %v3086, %v3108
    %v3111 = vtanh.pop %v3110
    %3112 = vst.msk [vmem:[#allocation2 + $0x12] sm:$0x3] %vm172, %v3111
    %v3113 = vld [vmem:[#allocation3 + $0x14] sm:$0x3]
    %v3115 = vsel %vm134, %v3111, 0
    %3117 = vmatpush.msra.mxu0 0.0
    %3118 = vmatpush.msra.mxu0 0.0
    %3119 = vmatpush.msra.mxu0 0.0
    %3120 = vmatpush.msra.mxu0 0.0
    %3121 = vmatpush.msra.mxu0 0.0
    %3122 = vmatpush.msra.mxu0 0.0
    %3123 = vmatpush.msra.mxu0 0.0
    %3124 = vmatpush.msra.mxu0 0.0
    %3125 = vmatpush.msra.mxu0 0.0
    %3126 = vmatpush.msra.mxu0 0.0
    %3127 = vmatpush.msra.mxu0 0.0
    %3128 = vmatpush.msra.mxu0 0.0
    %3129 = vmatpush.msra.mxu0 0.0
    %3130 = vmatpush.msra.mxu0 0.0
    %3131 = vmatpush.msra.mxu0 0.0
    %3132 = vmatpush.msra.mxu0 %v2840
    %3133 = vmatmul.f32.gmra.mxu0 %v3115
    %v3134 = vpop.f32.mrf.mxu0
    %v3135 = vadd.f32 0.0, %v3134
    %3136 = vdwg.mxu0
    %v3137 = vadd.f32 %v3113, %v3135
    %v3138 = vtanh.pop %v3137
    %3139 = vst.msk [vmem:[#allocation2 + $0x14] sm:$0x3] %vm172, %v3138
    %v3140 = vld [vmem:[#allocation3 + $0x16] sm:$0x3]
    %v3142 = vsel %vm134, %v3138, 0
    %3144 = vmatpush.msra.mxu0 0.0
    %3145 = vmatpush.msra.mxu0 0.0
    %3146 = vmatpush.msra.mxu0 0.0
    %3147 = vmatpush.msra.mxu0 0.0
    %3148 = vmatpush.msra.mxu0 0.0
    %3149 = vmatpush.msra.mxu0 0.0
    %3150 = vmatpush.msra.mxu0 0.0
    %3151 = vmatpush.msra.mxu0 0.0
    %3152 = vmatpush.msra.mxu0 0.0
    %3153 = vmatpush.msra.mxu0 0.0
    %3154 = vmatpush.msra.mxu0 0.0
    %3155 = vmatpush.msra.mxu0 0.0
    %3156 = vmatpush.msra.mxu0 0.0
    %3157 = vmatpush.msra.mxu0 0.0
    %3158 = vmatpush.msra.mxu0 0.0
    %3159 = vmatpush.msra.mxu0 %v2840
    %3160 = vmatmul.f32.gmra.mxu0 %v3142
    %v3161 = vpop.f32.mrf.mxu0
    %v3162 = vadd.f32 0.0, %v3161
    %3163 = vdwg.mxu0
    %v3164 = vadd.f32 %v3140, %v3162
    %v3165 = vtanh.pop %v3164
    %3166 = vst.msk [vmem:[#allocation2 + $0x16] sm:$0x3] %vm172, %v3165
    %v3167 = vld [vmem:[#allocation3 + $0x18] sm:$0x3]
    %v3169 = vsel %vm134, %v3165, 0
    %3171 = vmatpush.msra.mxu0 0.0
    %3172 = vmatpush.msra.mxu0 0.0
    %3173 = vmatpush.msra.mxu0 0.0
    %3174 = vmatpush.msra.mxu0 0.0
    %3175 = vmatpush.msra.mxu0 0.0
    %3176 = vmatpush.msra.mxu0 0.0
    %3177 = vmatpush.msra.mxu0 0.0
    %3178 = vmatpush.msra.mxu0 0.0
    %3179 = vmatpush.msra.mxu0 0.0
    %3180 = vmatpush.msra.mxu0 0.0
    %3181 = vmatpush.msra.mxu0 0.0
    %3182 = vmatpush.msra.mxu0 0.0
    %3183 = vmatpush.msra.mxu0 0.0
    %3184 = vmatpush.msra.mxu0 0.0
    %3185 = vmatpush.msra.mxu0 0.0
    %3186 = vmatpush.msra.mxu0 %v2840
    %3187 = vmatmul.f32.gmra.mxu0 %v3169
    %v3188 = vpop.f32.mrf.mxu0
    %v3189 = vadd.f32 0.0, %v3188
    %3190 = vdwg.mxu0
    %v3191 = vadd.f32 %v3167, %v3189
    %v3192 = vtanh.pop %v3191
    %3193 = vst.msk [vmem:[#allocation2 + $0x18] sm:$0x3] %vm172, %v3192
    %v3194 = vld [vmem:[#allocation3 + $0x1a] sm:$0x3]
    %v3196 = vsel %vm134, %v3192, 0
    %3198 = vmatpush.msra.mxu0 0.0
    %3199 = vmatpush.msra.mxu0 0.0
    %3200 = vmatpush.msra.mxu0 0.0
    %3201 = vmatpush.msra.mxu0 0.0
    %3202 = vmatpush.msra.mxu0 0.0
    %3203 = vmatpush.msra.mxu0 0.0
    %3204 = vmatpush.msra.mxu0 0.0
    %3205 = vmatpush.msra.mxu0 0.0
    %3206 = vmatpush.msra.mxu0 0.0
    %3207 = vmatpush.msra.mxu0 0.0
    %3208 = vmatpush.msra.mxu0 0.0
    %3209 = vmatpush.msra.mxu0 0.0
    %3210 = vmatpush.msra.mxu0 0.0
    %3211 = vmatpush.msra.mxu0 0.0
    %3212 = vmatpush.msra.mxu0 0.0
    %3213 = vmatpush.msra.mxu0 %v2840
    %3214 = vmatmul.f32.gmra.mxu0 %v3196
    %v3215 = vpop.f32.mrf.mxu0
    %v3216 = vadd.f32 0.0, %v3215
    %3217 = vdwg.mxu0
    %v3218 = vadd.f32 %v3194, %v3216
    %v3219 = vtanh.pop %v3218
    %3220 = vst.msk [vmem:[#allocation2 + $0x1a] sm:$0x3] %vm172, %v3219
    %v3221 = vld [vmem:[#allocation3 + $0x1c] sm:$0x3]
    %v3223 = vsel %vm134, %v3219, 0
    %3225 = vmatpush.msra.mxu0 0.0
    %3226 = vmatpush.msra.mxu0 0.0
    %3227 = vmatpush.msra.mxu0 0.0
    %3228 = vmatpush.msra.mxu0 0.0
    %3229 = vmatpush.msra.mxu0 0.0
    %3230 = vmatpush.msra.mxu0 0.0
    %3231 = vmatpush.msra.mxu0 0.0
    %3232 = vmatpush.msra.mxu0 0.0
    %3233 = vmatpush.msra.mxu0 0.0
    %3234 = vmatpush.msra.mxu0 0.0
    %3235 = vmatpush.msra.mxu0 0.0
    %3236 = vmatpush.msra.mxu0 0.0
    %3237 = vmatpush.msra.mxu0 0.0
    %3238 = vmatpush.msra.mxu0 0.0
    %3239 = vmatpush.msra.mxu0 0.0
    %3240 = vmatpush.msra.mxu0 %v2840
    %3241 = vmatmul.f32.gmra.mxu0 %v3223
    %v3242 = vpop.f32.mrf.mxu0
    %v3243 = vadd.f32 0.0, %v3242
    %3244 = vdwg.mxu0
    %v3245 = vadd.f32 %v3221, %v3243
    %v3246 = vtanh.pop %v3245
    %3247 = vst.msk [vmem:[#allocation2 + $0x1c] sm:$0x3] %vm172, %v3246
    %v3248 = vld [vmem:[#allocation3 + $0x1e] sm:$0x3]
    %v3250 = vsel %vm134, %v3246, 0
    %3252 = vmatpush.msra.mxu0 0.0
    %3253 = vmatpush.msra.mxu0 0.0
    %3254 = vmatpush.msra.mxu0 0.0
    %3255 = vmatpush.msra.mxu0 0.0
    %3256 = vmatpush.msra.mxu0 0.0
    %3257 = vmatpush.msra.mxu0 0.0
    %3258 = vmatpush.msra.mxu0 0.0
    %3259 = vmatpush.msra.mxu0 0.0
    %3260 = vmatpush.msra.mxu0 0.0
    %3261 = vmatpush.msra.mxu0 0.0
    %3262 = vmatpush.msra.mxu0 0.0
    %3263 = vmatpush.msra.mxu0 0.0
    %3264 = vmatpush.msra.mxu0 0.0
    %3265 = vmatpush.msra.mxu0 0.0
    %3266 = vmatpush.msra.mxu0 0.0
    %3267 = vmatpush.msra.mxu0 %v2840
    %3268 = vmatmul.f32.gmra.mxu0 %v3250
    %v3269 = vpop.f32.mrf.mxu0
    %v3270 = vadd.f32 0.0, %v3269
    %3271 = vdwg.mxu0
    %v3272 = vadd.f32 %v3248, %v3270
    %v3273 = vtanh.pop %v3272
    %3274 = vst.msk [vmem:[#allocation2 + $0x1e] sm:$0x3] %vm172, %v3273
    %v3275 = vld [vmem:[#allocation3 + $0x20] sm:$0x3]
    %v3277 = vsel %vm134, %v3273, 0
    %3279 = vmatpush.msra.mxu0 0.0
    %3280 = vmatpush.msra.mxu0 0.0
    %3281 = vmatpush.msra.mxu0 0.0
    %3282 = vmatpush.msra.mxu0 0.0
    %3283 = vmatpush.msra.mxu0 0.0
    %3284 = vmatpush.msra.mxu0 0.0
    %3285 = vmatpush.msra.mxu0 0.0
    %3286 = vmatpush.msra.mxu0 0.0
    %3287 = vmatpush.msra.mxu0 0.0
    %3288 = vmatpush.msra.mxu0 0.0
    %3289 = vmatpush.msra.mxu0 0.0
    %3290 = vmatpush.msra.mxu0 0.0
    %3291 = vmatpush.msra.mxu0 0.0
    %3292 = vmatpush.msra.mxu0 0.0
    %3293 = vmatpush.msra.mxu0 0.0
    %3294 = vmatpush.msra.mxu0 %v2840
    %3295 = vmatmul.f32.gmra.mxu0 %v3277
    %v3296 = vpop.f32.mrf.mxu0
    %v3297 = vadd.f32 0.0, %v3296
    %3298 = vdwg.mxu0
    %v3299 = vadd.f32 %v3275, %v3297
    %v3300 = vtanh.pop %v3299
    %3301 = vst.msk [vmem:[#allocation2 + $0x20] sm:$0x3] %vm172, %v3300
    %v3302 = vld [vmem:[#allocation3 + $0x22] sm:$0x3]
    %v3304 = vsel %vm134, %v3300, 0
    %3306 = vmatpush.msra.mxu0 0.0
    %3307 = vmatpush.msra.mxu0 0.0
    %3308 = vmatpush.msra.mxu0 0.0
    %3309 = vmatpush.msra.mxu0 0.0
    %3310 = vmatpush.msra.mxu0 0.0
    %3311 = vmatpush.msra.mxu0 0.0
    %3312 = vmatpush.msra.mxu0 0.0
    %3313 = vmatpush.msra.mxu0 0.0
    %3314 = vmatpush.msra.mxu0 0.0
    %3315 = vmatpush.msra.mxu0 0.0
    %3316 = vmatpush.msra.mxu0 0.0
    %3317 = vmatpush.msra.mxu0 0.0
    %3318 = vmatpush.msra.mxu0 0.0
    %3319 = vmatpush.msra.mxu0 0.0
    %3320 = vmatpush.msra.mxu0 0.0
    %3321 = vmatpush.msra.mxu0 %v2840
    %3322 = vmatmul.f32.gmra.mxu0 %v3304
    %v3323 = vpop.f32.mrf.mxu0
    %v3324 = vadd.f32 0.0, %v3323
    %3325 = vdwg.mxu0
    %v3326 = vadd.f32 %v3302, %v3324
    %v3327 = vtanh.pop %v3326
    %3328 = vst.msk [vmem:[#allocation2 + $0x22] sm:$0x3] %vm172, %v3327
    %v3329 = vld [vmem:[#allocation3 + $0x24] sm:$0x3]
    %v3331 = vsel %vm134, %v3327, 0
    %3333 = vmatpush.msra.mxu0 0.0
    %3334 = vmatpush.msra.mxu0 0.0
    %3335 = vmatpush.msra.mxu0 0.0
    %3336 = vmatpush.msra.mxu0 0.0
    %3337 = vmatpush.msra.mxu0 0.0
    %3338 = vmatpush.msra.mxu0 0.0
    %3339 = vmatpush.msra.mxu0 0.0
    %3340 = vmatpush.msra.mxu0 0.0
    %3341 = vmatpush.msra.mxu0 0.0
    %3342 = vmatpush.msra.mxu0 0.0
    %3343 = vmatpush.msra.mxu0 0.0
    %3344 = vmatpush.msra.mxu0 0.0
    %3345 = vmatpush.msra.mxu0 0.0
    %3346 = vmatpush.msra.mxu0 0.0
    %3347 = vmatpush.msra.mxu0 0.0
    %3348 = vmatpush.msra.mxu0 %v2840
    %3349 = vmatmul.f32.gmra.mxu0 %v3331
    %v3350 = vpop.f32.mrf.mxu0
    %v3351 = vadd.f32 0.0, %v3350
    %3352 = vdwg.mxu0
    %v3353 = vadd.f32 %v3329, %v3351
    %v3354 = vtanh.pop %v3353
    %3355 = vst.msk [vmem:[#allocation2 + $0x24] sm:$0x3] %vm172, %v3354
    %v3356 = vld [vmem:[#allocation3 + $0x26] sm:$0x3]
    %v3358 = vsel %vm134, %v3354, 0
    %3360 = vmatpush.msra.mxu0 0.0
    %3361 = vmatpush.msra.mxu0 0.0
    %3362 = vmatpush.msra.mxu0 0.0
    %3363 = vmatpush.msra.mxu0 0.0
    %3364 = vmatpush.msra.mxu0 0.0
    %3365 = vmatpush.msra.mxu0 0.0
    %3366 = vmatpush.msra.mxu0 0.0
    %3367 = vmatpush.msra.mxu0 0.0
    %3368 = vmatpush.msra.mxu0 0.0
    %3369 = vmatpush.msra.mxu0 0.0
    %3370 = vmatpush.msra.mxu0 0.0
    %3371 = vmatpush.msra.mxu0 0.0
    %3372 = vmatpush.msra.mxu0 0.0
    %3373 = vmatpush.msra.mxu0 0.0
    %3374 = vmatpush.msra.mxu0 0.0
    %3375 = vmatpush.msra.mxu0 %v2840
    %3376 = vmatmul.f32.gmra.mxu0 %v3358
    %v3377 = vpop.f32.mrf.mxu0
    %v3378 = vadd.f32 0.0, %v3377
    %3379 = vdwg.mxu0
    %v3380 = vadd.f32 %v3356, %v3378
    %v3381 = vtanh.pop %v3380
    %3382 = vst.msk [vmem:[#allocation2 + $0x26] sm:$0x3] %vm172, %v3381
    %v3383 = vld [vmem:[#allocation3 + $0x28] sm:$0x3]
    %v3385 = vsel %vm134, %v3381, 0
    %3387 = vmatpush.msra.mxu0 0.0
    %3388 = vmatpush.msra.mxu0 0.0
    %3389 = vmatpush.msra.mxu0 0.0
    %3390 = vmatpush.msra.mxu0 0.0
    %3391 = vmatpush.msra.mxu0 0.0
    %3392 = vmatpush.msra.mxu0 0.0
    %3393 = vmatpush.msra.mxu0 0.0
    %3394 = vmatpush.msra.mxu0 0.0
    %3395 = vmatpush.msra.mxu0 0.0
    %3396 = vmatpush.msra.mxu0 0.0
    %3397 = vmatpush.msra.mxu0 0.0
    %3398 = vmatpush.msra.mxu0 0.0
    %3399 = vmatpush.msra.mxu0 0.0
    %3400 = vmatpush.msra.mxu0 0.0
    %3401 = vmatpush.msra.mxu0 0.0
    %3402 = vmatpush.msra.mxu0 %v2840
    %3403 = vmatmul.f32.gmra.mxu0 %v3385
    %v3404 = vpop.f32.mrf.mxu0
    %v3405 = vadd.f32 0.0, %v3404
    %3406 = vdwg.mxu0
    %v3407 = vadd.f32 %v3383, %v3405
    %v3408 = vtanh.pop %v3407
    %3409 = vst.msk [vmem:[#allocation2 + $0x28] sm:$0x3] %vm172, %v3408
    %v3410 = vld [vmem:[#allocation3 + $0x2a] sm:$0x3]
    %v3412 = vsel %vm134, %v3408, 0
    %3414 = vmatpush.msra.mxu0 0.0
    %3415 = vmatpush.msra.mxu0 0.0
    %3416 = vmatpush.msra.mxu0 0.0
    %3417 = vmatpush.msra.mxu0 0.0
    %3418 = vmatpush.msra.mxu0 0.0
    %3419 = vmatpush.msra.mxu0 0.0
    %3420 = vmatpush.msra.mxu0 0.0
    %3421 = vmatpush.msra.mxu0 0.0
    %3422 = vmatpush.msra.mxu0 0.0
    %3423 = vmatpush.msra.mxu0 0.0
    %3424 = vmatpush.msra.mxu0 0.0
    %3425 = vmatpush.msra.mxu0 0.0
    %3426 = vmatpush.msra.mxu0 0.0
    %3427 = vmatpush.msra.mxu0 0.0
    %3428 = vmatpush.msra.mxu0 0.0
    %3429 = vmatpush.msra.mxu0 %v2840
    %3430 = vmatmul.f32.gmra.mxu0 %v3412
    %v3431 = vpop.f32.mrf.mxu0
    %v3432 = vadd.f32 0.0, %v3431
    %3433 = vdwg.mxu0
    %v3434 = vadd.f32 %v3410, %v3432
    %v3435 = vtanh.pop %v3434
    %3436 = vst.msk [vmem:[#allocation2 + $0x2a] sm:$0x3] %vm172, %v3435
    %v3437 = vld [vmem:[#allocation3 + $0x2c] sm:$0x3]
    %v3439 = vsel %vm134, %v3435, 0
    %3441 = vmatpush.msra.mxu0 0.0
    %3442 = vmatpush.msra.mxu0 0.0
    %3443 = vmatpush.msra.mxu0 0.0
    %3444 = vmatpush.msra.mxu0 0.0
    %3445 = vmatpush.msra.mxu0 0.0
    %3446 = vmatpush.msra.mxu0 0.0
    %3447 = vmatpush.msra.mxu0 0.0
    %3448 = vmatpush.msra.mxu0 0.0
    %3449 = vmatpush.msra.mxu0 0.0
    %3450 = vmatpush.msra.mxu0 0.0
    %3451 = vmatpush.msra.mxu0 0.0
    %3452 = vmatpush.msra.mxu0 0.0
    %3453 = vmatpush.msra.mxu0 0.0
    %3454 = vmatpush.msra.mxu0 0.0
    %3455 = vmatpush.msra.mxu0 0.0
    %3456 = vmatpush.msra.mxu0 %v2840
    %3457 = vmatmul.f32.gmra.mxu0 %v3439
    %v3458 = vpop.f32.mrf.mxu0
    %v3459 = vadd.f32 0.0, %v3458
    %3460 = vdwg.mxu0
    %v3461 = vadd.f32 %v3437, %v3459
    %v3462 = vtanh.pop %v3461
    %3463 = vst.msk [vmem:[#allocation2 + $0x2c] sm:$0x3] %vm172, %v3462
    %v3464 = vld [vmem:[#allocation3 + $0x2e] sm:$0x3]
    %v3466 = vsel %vm134, %v3462, 0
    %3468 = vmatpush.msra.mxu0 0.0
    %3469 = vmatpush.msra.mxu0 0.0
    %3470 = vmatpush.msra.mxu0 0.0
    %3471 = vmatpush.msra.mxu0 0.0
    %3472 = vmatpush.msra.mxu0 0.0
    %3473 = vmatpush.msra.mxu0 0.0
    %3474 = vmatpush.msra.mxu0 0.0
    %3475 = vmatpush.msra.mxu0 0.0
    %3476 = vmatpush.msra.mxu0 0.0
    %3477 = vmatpush.msra.mxu0 0.0
    %3478 = vmatpush.msra.mxu0 0.0
    %3479 = vmatpush.msra.mxu0 0.0
    %3480 = vmatpush.msra.mxu0 0.0
    %3481 = vmatpush.msra.mxu0 0.0
    %3482 = vmatpush.msra.mxu0 0.0
    %3483 = vmatpush.msra.mxu0 %v2840
    %3484 = vmatmul.f32.gmra.mxu0 %v3466
    %v3485 = vpop.f32.mrf.mxu0
    %v3486 = vadd.f32 0.0, %v3485
    %3487 = vdwg.mxu0
    %v3488 = vadd.f32 %v3464, %v3486
    %v3489 = vtanh.pop %v3488
    %3490 = vst.msk [vmem:[#allocation2 + $0x2e] sm:$0x3] %vm172, %v3489
    %v3491 = vld [vmem:[#allocation3 + $0x30] sm:$0x3]
    %v3493 = vsel %vm134, %v3489, 0
    %3495 = vmatpush.msra.mxu0 0.0
    %3496 = vmatpush.msra.mxu0 0.0
    %3497 = vmatpush.msra.mxu0 0.0
    %3498 = vmatpush.msra.mxu0 0.0
    %3499 = vmatpush.msra.mxu0 0.0
    %3500 = vmatpush.msra.mxu0 0.0
    %3501 = vmatpush.msra.mxu0 0.0
    %3502 = vmatpush.msra.mxu0 0.0
    %3503 = vmatpush.msra.mxu0 0.0
    %3504 = vmatpush.msra.mxu0 0.0
    %3505 = vmatpush.msra.mxu0 0.0
    %3506 = vmatpush.msra.mxu0 0.0
    %3507 = vmatpush.msra.mxu0 0.0
    %3508 = vmatpush.msra.mxu0 0.0
    %3509 = vmatpush.msra.mxu0 0.0
    %3510 = vmatpush.msra.mxu0 %v2840
    %3511 = vmatmul.f32.gmra.mxu0 %v3493
    %v3512 = vpop.f32.mrf.mxu0
    %v3513 = vadd.f32 0.0, %v3512
    %3514 = vdwg.mxu0
    %v3515 = vadd.f32 %v3491, %v3513
    %v3516 = vtanh.pop %v3515
    %3517 = vst.msk [vmem:[#allocation2 + $0x30] sm:$0x3] %vm172, %v3516
    %v3518 = vld [vmem:[#allocation3 + $0x32] sm:$0x3]
    %v3520 = vsel %vm134, %v3516, 0
    %3522 = vmatpush.msra.mxu0 0.0
    %3523 = vmatpush.msra.mxu0 0.0
    %3524 = vmatpush.msra.mxu0 0.0
    %3525 = vmatpush.msra.mxu0 0.0
    %3526 = vmatpush.msra.mxu0 0.0
    %3527 = vmatpush.msra.mxu0 0.0
    %3528 = vmatpush.msra.mxu0 0.0
    %3529 = vmatpush.msra.mxu0 0.0
    %3530 = vmatpush.msra.mxu0 0.0
    %3531 = vmatpush.msra.mxu0 0.0
    %3532 = vmatpush.msra.mxu0 0.0
    %3533 = vmatpush.msra.mxu0 0.0
    %3534 = vmatpush.msra.mxu0 0.0
    %3535 = vmatpush.msra.mxu0 0.0
    %3536 = vmatpush.msra.mxu0 0.0
    %3537 = vmatpush.msra.mxu0 %v2840
    %3538 = vmatmul.f32.gmra.mxu0 %v3520
    %v3539 = vpop.f32.mrf.mxu0
    %v3540 = vadd.f32 0.0, %v3539
    %3541 = vdwg.mxu0
    %v3542 = vadd.f32 %v3518, %v3540
    %v3543 = vtanh.pop %v3542
    %3544 = vst.msk [vmem:[#allocation2 + $0x32] sm:$0x3] %vm172, %v3543
    %v3545 = vld [vmem:[#allocation3 + $0x34] sm:$0x3]
    %v3547 = vsel %vm134, %v3543, 0
    %3549 = vmatpush.msra.mxu0 0.0
    %3550 = vmatpush.msra.mxu0 0.0
    %3551 = vmatpush.msra.mxu0 0.0
    %3552 = vmatpush.msra.mxu0 0.0
    %3553 = vmatpush.msra.mxu0 0.0
    %3554 = vmatpush.msra.mxu0 0.0
    %3555 = vmatpush.msra.mxu0 0.0
    %3556 = vmatpush.msra.mxu0 0.0
    %3557 = vmatpush.msra.mxu0 0.0
    %3558 = vmatpush.msra.mxu0 0.0
    %3559 = vmatpush.msra.mxu0 0.0
    %3560 = vmatpush.msra.mxu0 0.0
    %3561 = vmatpush.msra.mxu0 0.0
    %3562 = vmatpush.msra.mxu0 0.0
    %3563 = vmatpush.msra.mxu0 0.0
    %3564 = vmatpush.msra.mxu0 %v2840
    %3565 = vmatmul.f32.gmra.mxu0 %v3547
    %v3566 = vpop.f32.mrf.mxu0
    %v3567 = vadd.f32 0.0, %v3566
    %3568 = vdwg.mxu0
    %v3569 = vadd.f32 %v3545, %v3567
    %v3570 = vtanh.pop %v3569
    %3571 = vst.msk [vmem:[#allocation2 + $0x34] sm:$0x3] %vm172, %v3570
    %v3572 = vld [vmem:[#allocation3 + $0x36] sm:$0x3]
    %v3574 = vsel %vm134, %v3570, 0
    %3576 = vmatpush.msra.mxu0 0.0
    %3577 = vmatpush.msra.mxu0 0.0
    %3578 = vmatpush.msra.mxu0 0.0
    %3579 = vmatpush.msra.mxu0 0.0
    %3580 = vmatpush.msra.mxu0 0.0
    %3581 = vmatpush.msra.mxu0 0.0
    %3582 = vmatpush.msra.mxu0 0.0
    %3583 = vmatpush.msra.mxu0 0.0
    %3584 = vmatpush.msra.mxu0 0.0
    %3585 = vmatpush.msra.mxu0 0.0
    %3586 = vmatpush.msra.mxu0 0.0
    %3587 = vmatpush.msra.mxu0 0.0
    %3588 = vmatpush.msra.mxu0 0.0
    %3589 = vmatpush.msra.mxu0 0.0
    %3590 = vmatpush.msra.mxu0 0.0
    %3591 = vmatpush.msra.mxu0 %v2840
    %3592 = vmatmul.f32.gmra.mxu0 %v3574
    %v3593 = vpop.f32.mrf.mxu0
    %v3594 = vadd.f32 0.0, %v3593
    %3595 = vdwg.mxu0
    %v3596 = vadd.f32 %v3572, %v3594
    %v3597 = vtanh.pop %v3596
    %3598 = vst.msk [vmem:[#allocation2 + $0x36] sm:$0x3] %vm172, %v3597
    %v3599 = vld [vmem:[#allocation3 + $0x38] sm:$0x3]
    %v3601 = vsel %vm134, %v3597, 0
    %3603 = vmatpush.msra.mxu0 0.0
    %3604 = vmatpush.msra.mxu0 0.0
    %3605 = vmatpush.msra.mxu0 0.0
    %3606 = vmatpush.msra.mxu0 0.0
    %3607 = vmatpush.msra.mxu0 0.0
    %3608 = vmatpush.msra.mxu0 0.0
    %3609 = vmatpush.msra.mxu0 0.0
    %3610 = vmatpush.msra.mxu0 0.0
    %3611 = vmatpush.msra.mxu0 0.0
    %3612 = vmatpush.msra.mxu0 0.0
    %3613 = vmatpush.msra.mxu0 0.0
    %3614 = vmatpush.msra.mxu0 0.0
    %3615 = vmatpush.msra.mxu0 0.0
    %3616 = vmatpush.msra.mxu0 0.0
    %3617 = vmatpush.msra.mxu0 0.0
    %3618 = vmatpush.msra.mxu0 %v2840
    %3619 = vmatmul.f32.gmra.mxu0 %v3601
    %v3620 = vpop.f32.mrf.mxu0
    %v3621 = vadd.f32 0.0, %v3620
    %3622 = vdwg.mxu0
    %v3623 = vadd.f32 %v3599, %v3621
    %v3624 = vtanh.pop %v3623
    %3625 = vst.msk [vmem:[#allocation2 + $0x38] sm:$0x3] %vm172, %v3624
    %v3626 = vld [vmem:[#allocation3 + $0x3a] sm:$0x3]
    %v3628 = vsel %vm134, %v3624, 0
    %3630 = vmatpush.msra.mxu0 0.0
    %3631 = vmatpush.msra.mxu0 0.0
    %3632 = vmatpush.msra.mxu0 0.0
    %3633 = vmatpush.msra.mxu0 0.0
    %3634 = vmatpush.msra.mxu0 0.0
    %3635 = vmatpush.msra.mxu0 0.0
    %3636 = vmatpush.msra.mxu0 0.0
    %3637 = vmatpush.msra.mxu0 0.0
    %3638 = vmatpush.msra.mxu0 0.0
    %3639 = vmatpush.msra.mxu0 0.0
    %3640 = vmatpush.msra.mxu0 0.0
    %3641 = vmatpush.msra.mxu0 0.0
    %3642 = vmatpush.msra.mxu0 0.0
    %3643 = vmatpush.msra.mxu0 0.0
    %3644 = vmatpush.msra.mxu0 0.0
    %3645 = vmatpush.msra.mxu0 %v2840
    %3646 = vmatmul.f32.gmra.mxu0 %v3628
    %v3647 = vpop.f32.mrf.mxu0
    %v3648 = vadd.f32 0.0, %v3647
    %3649 = vdwg.mxu0
    %v3650 = vadd.f32 %v3626, %v3648
    %v3651 = vtanh.pop %v3650
    %3652 = vst.msk [vmem:[#allocation2 + $0x3a] sm:$0x3] %vm172, %v3651
    %v3653 = vld [vmem:[%s5 + $0x4] sm:$0x1]
    %v3654 = vld [vmem:[#allocation2] sm:$0xff]
    %v3655 = vld [vmem:[#allocation2 + $0x8] sm:$0xff]
    %v3656 = vld [vmem:[#allocation2 + $0x10] sm:$0xff]
    %v3657 = vld [vmem:[#allocation2 + $0x18] sm:$0xff]
    %v3658 = vld [vmem:[#allocation2 + $0x20] sm:$0xff]
    %v3659 = vld [vmem:[#allocation2 + $0x28] sm:$0xff]
    %v3660 = vld [vmem:[#allocation2 + $0x30] sm:$0xff]
    %v3661 = vld [vmem:[#allocation2 + $0x38] sm:$0xf]
    %s3662 = scalar_lea.vmem %s3, 24
    %v3663 = vld [vmem:[%s3662] sm:$0xff]
    %v3664 = vperm.slane %v3653, 0
    %v3666 = vsel %vm134, %v3654, 0
    %v3669 = vsel %vm134, %v3655, 0
    %v3672 = vsel %vm134, %v3656, 0
    %v3675 = vsel %vm134, %v3657, 0
    %v3678 = vsel %vm134, %v3658, 0
    %v3681 = vsel %vm134, %v3659, 0
    %v3684 = vsel %vm134, %v3660, 0
    %v3687 = vsel %vm134, %v3661, 0
    %3689 = vmatpush.msra.mxu0 0.0
    %3690 = vmatpush.msra.mxu0 0.0
    %3691 = vmatpush.msra.mxu0 0.0
    %3692 = vmatpush.msra.mxu0 0.0
    %3693 = vmatpush.msra.mxu0 0.0
    %3694 = vmatpush.msra.mxu0 0.0
    %3695 = vmatpush.msra.mxu0 0.0
    %3696 = vmatpush.msra.mxu0 0.0
    %3697 = vmatpush.msra.mxu0 0.0
    %3698 = vmatpush.msra.mxu0 0.0
    %3699 = vmatpush.msra.mxu0 0.0
    %3700 = vmatpush.msra.mxu0 0.0
    %3701 = vmatpush.msra.mxu0 0.0
    %3702 = vmatpush.msra.mxu0 0.0
    %3703 = vmatpush.msra.mxu0 0.0
    %3704 = vmatpush.msra.mxu0 %v3663
    %3705 = vmatmul.f32.gmra.mxu0 %v3666
    %v3706 = vpop.f32.mrf.mxu0
    %v3707 = vadd.f32 %v3664, %v3706
    %3708 = vmatmul.f32.gmra.mxu0 %v3669
    %v3709 = vpop.f32.mrf.mxu0
    %v3710 = vadd.f32 %v3664, %v3709
    %3711 = vmatmul.f32.gmra.mxu0 %v3672
    %v3712 = vpop.f32.mrf.mxu0
    %v3713 = vadd.f32 %v3664, %v3712
    %3714 = vmatmul.f32.gmra.mxu0 %v3675
    %v3715 = vpop.f32.mrf.mxu0
    %v3716 = vadd.f32 %v3664, %v3715
    %3717 = vmatmul.f32.gmra.mxu0 %v3678
    %v3718 = vpop.f32.mrf.mxu0
    %v3719 = vadd.f32 %v3664, %v3718
    %3720 = vmatmul.f32.gmra.mxu0 %v3681
    %v3721 = vpop.f32.mrf.mxu0
    %v3722 = vadd.f32 %v3664, %v3721
    %3723 = vmatmul.f32.gmra.mxu0 %v3684
    %v3724 = vpop.f32.mrf.mxu0
    %v3725 = vadd.f32 %v3664, %v3724
    %3726 = vmatmul.f32.gmra.mxu0 %v3687
    %v3727 = vpop.f32.mrf.mxu0
    %v3728 = vadd.f32 %v3664, %v3727
    %3729 = vdwg.mxu0
    %3730 = vst.msk [vmem:[#allocation3] sm:$0xff] %vm134, %v3707
    %3731 = vst.msk [vmem:[#allocation3 + $0x8] sm:$0xff] %vm134, %v3710
    %3732 = vst.msk [vmem:[#allocation3 + $0x10] sm:$0xff] %vm134, %v3713
    %3733 = vst.msk [vmem:[#allocation3 + $0x18] sm:$0xff] %vm134, %v3716
    %3734 = vst.msk [vmem:[#allocation3 + $0x20] sm:$0xff] %vm134, %v3719
    %3735 = vst.msk [vmem:[#allocation3 + $0x28] sm:$0xff] %vm134, %v3722
    %3736 = vst.msk [vmem:[#allocation3 + $0x30] sm:$0xff] %vm134, %v3725
    %3737 = vst.msk [vmem:[#allocation3 + $0x38] sm:$0xf] %vm142, %v3728
    %s3738 = scalar_lea.vmem %s4, 32
    %v3739 = vld [vmem:[%s3738] sm:$0xff]
    %s3740 = scalar_lea.vmem %s1, 8
    %v3741 = vld [vmem:[%s3740] sm:$0x3]
    %v3742 = vld [vmem:[#allocation3] sm:$0x3]
    %v3744 = vsel %vm134, %v3741, 0
    %3746 = vmatpush.msra.mxu0 0.0
    %3747 = vmatpush.msra.mxu0 0.0
    %3748 = vmatpush.msra.mxu0 0.0
    %3749 = vmatpush.msra.mxu0 0.0
    %3750 = vmatpush.msra.mxu0 0.0
    %3751 = vmatpush.msra.mxu0 0.0
    %3752 = vmatpush.msra.mxu0 0.0
    %3753 = vmatpush.msra.mxu0 0.0
    %3754 = vmatpush.msra.mxu0 0.0
    %3755 = vmatpush.msra.mxu0 0.0
    %3756 = vmatpush.msra.mxu0 0.0
    %3757 = vmatpush.msra.mxu0 0.0
    %3758 = vmatpush.msra.mxu0 0.0
    %3759 = vmatpush.msra.mxu0 0.0
    %3760 = vmatpush.msra.mxu0 0.0
    %3761 = vmatpush.msra.mxu0 %v3739
    %3762 = vmatmul.f32.gmra.mxu0 %v3744
    %v3763 = vpop.f32.mrf.mxu0
    %v3764 = vadd.f32 0.0, %v3763
    %3765 = vdwg.mxu0
    %v3766 = vadd.f32 %v3742, %v3764
    %v3767 = vtanh.pop %v3766
    %3768 = vst.msk [vmem:[#allocation4] sm:$0x3] %vm172, %v3767
    %v3769 = vld [vmem:[#allocation3 + $0x2] sm:$0x3]
    %v3771 = vsel %vm134, %v3767, 0
    %3773 = vmatpush.msra.mxu0 0.0
    %3774 = vmatpush.msra.mxu0 0.0
    %3775 = vmatpush.msra.mxu0 0.0
    %3776 = vmatpush.msra.mxu0 0.0
    %3777 = vmatpush.msra.mxu0 0.0
    %3778 = vmatpush.msra.mxu0 0.0
    %3779 = vmatpush.msra.mxu0 0.0
    %3780 = vmatpush.msra.mxu0 0.0
    %3781 = vmatpush.msra.mxu0 0.0
    %3782 = vmatpush.msra.mxu0 0.0
    %3783 = vmatpush.msra.mxu0 0.0
    %3784 = vmatpush.msra.mxu0 0.0
    %3785 = vmatpush.msra.mxu0 0.0
    %3786 = vmatpush.msra.mxu0 0.0
    %3787 = vmatpush.msra.mxu0 0.0
    %3788 = vmatpush.msra.mxu0 %v3739
    %3789 = vmatmul.f32.gmra.mxu0 %v3771
    %v3790 = vpop.f32.mrf.mxu0
    %v3791 = vadd.f32 0.0, %v3790
    %3792 = vdwg.mxu0
    %v3793 = vadd.f32 %v3769, %v3791
    %v3794 = vtanh.pop %v3793
    %3796 = vrot.lane.b32.xlu0 %v3794, 8
    %v3797 = vpop.permute.xlu0 %3796
    %vm3799 = vcmask 123968
    %3800 = vst.msk [vmem:[#allocation4] sm:$0x3] %vm3799, %v3797
    %v3801 = vld [vmem:[#allocation3 + $0x4] sm:$0x3]
    %v3802 = vsel %vm134, %v3794, 0
    %3804 = vmatpush.msra.mxu0 0.0
    %3805 = vmatpush.msra.mxu0 0.0
    %3806 = vmatpush.msra.mxu0 0.0
    %3807 = vmatpush.msra.mxu0 0.0
    %3808 = vmatpush.msra.mxu0 0.0
    %3809 = vmatpush.msra.mxu0 0.0
    %3810 = vmatpush.msra.mxu0 0.0
    %3811 = vmatpush.msra.mxu0 0.0
    %3812 = vmatpush.msra.mxu0 0.0
    %3813 = vmatpush.msra.mxu0 0.0
    %3814 = vmatpush.msra.mxu0 0.0
    %3815 = vmatpush.msra.mxu0 0.0
    %3816 = vmatpush.msra.mxu0 0.0
    %3817 = vmatpush.msra.mxu0 0.0
    %3818 = vmatpush.msra.mxu0 0.0
    %3819 = vmatpush.msra.mxu0 %v3739
    %3820 = vmatmul.f32.gmra.mxu0 %v3802
    %v3821 = vpop.f32.mrf.mxu0
    %v3822 = vadd.f32 0.0, %v3821
    %3823 = vdwg.mxu0
    %v3824 = vadd.f32 %v3801, %v3822
    %v3825 = vtanh.pop %v3824
    %3827 = vrot.lane.b32.xlu0 %v3825, 16
    %v3828 = vpop.permute.xlu0 %3827
    %vm3830 = vcmask 189568
    %3831 = vst.msk [vmem:[#allocation4] sm:$0x3] %vm3830, %v3828
    %v3832 = vld [vmem:[#allocation3 + $0x6] sm:$0x3]
    %v3833 = vsel %vm134, %v3825, 0
    %3835 = vmatpush.msra.mxu0 0.0
    %3836 = vmatpush.msra.mxu0 0.0
    %3837 = vmatpush.msra.mxu0 0.0
    %3838 = vmatpush.msra.mxu0 0.0
    %3839 = vmatpush.msra.mxu0 0.0
    %3840 = vmatpush.msra.mxu0 0.0
    %3841 = vmatpush.msra.mxu0 0.0
    %3842 = vmatpush.msra.mxu0 0.0
    %3843 = vmatpush.msra.mxu0 0.0
    %3844 = vmatpush.msra.mxu0 0.0
    %3845 = vmatpush.msra.mxu0 0.0
    %3846 = vmatpush.msra.mxu0 0.0
    %3847 = vmatpush.msra.mxu0 0.0
    %3848 = vmatpush.msra.mxu0 0.0
    %3849 = vmatpush.msra.mxu0 0.0
    %3850 = vmatpush.msra.mxu0 %v3739
    %3851 = vmatmul.f32.gmra.mxu0 %v3833
    %v3852 = vpop.f32.mrf.mxu0
    %v3853 = vadd.f32 0.0, %v3852
    %3854 = vdwg.mxu0
    %v3855 = vadd.f32 %v3832, %v3853
    %v3856 = vtanh.pop %v3855
    %3858 = vrot.lane.b32.xlu0 %v3856, 24
    %v3859 = vpop.permute.xlu0 %3858
    %vm3861 = vcmask 255168
    %3862 = vst.msk [vmem:[#allocation4] sm:$0x3] %vm3861, %v3859
    %v3863 = vld [vmem:[#allocation3 + $0x8] sm:$0x3]
    %v3864 = vsel %vm134, %v3856, 0
    %3866 = vmatpush.msra.mxu0 0.0
    %3867 = vmatpush.msra.mxu0 0.0
    %3868 = vmatpush.msra.mxu0 0.0
    %3869 = vmatpush.msra.mxu0 0.0
    %3870 = vmatpush.msra.mxu0 0.0
    %3871 = vmatpush.msra.mxu0 0.0
    %3872 = vmatpush.msra.mxu0 0.0
    %3873 = vmatpush.msra.mxu0 0.0
    %3874 = vmatpush.msra.mxu0 0.0
    %3875 = vmatpush.msra.mxu0 0.0
    %3876 = vmatpush.msra.mxu0 0.0
    %3877 = vmatpush.msra.mxu0 0.0
    %3878 = vmatpush.msra.mxu0 0.0
    %3879 = vmatpush.msra.mxu0 0.0
    %3880 = vmatpush.msra.mxu0 0.0
    %3881 = vmatpush.msra.mxu0 %v3739
    %3882 = vmatmul.f32.gmra.mxu0 %v3864
    %v3883 = vpop.f32.mrf.mxu0
    %v3884 = vadd.f32 0.0, %v3883
    %3885 = vdwg.mxu0
    %v3886 = vadd.f32 %v3863, %v3884
    %v3887 = vtanh.pop %v3886
    %3889 = vrot.lane.b32.xlu0 %v3887, 32
    %v3890 = vpop.permute.xlu0 %3889
    %vm3892 = vcmask 320768
    %3893 = vst.msk [vmem:[#allocation4] sm:$0x3] %vm3892, %v3890
    %v3894 = vld [vmem:[#allocation3 + $0xa] sm:$0x3]
    %v3895 = vsel %vm134, %v3887, 0
    %3897 = vmatpush.msra.mxu0 0.0
    %3898 = vmatpush.msra.mxu0 0.0
    %3899 = vmatpush.msra.mxu0 0.0
    %3900 = vmatpush.msra.mxu0 0.0
    %3901 = vmatpush.msra.mxu0 0.0
    %3902 = vmatpush.msra.mxu0 0.0
    %3903 = vmatpush.msra.mxu0 0.0
    %3904 = vmatpush.msra.mxu0 0.0
    %3905 = vmatpush.msra.mxu0 0.0
    %3906 = vmatpush.msra.mxu0 0.0
    %3907 = vmatpush.msra.mxu0 0.0
    %3908 = vmatpush.msra.mxu0 0.0
    %3909 = vmatpush.msra.mxu0 0.0
    %3910 = vmatpush.msra.mxu0 0.0
    %3911 = vmatpush.msra.mxu0 0.0
    %3912 = vmatpush.msra.mxu0 %v3739
    %3913 = vmatmul.f32.gmra.mxu0 %v3895
    %v3914 = vpop.f32.mrf.mxu0
    %v3915 = vadd.f32 0.0, %v3914
    %3916 = vdwg.mxu0
    %v3917 = vadd.f32 %v3894, %v3915
    %v3918 = vtanh.pop %v3917
    %3920 = vrot.lane.b32.xlu0 %v3918, 40
    %v3921 = vpop.permute.xlu0 %3920
    %vm3923 = vcmask 386368
    %3924 = vst.msk [vmem:[#allocation4] sm:$0x3] %vm3923, %v3921
    %v3925 = vld [vmem:[#allocation3 + $0xc] sm:$0x3]
    %v3926 = vsel %vm134, %v3918, 0
    %3928 = vmatpush.msra.mxu0 0.0
    %3929 = vmatpush.msra.mxu0 0.0
    %3930 = vmatpush.msra.mxu0 0.0
    %3931 = vmatpush.msra.mxu0 0.0
    %3932 = vmatpush.msra.mxu0 0.0
    %3933 = vmatpush.msra.mxu0 0.0
    %3934 = vmatpush.msra.mxu0 0.0
    %3935 = vmatpush.msra.mxu0 0.0
    %3936 = vmatpush.msra.mxu0 0.0
    %3937 = vmatpush.msra.mxu0 0.0
    %3938 = vmatpush.msra.mxu0 0.0
    %3939 = vmatpush.msra.mxu0 0.0
    %3940 = vmatpush.msra.mxu0 0.0
    %3941 = vmatpush.msra.mxu0 0.0
    %3942 = vmatpush.msra.mxu0 0.0
    %3943 = vmatpush.msra.mxu0 %v3739
    %3944 = vmatmul.f32.gmra.mxu0 %v3926
    %v3945 = vpop.f32.mrf.mxu0
    %v3946 = vadd.f32 0.0, %v3945
    %3947 = vdwg.mxu0
    %v3948 = vadd.f32 %v3925, %v3946
    %v3949 = vtanh.pop %v3948
    %3951 = vrot.lane.b32.xlu0 %v3949, 48
    %v3952 = vpop.permute.xlu0 %3951
    %vm3954 = vcmask 451968
    %3955 = vst.msk [vmem:[#allocation4] sm:$0x3] %vm3954, %v3952
    %v3956 = vld [vmem:[#allocation3 + $0xe] sm:$0x3]
    %v3957 = vsel %vm134, %v3949, 0
    %3959 = vmatpush.msra.mxu0 0.0
    %3960 = vmatpush.msra.mxu0 0.0
    %3961 = vmatpush.msra.mxu0 0.0
    %3962 = vmatpush.msra.mxu0 0.0
    %3963 = vmatpush.msra.mxu0 0.0
    %3964 = vmatpush.msra.mxu0 0.0
    %3965 = vmatpush.msra.mxu0 0.0
    %3966 = vmatpush.msra.mxu0 0.0
    %3967 = vmatpush.msra.mxu0 0.0
    %3968 = vmatpush.msra.mxu0 0.0
    %3969 = vmatpush.msra.mxu0 0.0
    %3970 = vmatpush.msra.mxu0 0.0
    %3971 = vmatpush.msra.mxu0 0.0
    %3972 = vmatpush.msra.mxu0 0.0
    %3973 = vmatpush.msra.mxu0 0.0
    %3974 = vmatpush.msra.mxu0 %v3739
    %3975 = vmatmul.f32.gmra.mxu0 %v3957
    %v3976 = vpop.f32.mrf.mxu0
    %v3977 = vadd.f32 0.0, %v3976
    %3978 = vdwg.mxu0
    %v3979 = vadd.f32 %v3956, %v3977
    %v3980 = vtanh.pop %v3979
    %3982 = vrot.lane.b32.xlu0 %v3980, 56
    %v3983 = vpop.permute.xlu0 %3982
    %vm3985 = vcmask 517568
    %3986 = vst.msk [vmem:[#allocation4] sm:$0x3] %vm3985, %v3983
    %v3987 = vld [vmem:[#allocation3 + $0x10] sm:$0x3]
    %v3988 = vsel %vm134, %v3980, 0
    %3990 = vmatpush.msra.mxu0 0.0
    %3991 = vmatpush.msra.mxu0 0.0
    %3992 = vmatpush.msra.mxu0 0.0
    %3993 = vmatpush.msra.mxu0 0.0
    %3994 = vmatpush.msra.mxu0 0.0
    %3995 = vmatpush.msra.mxu0 0.0
    %3996 = vmatpush.msra.mxu0 0.0
    %3997 = vmatpush.msra.mxu0 0.0
    %3998 = vmatpush.msra.mxu0 0.0
    %3999 = vmatpush.msra.mxu0 0.0
    %4000 = vmatpush.msra.mxu0 0.0
    %4001 = vmatpush.msra.mxu0 0.0
    %4002 = vmatpush.msra.mxu0 0.0
    %4003 = vmatpush.msra.mxu0 0.0
    %4004 = vmatpush.msra.mxu0 0.0
    %4005 = vmatpush.msra.mxu0 %v3739
    %4006 = vmatmul.f32.gmra.mxu0 %v3988
    %v4007 = vpop.f32.mrf.mxu0
    %v4008 = vadd.f32 0.0, %v4007
    %4009 = vdwg.mxu0
    %v4010 = vadd.f32 %v3987, %v4008
    %v4011 = vtanh.pop %v4010
    %4013 = vrot.lane.b32.xlu0 %v4011, 64
    %v4014 = vpop.permute.xlu0 %4013
    %vm4016 = vcmask 583168
    %4017 = vst.msk [vmem:[#allocation4] sm:$0x3] %vm4016, %v4014
    %v4018 = vld [vmem:[#allocation3 + $0x12] sm:$0x3]
    %v4019 = vsel %vm134, %v4011, 0
    %4021 = vmatpush.msra.mxu0 0.0
    %4022 = vmatpush.msra.mxu0 0.0
    %4023 = vmatpush.msra.mxu0 0.0
    %4024 = vmatpush.msra.mxu0 0.0
    %4025 = vmatpush.msra.mxu0 0.0
    %4026 = vmatpush.msra.mxu0 0.0
    %4027 = vmatpush.msra.mxu0 0.0
    %4028 = vmatpush.msra.mxu0 0.0
    %4029 = vmatpush.msra.mxu0 0.0
    %4030 = vmatpush.msra.mxu0 0.0
    %4031 = vmatpush.msra.mxu0 0.0
    %4032 = vmatpush.msra.mxu0 0.0
    %4033 = vmatpush.msra.mxu0 0.0
    %4034 = vmatpush.msra.mxu0 0.0
    %4035 = vmatpush.msra.mxu0 0.0
    %4036 = vmatpush.msra.mxu0 %v3739
    %4037 = vmatmul.f32.gmra.mxu0 %v4019
    %v4038 = vpop.f32.mrf.mxu0
    %v4039 = vadd.f32 0.0, %v4038
    %4040 = vdwg.mxu0
    %v4041 = vadd.f32 %v4018, %v4039
    %v4042 = vtanh.pop %v4041
    %4044 = vrot.lane.b32.xlu0 %v4042, 72
    %v4045 = vpop.permute.xlu0 %4044
    %vm4047 = vcmask 648768
    %4048 = vst.msk [vmem:[#allocation4] sm:$0x3] %vm4047, %v4045
    %v4049 = vld [vmem:[#allocation3 + $0x14] sm:$0x3]
    %v4050 = vsel %vm134, %v4042, 0
    %4052 = vmatpush.msra.mxu0 0.0
    %4053 = vmatpush.msra.mxu0 0.0
    %4054 = vmatpush.msra.mxu0 0.0
    %4055 = vmatpush.msra.mxu0 0.0
    %4056 = vmatpush.msra.mxu0 0.0
    %4057 = vmatpush.msra.mxu0 0.0
    %4058 = vmatpush.msra.mxu0 0.0
    %4059 = vmatpush.msra.mxu0 0.0
    %4060 = vmatpush.msra.mxu0 0.0
    %4061 = vmatpush.msra.mxu0 0.0
    %4062 = vmatpush.msra.mxu0 0.0
    %4063 = vmatpush.msra.mxu0 0.0
    %4064 = vmatpush.msra.mxu0 0.0
    %4065 = vmatpush.msra.mxu0 0.0
    %4066 = vmatpush.msra.mxu0 0.0
    %4067 = vmatpush.msra.mxu0 %v3739
    %4068 = vmatmul.f32.gmra.mxu0 %v4050
    %v4069 = vpop.f32.mrf.mxu0
    %v4070 = vadd.f32 0.0, %v4069
    %4071 = vdwg.mxu0
    %v4072 = vadd.f32 %v4049, %v4070
    %v4073 = vtanh.pop %v4072
    %4075 = vrot.lane.b32.xlu0 %v4073, 80
    %v4076 = vpop.permute.xlu0 %4075
    %vm4078 = vcmask 714368
    %4079 = vst.msk [vmem:[#allocation4] sm:$0x3] %vm4078, %v4076
    %v4080 = vld [vmem:[#allocation3 + $0x16] sm:$0x3]
    %v4081 = vsel %vm134, %v4073, 0
    %4083 = vmatpush.msra.mxu0 0.0
    %4084 = vmatpush.msra.mxu0 0.0
    %4085 = vmatpush.msra.mxu0 0.0
    %4086 = vmatpush.msra.mxu0 0.0
    %4087 = vmatpush.msra.mxu0 0.0
    %4088 = vmatpush.msra.mxu0 0.0
    %4089 = vmatpush.msra.mxu0 0.0
    %4090 = vmatpush.msra.mxu0 0.0
    %4091 = vmatpush.msra.mxu0 0.0
    %4092 = vmatpush.msra.mxu0 0.0
    %4093 = vmatpush.msra.mxu0 0.0
    %4094 = vmatpush.msra.mxu0 0.0
    %4095 = vmatpush.msra.mxu0 0.0
    %4096 = vmatpush.msra.mxu0 0.0
    %4097 = vmatpush.msra.mxu0 0.0
    %4098 = vmatpush.msra.mxu0 %v3739
    %4099 = vmatmul.f32.gmra.mxu0 %v4081
    %v4100 = vpop.f32.mrf.mxu0
    %v4101 = vadd.f32 0.0, %v4100
    %4102 = vdwg.mxu0
    %v4103 = vadd.f32 %v4080, %v4101
    %v4104 = vtanh.pop %v4103
    %4106 = vrot.lane.b32.xlu0 %v4104, 88
    %v4107 = vpop.permute.xlu0 %4106
    %vm4109 = vcmask 779968
    %4110 = vst.msk [vmem:[#allocation4] sm:$0x3] %vm4109, %v4107
    %v4111 = vld [vmem:[#allocation3 + $0x18] sm:$0x3]
    %v4112 = vsel %vm134, %v4104, 0
    %4114 = vmatpush.msra.mxu0 0.0
    %4115 = vmatpush.msra.mxu0 0.0
    %4116 = vmatpush.msra.mxu0 0.0
    %4117 = vmatpush.msra.mxu0 0.0
    %4118 = vmatpush.msra.mxu0 0.0
    %4119 = vmatpush.msra.mxu0 0.0
    %4120 = vmatpush.msra.mxu0 0.0
    %4121 = vmatpush.msra.mxu0 0.0
    %4122 = vmatpush.msra.mxu0 0.0
    %4123 = vmatpush.msra.mxu0 0.0
    %4124 = vmatpush.msra.mxu0 0.0
    %4125 = vmatpush.msra.mxu0 0.0
    %4126 = vmatpush.msra.mxu0 0.0
    %4127 = vmatpush.msra.mxu0 0.0
    %4128 = vmatpush.msra.mxu0 0.0
    %4129 = vmatpush.msra.mxu0 %v3739
    %4130 = vmatmul.f32.gmra.mxu0 %v4112
    %v4131 = vpop.f32.mrf.mxu0
    %v4132 = vadd.f32 0.0, %v4131
    %4133 = vdwg.mxu0
    %v4134 = vadd.f32 %v4111, %v4132
    %v4135 = vtanh.pop %v4134
    %4137 = vrot.lane.b32.xlu0 %v4135, 96
    %v4138 = vpop.permute.xlu0 %4137
    %vm4140 = vcmask 845568
    %4141 = vst.msk [vmem:[#allocation4] sm:$0x3] %vm4140, %v4138
    %v4142 = vld [vmem:[#allocation3 + $0x1a] sm:$0x3]
    %v4143 = vsel %vm134, %v4135, 0
    %4145 = vmatpush.msra.mxu0 0.0
    %4146 = vmatpush.msra.mxu0 0.0
    %4147 = vmatpush.msra.mxu0 0.0
    %4148 = vmatpush.msra.mxu0 0.0
    %4149 = vmatpush.msra.mxu0 0.0
    %4150 = vmatpush.msra.mxu0 0.0
    %4151 = vmatpush.msra.mxu0 0.0
    %4152 = vmatpush.msra.mxu0 0.0
    %4153 = vmatpush.msra.mxu0 0.0
    %4154 = vmatpush.msra.mxu0 0.0
    %4155 = vmatpush.msra.mxu0 0.0
    %4156 = vmatpush.msra.mxu0 0.0
    %4157 = vmatpush.msra.mxu0 0.0
    %4158 = vmatpush.msra.mxu0 0.0
    %4159 = vmatpush.msra.mxu0 0.0
    %4160 = vmatpush.msra.mxu0 %v3739
    %4161 = vmatmul.f32.gmra.mxu0 %v4143
    %v4162 = vpop.f32.mrf.mxu0
    %v4163 = vadd.f32 0.0, %v4162
    %4164 = vdwg.mxu0
    %v4165 = vadd.f32 %v4142, %v4163
    %v4166 = vtanh.pop %v4165
    %4168 = vrot.lane.b32.xlu0 %v4166, 104
    %v4169 = vpop.permute.xlu0 %4168
    %vm4171 = vcmask 911168
    %4172 = vst.msk [vmem:[#allocation4] sm:$0x3] %vm4171, %v4169
    %v4173 = vld [vmem:[#allocation3 + $0x1c] sm:$0x3]
    %v4174 = vsel %vm134, %v4166, 0
    %4176 = vmatpush.msra.mxu0 0.0
    %4177 = vmatpush.msra.mxu0 0.0
    %4178 = vmatpush.msra.mxu0 0.0
    %4179 = vmatpush.msra.mxu0 0.0
    %4180 = vmatpush.msra.mxu0 0.0
    %4181 = vmatpush.msra.mxu0 0.0
    %4182 = vmatpush.msra.mxu0 0.0
    %4183 = vmatpush.msra.mxu0 0.0
    %4184 = vmatpush.msra.mxu0 0.0
    %4185 = vmatpush.msra.mxu0 0.0
    %4186 = vmatpush.msra.mxu0 0.0
    %4187 = vmatpush.msra.mxu0 0.0
    %4188 = vmatpush.msra.mxu0 0.0
    %4189 = vmatpush.msra.mxu0 0.0
    %4190 = vmatpush.msra.mxu0 0.0
    %4191 = vmatpush.msra.mxu0 %v3739
    %4192 = vmatmul.f32.gmra.mxu0 %v4174
    %v4193 = vpop.f32.mrf.mxu0
    %v4194 = vadd.f32 0.0, %v4193
    %4195 = vdwg.mxu0
    %v4196 = vadd.f32 %v4173, %v4194
    %v4197 = vtanh.pop %v4196
    %4199 = vrot.lane.b32.xlu0 %v4197, 112
    %v4200 = vpop.permute.xlu0 %4199
    %vm4202 = vcmask 976768
    %4203 = vst.msk [vmem:[#allocation4] sm:$0x3] %vm4202, %v4200
    %v4204 = vld [vmem:[#allocation3 + $0x1e] sm:$0x3]
    %v4205 = vsel %vm134, %v4197, 0
    %4207 = vmatpush.msra.mxu0 0.0
    %4208 = vmatpush.msra.mxu0 0.0
    %4209 = vmatpush.msra.mxu0 0.0
    %4210 = vmatpush.msra.mxu0 0.0
    %4211 = vmatpush.msra.mxu0 0.0
    %4212 = vmatpush.msra.mxu0 0.0
    %4213 = vmatpush.msra.mxu0 0.0
    %4214 = vmatpush.msra.mxu0 0.0
    %4215 = vmatpush.msra.mxu0 0.0
    %4216 = vmatpush.msra.mxu0 0.0
    %4217 = vmatpush.msra.mxu0 0.0
    %4218 = vmatpush.msra.mxu0 0.0
    %4219 = vmatpush.msra.mxu0 0.0
    %4220 = vmatpush.msra.mxu0 0.0
    %4221 = vmatpush.msra.mxu0 0.0
    %4222 = vmatpush.msra.mxu0 %v3739
    %4223 = vmatmul.f32.gmra.mxu0 %v4205
    %v4224 = vpop.f32.mrf.mxu0
    %v4225 = vadd.f32 0.0, %v4224
    %4226 = vdwg.mxu0
    %v4227 = vadd.f32 %v4204, %v4225
    %v4228 = vtanh.pop %v4227
    %4230 = vrot.lane.b32.xlu0 %v4228, 120
    %v4231 = vpop.permute.xlu0 %4230
    %vm4233 = vcmask 1042368
    %4234 = vst.msk [vmem:[#allocation4] sm:$0x3] %vm4233, %v4231
    %v4235 = vld [vmem:[#allocation3 + $0x20] sm:$0x3]
    %v4236 = vsel %vm134, %v4228, 0
    %4238 = vmatpush.msra.mxu0 0.0
    %4239 = vmatpush.msra.mxu0 0.0
    %4240 = vmatpush.msra.mxu0 0.0
    %4241 = vmatpush.msra.mxu0 0.0
    %4242 = vmatpush.msra.mxu0 0.0
    %4243 = vmatpush.msra.mxu0 0.0
    %4244 = vmatpush.msra.mxu0 0.0
    %4245 = vmatpush.msra.mxu0 0.0
    %4246 = vmatpush.msra.mxu0 0.0
    %4247 = vmatpush.msra.mxu0 0.0
    %4248 = vmatpush.msra.mxu0 0.0
    %4249 = vmatpush.msra.mxu0 0.0
    %4250 = vmatpush.msra.mxu0 0.0
    %4251 = vmatpush.msra.mxu0 0.0
    %4252 = vmatpush.msra.mxu0 0.0
    %4253 = vmatpush.msra.mxu0 %v3739
    %4254 = vmatmul.f32.gmra.mxu0 %v4236
    %v4255 = vpop.f32.mrf.mxu0
    %v4256 = vadd.f32 0.0, %v4255
    %4257 = vdwg.mxu0
    %v4258 = vadd.f32 %v4235, %v4256
    %v4259 = vtanh.pop %v4258
    %4260 = vst.msk [vmem:[#allocation4 + $0x2] sm:$0x3] %vm172, %v4259
    %v4261 = vld [vmem:[#allocation3 + $0x22] sm:$0x3]
    %v4263 = vsel %vm134, %v4259, 0
    %4265 = vmatpush.msra.mxu0 0.0
    %4266 = vmatpush.msra.mxu0 0.0
    %4267 = vmatpush.msra.mxu0 0.0
    %4268 = vmatpush.msra.mxu0 0.0
    %4269 = vmatpush.msra.mxu0 0.0
    %4270 = vmatpush.msra.mxu0 0.0
    %4271 = vmatpush.msra.mxu0 0.0
    %4272 = vmatpush.msra.mxu0 0.0
    %4273 = vmatpush.msra.mxu0 0.0
    %4274 = vmatpush.msra.mxu0 0.0
    %4275 = vmatpush.msra.mxu0 0.0
    %4276 = vmatpush.msra.mxu0 0.0
    %4277 = vmatpush.msra.mxu0 0.0
    %4278 = vmatpush.msra.mxu0 0.0
    %4279 = vmatpush.msra.mxu0 0.0
    %4280 = vmatpush.msra.mxu0 %v3739
    %4281 = vmatmul.f32.gmra.mxu0 %v4263
    %v4282 = vpop.f32.mrf.mxu0
    %v4283 = vadd.f32 0.0, %v4282
    %4284 = vdwg.mxu0
    %v4285 = vadd.f32 %v4261, %v4283
    %v4286 = vtanh.pop %v4285
    %4288 = vrot.lane.b32.xlu0 %v4286, 8
    %v4289 = vpop.permute.xlu0 %4288
    %4291 = vst.msk [vmem:[#allocation4 + $0x2] sm:$0x3] %vm3799, %v4289
    %v4292 = vld [vmem:[#allocation3 + $0x24] sm:$0x3]
    %v4293 = vsel %vm134, %v4286, 0
    %4295 = vmatpush.msra.mxu0 0.0
    %4296 = vmatpush.msra.mxu0 0.0
    %4297 = vmatpush.msra.mxu0 0.0
    %4298 = vmatpush.msra.mxu0 0.0
    %4299 = vmatpush.msra.mxu0 0.0
    %4300 = vmatpush.msra.mxu0 0.0
    %4301 = vmatpush.msra.mxu0 0.0
    %4302 = vmatpush.msra.mxu0 0.0
    %4303 = vmatpush.msra.mxu0 0.0
    %4304 = vmatpush.msra.mxu0 0.0
    %4305 = vmatpush.msra.mxu0 0.0
    %4306 = vmatpush.msra.mxu0 0.0
    %4307 = vmatpush.msra.mxu0 0.0
    %4308 = vmatpush.msra.mxu0 0.0
    %4309 = vmatpush.msra.mxu0 0.0
    %4310 = vmatpush.msra.mxu0 %v3739
    %4311 = vmatmul.f32.gmra.mxu0 %v4293
    %v4312 = vpop.f32.mrf.mxu0
    %v4313 = vadd.f32 0.0, %v4312
    %4314 = vdwg.mxu0
    %v4315 = vadd.f32 %v4292, %v4313
    %v4316 = vtanh.pop %v4315
    %4318 = vrot.lane.b32.xlu0 %v4316, 16
    %v4319 = vpop.permute.xlu0 %4318
    %4321 = vst.msk [vmem:[#allocation4 + $0x2] sm:$0x3] %vm3830, %v4319
    %v4322 = vld [vmem:[#allocation3 + $0x26] sm:$0x3]
    %v4323 = vsel %vm134, %v4316, 0
    %4325 = vmatpush.msra.mxu0 0.0
    %4326 = vmatpush.msra.mxu0 0.0
    %4327 = vmatpush.msra.mxu0 0.0
    %4328 = vmatpush.msra.mxu0 0.0
    %4329 = vmatpush.msra.mxu0 0.0
    %4330 = vmatpush.msra.mxu0 0.0
    %4331 = vmatpush.msra.mxu0 0.0
    %4332 = vmatpush.msra.mxu0 0.0
    %4333 = vmatpush.msra.mxu0 0.0
    %4334 = vmatpush.msra.mxu0 0.0
    %4335 = vmatpush.msra.mxu0 0.0
    %4336 = vmatpush.msra.mxu0 0.0
    %4337 = vmatpush.msra.mxu0 0.0
    %4338 = vmatpush.msra.mxu0 0.0
    %4339 = vmatpush.msra.mxu0 0.0
    %4340 = vmatpush.msra.mxu0 %v3739
    %4341 = vmatmul.f32.gmra.mxu0 %v4323
    %v4342 = vpop.f32.mrf.mxu0
    %v4343 = vadd.f32 0.0, %v4342
    %4344 = vdwg.mxu0
    %v4345 = vadd.f32 %v4322, %v4343
    %v4346 = vtanh.pop %v4345
    %4348 = vrot.lane.b32.xlu0 %v4346, 24
    %v4349 = vpop.permute.xlu0 %4348
    %4351 = vst.msk [vmem:[#allocation4 + $0x2] sm:$0x3] %vm3861, %v4349
    %v4352 = vld [vmem:[#allocation3 + $0x28] sm:$0x3]
    %v4353 = vsel %vm134, %v4346, 0
    %4355 = vmatpush.msra.mxu0 0.0
    %4356 = vmatpush.msra.mxu0 0.0
    %4357 = vmatpush.msra.mxu0 0.0
    %4358 = vmatpush.msra.mxu0 0.0
    %4359 = vmatpush.msra.mxu0 0.0
    %4360 = vmatpush.msra.mxu0 0.0
    %4361 = vmatpush.msra.mxu0 0.0
    %4362 = vmatpush.msra.mxu0 0.0
    %4363 = vmatpush.msra.mxu0 0.0
    %4364 = vmatpush.msra.mxu0 0.0
    %4365 = vmatpush.msra.mxu0 0.0
    %4366 = vmatpush.msra.mxu0 0.0
    %4367 = vmatpush.msra.mxu0 0.0
    %4368 = vmatpush.msra.mxu0 0.0
    %4369 = vmatpush.msra.mxu0 0.0
    %4370 = vmatpush.msra.mxu0 %v3739
    %4371 = vmatmul.f32.gmra.mxu0 %v4353
    %v4372 = vpop.f32.mrf.mxu0
    %v4373 = vadd.f32 0.0, %v4372
    %4374 = vdwg.mxu0
    %v4375 = vadd.f32 %v4352, %v4373
    %v4376 = vtanh.pop %v4375
    %4378 = vrot.lane.b32.xlu0 %v4376, 32
    %v4379 = vpop.permute.xlu0 %4378
    %4381 = vst.msk [vmem:[#allocation4 + $0x2] sm:$0x3] %vm3892, %v4379
    %v4382 = vld [vmem:[#allocation3 + $0x2a] sm:$0x3]
    %v4383 = vsel %vm134, %v4376, 0
    %4385 = vmatpush.msra.mxu0 0.0
    %4386 = vmatpush.msra.mxu0 0.0
    %4387 = vmatpush.msra.mxu0 0.0
    %4388 = vmatpush.msra.mxu0 0.0
    %4389 = vmatpush.msra.mxu0 0.0
    %4390 = vmatpush.msra.mxu0 0.0
    %4391 = vmatpush.msra.mxu0 0.0
    %4392 = vmatpush.msra.mxu0 0.0
    %4393 = vmatpush.msra.mxu0 0.0
    %4394 = vmatpush.msra.mxu0 0.0
    %4395 = vmatpush.msra.mxu0 0.0
    %4396 = vmatpush.msra.mxu0 0.0
    %4397 = vmatpush.msra.mxu0 0.0
    %4398 = vmatpush.msra.mxu0 0.0
    %4399 = vmatpush.msra.mxu0 0.0
    %4400 = vmatpush.msra.mxu0 %v3739
    %4401 = vmatmul.f32.gmra.mxu0 %v4383
    %v4402 = vpop.f32.mrf.mxu0
    %v4403 = vadd.f32 0.0, %v4402
    %4404 = vdwg.mxu0
    %v4405 = vadd.f32 %v4382, %v4403
    %v4406 = vtanh.pop %v4405
    %4408 = vrot.lane.b32.xlu0 %v4406, 40
    %v4409 = vpop.permute.xlu0 %4408
    %4411 = vst.msk [vmem:[#allocation4 + $0x2] sm:$0x3] %vm3923, %v4409
    %v4412 = vld [vmem:[#allocation3 + $0x2c] sm:$0x3]
    %v4413 = vsel %vm134, %v4406, 0
    %4415 = vmatpush.msra.mxu0 0.0
    %4416 = vmatpush.msra.mxu0 0.0
    %4417 = vmatpush.msra.mxu0 0.0
    %4418 = vmatpush.msra.mxu0 0.0
    %4419 = vmatpush.msra.mxu0 0.0
    %4420 = vmatpush.msra.mxu0 0.0
    %4421 = vmatpush.msra.mxu0 0.0
    %4422 = vmatpush.msra.mxu0 0.0
    %4423 = vmatpush.msra.mxu0 0.0
    %4424 = vmatpush.msra.mxu0 0.0
    %4425 = vmatpush.msra.mxu0 0.0
    %4426 = vmatpush.msra.mxu0 0.0
    %4427 = vmatpush.msra.mxu0 0.0
    %4428 = vmatpush.msra.mxu0 0.0
    %4429 = vmatpush.msra.mxu0 0.0
    %4430 = vmatpush.msra.mxu0 %v3739
    %4431 = vmatmul.f32.gmra.mxu0 %v4413
    %v4432 = vpop.f32.mrf.mxu0
    %v4433 = vadd.f32 0.0, %v4432
    %4434 = vdwg.mxu0
    %v4435 = vadd.f32 %v4412, %v4433
    %v4436 = vtanh.pop %v4435
    %4438 = vrot.lane.b32.xlu0 %v4436, 48
    %v4439 = vpop.permute.xlu0 %4438
    %4441 = vst.msk [vmem:[#allocation4 + $0x2] sm:$0x3] %vm3954, %v4439
    %v4442 = vld [vmem:[#allocation3 + $0x2e] sm:$0x3]
    %v4443 = vsel %vm134, %v4436, 0
    %4445 = vmatpush.msra.mxu0 0.0
    %4446 = vmatpush.msra.mxu0 0.0
    %4447 = vmatpush.msra.mxu0 0.0
    %4448 = vmatpush.msra.mxu0 0.0
    %4449 = vmatpush.msra.mxu0 0.0
    %4450 = vmatpush.msra.mxu0 0.0
    %4451 = vmatpush.msra.mxu0 0.0
    %4452 = vmatpush.msra.mxu0 0.0
    %4453 = vmatpush.msra.mxu0 0.0
    %4454 = vmatpush.msra.mxu0 0.0
    %4455 = vmatpush.msra.mxu0 0.0
    %4456 = vmatpush.msra.mxu0 0.0
    %4457 = vmatpush.msra.mxu0 0.0
    %4458 = vmatpush.msra.mxu0 0.0
    %4459 = vmatpush.msra.mxu0 0.0
    %4460 = vmatpush.msra.mxu0 %v3739
    %4461 = vmatmul.f32.gmra.mxu0 %v4443
    %v4462 = vpop.f32.mrf.mxu0
    %v4463 = vadd.f32 0.0, %v4462
    %4464 = vdwg.mxu0
    %v4465 = vadd.f32 %v4442, %v4463
    %v4466 = vtanh.pop %v4465
    %4468 = vrot.lane.b32.xlu0 %v4466, 56
    %v4469 = vpop.permute.xlu0 %4468
    %4471 = vst.msk [vmem:[#allocation4 + $0x2] sm:$0x3] %vm3985, %v4469
    %v4472 = vld [vmem:[#allocation3 + $0x30] sm:$0x3]
    %v4473 = vsel %vm134, %v4466, 0
    %4475 = vmatpush.msra.mxu0 0.0
    %4476 = vmatpush.msra.mxu0 0.0
    %4477 = vmatpush.msra.mxu0 0.0
    %4478 = vmatpush.msra.mxu0 0.0
    %4479 = vmatpush.msra.mxu0 0.0
    %4480 = vmatpush.msra.mxu0 0.0
    %4481 = vmatpush.msra.mxu0 0.0
    %4482 = vmatpush.msra.mxu0 0.0
    %4483 = vmatpush.msra.mxu0 0.0
    %4484 = vmatpush.msra.mxu0 0.0
    %4485 = vmatpush.msra.mxu0 0.0
    %4486 = vmatpush.msra.mxu0 0.0
    %4487 = vmatpush.msra.mxu0 0.0
    %4488 = vmatpush.msra.mxu0 0.0
    %4489 = vmatpush.msra.mxu0 0.0
    %4490 = vmatpush.msra.mxu0 %v3739
    %4491 = vmatmul.f32.gmra.mxu0 %v4473
    %v4492 = vpop.f32.mrf.mxu0
    %v4493 = vadd.f32 0.0, %v4492
    %4494 = vdwg.mxu0
    %v4495 = vadd.f32 %v4472, %v4493
    %v4496 = vtanh.pop %v4495
    %4498 = vrot.lane.b32.xlu0 %v4496, 64
    %v4499 = vpop.permute.xlu0 %4498
    %4501 = vst.msk [vmem:[#allocation4 + $0x2] sm:$0x3] %vm4016, %v4499
    %v4502 = vld [vmem:[#allocation3 + $0x32] sm:$0x3]
    %v4503 = vsel %vm134, %v4496, 0
    %4505 = vmatpush.msra.mxu0 0.0
    %4506 = vmatpush.msra.mxu0 0.0
    %4507 = vmatpush.msra.mxu0 0.0
    %4508 = vmatpush.msra.mxu0 0.0
    %4509 = vmatpush.msra.mxu0 0.0
    %4510 = vmatpush.msra.mxu0 0.0
    %4511 = vmatpush.msra.mxu0 0.0
    %4512 = vmatpush.msra.mxu0 0.0
    %4513 = vmatpush.msra.mxu0 0.0
    %4514 = vmatpush.msra.mxu0 0.0
    %4515 = vmatpush.msra.mxu0 0.0
    %4516 = vmatpush.msra.mxu0 0.0
    %4517 = vmatpush.msra.mxu0 0.0
    %4518 = vmatpush.msra.mxu0 0.0
    %4519 = vmatpush.msra.mxu0 0.0
    %4520 = vmatpush.msra.mxu0 %v3739
    %4521 = vmatmul.f32.gmra.mxu0 %v4503
    %v4522 = vpop.f32.mrf.mxu0
    %v4523 = vadd.f32 0.0, %v4522
    %4524 = vdwg.mxu0
    %v4525 = vadd.f32 %v4502, %v4523
    %v4526 = vtanh.pop %v4525
    %4528 = vrot.lane.b32.xlu0 %v4526, 72
    %v4529 = vpop.permute.xlu0 %4528
    %4531 = vst.msk [vmem:[#allocation4 + $0x2] sm:$0x3] %vm4047, %v4529
    %v4532 = vld [vmem:[#allocation3 + $0x34] sm:$0x3]
    %v4533 = vsel %vm134, %v4526, 0
    %4535 = vmatpush.msra.mxu0 0.0
    %4536 = vmatpush.msra.mxu0 0.0
    %4537 = vmatpush.msra.mxu0 0.0
    %4538 = vmatpush.msra.mxu0 0.0
    %4539 = vmatpush.msra.mxu0 0.0
    %4540 = vmatpush.msra.mxu0 0.0
    %4541 = vmatpush.msra.mxu0 0.0
    %4542 = vmatpush.msra.mxu0 0.0
    %4543 = vmatpush.msra.mxu0 0.0
    %4544 = vmatpush.msra.mxu0 0.0
    %4545 = vmatpush.msra.mxu0 0.0
    %4546 = vmatpush.msra.mxu0 0.0
    %4547 = vmatpush.msra.mxu0 0.0
    %4548 = vmatpush.msra.mxu0 0.0
    %4549 = vmatpush.msra.mxu0 0.0
    %4550 = vmatpush.msra.mxu0 %v3739
    %4551 = vmatmul.f32.gmra.mxu0 %v4533
    %v4552 = vpop.f32.mrf.mxu0
    %v4553 = vadd.f32 0.0, %v4552
    %4554 = vdwg.mxu0
    %v4555 = vadd.f32 %v4532, %v4553
    %v4556 = vtanh.pop %v4555
    %4558 = vrot.lane.b32.xlu0 %v4556, 80
    %v4559 = vpop.permute.xlu0 %4558
    %4561 = vst.msk [vmem:[#allocation4 + $0x2] sm:$0x3] %vm4078, %v4559
    %v4562 = vld [vmem:[#allocation3 + $0x36] sm:$0x3]
    %v4563 = vsel %vm134, %v4556, 0
    %4565 = vmatpush.msra.mxu0 0.0
    %4566 = vmatpush.msra.mxu0 0.0
    %4567 = vmatpush.msra.mxu0 0.0
    %4568 = vmatpush.msra.mxu0 0.0
    %4569 = vmatpush.msra.mxu0 0.0
    %4570 = vmatpush.msra.mxu0 0.0
    %4571 = vmatpush.msra.mxu0 0.0
    %4572 = vmatpush.msra.mxu0 0.0
    %4573 = vmatpush.msra.mxu0 0.0
    %4574 = vmatpush.msra.mxu0 0.0
    %4575 = vmatpush.msra.mxu0 0.0
    %4576 = vmatpush.msra.mxu0 0.0
    %4577 = vmatpush.msra.mxu0 0.0
    %4578 = vmatpush.msra.mxu0 0.0
    %4579 = vmatpush.msra.mxu0 0.0
    %4580 = vmatpush.msra.mxu0 %v3739
    %4581 = vmatmul.f32.gmra.mxu0 %v4563
    %v4582 = vpop.f32.mrf.mxu0
    %v4583 = vadd.f32 0.0, %v4582
    %4584 = vdwg.mxu0
    %v4585 = vadd.f32 %v4562, %v4583
    %v4586 = vtanh.pop %v4585
    %4588 = vrot.lane.b32.xlu0 %v4586, 88
    %v4589 = vpop.permute.xlu0 %4588
    %4591 = vst.msk [vmem:[#allocation4 + $0x2] sm:$0x3] %vm4109, %v4589
    %v4592 = vld [vmem:[#allocation3 + $0x38] sm:$0x3]
    %v4593 = vsel %vm134, %v4586, 0
    %4595 = vmatpush.msra.mxu0 0.0
    %4596 = vmatpush.msra.mxu0 0.0
    %4597 = vmatpush.msra.mxu0 0.0
    %4598 = vmatpush.msra.mxu0 0.0
    %4599 = vmatpush.msra.mxu0 0.0
    %4600 = vmatpush.msra.mxu0 0.0
    %4601 = vmatpush.msra.mxu0 0.0
    %4602 = vmatpush.msra.mxu0 0.0
    %4603 = vmatpush.msra.mxu0 0.0
    %4604 = vmatpush.msra.mxu0 0.0
    %4605 = vmatpush.msra.mxu0 0.0
    %4606 = vmatpush.msra.mxu0 0.0
    %4607 = vmatpush.msra.mxu0 0.0
    %4608 = vmatpush.msra.mxu0 0.0
    %4609 = vmatpush.msra.mxu0 0.0
    %4610 = vmatpush.msra.mxu0 %v3739
    %4611 = vmatmul.f32.gmra.mxu0 %v4593
    %v4612 = vpop.f32.mrf.mxu0
    %v4613 = vadd.f32 0.0, %v4612
    %4614 = vdwg.mxu0
    %v4615 = vadd.f32 %v4592, %v4613
    %v4616 = vtanh.pop %v4615
    %4618 = vrot.lane.b32.xlu0 %v4616, 96
    %v4619 = vpop.permute.xlu0 %4618
    %4621 = vst.msk [vmem:[#allocation4 + $0x2] sm:$0x3] %vm4140, %v4619
    %v4622 = vld [vmem:[#allocation3 + $0x3a] sm:$0x3]
    %v4623 = vsel %vm134, %v4616, 0
    %4625 = vmatpush.msra.mxu0 0.0
    %4626 = vmatpush.msra.mxu0 0.0
    %4627 = vmatpush.msra.mxu0 0.0
    %4628 = vmatpush.msra.mxu0 0.0
    %4629 = vmatpush.msra.mxu0 0.0
    %4630 = vmatpush.msra.mxu0 0.0
    %4631 = vmatpush.msra.mxu0 0.0
    %4632 = vmatpush.msra.mxu0 0.0
    %4633 = vmatpush.msra.mxu0 0.0
    %4634 = vmatpush.msra.mxu0 0.0
    %4635 = vmatpush.msra.mxu0 0.0
    %4636 = vmatpush.msra.mxu0 0.0
    %4637 = vmatpush.msra.mxu0 0.0
    %4638 = vmatpush.msra.mxu0 0.0
    %4639 = vmatpush.msra.mxu0 0.0
    %4640 = vmatpush.msra.mxu0 %v3739
    %4641 = vmatmul.f32.gmra.mxu0 %v4623
    %v4642 = vpop.f32.mrf.mxu0
    %v4643 = vadd.f32 0.0, %v4642
    %4644 = vdwg.mxu0
    %v4645 = vadd.f32 %v4622, %v4643
    %v4646 = vtanh.pop %v4645
    %4648 = vrot.lane.b32.xlu0 %v4646, 104
    %v4649 = vpop.permute.xlu0 %4648
    %4651 = vst.msk [vmem:[#allocation4 + $0x2] sm:$0x3] %vm4171, %v4649
    %v4652 = vld [vmem:[#allocation4] sm:$0xf]
    %v4653 = vld [vmem:[#allocation6] sm:$0xff]
    %v4654 = vld [vmem:[#allocation6 + $0x8] sm:$0xff]
    %v4655 = vld [vmem:[#allocation6 + $0x10] sm:$0xff]
    %v4656 = vld [vmem:[#allocation6 + $0x18] sm:$0xff]
    %v4657 = vld [vmem:[#allocation6 + $0x20] sm:$0xff]
    %v4658 = vld [vmem:[#allocation6 + $0x28] sm:$0xff]
    %v4659 = vld [vmem:[#allocation6 + $0x30] sm:$0xff]
    %v4660 = vld [vmem:[#allocation6 + $0x38] sm:$0xff]
    %v4661 = vld [vmem:[#allocation6 + $0x40] sm:$0xff]
    %v4662 = vld [vmem:[#allocation6 + $0x48] sm:$0xff]
    %v4663 = vld [vmem:[#allocation6 + $0x50] sm:$0xff]
    %v4664 = vld [vmem:[#allocation6 + $0x58] sm:$0xff]
    %v4665 = vld [vmem:[#allocation6 + $0x60] sm:$0xff]
    %v4666 = vld [vmem:[#allocation6 + $0x68] sm:$0xff]
    %v4667 = vld [vmem:[#allocation6 + $0x70] sm:$0xff]
    %v4668 = vld [vmem:[#allocation6 + $0x78] sm:$0xff]
    %v4669 = vld [vmem:[#allocation6 + $0x80] sm:$0xff]
    %v4670 = vld [vmem:[#allocation6 + $0x88] sm:$0xff]
    %v4671 = vld [vmem:[#allocation6 + $0x90] sm:$0xff]
    %v4672 = vld [vmem:[#allocation6 + $0x98] sm:$0xff]
    %v4673 = vld [vmem:[#allocation6 + $0xa0] sm:$0xff]
    %v4674 = vld [vmem:[#allocation6 + $0xa8] sm:$0xff]
    %v4675 = vld [vmem:[#allocation6 + $0xb0] sm:$0xff]
    %v4676 = vld [vmem:[#allocation6 + $0xb8] sm:$0xff]
    %v4677 = vld [vmem:[#allocation6 + $0xc0] sm:$0xff]
    %v4678 = vld [vmem:[#allocation6 + $0xc8] sm:$0xff]
    %v4679 = vld [vmem:[#allocation6 + $0xd0] sm:$0xff]
    %v4680 = vld [vmem:[#allocation6 + $0xd8] sm:$0xff]
    %v4681 = vld [vmem:[#allocation6 + $0xe0] sm:$0xff]
    %v4682 = vld [vmem:[#allocation6 + $0xe8] sm:$0xff]
    %v4683 = vld [vmem:[%s7] sm:$0x1]
    %v4685 = vperm.slane %v4683, 0
    %4688 = vst [vmem:[#allocation1] ss:$4 sm:$0xff] %v4652
    %v4689 = vld.sshfl [vmem:[#allocation1] sm:$0xff pattern:$0x73625140]
    %v4690 = vld.sshfl [vmem:[#allocation1 + $0x8] sm:$0xff pattern:$0x73625140]
    %vm4692 = vcmask 916480
    %v4693 = vsel %vm4692, %v4690, 0
    %4695 = vmatpush.msra.mxu0 %v4668
    %4696 = vmatpush.msra.mxu0 %v4667
    %4697 = vmatpush.msra.mxu0 %v4666
    %4698 = vmatpush.msra.mxu0 %v4665
    %4699 = vmatpush.msra.mxu0 %v4664
    %4700 = vmatpush.msra.mxu0 %v4663
    %4701 = vmatpush.msra.mxu0 %v4662
    %4702 = vmatpush.msra.mxu0 %v4661
    %4703 = vmatpush.msra.mxu0 %v4660
    %4704 = vmatpush.msra.mxu0 %v4659
    %4705 = vmatpush.msra.mxu0 %v4658
    %4706 = vmatpush.msra.mxu0 %v4657
    %4707 = vmatpush.msra.mxu0 %v4656
    %4708 = vmatpush.msra.mxu0 %v4655
    %4709 = vmatpush.msra.mxu0 %v4654
    %4710 = vmatpush.msra.mxu0 %v4653
    %4711 = vmatmul.f32.gmra.mxu0 %v4689
    %v4712 = vpop.f32.mrf.mxu0
    %v4713 = vadd.f32 %v4685, %v4712
    %4714 = vdwg.mxu0
    %4715 = vmatpush.msra.mxu0 0.0
    %4716 = vmatpush.msra.mxu0 0.0
    %4717 = vmatpush.msra.mxu0 %v4682
    %4718 = vmatpush.msra.mxu0 %v4681
    %4719 = vmatpush.msra.mxu0 %v4680
    %4720 = vmatpush.msra.mxu0 %v4679
    %4721 = vmatpush.msra.mxu0 %v4678
    %4722 = vmatpush.msra.mxu0 %v4677
    %4723 = vmatpush.msra.mxu0 %v4676
    %4724 = vmatpush.msra.mxu0 %v4675
    %4725 = vmatpush.msra.mxu0 %v4674
    %4726 = vmatpush.msra.mxu0 %v4673
    %4727 = vmatpush.msra.mxu0 %v4672
    %4728 = vmatpush.msra.mxu0 %v4671
    %4729 = vmatpush.msra.mxu0 %v4670
    %4730 = vmatpush.msra.mxu0 %v4669
    %4731 = vmatmul.f32.gmra.mxu0 %v4693
    %v4732 = vpop.f32.mrf.mxu0
    %v4733 = vadd.f32 %v4713, %v4732
    %4734 = vdwg.mxu0
    %v4735 = vmax.f32 %v4733, 0.0
    %v4736 = vld [vmem:[%s8] sm:$0x1]
    %v4738 = vperm.slane %v4736, 0
    %v4740 = vmul.f32 %v4735, %v4738
    %vm4741 = vcmask 517120
    %v4742 = vsel %vm4741, %v4740, 0.0
    %4743 = vadd.xlane.f32.xlu0 %v4742
    %v4744 = vpop.xlane.xlu0 %4743
    %v4745 = vld [vmem:[#allocation5] sm:$0x1]
    %v4747 = vperm.slane %v4745, 0
    %v4749 = vadd.f32 %v4744, %v4747
    %vm4750 = vcmask 1024
    %4751 = vst.msk [vmem:[%s10] sm:$0x3] %vm4750, %v4749
    // Predicated region
    $region46: #{rnn_net_forward.1} parent=1 // pred_check
      _
    $region47: #{rnn_net_forward.1} parent=1 // pred_check_branch
      %4753 = sbr.rel (0) target = $region49
    $region48: #{rnn_net_forward.1} parent=1 // pred_region
      _
    $region49: #{rnn_net_forward.1} parent=1 // pred_fallthru
      _
    // Predicated region
    $region50: #{rnn_net_forward.1} parent=1 // pred_check
      _
    $region51: #{rnn_net_forward.1} parent=1 // pred_check_branch
      %4755 = sbr.rel (0) target = $region53
    $region52: #{rnn_net_forward.1} parent=1 // pred_region
      _
    $region53: #{rnn_net_forward.1} parent=1 // pred_fallthru
      _
    %4756 = vsyncpa [#allocation7], 1

</llo_original>
